<compile_context>
chip_gen: v7x
topology: tpu7x:2x2x1
jax: 0.10.0
libtpu: 0.0.40
codegen_flags: <defaults>
</compile_context>

<pallas_src>
import functools

import jax
import jax.numpy as jnp
import numpy as np
from jax import lax
from jax.experimental import pallas as pl
from jax.experimental.pallas import tpu as pltpu


def _round_up(x, m):
    return ((x + m - 1) // m) * m


def _pad_gate_cols(w, H, H_pad):
    """(..., 4H) -> (..., 4*H_pad): zero-pad each of the 4 gate blocks to H_pad."""
    lead = w.shape[:-1]
    w = w.reshape(lead + (4, H))
    pad = [(0, 0)] * len(lead) + [(0, 0), (0, H_pad - H)]
    return jnp.pad(w, pad).reshape(lead + (4 * H_pad,))


def _choose_time_chunk(T, TB, target_rows=1024):
    """Largest divisor of T with chunk*TB <= target_rows (caps matmul transients)."""
    tc = max(1, min(T, target_rows // max(TB, 1)))
    while T % tc:
        tc -= 1
    return tc


def _vmem_bytes(T, TB, D, H_pad, L, L_pad, TC, in_bytes, carry_state):
    """Conservative VMEM estimate: double-buffered ins/outs + scratch + transients."""
    G = 4 * H_pad
    f32 = 4
    per_grid_in = (TB * 4                          # lengths
                   + T * TB * D * in_bytes         # embeddings
                   + 2 * D * G * in_bytes          # Wih f|b
                   + 2 * G * f32                   # input biases
                   + 2 * H_pad * G * in_bytes      # Whh f|b
                   + 2 * H_pad * L_pad * in_bytes  # Wtag f|b
                   + L_pad * f32)                  # tag bias
    per_grid_out = T * TB * L * f32
    io = 2 * (per_grid_in + per_grid_out)          # BlockSpec double-buffering
    scratch = (2 * T * TB * G + 2 * T * TB * H_pad) * in_bytes
    if not carry_state:
        scratch += 4 * TB * H_pad * f32            # h/c states in VMEM
    transient = 2 * TC * TB * G * f32              # f32 chunk values (pro/epilogue)
    return io + scratch + transient + (2 << 20)


def _wordsequence_kernel(lens_ref, x_ref, wih_f_ref, wih_b_ref,
                         bih_f_ref, bih_b_ref, whh_f_ref, whh_b_ref,
                         wtag_f_ref, wtag_b_ref, btag_ref, out_ref,
                         *scratch, T, TB, H_pad, L, TC, unroll,
                         carry_state, compute_dtype):
    if carry_state:
        pre_f, pre_b, feat_f, feat_b = scratch
    else:
        pre_f, pre_b, feat_f, feat_b, h_f, c_f, h_b, c_b = scratch

    G = 4 * H_pad
    D = x_ref.shape[-1]
    f32 = jnp.float32

    # ---- prologue: hoisted input projection (both directions), chunked over T
    # so no transient spans the whole (T*TB, 8*H_pad) slab; two 4*H_pad-wide
    # dots written directly into the per-direction pre-gate scratch. ----
    def proj_chunk(r0):
        x2 = x_ref[pl.ds(r0, TC)].reshape(TC * TB, D)
        pf = jnp.dot(x2, wih_f_ref[...], preferred_element_type=f32) + bih_f_ref[...]
        pb = jnp.dot(x2, wih_b_ref[...], preferred_element_type=f32) + bih_b_ref[...]
        pre_f[pl.ds(r0, TC)] = pf.astype(compute_dtype).reshape(TC, TB, G)
        pre_b[pl.ds(r0, TC)] = pb.astype(compute_dtype).reshape(TC, TB, G)

    if TC == T:
        proj_chunk(0)
    else:
        def _proj_body(ci, carry):
            proj_chunk(pl.multiple_of(ci * TC, TC))
            return carry
        lax.fori_loop(0, T // TC, _proj_body, 0)

    lens = lens_ref[...]                              # (TB, 1) int32

    def gate_math(gates, c_prev):
        # PyTorch gate order i, f, g, o.  Padded gate lanes have zero weights
        # and bias, and c starts at zero, so padded lanes stay exactly zero.
        i = jax.nn.sigmoid(gates[:, 0:H_pad])
        f = jax.nn.sigmoid(gates[:, H_pad:2 * H_pad])
        g = jnp.tanh(gates[:, 2 * H_pad:3 * H_pad])
        o = jax.nn.sigmoid(gates[:, 3 * H_pad:4 * H_pad])
        c_new = f * c_prev + i * g
        h_new = o * jnp.tanh(c_new)
        return h_new, c_new

    def fused_step(s, hf, cf, hb, cb):
        """One forward step (t = s) and one backward step (t = T-1-s)."""
        tf = s
        tb = T - 1 - s
        m_f = tf < lens                               # (TB, 1) bool
        m_b = tb < lens
        # two independent dependency chains -> scheduler can interleave them
        gates_f = (pre_f[tf].astype(f32)
                   + jnp.dot(hf.astype(compute_dtype), whh_f_ref[...],
                             preferred_element_type=f32))
        gates_b = (pre_b[tb].astype(f32)
                   + jnp.dot(hb.astype(compute_dtype), whh_b_ref[...],
                             preferred_element_type=f32))
        hf_new, cf_new = gate_math(gates_f, cf)
        hb_new, cb_new = gate_math(gates_b, cb)
        # pad_packed_sequence pads outputs with zeros past each length.
        feat_f[tf] = jnp.where(m_f, hf_new, 0.0).astype(compute_dtype)
        feat_b[tb] = jnp.where(m_b, hb_new, 0.0).astype(compute_dtype)
        # packed semantics: fwd state frozen past len; bwd state 0 until len-1.
        return (jnp.where(m_f, hf_new, hf), jnp.where(m_f, cf_new, cf),
                jnp.where(m_b, hb_new, hb), jnp.where(m_b, cb_new, cb))

    if carry_state:
        # Small batch tiles: keep the 4 states as loop-carried vregs (no VMEM
        # load/store round trips on the serial critical path).
        def step(s, carry):
            return fused_step(s, *carry)
        z = jnp.zeros((TB, H_pad), f32)
        lax.fori_loop(0, T, step, (z, z, z, z), unroll=unroll)
    else:
        # Large batch tiles: states live in VMEM scratch (carrying would spill).
        h_f[...] = jnp.zeros_like(h_f)
        c_f[...] = jnp.zeros_like(c_f)
        h_b[...] = jnp.zeros_like(h_b)
        c_b[...] = jnp.zeros_like(c_b)

        def step(s, carry):
            hf, cf, hb, cb = fused_step(s, h_f[...], c_f[...], h_b[...], c_b[...])
            h_f[...] = hf
            c_f[...] = cf
            h_b[...] = hb
            c_b[...] = cb
            return carry
        lax.fori_loop(0, T, step, 0, unroll=unroll)

    # ---- epilogue: droplstm is identity (eval); hidden2tag without concat:
    # [feat_f | feat_b] @ W == feat_f @ W[:H] + feat_b @ W[H:].  Chunked over T;
    # only the L real label lanes are written (block last dim == out last dim).
    def tag_chunk(r0):
        ff = feat_f[pl.ds(r0, TC)].reshape(TC * TB, H_pad)
        fb = feat_b[pl.ds(r0, TC)].reshape(TC * TB, H_pad)
        logits = (jnp.dot(ff, wtag_f_ref[...], preferred_element_type=f32)
                  + jnp.dot(fb, wtag_b_ref[...], preferred_element_type=f32)
                  + btag_ref[...])
        out_ref[pl.ds(r0, TC)] = logits[:, :L].reshape(TC, TB, L)

    if TC == T:
        tag_chunk(0)
    else:
        def _tag_body(ci, carry):
            tag_chunk(pl.multiple_of(ci * TC, TC))
            return carry
        lax.fori_loop(0, T // TC, _tag_body, 0)


def wordsequence_forward(word_inputs, word_seq_lengths, params, *,
                         compute_dtype=jnp.bfloat16, batch_tile=None):
    """word_inputs: (B, T) int32; word_seq_lengths: (B,) int32 -> (B, T, L) f32."""
    # ---- WordRep: word embedding lookup (dropout = identity in eval) ----
    # TODO(synk): WordRep's char-CNN / feature-embedding branches are unused by
    # this forward (only word_inputs is consumed), so only the word embedding is kept.
    emb = params["word_emb"][word_inputs].astype(jnp.float32)          # (B, T, D)
    B, T, D = emb.shape
    H = params["wih_f"].shape[1] // 4
    L = params["w_tag"].shape[1]

    # TODO(synk): for tiny per-direction H (<128) the per-gate H_pad=128 padding
    # wastes EUP lanes (v5e); packing gates into shared lane blocks is a further
    # optimization not attempted here.
    H_pad = _round_up(H, 128)
    L_pad = _round_up(L, 128)
    in_bytes = jnp.dtype(compute_dtype).itemsize

    # ---- generation-aware VMEM budget (v7x: 64 MiB/TC; v5e/v6e: 128 MiB) ----
    vmem_cap = 64 << 20
    try:
        vmem_cap = int(pltpu.get_tpu_info().vmem_capacity_bytes)
    except Exception:
        pass
    budget = int(0.8 * vmem_cap)

    # ---- batch tile: as large as VMEM allows (MXU row utilization), <= 256 ----
    # TODO(synk): on v7x (2 TCs) prefer >= 2 grid tiles so "parallel" shards work;
    # no robust per-generation core-count query is used here.
    TB = batch_tile if batch_tile is not None else min(_round_up(B, 8), 256)
    TB = max(8, _round_up(TB, 8))
    while True:
        carry_state = TB * H_pad <= 16 * 128          # 4 states fit in vregs
        TC = _choose_time_chunk(T, TB)
        est = _vmem_bytes(T, TB, D, H_pad, L, L_pad, TC, in_bytes, carry_state)
        if est <= budget or TB <= 8:
            break
        TB = max(8, _round_up(TB // 2, 8))
    vmem_limit = int(min(max(est, 16 << 20), budget))

    B_pad = _round_up(max(B, TB), TB)
    nb = B_pad // TB

    # ---- lane/sublane-padded, pre-transposed parameters (matmul operands in
    # compute_dtype; biases stay f32 since they add post-accumulation) ----
    wih_f = _pad_gate_cols(params["wih_f"], H, H_pad).astype(compute_dtype)
    wih_b = _pad_gate_cols(params["wih_b"], H, H_pad).astype(compute_dtype)
    bih_f = _pad_gate_cols(params["b_f"], H, H_pad).astype(jnp.float32)
    bih_b = _pad_gate_cols(params["b_b"], H, H_pad).astype(jnp.float32)
    whh_f = jnp.pad(_pad_gate_cols(params["whh_f"], H, H_pad),
                    ((0, H_pad - H), (0, 0))).astype(compute_dtype)
    whh_b = jnp.pad(_pad_gate_cols(params["whh_b"], H, H_pad),
                    ((0, H_pad - H), (0, 0))).astype(compute_dtype)
    w_tag = params["w_tag"]                                            # (2H, L)
    wtag_f = jnp.pad(w_tag[:H], ((0, H_pad - H), (0, L_pad - L))).astype(compute_dtype)
    wtag_b = jnp.pad(w_tag[H:], ((0, H_pad - H), (0, L_pad - L))).astype(compute_dtype)
    btag = jnp.pad(params["b_tag"], ((0, 0), (0, L_pad - L))).astype(jnp.float32)

    # time-major activations, batch padded to the batch tile
    x_tm = jnp.pad(jnp.transpose(emb, (1, 0, 2)),
                   ((0, 0), (0, B_pad - B), (0, 0))).astype(compute_dtype)
    lens = jnp.pad(word_seq_lengths.astype(jnp.int32),
                   (0, B_pad - B)).reshape(B_pad, 1)                   # (B_pad, 1)

    unroll = min(T, 8) if TB <= 16 else 4
    kernel = functools.partial(
        _wordsequence_kernel, T=T, TB=TB, H_pad=H_pad, L=L, TC=TC,
        unroll=unroll, carry_state=carry_state, compute_dtype=compute_dtype)

    G = 4 * H_pad
    scratch_shapes = [
        pltpu.VMEM((T, TB, G), compute_dtype),        # pre-gates fwd
        pltpu.VMEM((T, TB, G), compute_dtype),        # pre-gates bwd
        pltpu.VMEM((T, TB, H_pad), compute_dtype),    # feat fwd
        pltpu.VMEM((T, TB, H_pad), compute_dtype),    # feat bwd
    ]
    if not carry_state:
        scratch_shapes += [pltpu.VMEM((TB, H_pad), jnp.float32)] * 4  # h_f c_f h_b c_b

    out_tm = pl.pallas_call(
        kernel,
        out_shape=jax.ShapeDtypeStruct((T, B_pad, L), jnp.float32),
        grid=(nb,),
        in_specs=[
            pl.BlockSpec((TB, 1), lambda b: (b, 0)),              # lengths
            pl.BlockSpec((T, TB, D), lambda b: (0, b, 0)),        # embeddings
            pl.BlockSpec((D, G), lambda b: (0, 0)),               # Wih fwd
            pl.BlockSpec((D, G), lambda b: (0, 0)),               # Wih bwd
            pl.BlockSpec((1, G), lambda b: (0, 0)),               # input bias fwd
            pl.BlockSpec((1, G), lambda b: (0, 0)),               # input bias bwd
            pl.BlockSpec((H_pad, G), lambda b: (0, 0)),           # Whh fwd
            pl.BlockSpec((H_pad, G), lambda b: (0, 0)),           # Whh bwd
            pl.BlockSpec((H_pad, L_pad), lambda b: (0, 0)),       # Wtag fwd
            pl.BlockSpec((H_pad, L_pad), lambda b: (0, 0)),       # Wtag bwd
            pl.BlockSpec((1, L_pad), lambda b: (0, 0)),           # tag bias
        ],
        out_specs=pl.BlockSpec((T, TB, L), lambda b: (0, b, 0)),
        scratch_shapes=scratch_shapes,
        compiler_params=pltpu.CompilerParams(
            dimension_semantics=("parallel",),
            vmem_limit_bytes=vmem_limit),
    )(lens, x_tm, wih_f, wih_b, bih_f, bih_b, whh_f, whh_b, wtag_f, wtag_b, btag)

    # drop batch padding, return batch_first like the PyTorch module
    return jnp.transpose(out_tm[:, :B, :], (1, 0, 2))                  # (B, T, L)


def _reference_forward(word_inputs, lengths, p):
    """Pure numpy reference mirroring the PyTorch semantics."""
    emb = np.asarray(p["word_emb"])[np.asarray(word_inputs)]           # (B, T, D)
    B, T, _ = emb.shape
    H = p["wih_f"].shape[1] // 4

    def sigmoid(x):
        return 1.0 / (1.0 + np.exp(-x))

    def run(direction, wih, whh, b):
        wih = np.asarray(wih); whh = np.asarray(whh); b = np.asarray(b)[0]
        out = np.zeros((B, T, H), np.float32)
        for bi in range(B):
            h = np.zeros(H, np.float32)
            c = np.zeros(H, np.float32)
            lb = int(lengths[bi])
            ts = range(lb) if direction == "f" else range(lb - 1, -1, -1)
            for t in ts:
                g = emb[bi, t] @ wih + h @ whh + b
                i = sigmoid(g[0:H]); f = sigmoid(g[H:2 * H])
                gg = np.tanh(g[2 * H:3 * H]); o = sigmoid(g[3 * H:4 * H])
                c = f * c + i * gg
                h = o * np.tanh(c)
                out[bi, t] = h
        return out

    fwd = run("f", p["wih_f"], p["whh_f"], p["b_f"])
    bwd = run("b", p["wih_b"], p["whh_b"], p["b_b"])
    feat = np.concatenate([fwd, bwd], axis=-1)                          # (B, T, 2H)
    return feat @ np.asarray(p["w_tag"]) + np.asarray(p["b_tag"])[0]    # (B, T, L)


if __name__ == "__main__":
    # Small, forward-consistent shapes.
    VOCAB = 50        # word alphabet size
    B, T = 2, 8       # batch, max sequence length
    D = 32            # data.word_emb_dim  (LSTM input_size)
    HIDDEN = 32       # data.HP_hidden_dim (bilstm -> per-direction H = 16)
    H = HIDDEN // 2
    L = 8             # data.label_alphabet_size

    key = jax.random.PRNGKey(0)
    ks = jax.random.split(key, 10)

    def rnd(k, shape, scale=0.2):
        return scale * jax.random.normal(k, shape, dtype=jnp.float32)

    params = {
        "word_emb": rnd(ks[0], (VOCAB, D), 1.0),
        # weights stored pre-transposed for x @ W layout: (in, 4H) / (H, 4H)
        "wih_f": rnd(ks[1], (D, 4 * H)),
        "whh_f": rnd(ks[2], (H, 4 * H)),
        "b_f":   rnd(ks[3], (1, 4 * H)),      # bias_ih + bias_hh combined
        "wih_b": rnd(ks[4], (D, 4 * H)),
        "whh_b": rnd(ks[5], (H, 4 * H)),
        "b_b":   rnd(ks[6], (1, 4 * H)),
        "w_tag": rnd(ks[7], (HIDDEN, L)),      # hidden2tag weight, transposed
        "b_tag": rnd(ks[8], (1, L)),
    }

    word_inputs = jax.random.randint(ks[9], (B, T), 1, VOCAB, dtype=jnp.int32)
    word_seq_lengths = jnp.array([T, 5], dtype=jnp.int32)   # sorted descending

    ref = _reference_forward(np.asarray(word_inputs),
                             np.asarray(word_seq_lengths), params)

    # exact-semantics path (f32 operands everywhere) -> tight tolerance
    out_f32 = jax.block_until_ready(
        wordsequence_forward(word_inputs, word_seq_lengths, params,
                             compute_dtype=jnp.float32))
    assert out_f32.shape == (B, T, L), out_f32.shape
    np.testing.assert_allclose(np.asarray(out_f32), ref, rtol=1e-4, atol=1e-4)

    # performance path (bf16 MXU operands + bf16 pre-gate/feature scratch)
    out_bf16 = jax.block_until_ready(
        wordsequence_forward(word_inputs, word_seq_lengths, params))
    assert out_bf16.shape == (B, T, L), out_bf16.shape
    np.testing.assert_allclose(np.asarray(out_bf16), ref, rtol=5e-2, atol=5e-2)

    print("KERNEL_OK")
</pallas_src>

<mosaic_0001>
module attributes {stable_mosaic.version = 11 : i64} {
  func.func @_wordsequence_kernel(%arg0: i32, %arg1: memref<8x1xi32, #tpu.memory_space<vmem>>, %arg2: memref<8x8x32xf32, #tpu.memory_space<vmem>>, %arg3: memref<32x512xf32, #tpu.memory_space<vmem>>, %arg4: memref<32x512xf32, #tpu.memory_space<vmem>>, %arg5: memref<1x512xf32, #tpu.memory_space<vmem>>, %arg6: memref<1x512xf32, #tpu.memory_space<vmem>>, %arg7: memref<128x512xf32, #tpu.memory_space<vmem>>, %arg8: memref<128x512xf32, #tpu.memory_space<vmem>>, %arg9: memref<128x128xf32, #tpu.memory_space<vmem>>, %arg10: memref<128x128xf32, #tpu.memory_space<vmem>>, %arg11: memref<1x128xf32, #tpu.memory_space<vmem>>, %arg12: memref<8x8x8xf32, #tpu.memory_space<vmem>>, %arg13: memref<8x8x512xf32, #tpu.memory_space<vmem>>, %arg14: memref<8x8x512xf32, #tpu.memory_space<vmem>>, %arg15: memref<8x8x128xf32, #tpu.memory_space<vmem>>, %arg16: memref<8x8x128xf32, #tpu.memory_space<vmem>>) attributes {dimension_semantics = [#tpu.dimension_semantics<parallel>], iteration_bounds = array<i64: 1>, scalar_prefetch = 0 : i64, scratch_operands = 4 : i64, tpu.core_type = #tpu.core_type<tc>, window_params = [{transform_indices = @transform_0, window_bounds = array<i64: 8, 1>}, {transform_indices = @transform_1, window_bounds = array<i64: 8, 8, 32>}, {pipeline_mode = #tpu.pipeline_mode<synchronous>, transform_indices = @transform_2, window_bounds = array<i64: 32, 512>}, {pipeline_mode = #tpu.pipeline_mode<synchronous>, transform_indices = @transform_3, window_bounds = array<i64: 32, 512>}, {pipeline_mode = #tpu.pipeline_mode<synchronous>, transform_indices = @transform_4, window_bounds = array<i64: 1, 512>}, {pipeline_mode = #tpu.pipeline_mode<synchronous>, transform_indices = @transform_5, window_bounds = array<i64: 1, 512>}, {pipeline_mode = #tpu.pipeline_mode<synchronous>, transform_indices = @transform_6, window_bounds = array<i64: 128, 512>}, {pipeline_mode = #tpu.pipeline_mode<synchronous>, transform_indices = @transform_7, window_bounds = array<i64: 128, 512>}, {pipeline_mode = #tpu.pipeline_mode<synchronous>, transform_indices = @transform_8, window_bounds = array<i64: 128, 128>}, {pipeline_mode = #tpu.pipeline_mode<synchronous>, transform_indices = @transform_9, window_bounds = array<i64: 128, 128>}, {pipeline_mode = #tpu.pipeline_mode<synchronous>, transform_indices = @transform_10, window_bounds = array<i64: 1, 128>}, {transform_indices = @transform_11, window_bounds = array<i64: 8, 8, 8>}]} {
    %c0 = arith.constant 0 : index
    %c0_0 = arith.constant 0 : index
    %c0_1 = arith.constant 0 : index
    %0 = vector.load %arg2[%c0, %c0_0, %c0_1] : memref<8x8x32xf32, #tpu.memory_space<vmem>>, vector<8x8x32xf32>
    %1 = vector.shape_cast %0 : vector<8x8x32xf32> to vector<64x32xf32>
    %c0_2 = arith.constant 0 : index
    %c0_3 = arith.constant 0 : index
    %2 = vector.load %arg3[%c0_2, %c0_3] : memref<32x512xf32, #tpu.memory_space<vmem>>, vector<32x512xf32>
    %cst = arith.constant dense<0.000000e+00> : vector<64x512xf32>
    %3 = tpu.matmul %1, %2, %cst {dimension_numbers = #tpu.dot_dimension_numbers<[1], [0], [0], [1], [0, 0, 1, 1], [], []>} : vector<64x32xf32>, vector<32x512xf32>, vector<64x512xf32> -> vector<64x512xf32>
    %c0_4 = arith.constant 0 : index
    %c0_5 = arith.constant 0 : index
    %4 = vector.load %arg5[%c0_4, %c0_5] : memref<1x512xf32, #tpu.memory_space<vmem>>, vector<1x512xf32>
    %5 = vector.broadcast %4 : vector<1x512xf32> to vector<64x512xf32>
    %6 = arith.addf %3, %5 : vector<64x512xf32>
    %c0_6 = arith.constant 0 : index
    %c0_7 = arith.constant 0 : index
    %7 = vector.load %arg4[%c0_6, %c0_7] : memref<32x512xf32, #tpu.memory_space<vmem>>, vector<32x512xf32>
    %cst_8 = arith.constant dense<0.000000e+00> : vector<64x512xf32>
    %8 = tpu.matmul %1, %7, %cst_8 {dimension_numbers = #tpu.dot_dimension_numbers<[1], [0], [0], [1], [0, 0, 1, 1], [], []>} : vector<64x32xf32>, vector<32x512xf32>, vector<64x512xf32> -> vector<64x512xf32>
    %c0_9 = arith.constant 0 : index
    %c0_10 = arith.constant 0 : index
    %9 = vector.load %arg6[%c0_9, %c0_10] : memref<1x512xf32, #tpu.memory_space<vmem>>, vector<1x512xf32>
    %10 = vector.broadcast %9 : vector<1x512xf32> to vector<64x512xf32>
    %11 = arith.addf %8, %10 : vector<64x512xf32>
    %12 = vector.shape_cast %6 : vector<64x512xf32> to vector<8x8x512xf32>
    %c0_11 = arith.constant 0 : index
    %c0_12 = arith.constant 0 : index
    %c0_13 = arith.constant 0 : index
    %13 = vector.load %arg13[%c0_11, %c0_12, %c0_13] : memref<8x8x512xf32, #tpu.memory_space<vmem>>, vector<8x8x512xf32>
    tpu.vector_store %arg13[%c0_11, %c0_12, %c0_13], %12 {strides = array<i32>} : memref<8x8x512xf32, #tpu.memory_space<vmem>>, vector<8x8x512xf32>,
    %14 = vector.shape_cast %11 : vector<64x512xf32> to vector<8x8x512xf32>
    %c0_14 = arith.constant 0 : index
    %c0_15 = arith.constant 0 : index
    %c0_16 = arith.constant 0 : index
    %15 = vector.load %arg14[%c0_14, %c0_15, %c0_16] : memref<8x8x512xf32, #tpu.memory_space<vmem>>, vector<8x8x512xf32>
    tpu.vector_store %arg14[%c0_14, %c0_15, %c0_16], %14 {strides = array<i32>} : memref<8x8x512xf32, #tpu.memory_space<vmem>>, vector<8x8x512xf32>,
    %c0_17 = arith.constant 0 : index
    %c0_18 = arith.constant 0 : index
    %16 = vector.load %arg1[%c0_17, %c0_18] : memref<8x1xi32, #tpu.memory_space<vmem>>, vector<8x1xi32>
    %cst_19 = arith.constant 0.000000e+00 : f32
    %17 = vector.broadcast %cst_19 : f32 to vector<8x128xf32>
    %c0_i32 = arith.constant 0 : i32
    %c7_i32 = arith.constant 7 : i32
    %18 = arith.subi %c7_i32, %c0_i32 : i32
    %19 = vector.broadcast %c0_i32 : i32 to vector<8x1xi32>
    %20 = arith.cmpi slt, %19, %16 : vector<8x1xi32>
    %21 = vector.broadcast %18 : i32 to vector<8x1xi32>
    %22 = arith.cmpi slt, %21, %16 : vector<8x1xi32>
    %23 = arith.index_cast %c0_i32 : i32 to index
    %c0_20 = arith.constant 0 : index
    %c0_21 = arith.constant 0 : index
    %24 = vector.load %arg13[%23, %c0_20, %c0_21] : memref<8x8x512xf32, #tpu.memory_space<vmem>>, vector<1x8x512xf32>
    %25 = vector.shape_cast %24 : vector<1x8x512xf32> to vector<8x512xf32>
    %c0_22 = arith.constant 0 : index
    %c0_23 = arith.constant 0 : index
    %26 = vector.load %arg7[%c0_22, %c0_23] : memref<128x512xf32, #tpu.memory_space<vmem>>, vector<128x512xf32>
    %cst_24 = arith.constant dense<0.000000e+00> : vector<8x512xf32>
    %27 = tpu.matmul %17, %26, %cst_24 {dimension_numbers = #tpu.dot_dimension_numbers<[1], [0], [0], [1], [0, 0, 1, 1], [], []>} : vector<8x128xf32>, vector<128x512xf32>, vector<8x512xf32> -> vector<8x512xf32>
    %28 = arith.addf %25, %27 : vector<8x512xf32>
    %29 = arith.index_cast %18 : i32 to index
    %c0_25 = arith.constant 0 : index
    %c0_26 = arith.constant 0 : index
    %30 = vector.load %arg14[%29, %c0_25, %c0_26] : memref<8x8x512xf32, #tpu.memory_space<vmem>>, vector<1x8x512xf32>
    %31 = vector.shape_cast %30 : vector<1x8x512xf32> to vector<8x512xf32>
    %c0_27 = arith.constant 0 : index
    %c0_28 = arith.constant 0 : index
    %32 = vector.load %arg8[%c0_27, %c0_28] : memref<128x512xf32, #tpu.memory_space<vmem>>, vector<128x512xf32>
    %cst_29 = arith.constant dense<0.000000e+00> : vector<8x512xf32>
    %33 = tpu.matmul %17, %32, %cst_29 {dimension_numbers = #tpu.dot_dimension_numbers<[1], [0], [0], [1], [0, 0, 1, 1], [], []>} : vector<8x128xf32>, vector<128x512xf32>, vector<8x512xf32> -> vector<8x512xf32>
    %34 = arith.addf %31, %33 : vector<8x512xf32>
    %35 = vector.extract_strided_slice %28 {offsets = [0, 0], sizes = [8, 128], strides = [1, 1]} : vector<8x512xf32> to vector<8x128xf32>
    %36 = arith.negf %35 : vector<8x128xf32>
    %37 = math.exp %36 : vector<8x128xf32>
    %cst_30 = arith.constant 1.000000e+00 : f32
    %38 = vector.broadcast %cst_30 : f32 to vector<8x128xf32>
    %39 = arith.addf %38, %37 : vector<8x128xf32>
    %40 = arith.divf %38, %39 : vector<8x128xf32>
    %41 = vector.extract_strided_slice %28 {offsets = [0, 128], sizes = [8, 128], strides = [1, 1]} : vector<8x512xf32> to vector<8x128xf32>
    %42 = arith.negf %41 : vector<8x128xf32>
    %43 = math.exp %42 : vector<8x128xf32>
    %cst_31 = arith.constant 1.000000e+00 : f32
    %44 = vector.broadcast %cst_31 : f32 to vector<8x128xf32>
    %45 = arith.addf %44, %43 : vector<8x128xf32>
    %46 = arith.divf %44, %45 : vector<8x128xf32>
    %47 = vector.extract_strided_slice %28 {offsets = [0, 256], sizes = [8, 128], strides = [1, 1]} : vector<8x512xf32> to vector<8x128xf32>
    %48 = math.tanh %47 : vector<8x128xf32>
    %49 = vector.extract_strided_slice %28 {offsets = [0, 384], sizes = [8, 128], strides = [1, 1]} : vector<8x512xf32> to vector<8x128xf32>
    %50 = arith.negf %49 : vector<8x128xf32>
    %51 = math.exp %50 : vector<8x128xf32>
    %cst_32 = arith.constant 1.000000e+00 : f32
    %52 = vector.broadcast %cst_32 : f32 to vector<8x128xf32>
    %53 = arith.addf %52, %51 : vector<8x128xf32>
    %54 = arith.divf %52, %53 : vector<8x128xf32>
    %55 = arith.mulf %46, %17 : vector<8x128xf32>
    %56 = arith.mulf %40, %48 : vector<8x128xf32>
    %57 = arith.addf %55, %56 : vector<8x128xf32>
    %58 = math.tanh %57 : vector<8x128xf32>
    %59 = arith.mulf %54, %58 : vector<8x128xf32>
    %60 = vector.extract_strided_slice %34 {offsets = [0, 0], sizes = [8, 128], strides = [1, 1]} : vector<8x512xf32> to vector<8x128xf32>
    %61 = arith.negf %60 : vector<8x128xf32>
    %62 = math.exp %61 : vector<8x128xf32>
    %cst_33 = arith.constant 1.000000e+00 : f32
    %63 = vector.broadcast %cst_33 : f32 to vector<8x128xf32>
    %64 = arith.addf %63, %62 : vector<8x128xf32>
    %65 = arith.divf %63, %64 : vector<8x128xf32>
    %66 = vector.extract_strided_slice %34 {offsets = [0, 128], sizes = [8, 128], strides = [1, 1]} : vector<8x512xf32> to vector<8x128xf32>
    %67 = arith.negf %66 : vector<8x128xf32>
    %68 = math.exp %67 : vector<8x128xf32>
    %cst_34 = arith.constant 1.000000e+00 : f32
    %69 = vector.broadcast %cst_34 : f32 to vector<8x128xf32>
    %70 = arith.addf %69, %68 : vector<8x128xf32>
    %71 = arith.divf %69, %70 : vector<8x128xf32>
    %72 = vector.extract_strided_slice %34 {offsets = [0, 256], sizes = [8, 128], strides = [1, 1]} : vector<8x512xf32> to vector<8x128xf32>
    %73 = math.tanh %72 : vector<8x128xf32>
    %74 = vector.extract_strided_slice %34 {offsets = [0, 384], sizes = [8, 128], strides = [1, 1]} : vector<8x512xf32> to vector<8x128xf32>
    %75 = arith.negf %74 : vector<8x128xf32>
    %76 = math.exp %75 : vector<8x128xf32>
    %cst_35 = arith.constant 1.000000e+00 : f32
    %77 = vector.broadcast %cst_35 : f32 to vector<8x128xf32>
    %78 = arith.addf %77, %76 : vector<8x128xf32>
    %79 = arith.divf %77, %78 : vector<8x128xf32>
    %80 = arith.mulf %71, %17 : vector<8x128xf32>
    %81 = arith.mulf %65, %73 : vector<8x128xf32>
    %82 = arith.addf %80, %81 : vector<8x128xf32>
    %83 = math.tanh %82 : vector<8x128xf32>
    %84 = arith.mulf %79, %83 : vector<8x128xf32>
    %cst_36 = arith.constant 0.000000e+00 : f32
    %85 = vector.shape_cast %20 : vector<8x1xi1> to vector<8x1xi1>
    %86 = vector.broadcast %85 : vector<8x1xi1> to vector<8x128xi1>
    %87 = vector.broadcast %cst_36 : f32 to vector<8x128xf32>
    %88 = arith.select %86, %59, %87 : vector<8x128xi1>, vector<8x128xf32>
    %89 = arith.index_cast %c0_i32 : i32 to index
    %c0_37 = arith.constant 0 : index
    %c0_38 = arith.constant 0 : index
    %90 = vector.load %arg15[%89, %c0_37, %c0_38] : memref<8x8x128xf32, #tpu.memory_space<vmem>>, vector<1x8x128xf32>
    %91 = vector.shape_cast %90 : vector<1x8x128xf32> to vector<8x128xf32>
    %92 = vector.shape_cast %88 : vector<8x128xf32> to vector<1x8x128xf32>
    tpu.vector_store %arg15[%89, %c0_37, %c0_38], %92 {strides = array<i32>} : memref<8x8x128xf32, #tpu.memory_space<vmem>>, vector<1x8x128xf32>,
    %cst_39 = arith.constant 0.000000e+00 : f32
    %93 = vector.shape_cast %22 : vector<8x1xi1> to vector<8x1xi1>
    %94 = vector.broadcast %93 : vector<8x1xi1> to vector<8x128xi1>
    %95 = vector.broadcast %cst_39 : f32 to vector<8x128xf32>
    %96 = arith.select %94, %84, %95 : vector<8x128xi1>, vector<8x128xf32>
    %97 = arith.index_cast %18 : i32 to index
    %c0_40 = arith.constant 0 : index
    %c0_41 = arith.constant 0 : index
    %98 = vector.load %arg16[%97, %c0_40, %c0_41] : memref<8x8x128xf32, #tpu.memory_space<vmem>>, vector<1x8x128xf32>
    %99 = vector.shape_cast %98 : vector<1x8x128xf32> to vector<8x128xf32>
    %100 = vector.shape_cast %96 : vector<8x128xf32> to vector<1x8x128xf32>
    tpu.vector_store %arg16[%97, %c0_40, %c0_41], %100 {strides = array<i32>} : memref<8x8x128xf32, #tpu.memory_space<vmem>>, vector<1x8x128xf32>,
    %101 = vector.shape_cast %20 : vector<8x1xi1> to vector<8x1xi1>
    %102 = vector.broadcast %101 : vector<8x1xi1> to vector<8x128xi1>
    %103 = arith.select %102, %59, %17 : vector<8x128xi1>, vector<8x128xf32>
    %104 = vector.shape_cast %20 : vector<8x1xi1> to vector<8x1xi1>
    %105 = vector.broadcast %104 : vector<8x1xi1> to vector<8x128xi1>
    %106 = arith.select %105, %57, %17 : vector<8x128xi1>, vector<8x128xf32>
    %107 = vector.shape_cast %22 : vector<8x1xi1> to vector<8x1xi1>
    %108 = vector.broadcast %107 : vector<8x1xi1> to vector<8x128xi1>
    %109 = arith.select %108, %84, %17 : vector<8x128xi1>, vector<8x128xf32>
    %110 = vector.shape_cast %22 : vector<8x1xi1> to vector<8x1xi1>
    %111 = vector.broadcast %110 : vector<8x1xi1> to vector<8x128xi1>
    %112 = arith.select %111, %82, %17 : vector<8x128xi1>, vector<8x128xf32>
    %c1_i32 = arith.constant 1 : i32
    %c7_i32_42 = arith.constant 7 : i32
    %113 = arith.subi %c7_i32_42, %c1_i32 : i32
    %114 = vector.broadcast %c1_i32 : i32 to vector<8x1xi32>
    %115 = arith.cmpi slt, %114, %16 : vector<8x1xi32>
    %116 = vector.broadcast %113 : i32 to vector<8x1xi32>
    %117 = arith.cmpi slt, %116, %16 : vector<8x1xi32>
    %118 = arith.index_cast %c1_i32 : i32 to index
    %c0_43 = arith.constant 0 : index
    %c0_44 = arith.constant 0 : index
    %119 = vector.load %arg13[%118, %c0_43, %c0_44] : memref<8x8x512xf32, #tpu.memory_space<vmem>>, vector<1x8x512xf32>
    %120 = vector.shape_cast %119 : vector<1x8x512xf32> to vector<8x512xf32>
    %c0_45 = arith.constant 0 : index
    %c0_46 = arith.constant 0 : index
    %121 = vector.load %arg7[%c0_45, %c0_46] : memref<128x512xf32, #tpu.memory_space<vmem>>, vector<128x512xf32>
    %cst_47 = arith.constant dense<0.000000e+00> : vector<8x512xf32>
    %122 = tpu.matmul %103, %121, %cst_47 {dimension_numbers = #tpu.dot_dimension_numbers<[1], [0], [0], [1], [0, 0, 1, 1], [], []>} : vector<8x128xf32>, vector<128x512xf32>, vector<8x512xf32> -> vector<8x512xf32>
    %123 = arith.addf %120, %122 : vector<8x512xf32>
    %124 = arith.index_cast %113 : i32 to index
    %c0_48 = arith.constant 0 : index
    %c0_49 = arith.constant 0 : index
    %125 = vector.load %arg14[%124, %c0_48, %c0_49] : memref<8x8x512xf32, #tpu.memory_space<vmem>>, vector<1x8x512xf32>
    %126 = vector.shape_cast %125 : vector<1x8x512xf32> to vector<8x512xf32>
    %c0_50 = arith.constant 0 : index
    %c0_51 = arith.constant 0 : index
    %127 = vector.load %arg8[%c0_50, %c0_51] : memref<128x512xf32, #tpu.memory_space<vmem>>, vector<128x512xf32>
    %cst_52 = arith.constant dense<0.000000e+00> : vector<8x512xf32>
    %128 = tpu.matmul %109, %127, %cst_52 {dimension_numbers = #tpu.dot_dimension_numbers<[1], [0], [0], [1], [0, 0, 1, 1], [], []>} : vector<8x128xf32>, vector<128x512xf32>, vector<8x512xf32> -> vector<8x512xf32>
    %129 = arith.addf %126, %128 : vector<8x512xf32>
    %130 = vector.extract_strided_slice %123 {offsets = [0, 0], sizes = [8, 128], strides = [1, 1]} : vector<8x512xf32> to vector<8x128xf32>
    %131 = arith.negf %130 : vector<8x128xf32>
    %132 = math.exp %131 : vector<8x128xf32>
    %cst_53 = arith.constant 1.000000e+00 : f32
    %133 = vector.broadcast %cst_53 : f32 to vector<8x128xf32>
    %134 = arith.addf %133, %132 : vector<8x128xf32>
    %135 = arith.divf %133, %134 : vector<8x128xf32>
    %136 = vector.extract_strided_slice %123 {offsets = [0, 128], sizes = [8, 128], strides = [1, 1]} : vector<8x512xf32> to vector<8x128xf32>
    %137 = arith.negf %136 : vector<8x128xf32>
    %138 = math.exp %137 : vector<8x128xf32>
    %cst_54 = arith.constant 1.000000e+00 : f32
    %139 = vector.broadcast %cst_54 : f32 to vector<8x128xf32>
    %140 = arith.addf %139, %138 : vector<8x128xf32>
    %141 = arith.divf %139, %140 : vector<8x128xf32>
    %142 = vector.extract_strided_slice %123 {offsets = [0, 256], sizes = [8, 128], strides = [1, 1]} : vector<8x512xf32> to vector<8x128xf32>
    %143 = math.tanh %142 : vector<8x128xf32>
    %144 = vector.extract_strided_slice %123 {offsets = [0, 384], sizes = [8, 128], strides = [1, 1]} : vector<8x512xf32> to vector<8x128xf32>
    %145 = arith.negf %144 : vector<8x128xf32>
    %146 = math.exp %145 : vector<8x128xf32>
    %cst_55 = arith.constant 1.000000e+00 : f32
    %147 = vector.broadcast %cst_55 : f32 to vector<8x128xf32>
    %148 = arith.addf %147, %146 : vector<8x128xf32>
    %149 = arith.divf %147, %148 : vector<8x128xf32>
    %150 = arith.mulf %141, %106 : vector<8x128xf32>
    %151 = arith.mulf %135, %143 : vector<8x128xf32>
    %152 = arith.addf %150, %151 : vector<8x128xf32>
    %153 = math.tanh %152 : vector<8x128xf32>
    %154 = arith.mulf %149, %153 : vector<8x128xf32>
    %155 = vector.extract_strided_slice %129 {offsets = [0, 0], sizes = [8, 128], strides = [1, 1]} : vector<8x512xf32> to vector<8x128xf32>
    %156 = arith.negf %155 : vector<8x128xf32>
    %157 = math.exp %156 : vector<8x128xf32>
    %cst_56 = arith.constant 1.000000e+00 : f32
    %158 = vector.broadcast %cst_56 : f32 to vector<8x128xf32>
    %159 = arith.addf %158, %157 : vector<8x128xf32>
    %160 = arith.divf %158, %159 : vector<8x128xf32>
    %161 = vector.extract_strided_slice %129 {offsets = [0, 128], sizes = [8, 128], strides = [1, 1]} : vector<8x512xf32> to vector<8x128xf32>
    %162 = arith.negf %161 : vector<8x128xf32>
    %163 = math.exp %162 : vector<8x128xf32>
    %cst_57 = arith.constant 1.000000e+00 : f32
    %164 = vector.broadcast %cst_57 : f32 to vector<8x128xf32>
    %165 = arith.addf %164, %163 : vector<8x128xf32>
    %166 = arith.divf %164, %165 : vector<8x128xf32>
    %167 = vector.extract_strided_slice %129 {offsets = [0, 256], sizes = [8, 128], strides = [1, 1]} : vector<8x512xf32> to vector<8x128xf32>
    %168 = math.tanh %167 : vector<8x128xf32>
    %169 = vector.extract_strided_slice %129 {offsets = [0, 384], sizes = [8, 128], strides = [1, 1]} : vector<8x512xf32> to vector<8x128xf32>
    %170 = arith.negf %169 : vector<8x128xf32>
    %171 = math.exp %170 : vector<8x128xf32>
    %cst_58 = arith.constant 1.000000e+00 : f32
    %172 = vector.broadcast %cst_58 : f32 to vector<8x128xf32>
    %173 = arith.addf %172, %171 : vector<8x128xf32>
    %174 = arith.divf %172, %173 : vector<8x128xf32>
    %175 = arith.mulf %166, %112 : vector<8x128xf32>
    %176 = arith.mulf %160, %168 : vector<8x128xf32>
    %177 = arith.addf %175, %176 : vector<8x128xf32>
    %178 = math.tanh %177 : vector<8x128xf32>
    %179 = arith.mulf %174, %178 : vector<8x128xf32>
    %cst_59 = arith.constant 0.000000e+00 : f32
    %180 = vector.shape_cast %115 : vector<8x1xi1> to vector<8x1xi1>
    %181 = vector.broadcast %180 : vector<8x1xi1> to vector<8x128xi1>
    %182 = vector.broadcast %cst_59 : f32 to vector<8x128xf32>
    %183 = arith.select %181, %154, %182 : vector<8x128xi1>, vector<8x128xf32>
    %184 = arith.index_cast %c1_i32 : i32 to index
    %c0_60 = arith.constant 0 : index
    %c0_61 = arith.constant 0 : index
    %185 = vector.load %arg15[%184, %c0_60, %c0_61] : memref<8x8x128xf32, #tpu.memory_space<vmem>>, vector<1x8x128xf32>
    %186 = vector.shape_cast %185 : vector<1x8x128xf32> to vector<8x128xf32>
    %187 = vector.shape_cast %183 : vector<8x128xf32> to vector<1x8x128xf32>
    tpu.vector_store %arg15[%184, %c0_60, %c0_61], %187 {strides = array<i32>} : memref<8x8x128xf32, #tpu.memory_space<vmem>>, vector<1x8x128xf32>,
    %cst_62 = arith.constant 0.000000e+00 : f32
    %188 = vector.shape_cast %117 : vector<8x1xi1> to vector<8x1xi1>
    %189 = vector.broadcast %188 : vector<8x1xi1> to vector<8x128xi1>
    %190 = vector.broadcast %cst_62 : f32 to vector<8x128xf32>
    %191 = arith.select %189, %179, %190 : vector<8x128xi1>, vector<8x128xf32>
    %192 = arith.index_cast %113 : i32 to index
    %c0_63 = arith.constant 0 : index
    %c0_64 = arith.constant 0 : index
    %193 = vector.load %arg16[%192, %c0_63, %c0_64] : memref<8x8x128xf32, #tpu.memory_space<vmem>>, vector<1x8x128xf32>
    %194 = vector.shape_cast %193 : vector<1x8x128xf32> to vector<8x128xf32>
    %195 = vector.shape_cast %191 : vector<8x128xf32> to vector<1x8x128xf32>
    tpu.vector_store %arg16[%192, %c0_63, %c0_64], %195 {strides = array<i32>} : memref<8x8x128xf32, #tpu.memory_space<vmem>>, vector<1x8x128xf32>,
    %196 = vector.shape_cast %115 : vector<8x1xi1> to vector<8x1xi1>
    %197 = vector.broadcast %196 : vector<8x1xi1> to vector<8x128xi1>
    %198 = arith.select %197, %154, %103 : vector<8x128xi1>, vector<8x128xf32>
    %199 = vector.shape_cast %115 : vector<8x1xi1> to vector<8x1xi1>
    %200 = vector.broadcast %199 : vector<8x1xi1> to vector<8x128xi1>
    %201 = arith.select %200, %152, %106 : vector<8x128xi1>, vector<8x128xf32>
    %202 = vector.shape_cast %117 : vector<8x1xi1> to vector<8x1xi1>
    %203 = vector.broadcast %202 : vector<8x1xi1> to vector<8x128xi1>
    %204 = arith.select %203, %179, %109 : vector<8x128xi1>, vector<8x128xf32>
    %205 = vector.shape_cast %117 : vector<8x1xi1> to vector<8x1xi1>
    %206 = vector.broadcast %205 : vector<8x1xi1> to vector<8x128xi1>
    %207 = arith.select %206, %177, %112 : vector<8x128xi1>, vector<8x128xf32>
    %c2_i32 = arith.constant 2 : i32
    %c7_i32_65 = arith.constant 7 : i32
    %208 = arith.subi %c7_i32_65, %c2_i32 : i32
    %209 = vector.broadcast %c2_i32 : i32 to vector<8x1xi32>
    %210 = arith.cmpi slt, %209, %16 : vector<8x1xi32>
    %211 = vector.broadcast %208 : i32 to vector<8x1xi32>
    %212 = arith.cmpi slt, %211, %16 : vector<8x1xi32>
    %213 = arith.index_cast %c2_i32 : i32 to index
    %c0_66 = arith.constant 0 : index
    %c0_67 = arith.constant 0 : index
    %214 = vector.load %arg13[%213, %c0_66, %c0_67] : memref<8x8x512xf32, #tpu.memory_space<vmem>>, vector<1x8x512xf32>
    %215 = vector.shape_cast %214 : vector<1x8x512xf32> to vector<8x512xf32>
    %c0_68 = arith.constant 0 : index
    %c0_69 = arith.constant 0 : index
    %216 = vector.load %arg7[%c0_68, %c0_69] : memref<128x512xf32, #tpu.memory_space<vmem>>, vector<128x512xf32>
    %cst_70 = arith.constant dense<0.000000e+00> : vector<8x512xf32>
    %217 = tpu.matmul %198, %216, %cst_70 {dimension_numbers = #tpu.dot_dimension_numbers<[1], [0], [0], [1], [0, 0, 1, 1], [], []>} : vector<8x128xf32>, vector<128x512xf32>, vector<8x512xf32> -> vector<8x512xf32>
    %218 = arith.addf %215, %217 : vector<8x512xf32>
    %219 = arith.index_cast %208 : i32 to index
    %c0_71 = arith.constant 0 : index
    %c0_72 = arith.constant 0 : index
    %220 = vector.load %arg14[%219, %c0_71, %c0_72] : memref<8x8x512xf32, #tpu.memory_space<vmem>>, vector<1x8x512xf32>
    %221 = vector.shape_cast %220 : vector<1x8x512xf32> to vector<8x512xf32>
    %c0_73 = arith.constant 0 : index
    %c0_74 = arith.constant 0 : index
    %222 = vector.load %arg8[%c0_73, %c0_74] : memref<128x512xf32, #tpu.memory_space<vmem>>, vector<128x512xf32>
    %cst_75 = arith.constant dense<0.000000e+00> : vector<8x512xf32>
    %223 = tpu.matmul %204, %222, %cst_75 {dimension_numbers = #tpu.dot_dimension_numbers<[1], [0], [0], [1], [0, 0, 1, 1], [], []>} : vector<8x128xf32>, vector<128x512xf32>, vector<8x512xf32> -> vector<8x512xf32>
    %224 = arith.addf %221, %223 : vector<8x512xf32>
    %225 = vector.extract_strided_slice %218 {offsets = [0, 0], sizes = [8, 128], strides = [1, 1]} : vector<8x512xf32> to vector<8x128xf32>
    %226 = arith.negf %225 : vector<8x128xf32>
    %227 = math.exp %226 : vector<8x128xf32>
    %cst_76 = arith.constant 1.000000e+00 : f32
    %228 = vector.broadcast %cst_76 : f32 to vector<8x128xf32>
    %229 = arith.addf %228, %227 : vector<8x128xf32>
    %230 = arith.divf %228, %229 : vector<8x128xf32>
    %231 = vector.extract_strided_slice %218 {offsets = [0, 128], sizes = [8, 128], strides = [1, 1]} : vector<8x512xf32> to vector<8x128xf32>
    %232 = arith.negf %231 : vector<8x128xf32>
    %233 = math.exp %232 : vector<8x128xf32>
    %cst_77 = arith.constant 1.000000e+00 : f32
    %234 = vector.broadcast %cst_77 : f32 to vector<8x128xf32>
    %235 = arith.addf %234, %233 : vector<8x128xf32>
    %236 = arith.divf %234, %235 : vector<8x128xf32>
    %237 = vector.extract_strided_slice %218 {offsets = [0, 256], sizes = [8, 128], strides = [1, 1]} : vector<8x512xf32> to vector<8x128xf32>
    %238 = math.tanh %237 : vector<8x128xf32>
    %239 = vector.extract_strided_slice %218 {offsets = [0, 384], sizes = [8, 128], strides = [1, 1]} : vector<8x512xf32> to vector<8x128xf32>
    %240 = arith.negf %239 : vector<8x128xf32>
    %241 = math.exp %240 : vector<8x128xf32>
    %cst_78 = arith.constant 1.000000e+00 : f32
    %242 = vector.broadcast %cst_78 : f32 to vector<8x128xf32>
    %243 = arith.addf %242, %241 : vector<8x128xf32>
    %244 = arith.divf %242, %243 : vector<8x128xf32>
    %245 = arith.mulf %236, %201 : vector<8x128xf32>
    %246 = arith.mulf %230, %238 : vector<8x128xf32>
    %247 = arith.addf %245, %246 : vector<8x128xf32>
    %248 = math.tanh %247 : vector<8x128xf32>
    %249 = arith.mulf %244, %248 : vector<8x128xf32>
    %250 = vector.extract_strided_slice %224 {offsets = [0, 0], sizes = [8, 128], strides = [1, 1]} : vector<8x512xf32> to vector<8x128xf32>
    %251 = arith.negf %250 : vector<8x128xf32>
    %252 = math.exp %251 : vector<8x128xf32>
    %cst_79 = arith.constant 1.000000e+00 : f32
    %253 = vector.broadcast %cst_79 : f32 to vector<8x128xf32>
    %254 = arith.addf %253, %252 : vector<8x128xf32>
    %255 = arith.divf %253, %254 : vector<8x128xf32>
    %256 = vector.extract_strided_slice %224 {offsets = [0, 128], sizes = [8, 128], strides = [1, 1]} : vector<8x512xf32> to vector<8x128xf32>
    %257 = arith.negf %256 : vector<8x128xf32>
    %258 = math.exp %257 : vector<8x128xf32>
    %cst_80 = arith.constant 1.000000e+00 : f32
    %259 = vector.broadcast %cst_80 : f32 to vector<8x128xf32>
    %260 = arith.addf %259, %258 : vector<8x128xf32>
    %261 = arith.divf %259, %260 : vector<8x128xf32>
    %262 = vector.extract_strided_slice %224 {offsets = [0, 256], sizes = [8, 128], strides = [1, 1]} : vector<8x512xf32> to vector<8x128xf32>
    %263 = math.tanh %262 : vector<8x128xf32>
    %264 = vector.extract_strided_slice %224 {offsets = [0, 384], sizes = [8, 128], strides = [1, 1]} : vector<8x512xf32> to vector<8x128xf32>
    %265 = arith.negf %264 : vector<8x128xf32>
    %266 = math.exp %265 : vector<8x128xf32>
    %cst_81 = arith.constant 1.000000e+00 : f32
    %267 = vector.broadcast %cst_81 : f32 to vector<8x128xf32>
    %268 = arith.addf %267, %266 : vector<8x128xf32>
    %269 = arith.divf %267, %268 : vector<8x128xf32>
    %270 = arith.mulf %261, %207 : vector<8x128xf32>
    %271 = arith.mulf %255, %263 : vector<8x128xf32>
    %272 = arith.addf %270, %271 : vector<8x128xf32>
    %273 = math.tanh %272 : vector<8x128xf32>
    %274 = arith.mulf %269, %273 : vector<8x128xf32>
    %cst_82 = arith.constant 0.000000e+00 : f32
    %275 = vector.shape_cast %210 : vector<8x1xi1> to vector<8x1xi1>
    %276 = vector.broadcast %275 : vector<8x1xi1> to vector<8x128xi1>
    %277 = vector.broadcast %cst_82 : f32 to vector<8x128xf32>
    %278 = arith.select %276, %249, %277 : vector<8x128xi1>, vector<8x128xf32>
    %279 = arith.index_cast %c2_i32 : i32 to index
    %c0_83 = arith.constant 0 : index
    %c0_84 = arith.constant 0 : index
    %280 = vector.load %arg15[%279, %c0_83, %c0_84] : memref<8x8x128xf32, #tpu.memory_space<vmem>>, vector<1x8x128xf32>
    %281 = vector.shape_cast %280 : vector<1x8x128xf32> to vector<8x128xf32>
    %282 = vector.shape_cast %278 : vector<8x128xf32> to vector<1x8x128xf32>
    tpu.vector_store %arg15[%279, %c0_83, %c0_84], %282 {strides = array<i32>} : memref<8x8x128xf32, #tpu.memory_space<vmem>>, vector<1x8x128xf32>,
    %cst_85 = arith.constant 0.000000e+00 : f32
    %283 = vector.shape_cast %212 : vector<8x1xi1> to vector<8x1xi1>
    %284 = vector.broadcast %283 : vector<8x1xi1> to vector<8x128xi1>
    %285 = vector.broadcast %cst_85 : f32 to vector<8x128xf32>
    %286 = arith.select %284, %274, %285 : vector<8x128xi1>, vector<8x128xf32>
    %287 = arith.index_cast %208 : i32 to index
    %c0_86 = arith.constant 0 : index
    %c0_87 = arith.constant 0 : index
    %288 = vector.load %arg16[%287, %c0_86, %c0_87] : memref<8x8x128xf32, #tpu.memory_space<vmem>>, vector<1x8x128xf32>
    %289 = vector.shape_cast %288 : vector<1x8x128xf32> to vector<8x128xf32>
    %290 = vector.shape_cast %286 : vector<8x128xf32> to vector<1x8x128xf32>
    tpu.vector_store %arg16[%287, %c0_86, %c0_87], %290 {strides = array<i32>} : memref<8x8x128xf32, #tpu.memory_space<vmem>>, vector<1x8x128xf32>,
    %291 = vector.shape_cast %210 : vector<8x1xi1> to vector<8x1xi1>
    %292 = vector.broadcast %291 : vector<8x1xi1> to vector<8x128xi1>
    %293 = arith.select %292, %249, %198 : vector<8x128xi1>, vector<8x128xf32>
    %294 = vector.shape_cast %210 : vector<8x1xi1> to vector<8x1xi1>
    %295 = vector.broadcast %294 : vector<8x1xi1> to vector<8x128xi1>
    %296 = arith.select %295, %247, %201 : vector<8x128xi1>, vector<8x128xf32>
    %297 = vector.shape_cast %212 : vector<8x1xi1> to vector<8x1xi1>
    %298 = vector.broadcast %297 : vector<8x1xi1> to vector<8x128xi1>
    %299 = arith.select %298, %274, %204 : vector<8x128xi1>, vector<8x128xf32>
    %300 = vector.shape_cast %212 : vector<8x1xi1> to vector<8x1xi1>
    %301 = vector.broadcast %300 : vector<8x1xi1> to vector<8x128xi1>
    %302 = arith.select %301, %272, %207 : vector<8x128xi1>, vector<8x128xf32>
    %c3_i32 = arith.constant 3 : i32
    %c7_i32_88 = arith.constant 7 : i32
    %303 = arith.subi %c7_i32_88, %c3_i32 : i32
    %304 = vector.broadcast %c3_i32 : i32 to vector<8x1xi32>
    %305 = arith.cmpi slt, %304, %16 : vector<8x1xi32>
    %306 = vector.broadcast %303 : i32 to vector<8x1xi32>
    %307 = arith.cmpi slt, %306, %16 : vector<8x1xi32>
    %308 = arith.index_cast %c3_i32 : i32 to index
    %c0_89 = arith.constant 0 : index
    %c0_90 = arith.constant 0 : index
    %309 = vector.load %arg13[%308, %c0_89, %c0_90] : memref<8x8x512xf32, #tpu.memory_space<vmem>>, vector<1x8x512xf32>
    %310 = vector.shape_cast %309 : vector<1x8x512xf32> to vector<8x512xf32>
    %c0_91 = arith.constant 0 : index
    %c0_92 = arith.constant 0 : index
    %311 = vector.load %arg7[%c0_91, %c0_92] : memref<128x512xf32, #tpu.memory_space<vmem>>, vector<128x512xf32>
    %cst_93 = arith.constant dense<0.000000e+00> : vector<8x512xf32>
    %312 = tpu.matmul %293, %311, %cst_93 {dimension_numbers = #tpu.dot_dimension_numbers<[1], [0], [0], [1], [0, 0, 1, 1], [], []>} : vector<8x128xf32>, vector<128x512xf32>, vector<8x512xf32> -> vector<8x512xf32>
    %313 = arith.addf %310, %312 : vector<8x512xf32>
    %314 = arith.index_cast %303 : i32 to index
    %c0_94 = arith.constant 0 : index
    %c0_95 = arith.constant 0 : index
    %315 = vector.load %arg14[%314, %c0_94, %c0_95] : memref<8x8x512xf32, #tpu.memory_space<vmem>>, vector<1x8x512xf32>
    %316 = vector.shape_cast %315 : vector<1x8x512xf32> to vector<8x512xf32>
    %c0_96 = arith.constant 0 : index
    %c0_97 = arith.constant 0 : index
    %317 = vector.load %arg8[%c0_96, %c0_97] : memref<128x512xf32, #tpu.memory_space<vmem>>, vector<128x512xf32>
    %cst_98 = arith.constant dense<0.000000e+00> : vector<8x512xf32>
    %318 = tpu.matmul %299, %317, %cst_98 {dimension_numbers = #tpu.dot_dimension_numbers<[1], [0], [0], [1], [0, 0, 1, 1], [], []>} : vector<8x128xf32>, vector<128x512xf32>, vector<8x512xf32> -> vector<8x512xf32>
    %319 = arith.addf %316, %318 : vector<8x512xf32>
    %320 = vector.extract_strided_slice %313 {offsets = [0, 0], sizes = [8, 128], strides = [1, 1]} : vector<8x512xf32> to vector<8x128xf32>
    %321 = arith.negf %320 : vector<8x128xf32>
    %322 = math.exp %321 : vector<8x128xf32>
    %cst_99 = arith.constant 1.000000e+00 : f32
    %323 = vector.broadcast %cst_99 : f32 to vector<8x128xf32>
    %324 = arith.addf %323, %322 : vector<8x128xf32>
    %325 = arith.divf %323, %324 : vector<8x128xf32>
    %326 = vector.extract_strided_slice %313 {offsets = [0, 128], sizes = [8, 128], strides = [1, 1]} : vector<8x512xf32> to vector<8x128xf32>
    %327 = arith.negf %326 : vector<8x128xf32>
    %328 = math.exp %327 : vector<8x128xf32>
    %cst_100 = arith.constant 1.000000e+00 : f32
    %329 = vector.broadcast %cst_100 : f32 to vector<8x128xf32>
    %330 = arith.addf %329, %328 : vector<8x128xf32>
    %331 = arith.divf %329, %330 : vector<8x128xf32>
    %332 = vector.extract_strided_slice %313 {offsets = [0, 256], sizes = [8, 128], strides = [1, 1]} : vector<8x512xf32> to vector<8x128xf32>
    %333 = math.tanh %332 : vector<8x128xf32>
    %334 = vector.extract_strided_slice %313 {offsets = [0, 384], sizes = [8, 128], strides = [1, 1]} : vector<8x512xf32> to vector<8x128xf32>
    %335 = arith.negf %334 : vector<8x128xf32>
    %336 = math.exp %335 : vector<8x128xf32>
    %cst_101 = arith.constant 1.000000e+00 : f32
    %337 = vector.broadcast %cst_101 : f32 to vector<8x128xf32>
    %338 = arith.addf %337, %336 : vector<8x128xf32>
    %339 = arith.divf %337, %338 : vector<8x128xf32>
    %340 = arith.mulf %331, %296 : vector<8x128xf32>
    %341 = arith.mulf %325, %333 : vector<8x128xf32>
    %342 = arith.addf %340, %341 : vector<8x128xf32>
    %343 = math.tanh %342 : vector<8x128xf32>
    %344 = arith.mulf %339, %343 : vector<8x128xf32>
    %345 = vector.extract_strided_slice %319 {offsets = [0, 0], sizes = [8, 128], strides = [1, 1]} : vector<8x512xf32> to vector<8x128xf32>
    %346 = arith.negf %345 : vector<8x128xf32>
    %347 = math.exp %346 : vector<8x128xf32>
    %cst_102 = arith.constant 1.000000e+00 : f32
    %348 = vector.broadcast %cst_102 : f32 to vector<8x128xf32>
    %349 = arith.addf %348, %347 : vector<8x128xf32>
    %350 = arith.divf %348, %349 : vector<8x128xf32>
    %351 = vector.extract_strided_slice %319 {offsets = [0, 128], sizes = [8, 128], strides = [1, 1]} : vector<8x512xf32> to vector<8x128xf32>
    %352 = arith.negf %351 : vector<8x128xf32>
    %353 = math.exp %352 : vector<8x128xf32>
    %cst_103 = arith.constant 1.000000e+00 : f32
    %354 = vector.broadcast %cst_103 : f32 to vector<8x128xf32>
    %355 = arith.addf %354, %353 : vector<8x128xf32>
    %356 = arith.divf %354, %355 : vector<8x128xf32>
    %357 = vector.extract_strided_slice %319 {offsets = [0, 256], sizes = [8, 128], strides = [1, 1]} : vector<8x512xf32> to vector<8x128xf32>
    %358 = math.tanh %357 : vector<8x128xf32>
    %359 = vector.extract_strided_slice %319 {offsets = [0, 384], sizes = [8, 128], strides = [1, 1]} : vector<8x512xf32> to vector<8x128xf32>
    %360 = arith.negf %359 : vector<8x128xf32>
    %361 = math.exp %360 : vector<8x128xf32>
    %cst_104 = arith.constant 1.000000e+00 : f32
    %362 = vector.broadcast %cst_104 : f32 to vector<8x128xf32>
    %363 = arith.addf %362, %361 : vector<8x128xf32>
    %364 = arith.divf %362, %363 : vector<8x128xf32>
    %365 = arith.mulf %356, %302 : vector<8x128xf32>
    %366 = arith.mulf %350, %358 : vector<8x128xf32>
    %367 = arith.addf %365, %366 : vector<8x128xf32>
    %368 = math.tanh %367 : vector<8x128xf32>
    %369 = arith.mulf %364, %368 : vector<8x128xf32>
    %cst_105 = arith.constant 0.000000e+00 : f32
    %370 = vector.shape_cast %305 : vector<8x1xi1> to vector<8x1xi1>
    %371 = vector.broadcast %370 : vector<8x1xi1> to vector<8x128xi1>
    %372 = vector.broadcast %cst_105 : f32 to vector<8x128xf32>
    %373 = arith.select %371, %344, %372 : vector<8x128xi1>, vector<8x128xf32>
    %374 = arith.index_cast %c3_i32 : i32 to index
    %c0_106 = arith.constant 0 : index
    %c0_107 = arith.constant 0 : index
    %375 = vector.load %arg15[%374, %c0_106, %c0_107] : memref<8x8x128xf32, #tpu.memory_space<vmem>>, vector<1x8x128xf32>
    %376 = vector.shape_cast %375 : vector<1x8x128xf32> to vector<8x128xf32>
    %377 = vector.shape_cast %373 : vector<8x128xf32> to vector<1x8x128xf32>
    tpu.vector_store %arg15[%374, %c0_106, %c0_107], %377 {strides = array<i32>} : memref<8x8x128xf32, #tpu.memory_space<vmem>>, vector<1x8x128xf32>,
    %cst_108 = arith.constant 0.000000e+00 : f32
    %378 = vector.shape_cast %307 : vector<8x1xi1> to vector<8x1xi1>
    %379 = vector.broadcast %378 : vector<8x1xi1> to vector<8x128xi1>
    %380 = vector.broadcast %cst_108 : f32 to vector<8x128xf32>
    %381 = arith.select %379, %369, %380 : vector<8x128xi1>, vector<8x128xf32>
    %382 = arith.index_cast %303 : i32 to index
    %c0_109 = arith.constant 0 : index
    %c0_110 = arith.constant 0 : index
    %383 = vector.load %arg16[%382, %c0_109, %c0_110] : memref<8x8x128xf32, #tpu.memory_space<vmem>>, vector<1x8x128xf32>
    %384 = vector.shape_cast %383 : vector<1x8x128xf32> to vector<8x128xf32>
    %385 = vector.shape_cast %381 : vector<8x128xf32> to vector<1x8x128xf32>
    tpu.vector_store %arg16[%382, %c0_109, %c0_110], %385 {strides = array<i32>} : memref<8x8x128xf32, #tpu.memory_space<vmem>>, vector<1x8x128xf32>,
    %386 = vector.shape_cast %305 : vector<8x1xi1> to vector<8x1xi1>
    %387 = vector.broadcast %386 : vector<8x1xi1> to vector<8x128xi1>
    %388 = arith.select %387, %344, %293 : vector<8x128xi1>, vector<8x128xf32>
    %389 = vector.shape_cast %305 : vector<8x1xi1> to vector<8x1xi1>
    %390 = vector.broadcast %389 : vector<8x1xi1> to vector<8x128xi1>
    %391 = arith.select %390, %342, %296 : vector<8x128xi1>, vector<8x128xf32>
    %392 = vector.shape_cast %307 : vector<8x1xi1> to vector<8x1xi1>
    %393 = vector.broadcast %392 : vector<8x1xi1> to vector<8x128xi1>
    %394 = arith.select %393, %369, %299 : vector<8x128xi1>, vector<8x128xf32>
    %395 = vector.shape_cast %307 : vector<8x1xi1> to vector<8x1xi1>
    %396 = vector.broadcast %395 : vector<8x1xi1> to vector<8x128xi1>
    %397 = arith.select %396, %367, %302 : vector<8x128xi1>, vector<8x128xf32>
    %c4_i32 = arith.constant 4 : i32
    %c7_i32_111 = arith.constant 7 : i32
    %398 = arith.subi %c7_i32_111, %c4_i32 : i32
    %399 = vector.broadcast %c4_i32 : i32 to vector<8x1xi32>
    %400 = arith.cmpi slt, %399, %16 : vector<8x1xi32>
    %401 = vector.broadcast %398 : i32 to vector<8x1xi32>
    %402 = arith.cmpi slt, %401, %16 : vector<8x1xi32>
    %403 = arith.index_cast %c4_i32 : i32 to index
    %c0_112 = arith.constant 0 : index
    %c0_113 = arith.constant 0 : index
    %404 = vector.load %arg13[%403, %c0_112, %c0_113] : memref<8x8x512xf32, #tpu.memory_space<vmem>>, vector<1x8x512xf32>
    %405 = vector.shape_cast %404 : vector<1x8x512xf32> to vector<8x512xf32>
    %c0_114 = arith.constant 0 : index
    %c0_115 = arith.constant 0 : index
    %406 = vector.load %arg7[%c0_114, %c0_115] : memref<128x512xf32, #tpu.memory_space<vmem>>, vector<128x512xf32>
    %cst_116 = arith.constant dense<0.000000e+00> : vector<8x512xf32>
    %407 = tpu.matmul %388, %406, %cst_116 {dimension_numbers = #tpu.dot_dimension_numbers<[1], [0], [0], [1], [0, 0, 1, 1], [], []>} : vector<8x128xf32>, vector<128x512xf32>, vector<8x512xf32> -> vector<8x512xf32>
    %408 = arith.addf %405, %407 : vector<8x512xf32>
    %409 = arith.index_cast %398 : i32 to index
    %c0_117 = arith.constant 0 : index
    %c0_118 = arith.constant 0 : index
    %410 = vector.load %arg14[%409, %c0_117, %c0_118] : memref<8x8x512xf32, #tpu.memory_space<vmem>>, vector<1x8x512xf32>
    %411 = vector.shape_cast %410 : vector<1x8x512xf32> to vector<8x512xf32>
    %c0_119 = arith.constant 0 : index
    %c0_120 = arith.constant 0 : index
    %412 = vector.load %arg8[%c0_119, %c0_120] : memref<128x512xf32, #tpu.memory_space<vmem>>, vector<128x512xf32>
    %cst_121 = arith.constant dense<0.000000e+00> : vector<8x512xf32>
    %413 = tpu.matmul %394, %412, %cst_121 {dimension_numbers = #tpu.dot_dimension_numbers<[1], [0], [0], [1], [0, 0, 1, 1], [], []>} : vector<8x128xf32>, vector<128x512xf32>, vector<8x512xf32> -> vector<8x512xf32>
    %414 = arith.addf %411, %413 : vector<8x512xf32>
    %415 = vector.extract_strided_slice %408 {offsets = [0, 0], sizes = [8, 128], strides = [1, 1]} : vector<8x512xf32> to vector<8x128xf32>
    %416 = arith.negf %415 : vector<8x128xf32>
    %417 = math.exp %416 : vector<8x128xf32>
    %cst_122 = arith.constant 1.000000e+00 : f32
    %418 = vector.broadcast %cst_122 : f32 to vector<8x128xf32>
    %419 = arith.addf %418, %417 : vector<8x128xf32>
    %420 = arith.divf %418, %419 : vector<8x128xf32>
    %421 = vector.extract_strided_slice %408 {offsets = [0, 128], sizes = [8, 128], strides = [1, 1]} : vector<8x512xf32> to vector<8x128xf32>
    %422 = arith.negf %421 : vector<8x128xf32>
    %423 = math.exp %422 : vector<8x128xf32>
    %cst_123 = arith.constant 1.000000e+00 : f32
    %424 = vector.broadcast %cst_123 : f32 to vector<8x128xf32>
    %425 = arith.addf %424, %423 : vector<8x128xf32>
    %426 = arith.divf %424, %425 : vector<8x128xf32>
    %427 = vector.extract_strided_slice %408 {offsets = [0, 256], sizes = [8, 128], strides = [1, 1]} : vector<8x512xf32> to vector<8x128xf32>
    %428 = math.tanh %427 : vector<8x128xf32>
    %429 = vector.extract_strided_slice %408 {offsets = [0, 384], sizes = [8, 128], strides = [1, 1]} : vector<8x512xf32> to vector<8x128xf32>
    %430 = arith.negf %429 : vector<8x128xf32>
    %431 = math.exp %430 : vector<8x128xf32>
    %cst_124 = arith.constant 1.000000e+00 : f32
    %432 = vector.broadcast %cst_124 : f32 to vector<8x128xf32>
    %433 = arith.addf %432, %431 : vector<8x128xf32>
    %434 = arith.divf %432, %433 : vector<8x128xf32>
    %435 = arith.mulf %426, %391 : vector<8x128xf32>
    %436 = arith.mulf %420, %428 : vector<8x128xf32>
    %437 = arith.addf %435, %436 : vector<8x128xf32>
    %438 = math.tanh %437 : vector<8x128xf32>
    %439 = arith.mulf %434, %438 : vector<8x128xf32>
    %440 = vector.extract_strided_slice %414 {offsets = [0, 0], sizes = [8, 128], strides = [1, 1]} : vector<8x512xf32> to vector<8x128xf32>
    %441 = arith.negf %440 : vector<8x128xf32>
    %442 = math.exp %441 : vector<8x128xf32>
    %cst_125 = arith.constant 1.000000e+00 : f32
    %443 = vector.broadcast %cst_125 : f32 to vector<8x128xf32>
    %444 = arith.addf %443, %442 : vector<8x128xf32>
    %445 = arith.divf %443, %444 : vector<8x128xf32>
    %446 = vector.extract_strided_slice %414 {offsets = [0, 128], sizes = [8, 128], strides = [1, 1]} : vector<8x512xf32> to vector<8x128xf32>
    %447 = arith.negf %446 : vector<8x128xf32>
    %448 = math.exp %447 : vector<8x128xf32>
    %cst_126 = arith.constant 1.000000e+00 : f32
    %449 = vector.broadcast %cst_126 : f32 to vector<8x128xf32>
    %450 = arith.addf %449, %448 : vector<8x128xf32>
    %451 = arith.divf %449, %450 : vector<8x128xf32>
    %452 = vector.extract_strided_slice %414 {offsets = [0, 256], sizes = [8, 128], strides = [1, 1]} : vector<8x512xf32> to vector<8x128xf32>
    %453 = math.tanh %452 : vector<8x128xf32>
    %454 = vector.extract_strided_slice %414 {offsets = [0, 384], sizes = [8, 128], strides = [1, 1]} : vector<8x512xf32> to vector<8x128xf32>
    %455 = arith.negf %454 : vector<8x128xf32>
    %456 = math.exp %455 : vector<8x128xf32>
    %cst_127 = arith.constant 1.000000e+00 : f32
    %457 = vector.broadcast %cst_127 : f32 to vector<8x128xf32>
    %458 = arith.addf %457, %456 : vector<8x128xf32>
    %459 = arith.divf %457, %458 : vector<8x128xf32>
    %460 = arith.mulf %451, %397 : vector<8x128xf32>
    %461 = arith.mulf %445, %453 : vector<8x128xf32>
    %462 = arith.addf %460, %461 : vector<8x128xf32>
    %463 = math.tanh %462 : vector<8x128xf32>
    %464 = arith.mulf %459, %463 : vector<8x128xf32>
    %cst_128 = arith.constant 0.000000e+00 : f32
    %465 = vector.shape_cast %400 : vector<8x1xi1> to vector<8x1xi1>
    %466 = vector.broadcast %465 : vector<8x1xi1> to vector<8x128xi1>
    %467 = vector.broadcast %cst_128 : f32 to vector<8x128xf32>
    %468 = arith.select %466, %439, %467 : vector<8x128xi1>, vector<8x128xf32>
    %469 = arith.index_cast %c4_i32 : i32 to index
    %c0_129 = arith.constant 0 : index
    %c0_130 = arith.constant 0 : index
    %470 = vector.load %arg15[%469, %c0_129, %c0_130] : memref<8x8x128xf32, #tpu.memory_space<vmem>>, vector<1x8x128xf32>
    %471 = vector.shape_cast %470 : vector<1x8x128xf32> to vector<8x128xf32>
    %472 = vector.shape_cast %468 : vector<8x128xf32> to vector<1x8x128xf32>
    tpu.vector_store %arg15[%469, %c0_129, %c0_130], %472 {strides = array<i32>} : memref<8x8x128xf32, #tpu.memory_space<vmem>>, vector<1x8x128xf32>,
    %cst_131 = arith.constant 0.000000e+00 : f32
    %473 = vector.shape_cast %402 : vector<8x1xi1> to vector<8x1xi1>
    %474 = vector.broadcast %473 : vector<8x1xi1> to vector<8x128xi1>
    %475 = vector.broadcast %cst_131 : f32 to vector<8x128xf32>
    %476 = arith.select %474, %464, %475 : vector<8x128xi1>, vector<8x128xf32>
    %477 = arith.index_cast %398 : i32 to index
    %c0_132 = arith.constant 0 : index
    %c0_133 = arith.constant 0 : index
    %478 = vector.load %arg16[%477, %c0_132, %c0_133] : memref<8x8x128xf32, #tpu.memory_space<vmem>>, vector<1x8x128xf32>
    %479 = vector.shape_cast %478 : vector<1x8x128xf32> to vector<8x128xf32>
    %480 = vector.shape_cast %476 : vector<8x128xf32> to vector<1x8x128xf32>
    tpu.vector_store %arg16[%477, %c0_132, %c0_133], %480 {strides = array<i32>} : memref<8x8x128xf32, #tpu.memory_space<vmem>>, vector<1x8x128xf32>,
    %481 = vector.shape_cast %400 : vector<8x1xi1> to vector<8x1xi1>
    %482 = vector.broadcast %481 : vector<8x1xi1> to vector<8x128xi1>
    %483 = arith.select %482, %439, %388 : vector<8x128xi1>, vector<8x128xf32>
    %484 = vector.shape_cast %400 : vector<8x1xi1> to vector<8x1xi1>
    %485 = vector.broadcast %484 : vector<8x1xi1> to vector<8x128xi1>
    %486 = arith.select %485, %437, %391 : vector<8x128xi1>, vector<8x128xf32>
    %487 = vector.shape_cast %402 : vector<8x1xi1> to vector<8x1xi1>
    %488 = vector.broadcast %487 : vector<8x1xi1> to vector<8x128xi1>
    %489 = arith.select %488, %464, %394 : vector<8x128xi1>, vector<8x128xf32>
    %490 = vector.shape_cast %402 : vector<8x1xi1> to vector<8x1xi1>
    %491 = vector.broadcast %490 : vector<8x1xi1> to vector<8x128xi1>
    %492 = arith.select %491, %462, %397 : vector<8x128xi1>, vector<8x128xf32>
    %c5_i32 = arith.constant 5 : i32
    %c7_i32_134 = arith.constant 7 : i32
    %493 = arith.subi %c7_i32_134, %c5_i32 : i32
    %494 = vector.broadcast %c5_i32 : i32 to vector<8x1xi32>
    %495 = arith.cmpi slt, %494, %16 : vector<8x1xi32>
    %496 = vector.broadcast %493 : i32 to vector<8x1xi32>
    %497 = arith.cmpi slt, %496, %16 : vector<8x1xi32>
    %498 = arith.index_cast %c5_i32 : i32 to index
    %c0_135 = arith.constant 0 : index
    %c0_136 = arith.constant 0 : index
    %499 = vector.load %arg13[%498, %c0_135, %c0_136] : memref<8x8x512xf32, #tpu.memory_space<vmem>>, vector<1x8x512xf32>
    %500 = vector.shape_cast %499 : vector<1x8x512xf32> to vector<8x512xf32>
    %c0_137 = arith.constant 0 : index
    %c0_138 = arith.constant 0 : index
    %501 = vector.load %arg7[%c0_137, %c0_138] : memref<128x512xf32, #tpu.memory_space<vmem>>, vector<128x512xf32>
    %cst_139 = arith.constant dense<0.000000e+00> : vector<8x512xf32>
    %502 = tpu.matmul %483, %501, %cst_139 {dimension_numbers = #tpu.dot_dimension_numbers<[1], [0], [0], [1], [0, 0, 1, 1], [], []>} : vector<8x128xf32>, vector<128x512xf32>, vector<8x512xf32> -> vector<8x512xf32>
    %503 = arith.addf %500, %502 : vector<8x512xf32>
    %504 = arith.index_cast %493 : i32 to index
    %c0_140 = arith.constant 0 : index
    %c0_141 = arith.constant 0 : index
    %505 = vector.load %arg14[%504, %c0_140, %c0_141] : memref<8x8x512xf32, #tpu.memory_space<vmem>>, vector<1x8x512xf32>
    %506 = vector.shape_cast %505 : vector<1x8x512xf32> to vector<8x512xf32>
    %c0_142 = arith.constant 0 : index
    %c0_143 = arith.constant 0 : index
    %507 = vector.load %arg8[%c0_142, %c0_143] : memref<128x512xf32, #tpu.memory_space<vmem>>, vector<128x512xf32>
    %cst_144 = arith.constant dense<0.000000e+00> : vector<8x512xf32>
    %508 = tpu.matmul %489, %507, %cst_144 {dimension_numbers = #tpu.dot_dimension_numbers<[1], [0], [0], [1], [0, 0, 1, 1], [], []>} : vector<8x128xf32>, vector<128x512xf32>, vector<8x512xf32> -> vector<8x512xf32>
    %509 = arith.addf %506, %508 : vector<8x512xf32>
    %510 = vector.extract_strided_slice %503 {offsets = [0, 0], sizes = [8, 128], strides = [1, 1]} : vector<8x512xf32> to vector<8x128xf32>
    %511 = arith.negf %510 : vector<8x128xf32>
    %512 = math.exp %511 : vector<8x128xf32>
    %cst_145 = arith.constant 1.000000e+00 : f32
    %513 = vector.broadcast %cst_145 : f32 to vector<8x128xf32>
    %514 = arith.addf %513, %512 : vector<8x128xf32>
    %515 = arith.divf %513, %514 : vector<8x128xf32>
    %516 = vector.extract_strided_slice %503 {offsets = [0, 128], sizes = [8, 128], strides = [1, 1]} : vector<8x512xf32> to vector<8x128xf32>
    %517 = arith.negf %516 : vector<8x128xf32>
    %518 = math.exp %517 : vector<8x128xf32>
    %cst_146 = arith.constant 1.000000e+00 : f32
    %519 = vector.broadcast %cst_146 : f32 to vector<8x128xf32>
    %520 = arith.addf %519, %518 : vector<8x128xf32>
    %521 = arith.divf %519, %520 : vector<8x128xf32>
    %522 = vector.extract_strided_slice %503 {offsets = [0, 256], sizes = [8, 128], strides = [1, 1]} : vector<8x512xf32> to vector<8x128xf32>
    %523 = math.tanh %522 : vector<8x128xf32>
    %524 = vector.extract_strided_slice %503 {offsets = [0, 384], sizes = [8, 128], strides = [1, 1]} : vector<8x512xf32> to vector<8x128xf32>
    %525 = arith.negf %524 : vector<8x128xf32>
    %526 = math.exp %525 : vector<8x128xf32>
    %cst_147 = arith.constant 1.000000e+00 : f32
    %527 = vector.broadcast %cst_147 : f32 to vector<8x128xf32>
    %528 = arith.addf %527, %526 : vector<8x128xf32>
    %529 = arith.divf %527, %528 : vector<8x128xf32>
    %530 = arith.mulf %521, %486 : vector<8x128xf32>
    %531 = arith.mulf %515, %523 : vector<8x128xf32>
    %532 = arith.addf %530, %531 : vector<8x128xf32>
    %533 = math.tanh %532 : vector<8x128xf32>
    %534 = arith.mulf %529, %533 : vector<8x128xf32>
    %535 = vector.extract_strided_slice %509 {offsets = [0, 0], sizes = [8, 128], strides = [1, 1]} : vector<8x512xf32> to vector<8x128xf32>
    %536 = arith.negf %535 : vector<8x128xf32>
    %537 = math.exp %536 : vector<8x128xf32>
    %cst_148 = arith.constant 1.000000e+00 : f32
    %538 = vector.broadcast %cst_148 : f32 to vector<8x128xf32>
    %539 = arith.addf %538, %537 : vector<8x128xf32>
    %540 = arith.divf %538, %539 : vector<8x128xf32>
    %541 = vector.extract_strided_slice %509 {offsets = [0, 128], sizes = [8, 128], strides = [1, 1]} : vector<8x512xf32> to vector<8x128xf32>
    %542 = arith.negf %541 : vector<8x128xf32>
    %543 = math.exp %542 : vector<8x128xf32>
    %cst_149 = arith.constant 1.000000e+00 : f32
    %544 = vector.broadcast %cst_149 : f32 to vector<8x128xf32>
    %545 = arith.addf %544, %543 : vector<8x128xf32>
    %546 = arith.divf %544, %545 : vector<8x128xf32>
    %547 = vector.extract_strided_slice %509 {offsets = [0, 256], sizes = [8, 128], strides = [1, 1]} : vector<8x512xf32> to vector<8x128xf32>
    %548 = math.tanh %547 : vector<8x128xf32>
    %549 = vector.extract_strided_slice %509 {offsets = [0, 384], sizes = [8, 128], strides = [1, 1]} : vector<8x512xf32> to vector<8x128xf32>
    %550 = arith.negf %549 : vector<8x128xf32>
    %551 = math.exp %550 : vector<8x128xf32>
    %cst_150 = arith.constant 1.000000e+00 : f32
    %552 = vector.broadcast %cst_150 : f32 to vector<8x128xf32>
    %553 = arith.addf %552, %551 : vector<8x128xf32>
    %554 = arith.divf %552, %553 : vector<8x128xf32>
    %555 = arith.mulf %546, %492 : vector<8x128xf32>
    %556 = arith.mulf %540, %548 : vector<8x128xf32>
    %557 = arith.addf %555, %556 : vector<8x128xf32>
    %558 = math.tanh %557 : vector<8x128xf32>
    %559 = arith.mulf %554, %558 : vector<8x128xf32>
    %cst_151 = arith.constant 0.000000e+00 : f32
    %560 = vector.shape_cast %495 : vector<8x1xi1> to vector<8x1xi1>
    %561 = vector.broadcast %560 : vector<8x1xi1> to vector<8x128xi1>
    %562 = vector.broadcast %cst_151 : f32 to vector<8x128xf32>
    %563 = arith.select %561, %534, %562 : vector<8x128xi1>, vector<8x128xf32>
    %564 = arith.index_cast %c5_i32 : i32 to index
    %c0_152 = arith.constant 0 : index
    %c0_153 = arith.constant 0 : index
    %565 = vector.load %arg15[%564, %c0_152, %c0_153] : memref<8x8x128xf32, #tpu.memory_space<vmem>>, vector<1x8x128xf32>
    %566 = vector.shape_cast %565 : vector<1x8x128xf32> to vector<8x128xf32>
    %567 = vector.shape_cast %563 : vector<8x128xf32> to vector<1x8x128xf32>
    tpu.vector_store %arg15[%564, %c0_152, %c0_153], %567 {strides = array<i32>} : memref<8x8x128xf32, #tpu.memory_space<vmem>>, vector<1x8x128xf32>,
    %cst_154 = arith.constant 0.000000e+00 : f32
    %568 = vector.shape_cast %497 : vector<8x1xi1> to vector<8x1xi1>
    %569 = vector.broadcast %568 : vector<8x1xi1> to vector<8x128xi1>
    %570 = vector.broadcast %cst_154 : f32 to vector<8x128xf32>
    %571 = arith.select %569, %559, %570 : vector<8x128xi1>, vector<8x128xf32>
    %572 = arith.index_cast %493 : i32 to index
    %c0_155 = arith.constant 0 : index
    %c0_156 = arith.constant 0 : index
    %573 = vector.load %arg16[%572, %c0_155, %c0_156] : memref<8x8x128xf32, #tpu.memory_space<vmem>>, vector<1x8x128xf32>
    %574 = vector.shape_cast %573 : vector<1x8x128xf32> to vector<8x128xf32>
    %575 = vector.shape_cast %571 : vector<8x128xf32> to vector<1x8x128xf32>
    tpu.vector_store %arg16[%572, %c0_155, %c0_156], %575 {strides = array<i32>} : memref<8x8x128xf32, #tpu.memory_space<vmem>>, vector<1x8x128xf32>,
    %576 = vector.shape_cast %495 : vector<8x1xi1> to vector<8x1xi1>
    %577 = vector.broadcast %576 : vector<8x1xi1> to vector<8x128xi1>
    %578 = arith.select %577, %534, %483 : vector<8x128xi1>, vector<8x128xf32>
    %579 = vector.shape_cast %495 : vector<8x1xi1> to vector<8x1xi1>
    %580 = vector.broadcast %579 : vector<8x1xi1> to vector<8x128xi1>
    %581 = arith.select %580, %532, %486 : vector<8x128xi1>, vector<8x128xf32>
    %582 = vector.shape_cast %497 : vector<8x1xi1> to vector<8x1xi1>
    %583 = vector.broadcast %582 : vector<8x1xi1> to vector<8x128xi1>
    %584 = arith.select %583, %559, %489 : vector<8x128xi1>, vector<8x128xf32>
    %585 = vector.shape_cast %497 : vector<8x1xi1> to vector<8x1xi1>
    %586 = vector.broadcast %585 : vector<8x1xi1> to vector<8x128xi1>
    %587 = arith.select %586, %557, %492 : vector<8x128xi1>, vector<8x128xf32>
    %c6_i32 = arith.constant 6 : i32
    %c7_i32_157 = arith.constant 7 : i32
    %588 = arith.subi %c7_i32_157, %c6_i32 : i32
    %589 = vector.broadcast %c6_i32 : i32 to vector<8x1xi32>
    %590 = arith.cmpi slt, %589, %16 : vector<8x1xi32>
    %591 = vector.broadcast %588 : i32 to vector<8x1xi32>
    %592 = arith.cmpi slt, %591, %16 : vector<8x1xi32>
    %593 = arith.index_cast %c6_i32 : i32 to index
    %c0_158 = arith.constant 0 : index
    %c0_159 = arith.constant 0 : index
    %594 = vector.load %arg13[%593, %c0_158, %c0_159] : memref<8x8x512xf32, #tpu.memory_space<vmem>>, vector<1x8x512xf32>
    %595 = vector.shape_cast %594 : vector<1x8x512xf32> to vector<8x512xf32>
    %c0_160 = arith.constant 0 : index
    %c0_161 = arith.constant 0 : index
    %596 = vector.load %arg7[%c0_160, %c0_161] : memref<128x512xf32, #tpu.memory_space<vmem>>, vector<128x512xf32>
    %cst_162 = arith.constant dense<0.000000e+00> : vector<8x512xf32>
    %597 = tpu.matmul %578, %596, %cst_162 {dimension_numbers = #tpu.dot_dimension_numbers<[1], [0], [0], [1], [0, 0, 1, 1], [], []>} : vector<8x128xf32>, vector<128x512xf32>, vector<8x512xf32> -> vector<8x512xf32>
    %598 = arith.addf %595, %597 : vector<8x512xf32>
    %599 = arith.index_cast %588 : i32 to index
    %c0_163 = arith.constant 0 : index
    %c0_164 = arith.constant 0 : index
    %600 = vector.load %arg14[%599, %c0_163, %c0_164] : memref<8x8x512xf32, #tpu.memory_space<vmem>>, vector<1x8x512xf32>
    %601 = vector.shape_cast %600 : vector<1x8x512xf32> to vector<8x512xf32>
    %c0_165 = arith.constant 0 : index
    %c0_166 = arith.constant 0 : index
    %602 = vector.load %arg8[%c0_165, %c0_166] : memref<128x512xf32, #tpu.memory_space<vmem>>, vector<128x512xf32>
    %cst_167 = arith.constant dense<0.000000e+00> : vector<8x512xf32>
    %603 = tpu.matmul %584, %602, %cst_167 {dimension_numbers = #tpu.dot_dimension_numbers<[1], [0], [0], [1], [0, 0, 1, 1], [], []>} : vector<8x128xf32>, vector<128x512xf32>, vector<8x512xf32> -> vector<8x512xf32>
    %604 = arith.addf %601, %603 : vector<8x512xf32>
    %605 = vector.extract_strided_slice %598 {offsets = [0, 0], sizes = [8, 128], strides = [1, 1]} : vector<8x512xf32> to vector<8x128xf32>
    %606 = arith.negf %605 : vector<8x128xf32>
    %607 = math.exp %606 : vector<8x128xf32>
    %cst_168 = arith.constant 1.000000e+00 : f32
    %608 = vector.broadcast %cst_168 : f32 to vector<8x128xf32>
    %609 = arith.addf %608, %607 : vector<8x128xf32>
    %610 = arith.divf %608, %609 : vector<8x128xf32>
    %611 = vector.extract_strided_slice %598 {offsets = [0, 128], sizes = [8, 128], strides = [1, 1]} : vector<8x512xf32> to vector<8x128xf32>
    %612 = arith.negf %611 : vector<8x128xf32>
    %613 = math.exp %612 : vector<8x128xf32>
    %cst_169 = arith.constant 1.000000e+00 : f32
    %614 = vector.broadcast %cst_169 : f32 to vector<8x128xf32>
    %615 = arith.addf %614, %613 : vector<8x128xf32>
    %616 = arith.divf %614, %615 : vector<8x128xf32>
    %617 = vector.extract_strided_slice %598 {offsets = [0, 256], sizes = [8, 128], strides = [1, 1]} : vector<8x512xf32> to vector<8x128xf32>
    %618 = math.tanh %617 : vector<8x128xf32>
    %619 = vector.extract_strided_slice %598 {offsets = [0, 384], sizes = [8, 128], strides = [1, 1]} : vector<8x512xf32> to vector<8x128xf32>
    %620 = arith.negf %619 : vector<8x128xf32>
    %621 = math.exp %620 : vector<8x128xf32>
    %cst_170 = arith.constant 1.000000e+00 : f32
    %622 = vector.broadcast %cst_170 : f32 to vector<8x128xf32>
    %623 = arith.addf %622, %621 : vector<8x128xf32>
    %624 = arith.divf %622, %623 : vector<8x128xf32>
    %625 = arith.mulf %616, %581 : vector<8x128xf32>
    %626 = arith.mulf %610, %618 : vector<8x128xf32>
    %627 = arith.addf %625, %626 : vector<8x128xf32>
    %628 = math.tanh %627 : vector<8x128xf32>
    %629 = arith.mulf %624, %628 : vector<8x128xf32>
    %630 = vector.extract_strided_slice %604 {offsets = [0, 0], sizes = [8, 128], strides = [1, 1]} : vector<8x512xf32> to vector<8x128xf32>
    %631 = arith.negf %630 : vector<8x128xf32>
    %632 = math.exp %631 : vector<8x128xf32>
    %cst_171 = arith.constant 1.000000e+00 : f32
    %633 = vector.broadcast %cst_171 : f32 to vector<8x128xf32>
    %634 = arith.addf %633, %632 : vector<8x128xf32>
    %635 = arith.divf %633, %634 : vector<8x128xf32>
    %636 = vector.extract_strided_slice %604 {offsets = [0, 128], sizes = [8, 128], strides = [1, 1]} : vector<8x512xf32> to vector<8x128xf32>
    %637 = arith.negf %636 : vector<8x128xf32>
    %638 = math.exp %637 : vector<8x128xf32>
    %cst_172 = arith.constant 1.000000e+00 : f32
    %639 = vector.broadcast %cst_172 : f32 to vector<8x128xf32>
    %640 = arith.addf %639, %638 : vector<8x128xf32>
    %641 = arith.divf %639, %640 : vector<8x128xf32>
    %642 = vector.extract_strided_slice %604 {offsets = [0, 256], sizes = [8, 128], strides = [1, 1]} : vector<8x512xf32> to vector<8x128xf32>
    %643 = math.tanh %642 : vector<8x128xf32>
    %644 = vector.extract_strided_slice %604 {offsets = [0, 384], sizes = [8, 128], strides = [1, 1]} : vector<8x512xf32> to vector<8x128xf32>
    %645 = arith.negf %644 : vector<8x128xf32>
    %646 = math.exp %645 : vector<8x128xf32>
    %cst_173 = arith.constant 1.000000e+00 : f32
    %647 = vector.broadcast %cst_173 : f32 to vector<8x128xf32>
    %648 = arith.addf %647, %646 : vector<8x128xf32>
    %649 = arith.divf %647, %648 : vector<8x128xf32>
    %650 = arith.mulf %641, %587 : vector<8x128xf32>
    %651 = arith.mulf %635, %643 : vector<8x128xf32>
    %652 = arith.addf %650, %651 : vector<8x128xf32>
    %653 = math.tanh %652 : vector<8x128xf32>
    %654 = arith.mulf %649, %653 : vector<8x128xf32>
    %cst_174 = arith.constant 0.000000e+00 : f32
    %655 = vector.shape_cast %590 : vector<8x1xi1> to vector<8x1xi1>
    %656 = vector.broadcast %655 : vector<8x1xi1> to vector<8x128xi1>
    %657 = vector.broadcast %cst_174 : f32 to vector<8x128xf32>
    %658 = arith.select %656, %629, %657 : vector<8x128xi1>, vector<8x128xf32>
    %659 = arith.index_cast %c6_i32 : i32 to index
    %c0_175 = arith.constant 0 : index
    %c0_176 = arith.constant 0 : index
    %660 = vector.load %arg15[%659, %c0_175, %c0_176] : memref<8x8x128xf32, #tpu.memory_space<vmem>>, vector<1x8x128xf32>
    %661 = vector.shape_cast %660 : vector<1x8x128xf32> to vector<8x128xf32>
    %662 = vector.shape_cast %658 : vector<8x128xf32> to vector<1x8x128xf32>
    tpu.vector_store %arg15[%659, %c0_175, %c0_176], %662 {strides = array<i32>} : memref<8x8x128xf32, #tpu.memory_space<vmem>>, vector<1x8x128xf32>,
    %cst_177 = arith.constant 0.000000e+00 : f32
    %663 = vector.shape_cast %592 : vector<8x1xi1> to vector<8x1xi1>
    %664 = vector.broadcast %663 : vector<8x1xi1> to vector<8x128xi1>
    %665 = vector.broadcast %cst_177 : f32 to vector<8x128xf32>
    %666 = arith.select %664, %654, %665 : vector<8x128xi1>, vector<8x128xf32>
    %667 = arith.index_cast %588 : i32 to index
    %c0_178 = arith.constant 0 : index
    %c0_179 = arith.constant 0 : index
    %668 = vector.load %arg16[%667, %c0_178, %c0_179] : memref<8x8x128xf32, #tpu.memory_space<vmem>>, vector<1x8x128xf32>
    %669 = vector.shape_cast %668 : vector<1x8x128xf32> to vector<8x128xf32>
    %670 = vector.shape_cast %666 : vector<8x128xf32> to vector<1x8x128xf32>
    tpu.vector_store %arg16[%667, %c0_178, %c0_179], %670 {strides = array<i32>} : memref<8x8x128xf32, #tpu.memory_space<vmem>>, vector<1x8x128xf32>,
    %671 = vector.shape_cast %590 : vector<8x1xi1> to vector<8x1xi1>
    %672 = vector.broadcast %671 : vector<8x1xi1> to vector<8x128xi1>
    %673 = arith.select %672, %629, %578 : vector<8x128xi1>, vector<8x128xf32>
    %674 = vector.shape_cast %590 : vector<8x1xi1> to vector<8x1xi1>
    %675 = vector.broadcast %674 : vector<8x1xi1> to vector<8x128xi1>
    %676 = arith.select %675, %627, %581 : vector<8x128xi1>, vector<8x128xf32>
    %677 = vector.shape_cast %592 : vector<8x1xi1> to vector<8x1xi1>
    %678 = vector.broadcast %677 : vector<8x1xi1> to vector<8x128xi1>
    %679 = arith.select %678, %654, %584 : vector<8x128xi1>, vector<8x128xf32>
    %680 = vector.shape_cast %592 : vector<8x1xi1> to vector<8x1xi1>
    %681 = vector.broadcast %680 : vector<8x1xi1> to vector<8x128xi1>
    %682 = arith.select %681, %652, %587 : vector<8x128xi1>, vector<8x128xf32>
    %c7_i32_180 = arith.constant 7 : i32
    %c7_i32_181 = arith.constant 7 : i32
    %683 = arith.subi %c7_i32_181, %c7_i32_180 : i32
    %684 = vector.broadcast %c7_i32_180 : i32 to vector<8x1xi32>
    %685 = arith.cmpi slt, %684, %16 : vector<8x1xi32>
    %686 = vector.broadcast %683 : i32 to vector<8x1xi32>
    %687 = arith.cmpi slt, %686, %16 : vector<8x1xi32>
    %688 = arith.index_cast %c7_i32_180 : i32 to index
    %c0_182 = arith.constant 0 : index
    %c0_183 = arith.constant 0 : index
    %689 = vector.load %arg13[%688, %c0_182, %c0_183] : memref<8x8x512xf32, #tpu.memory_space<vmem>>, vector<1x8x512xf32>
    %690 = vector.shape_cast %689 : vector<1x8x512xf32> to vector<8x512xf32>
    %c0_184 = arith.constant 0 : index
    %c0_185 = arith.constant 0 : index
    %691 = vector.load %arg7[%c0_184, %c0_185] : memref<128x512xf32, #tpu.memory_space<vmem>>, vector<128x512xf32>
    %cst_186 = arith.constant dense<0.000000e+00> : vector<8x512xf32>
    %692 = tpu.matmul %673, %691, %cst_186 {dimension_numbers = #tpu.dot_dimension_numbers<[1], [0], [0], [1], [0, 0, 1, 1], [], []>} : vector<8x128xf32>, vector<128x512xf32>, vector<8x512xf32> -> vector<8x512xf32>
    %693 = arith.addf %690, %692 : vector<8x512xf32>
    %694 = arith.index_cast %683 : i32 to index
    %c0_187 = arith.constant 0 : index
    %c0_188 = arith.constant 0 : index
    %695 = vector.load %arg14[%694, %c0_187, %c0_188] : memref<8x8x512xf32, #tpu.memory_space<vmem>>, vector<1x8x512xf32>
    %696 = vector.shape_cast %695 : vector<1x8x512xf32> to vector<8x512xf32>
    %c0_189 = arith.constant 0 : index
    %c0_190 = arith.constant 0 : index
    %697 = vector.load %arg8[%c0_189, %c0_190] : memref<128x512xf32, #tpu.memory_space<vmem>>, vector<128x512xf32>
    %cst_191 = arith.constant dense<0.000000e+00> : vector<8x512xf32>
    %698 = tpu.matmul %679, %697, %cst_191 {dimension_numbers = #tpu.dot_dimension_numbers<[1], [0], [0], [1], [0, 0, 1, 1], [], []>} : vector<8x128xf32>, vector<128x512xf32>, vector<8x512xf32> -> vector<8x512xf32>
    %699 = arith.addf %696, %698 : vector<8x512xf32>
    %700 = vector.extract_strided_slice %693 {offsets = [0, 0], sizes = [8, 128], strides = [1, 1]} : vector<8x512xf32> to vector<8x128xf32>
    %701 = arith.negf %700 : vector<8x128xf32>
    %702 = math.exp %701 : vector<8x128xf32>
    %cst_192 = arith.constant 1.000000e+00 : f32
    %703 = vector.broadcast %cst_192 : f32 to vector<8x128xf32>
    %704 = arith.addf %703, %702 : vector<8x128xf32>
    %705 = arith.divf %703, %704 : vector<8x128xf32>
    %706 = vector.extract_strided_slice %693 {offsets = [0, 128], sizes = [8, 128], strides = [1, 1]} : vector<8x512xf32> to vector<8x128xf32>
    %707 = arith.negf %706 : vector<8x128xf32>
    %708 = math.exp %707 : vector<8x128xf32>
    %cst_193 = arith.constant 1.000000e+00 : f32
    %709 = vector.broadcast %cst_193 : f32 to vector<8x128xf32>
    %710 = arith.addf %709, %708 : vector<8x128xf32>
    %711 = arith.divf %709, %710 : vector<8x128xf32>
    %712 = vector.extract_strided_slice %693 {offsets = [0, 256], sizes = [8, 128], strides = [1, 1]} : vector<8x512xf32> to vector<8x128xf32>
    %713 = math.tanh %712 : vector<8x128xf32>
    %714 = vector.extract_strided_slice %693 {offsets = [0, 384], sizes = [8, 128], strides = [1, 1]} : vector<8x512xf32> to vector<8x128xf32>
    %715 = arith.negf %714 : vector<8x128xf32>
    %716 = math.exp %715 : vector<8x128xf32>
    %cst_194 = arith.constant 1.000000e+00 : f32
    %717 = vector.broadcast %cst_194 : f32 to vector<8x128xf32>
    %718 = arith.addf %717, %716 : vector<8x128xf32>
    %719 = arith.divf %717, %718 : vector<8x128xf32>
    %720 = arith.mulf %711, %676 : vector<8x128xf32>
    %721 = arith.mulf %705, %713 : vector<8x128xf32>
    %722 = arith.addf %720, %721 : vector<8x128xf32>
    %723 = math.tanh %722 : vector<8x128xf32>
    %724 = arith.mulf %719, %723 : vector<8x128xf32>
    %725 = vector.extract_strided_slice %699 {offsets = [0, 0], sizes = [8, 128], strides = [1, 1]} : vector<8x512xf32> to vector<8x128xf32>
    %726 = arith.negf %725 : vector<8x128xf32>
    %727 = math.exp %726 : vector<8x128xf32>
    %cst_195 = arith.constant 1.000000e+00 : f32
    %728 = vector.broadcast %cst_195 : f32 to vector<8x128xf32>
    %729 = arith.addf %728, %727 : vector<8x128xf32>
    %730 = arith.divf %728, %729 : vector<8x128xf32>
    %731 = vector.extract_strided_slice %699 {offsets = [0, 128], sizes = [8, 128], strides = [1, 1]} : vector<8x512xf32> to vector<8x128xf32>
    %732 = arith.negf %731 : vector<8x128xf32>
    %733 = math.exp %732 : vector<8x128xf32>
    %cst_196 = arith.constant 1.000000e+00 : f32
    %734 = vector.broadcast %cst_196 : f32 to vector<8x128xf32>
    %735 = arith.addf %734, %733 : vector<8x128xf32>
    %736 = arith.divf %734, %735 : vector<8x128xf32>
    %737 = vector.extract_strided_slice %699 {offsets = [0, 256], sizes = [8, 128], strides = [1, 1]} : vector<8x512xf32> to vector<8x128xf32>
    %738 = math.tanh %737 : vector<8x128xf32>
    %739 = vector.extract_strided_slice %699 {offsets = [0, 384], sizes = [8, 128], strides = [1, 1]} : vector<8x512xf32> to vector<8x128xf32>
    %740 = arith.negf %739 : vector<8x128xf32>
    %741 = math.exp %740 : vector<8x128xf32>
    %cst_197 = arith.constant 1.000000e+00 : f32
    %742 = vector.broadcast %cst_197 : f32 to vector<8x128xf32>
    %743 = arith.addf %742, %741 : vector<8x128xf32>
    %744 = arith.divf %742, %743 : vector<8x128xf32>
    %745 = arith.mulf %736, %682 : vector<8x128xf32>
    %746 = arith.mulf %730, %738 : vector<8x128xf32>
    %747 = arith.addf %745, %746 : vector<8x128xf32>
    %748 = math.tanh %747 : vector<8x128xf32>
    %749 = arith.mulf %744, %748 : vector<8x128xf32>
    %cst_198 = arith.constant 0.000000e+00 : f32
    %750 = vector.shape_cast %685 : vector<8x1xi1> to vector<8x1xi1>
    %751 = vector.broadcast %750 : vector<8x1xi1> to vector<8x128xi1>
    %752 = vector.broadcast %cst_198 : f32 to vector<8x128xf32>
    %753 = arith.select %751, %724, %752 : vector<8x128xi1>, vector<8x128xf32>
    %754 = arith.index_cast %c7_i32_180 : i32 to index
    %c0_199 = arith.constant 0 : index
    %c0_200 = arith.constant 0 : index
    %755 = vector.load %arg15[%754, %c0_199, %c0_200] : memref<8x8x128xf32, #tpu.memory_space<vmem>>, vector<1x8x128xf32>
    %756 = vector.shape_cast %755 : vector<1x8x128xf32> to vector<8x128xf32>
    %757 = vector.shape_cast %753 : vector<8x128xf32> to vector<1x8x128xf32>
    tpu.vector_store %arg15[%754, %c0_199, %c0_200], %757 {strides = array<i32>} : memref<8x8x128xf32, #tpu.memory_space<vmem>>, vector<1x8x128xf32>,
    %cst_201 = arith.constant 0.000000e+00 : f32
    %758 = vector.shape_cast %687 : vector<8x1xi1> to vector<8x1xi1>
    %759 = vector.broadcast %758 : vector<8x1xi1> to vector<8x128xi1>
    %760 = vector.broadcast %cst_201 : f32 to vector<8x128xf32>
    %761 = arith.select %759, %749, %760 : vector<8x128xi1>, vector<8x128xf32>
    %762 = arith.index_cast %683 : i32 to index
    %c0_202 = arith.constant 0 : index
    %c0_203 = arith.constant 0 : index
    %763 = vector.load %arg16[%762, %c0_202, %c0_203] : memref<8x8x128xf32, #tpu.memory_space<vmem>>, vector<1x8x128xf32>
    %764 = vector.shape_cast %763 : vector<1x8x128xf32> to vector<8x128xf32>
    %765 = vector.shape_cast %761 : vector<8x128xf32> to vector<1x8x128xf32>
    tpu.vector_store %arg16[%762, %c0_202, %c0_203], %765 {strides = array<i32>} : memref<8x8x128xf32, #tpu.memory_space<vmem>>, vector<1x8x128xf32>,
    %766 = vector.shape_cast %685 : vector<8x1xi1> to vector<8x1xi1>
    %767 = vector.broadcast %766 : vector<8x1xi1> to vector<8x128xi1>
    %768 = arith.select %767, %724, %673 : vector<8x128xi1>, vector<8x128xf32>
    %769 = vector.shape_cast %685 : vector<8x1xi1> to vector<8x1xi1>
    %770 = vector.broadcast %769 : vector<8x1xi1> to vector<8x128xi1>
    %771 = arith.select %770, %722, %676 : vector<8x128xi1>, vector<8x128xf32>
    %772 = vector.shape_cast %687 : vector<8x1xi1> to vector<8x1xi1>
    %773 = vector.broadcast %772 : vector<8x1xi1> to vector<8x128xi1>
    %774 = arith.select %773, %749, %679 : vector<8x128xi1>, vector<8x128xf32>
    %775 = vector.shape_cast %687 : vector<8x1xi1> to vector<8x1xi1>
    %776 = vector.broadcast %775 : vector<8x1xi1> to vector<8x128xi1>
    %777 = arith.select %776, %747, %682 : vector<8x128xi1>, vector<8x128xf32>
    %c8_i32 = arith.constant 8 : i32
    %c0_204 = arith.constant 0 : index
    %c0_205 = arith.constant 0 : index
    %c0_206 = arith.constant 0 : index
    %778 = vector.load %arg15[%c0_204, %c0_205, %c0_206] : memref<8x8x128xf32, #tpu.memory_space<vmem>>, vector<8x8x128xf32>
    %779 = vector.shape_cast %778 : vector<8x8x128xf32> to vector<64x128xf32>
    %c0_207 = arith.constant 0 : index
    %c0_208 = arith.constant 0 : index
    %c0_209 = arith.constant 0 : index
    %780 = vector.load %arg16[%c0_207, %c0_208, %c0_209] : memref<8x8x128xf32, #tpu.memory_space<vmem>>, vector<8x8x128xf32>
    %781 = vector.shape_cast %780 : vector<8x8x128xf32> to vector<64x128xf32>
    %c0_210 = arith.constant 0 : index
    %c0_211 = arith.constant 0 : index
    %782 = vector.load %arg9[%c0_210, %c0_211] : memref<128x128xf32, #tpu.memory_space<vmem>>, vector<128x128xf32>
    %cst_212 = arith.constant dense<0.000000e+00> : vector<64x128xf32>
    %783 = tpu.matmul %779, %782, %cst_212 {dimension_numbers = #tpu.dot_dimension_numbers<[1], [0], [0], [1], [0, 0, 1, 1], [], []>} : vector<64x128xf32>, vector<128x128xf32>, vector<64x128xf32> -> vector<64x128xf32>
    %c0_213 = arith.constant 0 : index
    %c0_214 = arith.constant 0 : index
    %784 = vector.load %arg10[%c0_213, %c0_214] : memref<128x128xf32, #tpu.memory_space<vmem>>, vector<128x128xf32>
    %cst_215 = arith.constant dense<0.000000e+00> : vector<64x128xf32>
    %785 = tpu.matmul %781, %784, %cst_215 {dimension_numbers = #tpu.dot_dimension_numbers<[1], [0], [0], [1], [0, 0, 1, 1], [], []>} : vector<64x128xf32>, vector<128x128xf32>, vector<64x128xf32> -> vector<64x128xf32>
    %786 = arith.addf %783, %785 : vector<64x128xf32>
    %c0_216 = arith.constant 0 : index
    %c0_217 = arith.constant 0 : index
    %787 = vector.load %arg11[%c0_216, %c0_217] : memref<1x128xf32, #tpu.memory_space<vmem>>, vector<1x128xf32>
    %788 = vector.broadcast %787 : vector<1x128xf32> to vector<64x128xf32>
    %789 = arith.addf %786, %788 : vector<64x128xf32>
    %790 = vector.extract_strided_slice %789 {offsets = [0, 0], sizes = [64, 8], strides = [1, 1]} : vector<64x128xf32> to vector<64x8xf32>
    %791 = vector.shape_cast %790 : vector<64x8xf32> to vector<8x8x8xf32>
    %c0_218 = arith.constant 0 : index
    %c0_219 = arith.constant 0 : index
    %c0_220 = arith.constant 0 : index
    %792 = vector.load %arg12[%c0_218, %c0_219, %c0_220] : memref<8x8x8xf32, #tpu.memory_space<vmem>>, vector<8x8x8xf32>
    tpu.vector_store %arg12[%c0_218, %c0_219, %c0_220], %791 {strides = array<i32>} : memref<8x8x8xf32, #tpu.memory_space<vmem>>, vector<8x8x8xf32>,
    return
  }
  func.func @transform_0(%arg0: i32) -> (i32, i32) {
    %c0_i32 = arith.constant 0 : i32
    %c0_i32_0 = arith.constant 0 : i32
    return %arg0, %c0_i32 : i32, i32
  }
  func.func @transform_1(%arg0: i32) -> (i32, i32, i32) {
    %c0_i32 = arith.constant 0 : i32
    %c0_i32_0 = arith.constant 0 : i32
    %c0_i32_1 = arith.constant 0 : i32
    return %c0_i32, %arg0, %c0_i32_0 : i32, i32, i32
  }
  func.func @transform_2(%arg0: i32) -> (i32, i32) {
    %c0_i32 = arith.constant 0 : i32
    %c0_i32_0 = arith.constant 0 : i32
    %c0_i32_1 = arith.constant 0 : i32
    return %c0_i32, %c0_i32_0 : i32, i32
  }
  func.func @transform_3(%arg0: i32) -> (i32, i32) {
    %c0_i32 = arith.constant 0 : i32
    %c0_i32_0 = arith.constant 0 : i32
    %c0_i32_1 = arith.constant 0 : i32
    return %c0_i32, %c0_i32_0 : i32, i32
  }
  func.func @transform_4(%arg0: i32) -> (i32, i32) {
    %c0_i32 = arith.constant 0 : i32
    %c0_i32_0 = arith.constant 0 : i32
    %c0_i32_1 = arith.constant 0 : i32
    return %c0_i32, %c0_i32_0 : i32, i32
  }
  func.func @transform_5(%arg0: i32) -> (i32, i32) {
    %c0_i32 = arith.constant 0 : i32
    %c0_i32_0 = arith.constant 0 : i32
    %c0_i32_1 = arith.constant 0 : i32
    return %c0_i32, %c0_i32_0 : i32, i32
  }
  func.func @transform_6(%arg0: i32) -> (i32, i32) {
    %c0_i32 = arith.constant 0 : i32
    %c0_i32_0 = arith.constant 0 : i32
    %c0_i32_1 = arith.constant 0 : i32
    return %c0_i32, %c0_i32_0 : i32, i32
  }
  func.func @transform_7(%arg0: i32) -> (i32, i32) {
    %c0_i32 = arith.constant 0 : i32
    %c0_i32_0 = arith.constant 0 : i32
    %c0_i32_1 = arith.constant 0 : i32
    return %c0_i32, %c0_i32_0 : i32, i32
  }
  func.func @transform_8(%arg0: i32) -> (i32, i32) {
    %c0_i32 = arith.constant 0 : i32
    %c0_i32_0 = arith.constant 0 : i32
    %c0_i32_1 = arith.constant 0 : i32
    return %c0_i32, %c0_i32_0 : i32, i32
  }
  func.func @transform_9(%arg0: i32) -> (i32, i32) {
    %c0_i32 = arith.constant 0 : i32
    %c0_i32_0 = arith.constant 0 : i32
    %c0_i32_1 = arith.constant 0 : i32
    return %c0_i32, %c0_i32_0 : i32, i32
  }
  func.func @transform_10(%arg0: i32) -> (i32, i32) {
    %c0_i32 = arith.constant 0 : i32
    %c0_i32_0 = arith.constant 0 : i32
    %c0_i32_1 = arith.constant 0 : i32
    return %c0_i32, %c0_i32_0 : i32, i32
  }
  func.func @transform_11(%arg0: i32) -> (i32, i32, i32) {
    %c0_i32 = arith.constant 0 : i32
    %c0_i32_0 = arith.constant 0 : i32
    %c0_i32_1 = arith.constant 0 : i32
    return %c0_i32, %arg0, %c0_i32_0 : i32, i32, i32
  }
}

</mosaic_0001>

<llo_original>
// kernel: tpu_custom_call.1
$region0: #{tpu_custom_call.1}
  #allocation0 [shape = 'u32[]', space=smem, size = 0x4, offset = 0x4, fixed_abs, tag = 'smem constant byte address 0x4 - core index']
  #allocation1 [shape = 'u32[144,128]{1,0:T(1,128)}', space=vmem, size = 0x12000, scoped, tag = 'internal scratch']
  #allocation2 [shape = 'f32[8,8,512]{2,1,0:T(8,128)}', space=vmem, size = 0x20000, scoped, tag = 'scratch operand']
  #allocation3 [shape = 'f32[8,8,512]{2,1,0:T(8,128)}', space=vmem, size = 0x20000, scoped, tag = 'scratch operand']
  #allocation4 [shape = 'f32[8,8,128]{2,1,0:T(8,128)}', space=vmem, size = 0x8000, scoped, tag = 'scratch operand']
  #allocation5 [shape = 'f32[8,8,128]{2,1,0:T(8,128)}', space=vmem, size = 0x8000, scoped, tag = 'scratch operand']
  %s0 = inlined_call_operand.vmem [shape: s32[8,1], index: 0, kind: input, shape index: {}]
  %s1 = inlined_call_operand.hbm [shape: f32[8,8,32], index: 1, kind: input, shape index: {}]
  %s2 = inlined_call_operand.hbm [shape: f32[32,512], index: 2, kind: input, shape index: {}]
  %s3 = inlined_call_operand.hbm [shape: f32[32,512], index: 3, kind: input, shape index: {}]
  %s4 = inlined_call_operand.vmem [shape: f32[1,512], index: 4, kind: input, shape index: {}]
  %s5 = inlined_call_operand.vmem [shape: f32[1,512], index: 5, kind: input, shape index: {}]
  %s6 = inlined_call_operand.hbm [shape: f32[128,512], index: 6, kind: input, shape index: {}]
  %s7 = inlined_call_operand.hbm [shape: f32[128,512], index: 7, kind: input, shape index: {}]
  %s8 = inlined_call_operand.hbm [shape: f32[128,128], index: 8, kind: input, shape index: {}]
  %s9 = inlined_call_operand.hbm [shape: f32[128,128], index: 9, kind: input, shape index: {}]
  %s10 = inlined_call_operand.vmem [shape: f32[1,128], index: 10, kind: input, shape index: {}]
  %s11 = inlined_call_operand.hbm [shape: f32[8,8,8], index: 11, kind: output, shape index: {}]
  %s12 = sld [smem:[#allocation0]]
  $region82: #{tpu_custom_call.1} parent=0
    _
  %s14 = ssub.s32 1, %s12
  %s15 = scalar_select 0, %s14, %s12
  $region1: #{tpu_custom_call.1} parent=0
    #allocation6 [shape = 'u8[32768]{0}', space=vmem, size = 0x8000, scoped, tag = 'input window, operand 1, single buffered']
    #allocation7 [shape = 's32[1]{0}', space=sflag, size = 0x4, scoped, tag = 'scoped memory for tpu_custom_call.1']
    #allocation8 [shape = 's32[1]{0}', space=sflag, size = 0x4, scoped, tag = 'scoped memory for tpu_custom_call.1']
    #allocation9 [shape = 'u8[65536]{0}', space=vmem, size = 0x10000, scoped, tag = 'input window, operand 2, single buffered']
    #allocation10 [shape = 's32[1]{0}', space=sflag, size = 0x4, scoped, tag = 'scoped memory for tpu_custom_call.1']
    #allocation11 [shape = 'u8[65536]{0}', space=vmem, size = 0x10000, scoped, tag = 'input window, operand 3, single buffered']
    #allocation12 [shape = 'u8[262144]{0}', space=vmem, size = 0x40000, scoped, tag = 'input window, operand 6, single buffered']
    #allocation13 [shape = 's32[1]{0}', space=sflag, size = 0x4, scoped, tag = 'scoped memory for tpu_custom_call.1']
    #allocation14 [shape = 'u8[262144]{0}', space=vmem, size = 0x40000, scoped, tag = 'input window, operand 7, single buffered']
    #allocation15 [shape = 'u8[65536]{0}', space=vmem, size = 0x10000, scoped, tag = 'input window, operand 8, single buffered']
    #allocation16 [shape = 's32[1]{0}', space=sflag, size = 0x4, scoped, tag = 'scoped memory for tpu_custom_call.1']
    #allocation17 [shape = 'u8[65536]{0}', space=vmem, size = 0x10000, scoped, tag = 'input window, operand 9, single buffered']
    #allocation18 [shape = 'u8[32768]{0}', space=vmem, size = 0x8000, scoped, tag = 'output window, operand 0, single buffered']
    %16 = vsyncpa [#allocation7], 0
    %17 = vsyncpa [#allocation10], 0
    %18 = vsyncpa [#allocation13], 0
    %19 = vsyncpa [#allocation16], 0
    %20 = vsyncpa [#allocation8], 0
    // Predicated region
    $region2: #{tpu_custom_call.1} parent=1 // pred_check
      _
    $region3: #{tpu_custom_call.1} parent=1 // pred_check_branch
      %22 = sbr.rel (0) target = $region5
    $region4: #{tpu_custom_call.1} parent=1 // pred_region
      _
    $region5: #{tpu_custom_call.1} parent=1 // pred_fallthru
      _
    // Predicated region
    $region6: #{tpu_custom_call.1} parent=1 // pred_check
      _
    $region7: #{tpu_custom_call.1} parent=1 // pred_check_branch
      %24 = sbr.rel (0) target = $region9
    $region8: #{tpu_custom_call.1} parent=1 // pred_region
      %s26 = ssub.s32 1024, 1024
      %27 = vsyncadd [#allocation7], %s26
      %s28 = sshll.u32 [#allocation6], 4
      %s29 = int_to_ptr.vmem [resolvable:$true] %s28
      %34 = dma.hbm_to_vmem [thread:$0]  %s1, 1024, %s29, [#allocation7], 128, 128, 8
    $region9: #{tpu_custom_call.1} parent=1 // pred_fallthru
      _
    // Predicated region
    $region10: #{tpu_custom_call.1} parent=1 // pred_check
      _
    $region11: #{tpu_custom_call.1} parent=1 // pred_check_branch
      %36 = sbr.rel (0) target = $region13
    $region12: #{tpu_custom_call.1} parent=1 // pred_region
      %s38 = ssub.s32 2048, 2048
      %39 = vsyncadd [#allocation10], %s38
      %s40 = sshll.u32 [#allocation9], 4
      %s41 = int_to_ptr.vmem [resolvable:$true] %s40
      %46 = dma.hbm_to_vmem [thread:$0]  %s2, 2048, %s41, [#allocation10], 512, 512, 32
    $region13: #{tpu_custom_call.1} parent=1 // pred_fallthru
      _
    // Predicated region
    $region14: #{tpu_custom_call.1} parent=1 // pred_check
      _
    $region15: #{tpu_custom_call.1} parent=1 // pred_check_branch
      %48 = sbr.rel (0) target = $region17
    $region16: #{tpu_custom_call.1} parent=1 // pred_region
      %s50 = ssub.s32 2048, 2048
      %51 = vsyncadd [#allocation10], %s50
      %s52 = sshll.u32 [#allocation11], 4
      %s53 = int_to_ptr.vmem [resolvable:$true] %s52
      %58 = dma.hbm_to_vmem [thread:$0]  %s3, 2048, %s53, [#allocation10], 512, 512, 32
    $region17: #{tpu_custom_call.1} parent=1 // pred_fallthru
      _
    // Predicated region
    $region18: #{tpu_custom_call.1} parent=1 // pred_check
      _
    $region19: #{tpu_custom_call.1} parent=1 // pred_check_branch
      %60 = sbr.rel (0) target = $region21
    $region20: #{tpu_custom_call.1} parent=1 // pred_region
      _
    $region21: #{tpu_custom_call.1} parent=1 // pred_fallthru
      _
    // Predicated region
    $region22: #{tpu_custom_call.1} parent=1 // pred_check
      _
    $region23: #{tpu_custom_call.1} parent=1 // pred_check_branch
      %62 = sbr.rel (0) target = $region25
    $region24: #{tpu_custom_call.1} parent=1 // pred_region
      _
    $region25: #{tpu_custom_call.1} parent=1 // pred_fallthru
      _
    // Predicated region
    $region26: #{tpu_custom_call.1} parent=1 // pred_check
      _
    $region27: #{tpu_custom_call.1} parent=1 // pred_check_branch
      %64 = sbr.rel (0) target = $region29
    $region28: #{tpu_custom_call.1} parent=1 // pred_region
      %s66 = ssub.s32 8192, 8192
      %67 = vsyncadd [#allocation13], %s66
      %s68 = sshll.u32 [#allocation12], 4
      %s69 = int_to_ptr.vmem [resolvable:$true] %s68
      %74 = dma.hbm_to_vmem [thread:$0]  %s6, 8192, %s69, [#allocation13], 512, 512, 32
    $region29: #{tpu_custom_call.1} parent=1 // pred_fallthru
      _
    // Predicated region
    $region30: #{tpu_custom_call.1} parent=1 // pred_check
      _
    $region31: #{tpu_custom_call.1} parent=1 // pred_check_branch
      %76 = sbr.rel (0) target = $region33
    $region32: #{tpu_custom_call.1} parent=1 // pred_region
      %s78 = ssub.s32 8192, 8192
      %79 = vsyncadd [#allocation13], %s78
      %s80 = sshll.u32 [#allocation14], 4
      %s81 = int_to_ptr.vmem [resolvable:$true] %s80
      %86 = dma.hbm_to_vmem [thread:$0]  %s7, 8192, %s81, [#allocation13], 512, 512, 32
    $region33: #{tpu_custom_call.1} parent=1 // pred_fallthru
      _
    // Predicated region
    $region34: #{tpu_custom_call.1} parent=1 // pred_check
      _
    $region35: #{tpu_custom_call.1} parent=1 // pred_check_branch
      %88 = sbr.rel (0) target = $region37
    $region36: #{tpu_custom_call.1} parent=1 // pred_region
      %s90 = ssub.s32 2048, 2048
      %91 = vsyncadd [#allocation16], %s90
      %s92 = sshll.u32 [#allocation15], 4
      %s93 = int_to_ptr.vmem [resolvable:$true] %s92
      %98 = dma.hbm_to_vmem [thread:$0]  %s8, 2048, %s93, [#allocation16], 128, 128, 8
    $region37: #{tpu_custom_call.1} parent=1 // pred_fallthru
      _
    // Predicated region
    $region38: #{tpu_custom_call.1} parent=1 // pred_check
      _
    $region39: #{tpu_custom_call.1} parent=1 // pred_check_branch
      %100 = sbr.rel (0) target = $region41
    $region40: #{tpu_custom_call.1} parent=1 // pred_region
      %s102 = ssub.s32 2048, 2048
      %103 = vsyncadd [#allocation16], %s102
      %s104 = sshll.u32 [#allocation17], 4
      %s105 = int_to_ptr.vmem [resolvable:$true] %s104
      %110 = dma.hbm_to_vmem [thread:$0]  %s9, 2048, %s105, [#allocation16], 128, 128, 8
    $region41: #{tpu_custom_call.1} parent=1 // pred_fallthru
      _
    // Predicated region
    $region42: #{tpu_custom_call.1} parent=1 // pred_check
      _
    $region43: #{tpu_custom_call.1} parent=1 // pred_check_branch
      %112 = sbr.rel (0) target = $region45
    $region44: #{tpu_custom_call.1} parent=1 // pred_region
      _
    $region45: #{tpu_custom_call.1} parent=1 // pred_fallthru
      _
    // Predicated region
    $region46: #{tpu_custom_call.1} parent=1 // pred_check
      _
    $region47: #{tpu_custom_call.1} parent=1 // pred_check_branch
      %114 = sbr.rel (0) target = $region49
    $region48: #{tpu_custom_call.1} parent=1 // pred_region
      %115 = dma.done [#allocation7], 1024
    $region49: #{tpu_custom_call.1} parent=1 // pred_fallthru
      _
    // Predicated region
    $region50: #{tpu_custom_call.1} parent=1 // pred_check
      _
    $region51: #{tpu_custom_call.1} parent=1 // pred_check_branch
      %117 = sbr.rel (0) target = $region53
    $region52: #{tpu_custom_call.1} parent=1 // pred_region
      %118 = dma.done [#allocation10], 2048
    $region53: #{tpu_custom_call.1} parent=1 // pred_fallthru
      _
    // Predicated region
    $region54: #{tpu_custom_call.1} parent=1 // pred_check
      _
    $region55: #{tpu_custom_call.1} parent=1 // pred_check_branch
      %120 = sbr.rel (0) target = $region57
    $region56: #{tpu_custom_call.1} parent=1 // pred_region
      %121 = dma.done [#allocation10], 2048
    $region57: #{tpu_custom_call.1} parent=1 // pred_fallthru
      _
    // Predicated region
    $region58: #{tpu_custom_call.1} parent=1 // pred_check
      _
    $region59: #{tpu_custom_call.1} parent=1 // pred_check_branch
      %123 = sbr.rel (0) target = $region61
    $region60: #{tpu_custom_call.1} parent=1 // pred_region
      %124 = dma.done [#allocation13], 8192
    $region61: #{tpu_custom_call.1} parent=1 // pred_fallthru
      _
    // Predicated region
    $region62: #{tpu_custom_call.1} parent=1 // pred_check
      _
    $region63: #{tpu_custom_call.1} parent=1 // pred_check_branch
      %126 = sbr.rel (0) target = $region65
    $region64: #{tpu_custom_call.1} parent=1 // pred_region
      %127 = dma.done [#allocation13], 8192
    $region65: #{tpu_custom_call.1} parent=1 // pred_fallthru
      _
    // Predicated region
    $region66: #{tpu_custom_call.1} parent=1 // pred_check
      _
    $region67: #{tpu_custom_call.1} parent=1 // pred_check_branch
      %129 = sbr.rel (0) target = $region69
    $region68: #{tpu_custom_call.1} parent=1 // pred_region
      %130 = dma.done [#allocation16], 2048
    $region69: #{tpu_custom_call.1} parent=1 // pred_fallthru
      _
    // Predicated region
    $region70: #{tpu_custom_call.1} parent=1 // pred_check
      _
    $region71: #{tpu_custom_call.1} parent=1 // pred_check_branch
      %132 = sbr.rel (0) target = $region73
    $region72: #{tpu_custom_call.1} parent=1 // pred_region
      %133 = dma.done [#allocation16], 2048
    $region73: #{tpu_custom_call.1} parent=1 // pred_fallthru
      _
    %v134 = vld [vmem:[#allocation6] sm:$0xff]
    %v135 = vld [vmem:[#allocation6 + $0x8] sm:$0xff]
    %v136 = vld [vmem:[#allocation6 + $0x10] sm:$0xff]
    %v137 = vld [vmem:[#allocation6 + $0x18] sm:$0xff]
    %v138 = vld [vmem:[#allocation6 + $0x20] sm:$0xff]
    %v139 = vld [vmem:[#allocation6 + $0x28] sm:$0xff]
    %v140 = vld [vmem:[#allocation6 + $0x30] sm:$0xff]
    %v141 = vld [vmem:[#allocation6 + $0x38] sm:$0xff]
    %v142 = vld [vmem:[#allocation9] sm:$0xff]
    %v143 = vld [vmem:[#allocation9 + $0x8] sm:$0xff]
    %v144 = vld [vmem:[#allocation9 + $0x10] sm:$0xff]
    %v145 = vld [vmem:[#allocation9 + $0x18] sm:$0xff]
    %v146 = vld [vmem:[#allocation9 + $0x20] sm:$0xff]
    %v147 = vld [vmem:[#allocation9 + $0x28] sm:$0xff]
    %v148 = vld [vmem:[#allocation9 + $0x30] sm:$0xff]
    %v149 = vld [vmem:[#allocation9 + $0x38] sm:$0xff]
    %v150 = vld [vmem:[#allocation9 + $0x40] sm:$0xff]
    %v151 = vld [vmem:[#allocation9 + $0x48] sm:$0xff]
    %v152 = vld [vmem:[#allocation9 + $0x50] sm:$0xff]
    %v153 = vld [vmem:[#allocation9 + $0x58] sm:$0xff]
    %v154 = vld [vmem:[#allocation9 + $0x60] sm:$0xff]
    %v155 = vld [vmem:[#allocation9 + $0x68] sm:$0xff]
    %v156 = vld [vmem:[#allocation9 + $0x70] sm:$0xff]
    %v157 = vld [vmem:[#allocation9 + $0x78] sm:$0xff]
    %v158 = vld [vmem:[%s4] sm:$0xf]
    %v160 = vlaneseq
    %v161 = vshrl.u32 %v160, 7
    %v162 = vsub.s32 0, %v161
    %v163 = vrot.slane %v158, %v162
    %v164 = vlaneseq
    %v165 = vshrl.u32 %v164, 7
    %v166 = vsub.s32 1, %v165
    %v167 = vrot.slane %v158, %v166
    %v168 = vlaneseq
    %v169 = vshrl.u32 %v168, 7
    %v170 = vsub.s32 2, %v169
    %v171 = vrot.slane %v158, %v170
    %v172 = vlaneseq
    %v173 = vshrl.u32 %v172, 7
    %v174 = vsub.s32 3, %v173
    %v175 = vrot.slane %v158, %v174
    %vm180 = vcmask 261120
    %v182 = vsel %vm180, %v134, 0
    %v185 = vsel %vm180, %v135, 0
    %v188 = vsel %vm180, %v136, 0
    %v191 = vsel %vm180, %v137, 0
    %v194 = vsel %vm180, %v138, 0
    %v197 = vsel %vm180, %v139, 0
    %v200 = vsel %vm180, %v140, 0
    %v203 = vsel %vm180, %v141, 0
    %205 = vmatprep.subr.mxu0 %v143
    %206 = vmatpush1.msra.mxu0 %v142
    %207 = vmatprep.subr.mxu0 %v147
    %208 = vmatpush1.msra.mxu0 %v146
    %209 = vmatprep.subr.mxu0 %v151
    %210 = vmatpush1.msra.mxu0 %v150
    %211 = vmatprep.subr.mxu0 %v155
    %212 = vmatpush1.msra.mxu0 %v154
    %213 = vmatprep.subr.mxu0 0.0
    %214 = vmatpush1.msra.mxu0 0.0
    %215 = vmatprep.subr.mxu0 0.0
    %216 = vmatpush1.msra.mxu0 0.0
    %217 = vmatprep.subr.mxu0 0.0
    %218 = vmatpush1.msra.mxu0 0.0
    %219 = vmatprep.subr.mxu0 0.0
    %220 = vmatpush1.msra.mxu0 0.0
    %221 = vmatprep.subr.mxu0 0.0
    %222 = vmatpush1.msra.mxu0 0.0
    %223 = vmatprep.subr.mxu0 0.0
    %224 = vmatpush1.msra.mxu0 0.0
    %225 = vmatprep.subr.mxu0 0.0
    %226 = vmatpush1.msra.mxu0 0.0
    %227 = vmatprep.subr.mxu0 0.0
    %228 = vmatpush1.msra.mxu0 0.0
    %229 = vmatprep.subr.mxu0 0.0
    %230 = vmatpush1.msra.mxu0 0.0
    %231 = vmatprep.subr.mxu0 0.0
    %232 = vmatpush1.msra.mxu0 0.0
    %233 = vmatprep.subr.mxu0 0.0
    %234 = vmatpush1.msra.mxu0 0.0
    %235 = vmatprep.subr.mxu0 0.0
    %236 = vmatpush1.msra.mxu0 0.0
    %237 = vmatprep.subr.mxu0 0.0
    %238 = vmatpush1.msra.mxu0 0.0
    %239 = vmatprep.subr.mxu0 0.0
    %240 = vmatpush1.msra.mxu0 0.0
    %241 = vmatprep.subr.mxu0 0.0
    %242 = vmatpush1.msra.mxu0 0.0
    %243 = vmatprep.subr.mxu0 0.0
    %244 = vmatpush1.msra.mxu0 0.0
    %245 = vmatprep.subr.mxu0 0.0
    %246 = vmatpush1.msra.mxu0 0.0
    %247 = vmatprep.subr.mxu0 0.0
    %248 = vmatpush1.msra.mxu0 0.0
    %249 = vmatprep.subr.mxu0 0.0
    %250 = vmatpush1.msra.mxu0 0.0
    %251 = vmatprep.subr.mxu0 0.0
    %252 = vmatpush1.msra.mxu0 0.0
    %253 = vmatprep.subr.mxu0 0.0
    %254 = vmatpush1.msra.mxu0 0.0
    %255 = vmatprep.subr.mxu0 0.0
    %256 = vmatpush1.msra.mxu0 0.0
    %257 = vmatprep.subr.mxu0 0.0
    %258 = vmatpush1.msra.mxu0 0.0
    %259 = vmatprep.subr.mxu0 0.0
    %260 = vmatpush1.msra.mxu0 0.0
    %261 = vmatprep.subr.mxu0 0.0
    %262 = vmatpush1.msra.mxu0 0.0
    %263 = vmatprep.subr.mxu0 0.0
    %264 = vmatpush1.msra.mxu0 0.0
    %265 = vmatprep.subr.mxu0 0.0
    %266 = vmatpush1.msra.mxu0 0.0
    %267 = vmatprep.subr.mxu0 0.0
    %268 = vmatpush1.msra.mxu0 0.0
    %269 = vmatprep.mubr.f32.mxu0 0.0
    %270 = vmatmul.mubr.f32.gmra.mrb[0].mxu0 %v182
    %v271 = vpop.f32.mrb[0].mxu0
    %v272 = vadd.f32 %v163, %v271
    %v273 = vpop.f32.mrb[0].mxu0
    %v274 = vadd.f32 %v167, %v273
    %275 = vmatprep.mubr.f32.mxu0 0.0
    %276 = vmatmul.mubr.f32.gmra.mrb[0].mxu0 %v185
    %v277 = vpop.f32.mrb[0].mxu0
    %v278 = vadd.f32 %v163, %v277
    %v279 = vpop.f32.mrb[0].mxu0
    %v280 = vadd.f32 %v167, %v279
    %281 = vmatprep.mubr.f32.mxu0 0.0
    %282 = vmatmul.mubr.f32.gmra.mrb[0].mxu0 %v188
    %v283 = vpop.f32.mrb[0].mxu0
    %v284 = vadd.f32 %v163, %v283
    %v285 = vpop.f32.mrb[0].mxu0
    %v286 = vadd.f32 %v167, %v285
    %287 = vmatprep.mubr.f32.mxu0 0.0
    %288 = vmatmul.mubr.f32.gmra.mrb[0].mxu0 %v191
    %v289 = vpop.f32.mrb[0].mxu0
    %v290 = vadd.f32 %v163, %v289
    %v291 = vpop.f32.mrb[0].mxu0
    %v292 = vadd.f32 %v167, %v291
    %293 = vmatprep.mubr.f32.mxu0 0.0
    %294 = vmatmul.mubr.f32.gmra.mrb[0].mxu0 %v194
    %v295 = vpop.f32.mrb[0].mxu0
    %v296 = vadd.f32 %v163, %v295
    %v297 = vpop.f32.mrb[0].mxu0
    %v298 = vadd.f32 %v167, %v297
    %299 = vmatprep.mubr.f32.mxu0 0.0
    %300 = vmatmul.mubr.f32.gmra.mrb[0].mxu0 %v197
    %v301 = vpop.f32.mrb[0].mxu0
    %v302 = vadd.f32 %v163, %v301
    %v303 = vpop.f32.mrb[0].mxu0
    %v304 = vadd.f32 %v167, %v303
    %305 = vmatprep.mubr.f32.mxu0 0.0
    %306 = vmatmul.mubr.f32.gmra.mrb[0].mxu0 %v200
    %v307 = vpop.f32.mrb[0].mxu0
    %v308 = vadd.f32 %v163, %v307
    %v309 = vpop.f32.mrb[0].mxu0
    %v310 = vadd.f32 %v167, %v309
    %311 = vmatprep.mubr.f32.mxu0 0.0
    %312 = vmatmul.mubr.f32.gmra.mrb[0].mxu0 %v203
    %v313 = vpop.f32.mrb[0].mxu0
    %v314 = vadd.f32 %v163, %v313
    %v315 = vpop.f32.mrb[0].mxu0
    %v316 = vadd.f32 %v167, %v315
    %317 = vdwg.mxu0
    %318 = vmatprep.subr.mxu0 %v145
    %319 = vmatpush1.msra.mxu0 %v144
    %320 = vmatprep.subr.mxu0 %v149
    %321 = vmatpush1.msra.mxu0 %v148
    %322 = vmatprep.subr.mxu0 %v153
    %323 = vmatpush1.msra.mxu0 %v152
    %324 = vmatprep.subr.mxu0 %v157
    %325 = vmatpush1.msra.mxu0 %v156
    %326 = vmatprep.subr.mxu0 0.0
    %327 = vmatpush1.msra.mxu0 0.0
    %328 = vmatprep.subr.mxu0 0.0
    %329 = vmatpush1.msra.mxu0 0.0
    %330 = vmatprep.subr.mxu0 0.0
    %331 = vmatpush1.msra.mxu0 0.0
    %332 = vmatprep.subr.mxu0 0.0
    %333 = vmatpush1.msra.mxu0 0.0
    %334 = vmatprep.subr.mxu0 0.0
    %335 = vmatpush1.msra.mxu0 0.0
    %336 = vmatprep.subr.mxu0 0.0
    %337 = vmatpush1.msra.mxu0 0.0
    %338 = vmatprep.subr.mxu0 0.0
    %339 = vmatpush1.msra.mxu0 0.0
    %340 = vmatprep.subr.mxu0 0.0
    %341 = vmatpush1.msra.mxu0 0.0
    %342 = vmatprep.subr.mxu0 0.0
    %343 = vmatpush1.msra.mxu0 0.0
    %344 = vmatprep.subr.mxu0 0.0
    %345 = vmatpush1.msra.mxu0 0.0
    %346 = vmatprep.subr.mxu0 0.0
    %347 = vmatpush1.msra.mxu0 0.0
    %348 = vmatprep.subr.mxu0 0.0
    %349 = vmatpush1.msra.mxu0 0.0
    %350 = vmatprep.subr.mxu0 0.0
    %351 = vmatpush1.msra.mxu0 0.0
    %352 = vmatprep.subr.mxu0 0.0
    %353 = vmatpush1.msra.mxu0 0.0
    %354 = vmatprep.subr.mxu0 0.0
    %355 = vmatpush1.msra.mxu0 0.0
    %356 = vmatprep.subr.mxu0 0.0
    %357 = vmatpush1.msra.mxu0 0.0
    %358 = vmatprep.subr.mxu0 0.0
    %359 = vmatpush1.msra.mxu0 0.0
    %360 = vmatprep.subr.mxu0 0.0
    %361 = vmatpush1.msra.mxu0 0.0
    %362 = vmatprep.subr.mxu0 0.0
    %363 = vmatpush1.msra.mxu0 0.0
    %364 = vmatprep.subr.mxu0 0.0
    %365 = vmatpush1.msra.mxu0 0.0
    %366 = vmatprep.subr.mxu0 0.0
    %367 = vmatpush1.msra.mxu0 0.0
    %368 = vmatprep.subr.mxu0 0.0
    %369 = vmatpush1.msra.mxu0 0.0
    %370 = vmatprep.subr.mxu0 0.0
    %371 = vmatpush1.msra.mxu0 0.0
    %372 = vmatprep.subr.mxu0 0.0
    %373 = vmatpush1.msra.mxu0 0.0
    %374 = vmatprep.subr.mxu0 0.0
    %375 = vmatpush1.msra.mxu0 0.0
    %376 = vmatprep.subr.mxu0 0.0
    %377 = vmatpush1.msra.mxu0 0.0
    %378 = vmatprep.subr.mxu0 0.0
    %379 = vmatpush1.msra.mxu0 0.0
    %380 = vmatprep.subr.mxu0 0.0
    %381 = vmatpush1.msra.mxu0 0.0
    %382 = vmatprep.mubr.f32.mxu0 0.0
    %383 = vmatmul.mubr.f32.gmra.mrb[0].mxu0 %v182
    %v384 = vpop.f32.mrb[0].mxu0
    %v385 = vadd.f32 %v171, %v384
    %v386 = vpop.f32.mrb[0].mxu0
    %v387 = vadd.f32 %v175, %v386
    %388 = vmatprep.mubr.f32.mxu0 0.0
    %389 = vmatmul.mubr.f32.gmra.mrb[0].mxu0 %v185
    %v390 = vpop.f32.mrb[0].mxu0
    %v391 = vadd.f32 %v171, %v390
    %v392 = vpop.f32.mrb[0].mxu0
    %v393 = vadd.f32 %v175, %v392
    %394 = vmatprep.mubr.f32.mxu0 0.0
    %395 = vmatmul.mubr.f32.gmra.mrb[0].mxu0 %v188
    %v396 = vpop.f32.mrb[0].mxu0
    %v397 = vadd.f32 %v171, %v396
    %v398 = vpop.f32.mrb[0].mxu0
    %v399 = vadd.f32 %v175, %v398
    %400 = vmatprep.mubr.f32.mxu0 0.0
    %401 = vmatmul.mubr.f32.gmra.mrb[0].mxu0 %v191
    %v402 = vpop.f32.mrb[0].mxu0
    %v403 = vadd.f32 %v171, %v402
    %v404 = vpop.f32.mrb[0].mxu0
    %v405 = vadd.f32 %v175, %v404
    %406 = vmatprep.mubr.f32.mxu0 0.0
    %407 = vmatmul.mubr.f32.gmra.mrb[0].mxu0 %v194
    %v408 = vpop.f32.mrb[0].mxu0
    %v409 = vadd.f32 %v171, %v408
    %v410 = vpop.f32.mrb[0].mxu0
    %v411 = vadd.f32 %v175, %v410
    %412 = vmatprep.mubr.f32.mxu0 0.0
    %413 = vmatmul.mubr.f32.gmra.mrb[0].mxu0 %v197
    %v414 = vpop.f32.mrb[0].mxu0
    %v415 = vadd.f32 %v171, %v414
    %v416 = vpop.f32.mrb[0].mxu0
    %v417 = vadd.f32 %v175, %v416
    %418 = vmatprep.mubr.f32.mxu0 0.0
    %419 = vmatmul.mubr.f32.gmra.mrb[0].mxu0 %v200
    %v420 = vpop.f32.mrb[0].mxu0
    %v421 = vadd.f32 %v171, %v420
    %v422 = vpop.f32.mrb[0].mxu0
    %v423 = vadd.f32 %v175, %v422
    %424 = vmatprep.mubr.f32.mxu0 0.0
    %425 = vmatmul.mubr.f32.gmra.mrb[0].mxu0 %v203
    %v426 = vpop.f32.mrb[0].mxu0
    %v427 = vadd.f32 %v171, %v426
    %v428 = vpop.f32.mrb[0].mxu0
    %v429 = vadd.f32 %v175, %v428
    %430 = vdwg.mxu0
    %v431 = vld [vmem:[#allocation11] sm:$0xff]
    %v432 = vld [vmem:[#allocation11 + $0x8] sm:$0xff]
    %v433 = vld [vmem:[#allocation11 + $0x10] sm:$0xff]
    %v434 = vld [vmem:[#allocation11 + $0x18] sm:$0xff]
    %v435 = vld [vmem:[#allocation11 + $0x20] sm:$0xff]
    %v436 = vld [vmem:[#allocation11 + $0x28] sm:$0xff]
    %v437 = vld [vmem:[#allocation11 + $0x30] sm:$0xff]
    %v438 = vld [vmem:[#allocation11 + $0x38] sm:$0xff]
    %v439 = vld [vmem:[#allocation11 + $0x40] sm:$0xff]
    %v440 = vld [vmem:[#allocation11 + $0x48] sm:$0xff]
    %v441 = vld [vmem:[#allocation11 + $0x50] sm:$0xff]
    %v442 = vld [vmem:[#allocation11 + $0x58] sm:$0xff]
    %v443 = vld [vmem:[#allocation11 + $0x60] sm:$0xff]
    %v444 = vld [vmem:[#allocation11 + $0x68] sm:$0xff]
    %v445 = vld [vmem:[#allocation11 + $0x70] sm:$0xff]
    %v446 = vld [vmem:[#allocation11 + $0x78] sm:$0xff]
    %v447 = vld [vmem:[%s5] sm:$0xf]
    %v449 = vlaneseq
    %v450 = vshrl.u32 %v449, 7
    %v451 = vsub.s32 0, %v450
    %v452 = vrot.slane %v447, %v451
    %v453 = vlaneseq
    %v454 = vshrl.u32 %v453, 7
    %v455 = vsub.s32 1, %v454
    %v456 = vrot.slane %v447, %v455
    %v457 = vlaneseq
    %v458 = vshrl.u32 %v457, 7
    %v459 = vsub.s32 2, %v458
    %v460 = vrot.slane %v447, %v459
    %v461 = vlaneseq
    %v462 = vshrl.u32 %v461, 7
    %v463 = vsub.s32 3, %v462
    %v464 = vrot.slane %v447, %v463
    %469 = vmatprep.subr.mxu0 %v432
    %470 = vmatpush1.msra.mxu0 %v431
    %471 = vmatprep.subr.mxu0 %v436
    %472 = vmatpush1.msra.mxu0 %v435
    %473 = vmatprep.subr.mxu0 %v440
    %474 = vmatpush1.msra.mxu0 %v439
    %475 = vmatprep.subr.mxu0 %v444
    %476 = vmatpush1.msra.mxu0 %v443
    %477 = vmatprep.subr.mxu0 0.0
    %478 = vmatpush1.msra.mxu0 0.0
    %479 = vmatprep.subr.mxu0 0.0
    %480 = vmatpush1.msra.mxu0 0.0
    %481 = vmatprep.subr.mxu0 0.0
    %482 = vmatpush1.msra.mxu0 0.0
    %483 = vmatprep.subr.mxu0 0.0
    %484 = vmatpush1.msra.mxu0 0.0
    %485 = vmatprep.subr.mxu0 0.0
    %486 = vmatpush1.msra.mxu0 0.0
    %487 = vmatprep.subr.mxu0 0.0
    %488 = vmatpush1.msra.mxu0 0.0
    %489 = vmatprep.subr.mxu0 0.0
    %490 = vmatpush1.msra.mxu0 0.0
    %491 = vmatprep.subr.mxu0 0.0
    %492 = vmatpush1.msra.mxu0 0.0
    %493 = vmatprep.subr.mxu0 0.0
    %494 = vmatpush1.msra.mxu0 0.0
    %495 = vmatprep.subr.mxu0 0.0
    %496 = vmatpush1.msra.mxu0 0.0
    %497 = vmatprep.subr.mxu0 0.0
    %498 = vmatpush1.msra.mxu0 0.0
    %499 = vmatprep.subr.mxu0 0.0
    %500 = vmatpush1.msra.mxu0 0.0
    %501 = vmatprep.subr.mxu0 0.0
    %502 = vmatpush1.msra.mxu0 0.0
    %503 = vmatprep.subr.mxu0 0.0
    %504 = vmatpush1.msra.mxu0 0.0
    %505 = vmatprep.subr.mxu0 0.0
    %506 = vmatpush1.msra.mxu0 0.0
    %507 = vmatprep.subr.mxu0 0.0
    %508 = vmatpush1.msra.mxu0 0.0
    %509 = vmatprep.subr.mxu0 0.0
    %510 = vmatpush1.msra.mxu0 0.0
    %511 = vmatprep.subr.mxu0 0.0
    %512 = vmatpush1.msra.mxu0 0.0
    %513 = vmatprep.subr.mxu0 0.0
    %514 = vmatpush1.msra.mxu0 0.0
    %515 = vmatprep.subr.mxu0 0.0
    %516 = vmatpush1.msra.mxu0 0.0
    %517 = vmatprep.subr.mxu0 0.0
    %518 = vmatpush1.msra.mxu0 0.0
    %519 = vmatprep.subr.mxu0 0.0
    %520 = vmatpush1.msra.mxu0 0.0
    %521 = vmatprep.subr.mxu0 0.0
    %522 = vmatpush1.msra.mxu0 0.0
    %523 = vmatprep.subr.mxu0 0.0
    %524 = vmatpush1.msra.mxu0 0.0
    %525 = vmatprep.subr.mxu0 0.0
    %526 = vmatpush1.msra.mxu0 0.0
    %527 = vmatprep.subr.mxu0 0.0
    %528 = vmatpush1.msra.mxu0 0.0
    %529 = vmatprep.subr.mxu0 0.0
    %530 = vmatpush1.msra.mxu0 0.0
    %531 = vmatprep.subr.mxu0 0.0
    %532 = vmatpush1.msra.mxu0 0.0
    %533 = vmatprep.mubr.f32.mxu0 0.0
    %534 = vmatmul.mubr.f32.gmra.mrb[0].mxu0 %v182
    %v535 = vpop.f32.mrb[0].mxu0
    %v536 = vadd.f32 %v452, %v535
    %v537 = vpop.f32.mrb[0].mxu0
    %v538 = vadd.f32 %v456, %v537
    %539 = vmatprep.mubr.f32.mxu0 0.0
    %540 = vmatmul.mubr.f32.gmra.mrb[0].mxu0 %v185
    %v541 = vpop.f32.mrb[0].mxu0
    %v542 = vadd.f32 %v452, %v541
    %v543 = vpop.f32.mrb[0].mxu0
    %v544 = vadd.f32 %v456, %v543
    %545 = vmatprep.mubr.f32.mxu0 0.0
    %546 = vmatmul.mubr.f32.gmra.mrb[0].mxu0 %v188
    %v547 = vpop.f32.mrb[0].mxu0
    %v548 = vadd.f32 %v452, %v547
    %v549 = vpop.f32.mrb[0].mxu0
    %v550 = vadd.f32 %v456, %v549
    %551 = vmatprep.mubr.f32.mxu0 0.0
    %552 = vmatmul.mubr.f32.gmra.mrb[0].mxu0 %v191
    %v553 = vpop.f32.mrb[0].mxu0
    %v554 = vadd.f32 %v452, %v553
    %v555 = vpop.f32.mrb[0].mxu0
    %v556 = vadd.f32 %v456, %v555
    %557 = vmatprep.mubr.f32.mxu0 0.0
    %558 = vmatmul.mubr.f32.gmra.mrb[0].mxu0 %v194
    %v559 = vpop.f32.mrb[0].mxu0
    %v560 = vadd.f32 %v452, %v559
    %v561 = vpop.f32.mrb[0].mxu0
    %v562 = vadd.f32 %v456, %v561
    %563 = vmatprep.mubr.f32.mxu0 0.0
    %564 = vmatmul.mubr.f32.gmra.mrb[0].mxu0 %v197
    %v565 = vpop.f32.mrb[0].mxu0
    %v566 = vadd.f32 %v452, %v565
    %v567 = vpop.f32.mrb[0].mxu0
    %v568 = vadd.f32 %v456, %v567
    %569 = vmatprep.mubr.f32.mxu0 0.0
    %570 = vmatmul.mubr.f32.gmra.mrb[0].mxu0 %v200
    %v571 = vpop.f32.mrb[0].mxu0
    %v572 = vadd.f32 %v452, %v571
    %v573 = vpop.f32.mrb[0].mxu0
    %v574 = vadd.f32 %v456, %v573
    %575 = vmatprep.mubr.f32.mxu0 0.0
    %576 = vmatmul.mubr.f32.gmra.mrb[0].mxu0 %v203
    %v577 = vpop.f32.mrb[0].mxu0
    %v578 = vadd.f32 %v452, %v577
    %v579 = vpop.f32.mrb[0].mxu0
    %v580 = vadd.f32 %v456, %v579
    %581 = vdwg.mxu0
    %582 = vmatprep.subr.mxu0 %v434
    %583 = vmatpush1.msra.mxu0 %v433
    %584 = vmatprep.subr.mxu0 %v438
    %585 = vmatpush1.msra.mxu0 %v437
    %586 = vmatprep.subr.mxu0 %v442
    %587 = vmatpush1.msra.mxu0 %v441
    %588 = vmatprep.subr.mxu0 %v446
    %589 = vmatpush1.msra.mxu0 %v445
    %590 = vmatprep.subr.mxu0 0.0
    %591 = vmatpush1.msra.mxu0 0.0
    %592 = vmatprep.subr.mxu0 0.0
    %593 = vmatpush1.msra.mxu0 0.0
    %594 = vmatprep.subr.mxu0 0.0
    %595 = vmatpush1.msra.mxu0 0.0
    %596 = vmatprep.subr.mxu0 0.0
    %597 = vmatpush1.msra.mxu0 0.0
    %598 = vmatprep.subr.mxu0 0.0
    %599 = vmatpush1.msra.mxu0 0.0
    %600 = vmatprep.subr.mxu0 0.0
    %601 = vmatpush1.msra.mxu0 0.0
    %602 = vmatprep.subr.mxu0 0.0
    %603 = vmatpush1.msra.mxu0 0.0
    %604 = vmatprep.subr.mxu0 0.0
    %605 = vmatpush1.msra.mxu0 0.0
    %606 = vmatprep.subr.mxu0 0.0
    %607 = vmatpush1.msra.mxu0 0.0
    %608 = vmatprep.subr.mxu0 0.0
    %609 = vmatpush1.msra.mxu0 0.0
    %610 = vmatprep.subr.mxu0 0.0
    %611 = vmatpush1.msra.mxu0 0.0
    %612 = vmatprep.subr.mxu0 0.0
    %613 = vmatpush1.msra.mxu0 0.0
    %614 = vmatprep.subr.mxu0 0.0
    %615 = vmatpush1.msra.mxu0 0.0
    %616 = vmatprep.subr.mxu0 0.0
    %617 = vmatpush1.msra.mxu0 0.0
    %618 = vmatprep.subr.mxu0 0.0
    %619 = vmatpush1.msra.mxu0 0.0
    %620 = vmatprep.subr.mxu0 0.0
    %621 = vmatpush1.msra.mxu0 0.0
    %622 = vmatprep.subr.mxu0 0.0
    %623 = vmatpush1.msra.mxu0 0.0
    %624 = vmatprep.subr.mxu0 0.0
    %625 = vmatpush1.msra.mxu0 0.0
    %626 = vmatprep.subr.mxu0 0.0
    %627 = vmatpush1.msra.mxu0 0.0
    %628 = vmatprep.subr.mxu0 0.0
    %629 = vmatpush1.msra.mxu0 0.0
    %630 = vmatprep.subr.mxu0 0.0
    %631 = vmatpush1.msra.mxu0 0.0
    %632 = vmatprep.subr.mxu0 0.0
    %633 = vmatpush1.msra.mxu0 0.0
    %634 = vmatprep.subr.mxu0 0.0
    %635 = vmatpush1.msra.mxu0 0.0
    %636 = vmatprep.subr.mxu0 0.0
    %637 = vmatpush1.msra.mxu0 0.0
    %638 = vmatprep.subr.mxu0 0.0
    %639 = vmatpush1.msra.mxu0 0.0
    %640 = vmatprep.subr.mxu0 0.0
    %641 = vmatpush1.msra.mxu0 0.0
    %642 = vmatprep.subr.mxu0 0.0
    %643 = vmatpush1.msra.mxu0 0.0
    %644 = vmatprep.subr.mxu0 0.0
    %645 = vmatpush1.msra.mxu0 0.0
    %646 = vmatprep.mubr.f32.mxu0 0.0
    %647 = vmatmul.mubr.f32.gmra.mrb[0].mxu0 %v182
    %v648 = vpop.f32.mrb[0].mxu0
    %v649 = vadd.f32 %v460, %v648
    %v650 = vpop.f32.mrb[0].mxu0
    %v651 = vadd.f32 %v464, %v650
    %652 = vmatprep.mubr.f32.mxu0 0.0
    %653 = vmatmul.mubr.f32.gmra.mrb[0].mxu0 %v185
    %v654 = vpop.f32.mrb[0].mxu0
    %v655 = vadd.f32 %v460, %v654
    %v656 = vpop.f32.mrb[0].mxu0
    %v657 = vadd.f32 %v464, %v656
    %658 = vmatprep.mubr.f32.mxu0 0.0
    %659 = vmatmul.mubr.f32.gmra.mrb[0].mxu0 %v188
    %v660 = vpop.f32.mrb[0].mxu0
    %v661 = vadd.f32 %v460, %v660
    %v662 = vpop.f32.mrb[0].mxu0
    %v663 = vadd.f32 %v464, %v662
    %664 = vmatprep.mubr.f32.mxu0 0.0
    %665 = vmatmul.mubr.f32.gmra.mrb[0].mxu0 %v191
    %v666 = vpop.f32.mrb[0].mxu0
    %v667 = vadd.f32 %v460, %v666
    %v668 = vpop.f32.mrb[0].mxu0
    %v669 = vadd.f32 %v464, %v668
    %670 = vmatprep.mubr.f32.mxu0 0.0
    %671 = vmatmul.mubr.f32.gmra.mrb[0].mxu0 %v194
    %v672 = vpop.f32.mrb[0].mxu0
    %v673 = vadd.f32 %v460, %v672
    %v674 = vpop.f32.mrb[0].mxu0
    %v675 = vadd.f32 %v464, %v674
    %676 = vmatprep.mubr.f32.mxu0 0.0
    %677 = vmatmul.mubr.f32.gmra.mrb[0].mxu0 %v197
    %v678 = vpop.f32.mrb[0].mxu0
    %v679 = vadd.f32 %v460, %v678
    %v680 = vpop.f32.mrb[0].mxu0
    %v681 = vadd.f32 %v464, %v680
    %682 = vmatprep.mubr.f32.mxu0 0.0
    %683 = vmatmul.mubr.f32.gmra.mrb[0].mxu0 %v200
    %v684 = vpop.f32.mrb[0].mxu0
    %v685 = vadd.f32 %v460, %v684
    %v686 = vpop.f32.mrb[0].mxu0
    %v687 = vadd.f32 %v464, %v686
    %688 = vmatprep.mubr.f32.mxu0 0.0
    %689 = vmatmul.mubr.f32.gmra.mrb[0].mxu0 %v203
    %v690 = vpop.f32.mrb[0].mxu0
    %v691 = vadd.f32 %v460, %v690
    %v692 = vpop.f32.mrb[0].mxu0
    %v693 = vadd.f32 %v464, %v692
    %694 = vdwg.mxu0
    %695 = vst [vmem:[#allocation2] sm:$0xff] %v272
    %696 = vst [vmem:[#allocation2 + $0x8] sm:$0xff] %v274
    %697 = vst [vmem:[#allocation2 + $0x10] sm:$0xff] %v385
    %698 = vst [vmem:[#allocation2 + $0x18] sm:$0xff] %v387
    %699 = vst [vmem:[#allocation2 + $0x20] sm:$0xff] %v278
    %700 = vst [vmem:[#allocation2 + $0x28] sm:$0xff] %v280
    %701 = vst [vmem:[#allocation2 + $0x30] sm:$0xff] %v391
    %702 = vst [vmem:[#allocation2 + $0x38] sm:$0xff] %v393
    %703 = vst [vmem:[#allocation2 + $0x40] sm:$0xff] %v284
    %704 = vst [vmem:[#allocation2 + $0x48] sm:$0xff] %v286
    %705 = vst [vmem:[#allocation2 + $0x50] sm:$0xff] %v397
    %706 = vst [vmem:[#allocation2 + $0x58] sm:$0xff] %v399
    %707 = vst [vmem:[#allocation2 + $0x60] sm:$0xff] %v290
    %708 = vst [vmem:[#allocation2 + $0x68] sm:$0xff] %v292
    %709 = vst [vmem:[#allocation2 + $0x70] sm:$0xff] %v403
    %710 = vst [vmem:[#allocation2 + $0x78] sm:$0xff] %v405
    %711 = vst [vmem:[#allocation2 + $0x80] sm:$0xff] %v296
    %712 = vst [vmem:[#allocation2 + $0x88] sm:$0xff] %v298
    %713 = vst [vmem:[#allocation2 + $0x90] sm:$0xff] %v409
    %714 = vst [vmem:[#allocation2 + $0x98] sm:$0xff] %v411
    %715 = vst [vmem:[#allocation2 + $0xa0] sm:$0xff] %v302
    %716 = vst [vmem:[#allocation2 + $0xa8] sm:$0xff] %v304
    %717 = vst [vmem:[#allocation2 + $0xb0] sm:$0xff] %v415
    %718 = vst [vmem:[#allocation2 + $0xb8] sm:$0xff] %v417
    %719 = vst [vmem:[#allocation2 + $0xc0] sm:$0xff] %v308
    %720 = vst [vmem:[#allocation2 + $0xc8] sm:$0xff] %v310
    %721 = vst [vmem:[#allocation2 + $0xd0] sm:$0xff] %v421
    %722 = vst [vmem:[#allocation2 + $0xd8] sm:$0xff] %v423
    %723 = vst [vmem:[#allocation2 + $0xe0] sm:$0xff] %v314
    %724 = vst [vmem:[#allocation2 + $0xe8] sm:$0xff] %v316
    %725 = vst [vmem:[#allocation2 + $0xf0] sm:$0xff] %v427
    %726 = vst [vmem:[#allocation2 + $0xf8] sm:$0xff] %v429
    %727 = vst [vmem:[#allocation3] sm:$0xff] %v536
    %728 = vst [vmem:[#allocation3 + $0x8] sm:$0xff] %v538
    %729 = vst [vmem:[#allocation3 + $0x10] sm:$0xff] %v649
    %730 = vst [vmem:[#allocation3 + $0x18] sm:$0xff] %v651
    %731 = vst [vmem:[#allocation3 + $0x20] sm:$0xff] %v542
    %732 = vst [vmem:[#allocation3 + $0x28] sm:$0xff] %v544
    %733 = vst [vmem:[#allocation3 + $0x30] sm:$0xff] %v655
    %734 = vst [vmem:[#allocation3 + $0x38] sm:$0xff] %v657
    %735 = vst [vmem:[#allocation3 + $0x40] sm:$0xff] %v548
    %736 = vst [vmem:[#allocation3 + $0x48] sm:$0xff] %v550
    %737 = vst [vmem:[#allocation3 + $0x50] sm:$0xff] %v661
    %738 = vst [vmem:[#allocation3 + $0x58] sm:$0xff] %v663
    %739 = vst [vmem:[#allocation3 + $0x60] sm:$0xff] %v554
    %740 = vst [vmem:[#allocation3 + $0x68] sm:$0xff] %v556
    %741 = vst [vmem:[#allocation3 + $0x70] sm:$0xff] %v667
    %742 = vst [vmem:[#allocation3 + $0x78] sm:$0xff] %v669
    %743 = vst [vmem:[#allocation3 + $0x80] sm:$0xff] %v560
    %744 = vst [vmem:[#allocation3 + $0x88] sm:$0xff] %v562
    %745 = vst [vmem:[#allocation3 + $0x90] sm:$0xff] %v673
    %746 = vst [vmem:[#allocation3 + $0x98] sm:$0xff] %v675
    %747 = vst [vmem:[#allocation3 + $0xa0] sm:$0xff] %v566
    %748 = vst [vmem:[#allocation3 + $0xa8] sm:$0xff] %v568
    %749 = vst [vmem:[#allocation3 + $0xb0] sm:$0xff] %v679
    %750 = vst [vmem:[#allocation3 + $0xb8] sm:$0xff] %v681
    %751 = vst [vmem:[#allocation3 + $0xc0] sm:$0xff] %v572
    %752 = vst [vmem:[#allocation3 + $0xc8] sm:$0xff] %v574
    %753 = vst [vmem:[#allocation3 + $0xd0] sm:$0xff] %v685
    %754 = vst [vmem:[#allocation3 + $0xd8] sm:$0xff] %v687
    %755 = vst [vmem:[#allocation3 + $0xe0] sm:$0xff] %v578
    %756 = vst [vmem:[#allocation3 + $0xe8] sm:$0xff] %v580
    %757 = vst [vmem:[#allocation3 + $0xf0] sm:$0xff] %v691
    %758 = vst [vmem:[#allocation3 + $0xf8] sm:$0xff] %v693
    %v759 = vld [vmem:[%s0] sm:$0xff]
    %vm760 = vcmp.gt.s32.totalorder %v759, 0
    %vm761 = vcmp.gt.s32.totalorder %v759, 7
    %v762 = vld [vmem:[#allocation2] sm:$0xff]
    %v763 = vld [vmem:[#allocation2 + $0x8] sm:$0xff]
    %v764 = vld [vmem:[#allocation2 + $0x10] sm:$0xff]
    %v765 = vld [vmem:[#allocation2 + $0x18] sm:$0xff]
    %v766 = vld [vmem:[#allocation12] sm:$0xff]
    %v767 = vld [vmem:[#allocation12 + $0x8] sm:$0xff]
    %v768 = vld [vmem:[#allocation12 + $0x10] sm:$0xff]
    %v769 = vld [vmem:[#allocation12 + $0x18] sm:$0xff]
    %v770 = vld [vmem:[#allocation12 + $0x20] sm:$0xff]
    %v771 = vld [vmem:[#allocation12 + $0x28] sm:$0xff]
    %v772 = vld [vmem:[#allocation12 + $0x30] sm:$0xff]
    %v773 = vld [vmem:[#allocation12 + $0x38] sm:$0xff]
    %v774 = vld [vmem:[#allocation12 + $0x40] sm:$0xff]
    %v775 = vld [vmem:[#allocation12 + $0x48] sm:$0xff]
    %v776 = vld [vmem:[#allocation12 + $0x50] sm:$0xff]
    %v777 = vld [vmem:[#allocation12 + $0x58] sm:$0xff]
    %v778 = vld [vmem:[#allocation12 + $0x60] sm:$0xff]
    %v779 = vld [vmem:[#allocation12 + $0x68] sm:$0xff]
    %v780 = vld [vmem:[#allocation12 + $0x70] sm:$0xff]
    %v781 = vld [vmem:[#allocation12 + $0x78] sm:$0xff]
    %v782 = vld [vmem:[#allocation12 + $0x80] sm:$0xff]
    %v783 = vld [vmem:[#allocation12 + $0x88] sm:$0xff]
    %v784 = vld [vmem:[#allocation12 + $0x90] sm:$0xff]
    %v785 = vld [vmem:[#allocation12 + $0x98] sm:$0xff]
    %v786 = vld [vmem:[#allocation12 + $0xa0] sm:$0xff]
    %v787 = vld [vmem:[#allocation12 + $0xa8] sm:$0xff]
    %v788 = vld [vmem:[#allocation12 + $0xb0] sm:$0xff]
    %v789 = vld [vmem:[#allocation12 + $0xb8] sm:$0xff]
    %v790 = vld [vmem:[#allocation12 + $0xc0] sm:$0xff]
    %v791 = vld [vmem:[#allocation12 + $0xc8] sm:$0xff]
    %v792 = vld [vmem:[#allocation12 + $0xd0] sm:$0xff]
    %v793 = vld [vmem:[#allocation12 + $0xd8] sm:$0xff]
    %v794 = vld [vmem:[#allocation12 + $0xe0] sm:$0xff]
    %v795 = vld [vmem:[#allocation12 + $0xe8] sm:$0xff]
    %v796 = vld [vmem:[#allocation12 + $0xf0] sm:$0xff]
    %v797 = vld [vmem:[#allocation12 + $0xf8] sm:$0xff]
    %v798 = vld [vmem:[#allocation12 + $0x100] sm:$0xff]
    %v799 = vld [vmem:[#allocation12 + $0x108] sm:$0xff]
    %v800 = vld [vmem:[#allocation12 + $0x110] sm:$0xff]
    %v801 = vld [vmem:[#allocation12 + $0x118] sm:$0xff]
    %v802 = vld [vmem:[#allocation12 + $0x120] sm:$0xff]
    %v803 = vld [vmem:[#allocation12 + $0x128] sm:$0xff]
    %v804 = vld [vmem:[#allocation12 + $0x130] sm:$0xff]
    %v805 = vld [vmem:[#allocation12 + $0x138] sm:$0xff]
    %v806 = vld [vmem:[#allocation12 + $0x140] sm:$0xff]
    %v807 = vld [vmem:[#allocation12 + $0x148] sm:$0xff]
    %v808 = vld [vmem:[#allocation12 + $0x150] sm:$0xff]
    %v809 = vld [vmem:[#allocation12 + $0x158] sm:$0xff]
    %v810 = vld [vmem:[#allocation12 + $0x160] sm:$0xff]
    %v811 = vld [vmem:[#allocation12 + $0x168] sm:$0xff]
    %v812 = vld [vmem:[#allocation12 + $0x170] sm:$0xff]
    %v813 = vld [vmem:[#allocation12 + $0x178] sm:$0xff]
    %v814 = vld [vmem:[#allocation12 + $0x180] sm:$0xff]
    %v815 = vld [vmem:[#allocation12 + $0x188] sm:$0xff]
    %v816 = vld [vmem:[#allocation12 + $0x190] sm:$0xff]
    %v817 = vld [vmem:[#allocation12 + $0x198] sm:$0xff]
    %v818 = vld [vmem:[#allocation12 + $0x1a0] sm:$0xff]
    %v819 = vld [vmem:[#allocation12 + $0x1a8] sm:$0xff]
    %v820 = vld [vmem:[#allocation12 + $0x1b0] sm:$0xff]
    %v821 = vld [vmem:[#allocation12 + $0x1b8] sm:$0xff]
    %v822 = vld [vmem:[#allocation12 + $0x1c0] sm:$0xff]
    %v823 = vld [vmem:[#allocation12 + $0x1c8] sm:$0xff]
    %v824 = vld [vmem:[#allocation12 + $0x1d0] sm:$0xff]
    %v825 = vld [vmem:[#allocation12 + $0x1d8] sm:$0xff]
    %v826 = vld [vmem:[#allocation12 + $0x1e0] sm:$0xff]
    %v827 = vld [vmem:[#allocation12 + $0x1e8] sm:$0xff]
    %v828 = vld [vmem:[#allocation12 + $0x1f0] sm:$0xff]
    %v829 = vld [vmem:[#allocation12 + $0x1f8] sm:$0xff]
    %830 = vmatprep.subr.mxu0 %v767
    %831 = vmatpush1.msra.mxu0 %v766
    %832 = vmatprep.subr.mxu0 %v771
    %833 = vmatpush1.msra.mxu0 %v770
    %834 = vmatprep.subr.mxu0 %v775
    %835 = vmatpush1.msra.mxu0 %v774
    %836 = vmatprep.subr.mxu0 %v779
    %837 = vmatpush1.msra.mxu0 %v778
    %838 = vmatprep.subr.mxu0 %v783
    %839 = vmatpush1.msra.mxu0 %v782
    %840 = vmatprep.subr.mxu0 %v787
    %841 = vmatpush1.msra.mxu0 %v786
    %842 = vmatprep.subr.mxu0 %v791
    %843 = vmatpush1.msra.mxu0 %v790
    %844 = vmatprep.subr.mxu0 %v795
    %845 = vmatpush1.msra.mxu0 %v794
    %846 = vmatprep.subr.mxu0 %v799
    %847 = vmatpush1.msra.mxu0 %v798
    %848 = vmatprep.subr.mxu0 %v803
    %849 = vmatpush1.msra.mxu0 %v802
    %850 = vmatprep.subr.mxu0 %v807
    %851 = vmatpush1.msra.mxu0 %v806
    %852 = vmatprep.subr.mxu0 %v811
    %853 = vmatpush1.msra.mxu0 %v810
    %854 = vmatprep.subr.mxu0 %v815
    %855 = vmatpush1.msra.mxu0 %v814
    %856 = vmatprep.subr.mxu0 %v819
    %857 = vmatpush1.msra.mxu0 %v818
    %858 = vmatprep.subr.mxu0 %v823
    %859 = vmatpush1.msra.mxu0 %v822
    %860 = vmatprep.subr.mxu0 %v827
    %861 = vmatpush1.msra.mxu0 %v826
    %862 = vmatprep.subr.mxu0 0.0
    %863 = vmatpush1.msra.mxu0 0.0
    %864 = vmatprep.subr.mxu0 0.0
    %865 = vmatpush1.msra.mxu0 0.0
    %866 = vmatprep.subr.mxu0 0.0
    %867 = vmatpush1.msra.mxu0 0.0
    %868 = vmatprep.subr.mxu0 0.0
    %869 = vmatpush1.msra.mxu0 0.0
    %870 = vmatprep.subr.mxu0 0.0
    %871 = vmatpush1.msra.mxu0 0.0
    %872 = vmatprep.subr.mxu0 0.0
    %873 = vmatpush1.msra.mxu0 0.0
    %874 = vmatprep.subr.mxu0 0.0
    %875 = vmatpush1.msra.mxu0 0.0
    %876 = vmatprep.subr.mxu0 0.0
    %877 = vmatpush1.msra.mxu0 0.0
    %878 = vmatprep.subr.mxu0 0.0
    %879 = vmatpush1.msra.mxu0 0.0
    %880 = vmatprep.subr.mxu0 0.0
    %881 = vmatpush1.msra.mxu0 0.0
    %882 = vmatprep.subr.mxu0 0.0
    %883 = vmatpush1.msra.mxu0 0.0
    %884 = vmatprep.subr.mxu0 0.0
    %885 = vmatpush1.msra.mxu0 0.0
    %886 = vmatprep.subr.mxu0 0.0
    %887 = vmatpush1.msra.mxu0 0.0
    %888 = vmatprep.subr.mxu0 0.0
    %889 = vmatpush1.msra.mxu0 0.0
    %890 = vmatprep.subr.mxu0 0.0
    %891 = vmatpush1.msra.mxu0 0.0
    %892 = vmatprep.subr.mxu0 0.0
    %893 = vmatpush1.msra.mxu0 0.0
    %894 = vmatprep.mubr.f32.mxu0 0.0
    %895 = vmatmul.mubr.f32.gmra.mrb[0].mxu0 0.0
    %v896 = vpop.f32.mrb[0].mxu0
    %v897 = vadd.f32 0.0, %v896
    %v898 = vpop.f32.mrb[0].mxu0
    %v899 = vadd.f32 0.0, %v898
    %900 = vdwg.mxu0
    %901 = vmatprep.subr.mxu0 %v769
    %902 = vmatpush1.msra.mxu0 %v768
    %903 = vmatprep.subr.mxu0 %v773
    %904 = vmatpush1.msra.mxu0 %v772
    %905 = vmatprep.subr.mxu0 %v777
    %906 = vmatpush1.msra.mxu0 %v776
    %907 = vmatprep.subr.mxu0 %v781
    %908 = vmatpush1.msra.mxu0 %v780
    %909 = vmatprep.subr.mxu0 %v785
    %910 = vmatpush1.msra.mxu0 %v784
    %911 = vmatprep.subr.mxu0 %v789
    %912 = vmatpush1.msra.mxu0 %v788
    %913 = vmatprep.subr.mxu0 %v793
    %914 = vmatpush1.msra.mxu0 %v792
    %915 = vmatprep.subr.mxu0 %v797
    %916 = vmatpush1.msra.mxu0 %v796
    %917 = vmatprep.subr.mxu0 %v801
    %918 = vmatpush1.msra.mxu0 %v800
    %919 = vmatprep.subr.mxu0 %v805
    %920 = vmatpush1.msra.mxu0 %v804
    %921 = vmatprep.subr.mxu0 %v809
    %922 = vmatpush1.msra.mxu0 %v808
    %923 = vmatprep.subr.mxu0 %v813
    %924 = vmatpush1.msra.mxu0 %v812
    %925 = vmatprep.subr.mxu0 %v817
    %926 = vmatpush1.msra.mxu0 %v816
    %927 = vmatprep.subr.mxu0 %v821
    %928 = vmatpush1.msra.mxu0 %v820
    %929 = vmatprep.subr.mxu0 %v825
    %930 = vmatpush1.msra.mxu0 %v824
    %931 = vmatprep.subr.mxu0 %v829
    %932 = vmatpush1.msra.mxu0 %v828
    %933 = vmatprep.subr.mxu0 0.0
    %934 = vmatpush1.msra.mxu0 0.0
    %935 = vmatprep.subr.mxu0 0.0
    %936 = vmatpush1.msra.mxu0 0.0
    %937 = vmatprep.subr.mxu0 0.0
    %938 = vmatpush1.msra.mxu0 0.0
    %939 = vmatprep.subr.mxu0 0.0
    %940 = vmatpush1.msra.mxu0 0.0
    %941 = vmatprep.subr.mxu0 0.0
    %942 = vmatpush1.msra.mxu0 0.0
    %943 = vmatprep.subr.mxu0 0.0
    %944 = vmatpush1.msra.mxu0 0.0
    %945 = vmatprep.subr.mxu0 0.0
    %946 = vmatpush1.msra.mxu0 0.0
    %947 = vmatprep.subr.mxu0 0.0
    %948 = vmatpush1.msra.mxu0 0.0
    %949 = vmatprep.subr.mxu0 0.0
    %950 = vmatpush1.msra.mxu0 0.0
    %951 = vmatprep.subr.mxu0 0.0
    %952 = vmatpush1.msra.mxu0 0.0
    %953 = vmatprep.subr.mxu0 0.0
    %954 = vmatpush1.msra.mxu0 0.0
    %955 = vmatprep.subr.mxu0 0.0
    %956 = vmatpush1.msra.mxu0 0.0
    %957 = vmatprep.subr.mxu0 0.0
    %958 = vmatpush1.msra.mxu0 0.0
    %959 = vmatprep.subr.mxu0 0.0
    %960 = vmatpush1.msra.mxu0 0.0
    %961 = vmatprep.subr.mxu0 0.0
    %962 = vmatpush1.msra.mxu0 0.0
    %963 = vmatprep.subr.mxu0 0.0
    %964 = vmatpush1.msra.mxu0 0.0
    %965 = vmatprep.mubr.f32.mxu0 0.0
    %966 = vmatmul.mubr.f32.gmra.mrb[0].mxu0 0.0
    %v967 = vpop.f32.mrb[0].mxu0
    %v968 = vadd.f32 0.0, %v967
    %v969 = vpop.f32.mrb[0].mxu0
    %v970 = vadd.f32 0.0, %v969
    %971 = vdwg.mxu0
    %v972 = vadd.f32 %v762, %v897
    %v973 = vadd.f32 %v763, %v899
    %v974 = vadd.f32 %v764, %v968
    %v975 = vadd.f32 %v765, %v970
    %s976 = scalar_lea.vmem [#allocation3], 224
    %v977 = vld [vmem:[%s976] sm:$0xff]
    %v978 = vld [vmem:[%s976 + $0x8] sm:$0xff]
    %v979 = vld [vmem:[%s976 + $0x10] sm:$0xff]
    %v980 = vld [vmem:[%s976 + $0x18] sm:$0xff]
    %v981 = vld [vmem:[#allocation14] sm:$0xff]
    %v982 = vld [vmem:[#allocation14 + $0x8] sm:$0xff]
    %v983 = vld [vmem:[#allocation14 + $0x10] sm:$0xff]
    %v984 = vld [vmem:[#allocation14 + $0x18] sm:$0xff]
    %v985 = vld [vmem:[#allocation14 + $0x20] sm:$0xff]
    %v986 = vld [vmem:[#allocation14 + $0x28] sm:$0xff]
    %v987 = vld [vmem:[#allocation14 + $0x30] sm:$0xff]
    %v988 = vld [vmem:[#allocation14 + $0x38] sm:$0xff]
    %v989 = vld [vmem:[#allocation14 + $0x40] sm:$0xff]
    %v990 = vld [vmem:[#allocation14 + $0x48] sm:$0xff]
    %v991 = vld [vmem:[#allocation14 + $0x50] sm:$0xff]
    %v992 = vld [vmem:[#allocation14 + $0x58] sm:$0xff]
    %v993 = vld [vmem:[#allocation14 + $0x60] sm:$0xff]
    %v994 = vld [vmem:[#allocation14 + $0x68] sm:$0xff]
    %v995 = vld [vmem:[#allocation14 + $0x70] sm:$0xff]
    %v996 = vld [vmem:[#allocation14 + $0x78] sm:$0xff]
    %v997 = vld [vmem:[#allocation14 + $0x80] sm:$0xff]
    %v998 = vld [vmem:[#allocation14 + $0x88] sm:$0xff]
    %v999 = vld [vmem:[#allocation14 + $0x90] sm:$0xff]
    %v1000 = vld [vmem:[#allocation14 + $0x98] sm:$0xff]
    %v1001 = vld [vmem:[#allocation14 + $0xa0] sm:$0xff]
    %v1002 = vld [vmem:[#allocation14 + $0xa8] sm:$0xff]
    %v1003 = vld [vmem:[#allocation14 + $0xb0] sm:$0xff]
    %v1004 = vld [vmem:[#allocation14 + $0xb8] sm:$0xff]
    %v1005 = vld [vmem:[#allocation14 + $0xc0] sm:$0xff]
    %v1006 = vld [vmem:[#allocation14 + $0xc8] sm:$0xff]
    %v1007 = vld [vmem:[#allocation14 + $0xd0] sm:$0xff]
    %v1008 = vld [vmem:[#allocation14 + $0xd8] sm:$0xff]
    %v1009 = vld [vmem:[#allocation14 + $0xe0] sm:$0xff]
    %v1010 = vld [vmem:[#allocation14 + $0xe8] sm:$0xff]
    %v1011 = vld [vmem:[#allocation14 + $0xf0] sm:$0xff]
    %v1012 = vld [vmem:[#allocation14 + $0xf8] sm:$0xff]
    %v1013 = vld [vmem:[#allocation14 + $0x100] sm:$0xff]
    %v1014 = vld [vmem:[#allocation14 + $0x108] sm:$0xff]
    %v1015 = vld [vmem:[#allocation14 + $0x110] sm:$0xff]
    %v1016 = vld [vmem:[#allocation14 + $0x118] sm:$0xff]
    %v1017 = vld [vmem:[#allocation14 + $0x120] sm:$0xff]
    %v1018 = vld [vmem:[#allocation14 + $0x128] sm:$0xff]
    %v1019 = vld [vmem:[#allocation14 + $0x130] sm:$0xff]
    %v1020 = vld [vmem:[#allocation14 + $0x138] sm:$0xff]
    %v1021 = vld [vmem:[#allocation14 + $0x140] sm:$0xff]
    %v1022 = vld [vmem:[#allocation14 + $0x148] sm:$0xff]
    %v1023 = vld [vmem:[#allocation14 + $0x150] sm:$0xff]
    %v1024 = vld [vmem:[#allocation14 + $0x158] sm:$0xff]
    %v1025 = vld [vmem:[#allocation14 + $0x160] sm:$0xff]
    %v1026 = vld [vmem:[#allocation14 + $0x168] sm:$0xff]
    %v1027 = vld [vmem:[#allocation14 + $0x170] sm:$0xff]
    %v1028 = vld [vmem:[#allocation14 + $0x178] sm:$0xff]
    %v1029 = vld [vmem:[#allocation14 + $0x180] sm:$0xff]
    %v1030 = vld [vmem:[#allocation14 + $0x188] sm:$0xff]
    %v1031 = vld [vmem:[#allocation14 + $0x190] sm:$0xff]
    %v1032 = vld [vmem:[#allocation14 + $0x198] sm:$0xff]
    %v1033 = vld [vmem:[#allocation14 + $0x1a0] sm:$0xff]
    %v1034 = vld [vmem:[#allocation14 + $0x1a8] sm:$0xff]
    %v1035 = vld [vmem:[#allocation14 + $0x1b0] sm:$0xff]
    %v1036 = vld [vmem:[#allocation14 + $0x1b8] sm:$0xff]
    %v1037 = vld [vmem:[#allocation14 + $0x1c0] sm:$0xff]
    %v1038 = vld [vmem:[#allocation14 + $0x1c8] sm:$0xff]
    %v1039 = vld [vmem:[#allocation14 + $0x1d0] sm:$0xff]
    %v1040 = vld [vmem:[#allocation14 + $0x1d8] sm:$0xff]
    %v1041 = vld [vmem:[#allocation14 + $0x1e0] sm:$0xff]
    %v1042 = vld [vmem:[#allocation14 + $0x1e8] sm:$0xff]
    %v1043 = vld [vmem:[#allocation14 + $0x1f0] sm:$0xff]
    %v1044 = vld [vmem:[#allocation14 + $0x1f8] sm:$0xff]
    %1045 = vmatprep.subr.mxu0 %v982
    %1046 = vmatpush1.msra.mxu0 %v981
    %1047 = vmatprep.subr.mxu0 %v986
    %1048 = vmatpush1.msra.mxu0 %v985
    %1049 = vmatprep.subr.mxu0 %v990
    %1050 = vmatpush1.msra.mxu0 %v989
    %1051 = vmatprep.subr.mxu0 %v994
    %1052 = vmatpush1.msra.mxu0 %v993
    %1053 = vmatprep.subr.mxu0 %v998
    %1054 = vmatpush1.msra.mxu0 %v997
    %1055 = vmatprep.subr.mxu0 %v1002
    %1056 = vmatpush1.msra.mxu0 %v1001
    %1057 = vmatprep.subr.mxu0 %v1006
    %1058 = vmatpush1.msra.mxu0 %v1005
    %1059 = vmatprep.subr.mxu0 %v1010
    %1060 = vmatpush1.msra.mxu0 %v1009
    %1061 = vmatprep.subr.mxu0 %v1014
    %1062 = vmatpush1.msra.mxu0 %v1013
    %1063 = vmatprep.subr.mxu0 %v1018
    %1064 = vmatpush1.msra.mxu0 %v1017
    %1065 = vmatprep.subr.mxu0 %v1022
    %1066 = vmatpush1.msra.mxu0 %v1021
    %1067 = vmatprep.subr.mxu0 %v1026
    %1068 = vmatpush1.msra.mxu0 %v1025
    %1069 = vmatprep.subr.mxu0 %v1030
    %1070 = vmatpush1.msra.mxu0 %v1029
    %1071 = vmatprep.subr.mxu0 %v1034
    %1072 = vmatpush1.msra.mxu0 %v1033
    %1073 = vmatprep.subr.mxu0 %v1038
    %1074 = vmatpush1.msra.mxu0 %v1037
    %1075 = vmatprep.subr.mxu0 %v1042
    %1076 = vmatpush1.msra.mxu0 %v1041
    %1077 = vmatprep.subr.mxu0 0.0
    %1078 = vmatpush1.msra.mxu0 0.0
    %1079 = vmatprep.subr.mxu0 0.0
    %1080 = vmatpush1.msra.mxu0 0.0
    %1081 = vmatprep.subr.mxu0 0.0
    %1082 = vmatpush1.msra.mxu0 0.0
    %1083 = vmatprep.subr.mxu0 0.0
    %1084 = vmatpush1.msra.mxu0 0.0
    %1085 = vmatprep.subr.mxu0 0.0
    %1086 = vmatpush1.msra.mxu0 0.0
    %1087 = vmatprep.subr.mxu0 0.0
    %1088 = vmatpush1.msra.mxu0 0.0
    %1089 = vmatprep.subr.mxu0 0.0
    %1090 = vmatpush1.msra.mxu0 0.0
    %1091 = vmatprep.subr.mxu0 0.0
    %1092 = vmatpush1.msra.mxu0 0.0
    %1093 = vmatprep.subr.mxu0 0.0
    %1094 = vmatpush1.msra.mxu0 0.0
    %1095 = vmatprep.subr.mxu0 0.0
    %1096 = vmatpush1.msra.mxu0 0.0
    %1097 = vmatprep.subr.mxu0 0.0
    %1098 = vmatpush1.msra.mxu0 0.0
    %1099 = vmatprep.subr.mxu0 0.0
    %1100 = vmatpush1.msra.mxu0 0.0
    %1101 = vmatprep.subr.mxu0 0.0
    %1102 = vmatpush1.msra.mxu0 0.0
    %1103 = vmatprep.subr.mxu0 0.0
    %1104 = vmatpush1.msra.mxu0 0.0
    %1105 = vmatprep.subr.mxu0 0.0
    %1106 = vmatpush1.msra.mxu0 0.0
    %1107 = vmatprep.subr.mxu0 0.0
    %1108 = vmatpush1.msra.mxu0 0.0
    %1109 = vmatprep.mubr.f32.mxu0 0.0
    %1110 = vmatmul.mubr.f32.gmra.mrb[0].mxu0 0.0
    %v1111 = vpop.f32.mrb[0].mxu0
    %v1112 = vadd.f32 0.0, %v1111
    %v1113 = vpop.f32.mrb[0].mxu0
    %v1114 = vadd.f32 0.0, %v1113
    %1115 = vdwg.mxu0
    %1116 = vmatprep.subr.mxu0 %v984
    %1117 = vmatpush1.msra.mxu0 %v983
    %1118 = vmatprep.subr.mxu0 %v988
    %1119 = vmatpush1.msra.mxu0 %v987
    %1120 = vmatprep.subr.mxu0 %v992
    %1121 = vmatpush1.msra.mxu0 %v991
    %1122 = vmatprep.subr.mxu0 %v996
    %1123 = vmatpush1.msra.mxu0 %v995
    %1124 = vmatprep.subr.mxu0 %v1000
    %1125 = vmatpush1.msra.mxu0 %v999
    %1126 = vmatprep.subr.mxu0 %v1004
    %1127 = vmatpush1.msra.mxu0 %v1003
    %1128 = vmatprep.subr.mxu0 %v1008
    %1129 = vmatpush1.msra.mxu0 %v1007
    %1130 = vmatprep.subr.mxu0 %v1012
    %1131 = vmatpush1.msra.mxu0 %v1011
    %1132 = vmatprep.subr.mxu0 %v1016
    %1133 = vmatpush1.msra.mxu0 %v1015
    %1134 = vmatprep.subr.mxu0 %v1020
    %1135 = vmatpush1.msra.mxu0 %v1019
    %1136 = vmatprep.subr.mxu0 %v1024
    %1137 = vmatpush1.msra.mxu0 %v1023
    %1138 = vmatprep.subr.mxu0 %v1028
    %1139 = vmatpush1.msra.mxu0 %v1027
    %1140 = vmatprep.subr.mxu0 %v1032
    %1141 = vmatpush1.msra.mxu0 %v1031
    %1142 = vmatprep.subr.mxu0 %v1036
    %1143 = vmatpush1.msra.mxu0 %v1035
    %1144 = vmatprep.subr.mxu0 %v1040
    %1145 = vmatpush1.msra.mxu0 %v1039
    %1146 = vmatprep.subr.mxu0 %v1044
    %1147 = vmatpush1.msra.mxu0 %v1043
    %1148 = vmatprep.subr.mxu0 0.0
    %1149 = vmatpush1.msra.mxu0 0.0
    %1150 = vmatprep.subr.mxu0 0.0
    %1151 = vmatpush1.msra.mxu0 0.0
    %1152 = vmatprep.subr.mxu0 0.0
    %1153 = vmatpush1.msra.mxu0 0.0
    %1154 = vmatprep.subr.mxu0 0.0
    %1155 = vmatpush1.msra.mxu0 0.0
    %1156 = vmatprep.subr.mxu0 0.0
    %1157 = vmatpush1.msra.mxu0 0.0
    %1158 = vmatprep.subr.mxu0 0.0
    %1159 = vmatpush1.msra.mxu0 0.0
    %1160 = vmatprep.subr.mxu0 0.0
    %1161 = vmatpush1.msra.mxu0 0.0
    %1162 = vmatprep.subr.mxu0 0.0
    %1163 = vmatpush1.msra.mxu0 0.0
    %1164 = vmatprep.subr.mxu0 0.0
    %1165 = vmatpush1.msra.mxu0 0.0
    %1166 = vmatprep.subr.mxu0 0.0
    %1167 = vmatpush1.msra.mxu0 0.0
    %1168 = vmatprep.subr.mxu0 0.0
    %1169 = vmatpush1.msra.mxu0 0.0
    %1170 = vmatprep.subr.mxu0 0.0
    %1171 = vmatpush1.msra.mxu0 0.0
    %1172 = vmatprep.subr.mxu0 0.0
    %1173 = vmatpush1.msra.mxu0 0.0
    %1174 = vmatprep.subr.mxu0 0.0
    %1175 = vmatpush1.msra.mxu0 0.0
    %1176 = vmatprep.subr.mxu0 0.0
    %1177 = vmatpush1.msra.mxu0 0.0
    %1178 = vmatprep.subr.mxu0 0.0
    %1179 = vmatpush1.msra.mxu0 0.0
    %1180 = vmatprep.mubr.f32.mxu0 0.0
    %1181 = vmatmul.mubr.f32.gmra.mrb[0].mxu0 0.0
    %v1182 = vpop.f32.mrb[0].mxu0
    %v1183 = vadd.f32 0.0, %v1182
    %v1184 = vpop.f32.mrb[0].mxu0
    %v1185 = vadd.f32 0.0, %v1184
    %1186 = vdwg.mxu0
    %v1187 = vadd.f32 %v977, %v1112
    %v1188 = vadd.f32 %v978, %v1114
    %v1189 = vadd.f32 %v979, %v1183
    %v1190 = vadd.f32 %v980, %v1185
    %v1191 = vxor.u32 %v972, 2147483648
    %v1192 = vmul.f32 %v1191, 1.442695
    %v1193 = vpow.pop %v1192
    %v1194 = vadd.f32 %v1193, 1.0
    %v1195 = vrcp.pop %v1194
    %v1196 = vmul.f32 1.0, %v1195
    %v1197 = vxor.u32 %v973, 2147483648
    %v1198 = vmul.f32 %v1197, 1.442695
    %v1199 = vpow.pop %v1198
    %v1200 = vadd.f32 %v1199, 1.0
    %v1201 = vrcp.pop %v1200
    %v1202 = vmul.f32 1.0, %v1201
    %v1203 = vtanh.pop %v974
    %v1204 = vxor.u32 %v975, 2147483648
    %v1205 = vmul.f32 %v1204, 1.442695
    %v1206 = vpow.pop %v1205
    %v1207 = vadd.f32 %v1206, 1.0
    %v1208 = vrcp.pop %v1207
    %v1209 = vmul.f32 1.0, %v1208
    %v1210 = vmul.f32 %v1202, 0.0
    %v1211 = vmul.f32 %v1196, %v1203
    %v1212 = vadd.f32 %v1210, %v1211
    %v1213 = vtanh.pop %v1212
    %v1214 = vmul.f32 %v1209, %v1213
    %v1215 = vxor.u32 %v1187, 2147483648
    %v1216 = vmul.f32 %v1215, 1.442695
    %v1217 = vpow.pop %v1216
    %v1218 = vadd.f32 %v1217, 1.0
    %v1219 = vrcp.pop %v1218
    %v1220 = vmul.f32 1.0, %v1219
    %v1221 = vxor.u32 %v1188, 2147483648
    %v1222 = vmul.f32 %v1221, 1.442695
    %v1223 = vpow.pop %v1222
    %v1224 = vadd.f32 %v1223, 1.0
    %v1225 = vrcp.pop %v1224
    %v1226 = vmul.f32 1.0, %v1225
    %v1227 = vtanh.pop %v1189
    %v1228 = vxor.u32 %v1190, 2147483648
    %v1229 = vmul.f32 %v1228, 1.442695
    %v1230 = vpow.pop %v1229
    %v1231 = vadd.f32 %v1230, 1.0
    %v1232 = vrcp.pop %v1231
    %v1233 = vmul.f32 1.0, %v1232
    %v1234 = vmul.f32 %v1226, 0.0
    %v1235 = vmul.f32 %v1220, %v1227
    %v1236 = vadd.f32 %v1234, %v1235
    %v1237 = vtanh.pop %v1236
    %v1238 = vmul.f32 %v1233, %v1237
    %v1239 = vsel %vm760, 1, 0
    %1240 = vset.pattern.permute.xlu0 0
    %1241 = vperm.xlu0 %1240, %v1239
    %v1242 = vpop.permute.xlu0 %1241
    %vm1243 = vcmp.eq.s32.totalorder %v1242, 1
    %v1244 = vsel %vm1243, %v1214, 0.0
    %1245 = vst [vmem:[#allocation4] sm:$0xff] %v1244
    %v1246 = vsel %vm761, 1, 0
    %1247 = vset.pattern.permute.xlu0 0
    %1248 = vperm.xlu0 %1247, %v1246
    %v1249 = vpop.permute.xlu0 %1248
    %vm1250 = vcmp.eq.s32.totalorder %v1249, 1
    %v1251 = vsel %vm1250, %v1238, 0.0
    %s1252 = scalar_lea.vmem [#allocation5], 56
    %1253 = vst [vmem:[%s1252] sm:$0xff] %v1251
    %v1254 = vsel %vm1243, %v1212, 0.0
    %v1255 = vsel %vm1250, %v1236, 0.0
    %vm1256 = vcmp.gt.s32.totalorder %v759, 1
    %vm1257 = vcmp.gt.s32.totalorder %v759, 6
    %s1258 = scalar_lea.vmem [#allocation2], 32
    %v1259 = vld [vmem:[%s1258] sm:$0xff]
    %v1260 = vld [vmem:[%s1258 + $0x8] sm:$0xff]
    %v1261 = vld [vmem:[%s1258 + $0x10] sm:$0xff]
    %v1262 = vld [vmem:[%s1258 + $0x18] sm:$0xff]
    %v1263 = vld [vmem:[#allocation12] sm:$0xff]
    %v1264 = vld [vmem:[#allocation12 + $0x8] sm:$0xff]
    %v1265 = vld [vmem:[#allocation12 + $0x10] sm:$0xff]
    %v1266 = vld [vmem:[#allocation12 + $0x18] sm:$0xff]
    %v1267 = vld [vmem:[#allocation12 + $0x20] sm:$0xff]
    %v1268 = vld [vmem:[#allocation12 + $0x28] sm:$0xff]
    %v1269 = vld [vmem:[#allocation12 + $0x30] sm:$0xff]
    %v1270 = vld [vmem:[#allocation12 + $0x38] sm:$0xff]
    %v1271 = vld [vmem:[#allocation12 + $0x40] sm:$0xff]
    %v1272 = vld [vmem:[#allocation12 + $0x48] sm:$0xff]
    %v1273 = vld [vmem:[#allocation12 + $0x50] sm:$0xff]
    %v1274 = vld [vmem:[#allocation12 + $0x58] sm:$0xff]
    %v1275 = vld [vmem:[#allocation12 + $0x60] sm:$0xff]
    %v1276 = vld [vmem:[#allocation12 + $0x68] sm:$0xff]
    %v1277 = vld [vmem:[#allocation12 + $0x70] sm:$0xff]
    %v1278 = vld [vmem:[#allocation12 + $0x78] sm:$0xff]
    %v1279 = vld [vmem:[#allocation12 + $0x80] sm:$0xff]
    %v1280 = vld [vmem:[#allocation12 + $0x88] sm:$0xff]
    %v1281 = vld [vmem:[#allocation12 + $0x90] sm:$0xff]
    %v1282 = vld [vmem:[#allocation12 + $0x98] sm:$0xff]
    %v1283 = vld [vmem:[#allocation12 + $0xa0] sm:$0xff]
    %v1284 = vld [vmem:[#allocation12 + $0xa8] sm:$0xff]
    %v1285 = vld [vmem:[#allocation12 + $0xb0] sm:$0xff]
    %v1286 = vld [vmem:[#allocation12 + $0xb8] sm:$0xff]
    %v1287 = vld [vmem:[#allocation12 + $0xc0] sm:$0xff]
    %v1288 = vld [vmem:[#allocation12 + $0xc8] sm:$0xff]
    %v1289 = vld [vmem:[#allocation12 + $0xd0] sm:$0xff]
    %v1290 = vld [vmem:[#allocation12 + $0xd8] sm:$0xff]
    %v1291 = vld [vmem:[#allocation12 + $0xe0] sm:$0xff]
    %v1292 = vld [vmem:[#allocation12 + $0xe8] sm:$0xff]
    %v1293 = vld [vmem:[#allocation12 + $0xf0] sm:$0xff]
    %v1294 = vld [vmem:[#allocation12 + $0xf8] sm:$0xff]
    %v1295 = vld [vmem:[#allocation12 + $0x100] sm:$0xff]
    %v1296 = vld [vmem:[#allocation12 + $0x108] sm:$0xff]
    %v1297 = vld [vmem:[#allocation12 + $0x110] sm:$0xff]
    %v1298 = vld [vmem:[#allocation12 + $0x118] sm:$0xff]
    %v1299 = vld [vmem:[#allocation12 + $0x120] sm:$0xff]
    %v1300 = vld [vmem:[#allocation12 + $0x128] sm:$0xff]
    %v1301 = vld [vmem:[#allocation12 + $0x130] sm:$0xff]
    %v1302 = vld [vmem:[#allocation12 + $0x138] sm:$0xff]
    %v1303 = vld [vmem:[#allocation12 + $0x140] sm:$0xff]
    %v1304 = vld [vmem:[#allocation12 + $0x148] sm:$0xff]
    %v1305 = vld [vmem:[#allocation12 + $0x150] sm:$0xff]
    %v1306 = vld [vmem:[#allocation12 + $0x158] sm:$0xff]
    %v1307 = vld [vmem:[#allocation12 + $0x160] sm:$0xff]
    %v1308 = vld [vmem:[#allocation12 + $0x168] sm:$0xff]
    %v1309 = vld [vmem:[#allocation12 + $0x170] sm:$0xff]
    %v1310 = vld [vmem:[#allocation12 + $0x178] sm:$0xff]
    %v1311 = vld [vmem:[#allocation12 + $0x180] sm:$0xff]
    %v1312 = vld [vmem:[#allocation12 + $0x188] sm:$0xff]
    %v1313 = vld [vmem:[#allocation12 + $0x190] sm:$0xff]
    %v1314 = vld [vmem:[#allocation12 + $0x198] sm:$0xff]
    %v1315 = vld [vmem:[#allocation12 + $0x1a0] sm:$0xff]
    %v1316 = vld [vmem:[#allocation12 + $0x1a8] sm:$0xff]
    %v1317 = vld [vmem:[#allocation12 + $0x1b0] sm:$0xff]
    %v1318 = vld [vmem:[#allocation12 + $0x1b8] sm:$0xff]
    %v1319 = vld [vmem:[#allocation12 + $0x1c0] sm:$0xff]
    %v1320 = vld [vmem:[#allocation12 + $0x1c8] sm:$0xff]
    %v1321 = vld [vmem:[#allocation12 + $0x1d0] sm:$0xff]
    %v1322 = vld [vmem:[#allocation12 + $0x1d8] sm:$0xff]
    %v1323 = vld [vmem:[#allocation12 + $0x1e0] sm:$0xff]
    %v1324 = vld [vmem:[#allocation12 + $0x1e8] sm:$0xff]
    %v1325 = vld [vmem:[#allocation12 + $0x1f0] sm:$0xff]
    %v1326 = vld [vmem:[#allocation12 + $0x1f8] sm:$0xff]
    %1327 = vmatprep.subr.mxu0 %v1264
    %1328 = vmatpush1.msra.mxu0 %v1263
    %1329 = vmatprep.subr.mxu0 %v1268
    %1330 = vmatpush1.msra.mxu0 %v1267
    %1331 = vmatprep.subr.mxu0 %v1272
    %1332 = vmatpush1.msra.mxu0 %v1271
    %1333 = vmatprep.subr.mxu0 %v1276
    %1334 = vmatpush1.msra.mxu0 %v1275
    %1335 = vmatprep.subr.mxu0 %v1280
    %1336 = vmatpush1.msra.mxu0 %v1279
    %1337 = vmatprep.subr.mxu0 %v1284
    %1338 = vmatpush1.msra.mxu0 %v1283
    %1339 = vmatprep.subr.mxu0 %v1288
    %1340 = vmatpush1.msra.mxu0 %v1287
    %1341 = vmatprep.subr.mxu0 %v1292
    %1342 = vmatpush1.msra.mxu0 %v1291
    %1343 = vmatprep.subr.mxu0 %v1296
    %1344 = vmatpush1.msra.mxu0 %v1295
    %1345 = vmatprep.subr.mxu0 %v1300
    %1346 = vmatpush1.msra.mxu0 %v1299
    %1347 = vmatprep.subr.mxu0 %v1304
    %1348 = vmatpush1.msra.mxu0 %v1303
    %1349 = vmatprep.subr.mxu0 %v1308
    %1350 = vmatpush1.msra.mxu0 %v1307
    %1351 = vmatprep.subr.mxu0 %v1312
    %1352 = vmatpush1.msra.mxu0 %v1311
    %1353 = vmatprep.subr.mxu0 %v1316
    %1354 = vmatpush1.msra.mxu0 %v1315
    %1355 = vmatprep.subr.mxu0 %v1320
    %1356 = vmatpush1.msra.mxu0 %v1319
    %1357 = vmatprep.subr.mxu0 %v1324
    %1358 = vmatpush1.msra.mxu0 %v1323
    %1359 = vmatprep.subr.mxu0 0.0
    %1360 = vmatpush1.msra.mxu0 0.0
    %1361 = vmatprep.subr.mxu0 0.0
    %1362 = vmatpush1.msra.mxu0 0.0
    %1363 = vmatprep.subr.mxu0 0.0
    %1364 = vmatpush1.msra.mxu0 0.0
    %1365 = vmatprep.subr.mxu0 0.0
    %1366 = vmatpush1.msra.mxu0 0.0
    %1367 = vmatprep.subr.mxu0 0.0
    %1368 = vmatpush1.msra.mxu0 0.0
    %1369 = vmatprep.subr.mxu0 0.0
    %1370 = vmatpush1.msra.mxu0 0.0
    %1371 = vmatprep.subr.mxu0 0.0
    %1372 = vmatpush1.msra.mxu0 0.0
    %1373 = vmatprep.subr.mxu0 0.0
    %1374 = vmatpush1.msra.mxu0 0.0
    %1375 = vmatprep.subr.mxu0 0.0
    %1376 = vmatpush1.msra.mxu0 0.0
    %1377 = vmatprep.subr.mxu0 0.0
    %1378 = vmatpush1.msra.mxu0 0.0
    %1379 = vmatprep.subr.mxu0 0.0
    %1380 = vmatpush1.msra.mxu0 0.0
    %1381 = vmatprep.subr.mxu0 0.0
    %1382 = vmatpush1.msra.mxu0 0.0
    %1383 = vmatprep.subr.mxu0 0.0
    %1384 = vmatpush1.msra.mxu0 0.0
    %1385 = vmatprep.subr.mxu0 0.0
    %1386 = vmatpush1.msra.mxu0 0.0
    %1387 = vmatprep.subr.mxu0 0.0
    %1388 = vmatpush1.msra.mxu0 0.0
    %1389 = vmatprep.subr.mxu0 0.0
    %1390 = vmatpush1.msra.mxu0 0.0
    %1391 = vmatprep.mubr.f32.mxu0 0.0
    %1392 = vmatmul.mubr.f32.gmra.mrb[0].mxu0 %v1244
    %v1393 = vpop.f32.mrb[0].mxu0
    %v1394 = vadd.f32 0.0, %v1393
    %v1395 = vpop.f32.mrb[0].mxu0
    %v1396 = vadd.f32 0.0, %v1395
    %1397 = vdwg.mxu0
    %1398 = vmatprep.subr.mxu0 %v1266
    %1399 = vmatpush1.msra.mxu0 %v1265
    %1400 = vmatprep.subr.mxu0 %v1270
    %1401 = vmatpush1.msra.mxu0 %v1269
    %1402 = vmatprep.subr.mxu0 %v1274
    %1403 = vmatpush1.msra.mxu0 %v1273
    %1404 = vmatprep.subr.mxu0 %v1278
    %1405 = vmatpush1.msra.mxu0 %v1277
    %1406 = vmatprep.subr.mxu0 %v1282
    %1407 = vmatpush1.msra.mxu0 %v1281
    %1408 = vmatprep.subr.mxu0 %v1286
    %1409 = vmatpush1.msra.mxu0 %v1285
    %1410 = vmatprep.subr.mxu0 %v1290
    %1411 = vmatpush1.msra.mxu0 %v1289
    %1412 = vmatprep.subr.mxu0 %v1294
    %1413 = vmatpush1.msra.mxu0 %v1293
    %1414 = vmatprep.subr.mxu0 %v1298
    %1415 = vmatpush1.msra.mxu0 %v1297
    %1416 = vmatprep.subr.mxu0 %v1302
    %1417 = vmatpush1.msra.mxu0 %v1301
    %1418 = vmatprep.subr.mxu0 %v1306
    %1419 = vmatpush1.msra.mxu0 %v1305
    %1420 = vmatprep.subr.mxu0 %v1310
    %1421 = vmatpush1.msra.mxu0 %v1309
    %1422 = vmatprep.subr.mxu0 %v1314
    %1423 = vmatpush1.msra.mxu0 %v1313
    %1424 = vmatprep.subr.mxu0 %v1318
    %1425 = vmatpush1.msra.mxu0 %v1317
    %1426 = vmatprep.subr.mxu0 %v1322
    %1427 = vmatpush1.msra.mxu0 %v1321
    %1428 = vmatprep.subr.mxu0 %v1326
    %1429 = vmatpush1.msra.mxu0 %v1325
    %1430 = vmatprep.subr.mxu0 0.0
    %1431 = vmatpush1.msra.mxu0 0.0
    %1432 = vmatprep.subr.mxu0 0.0
    %1433 = vmatpush1.msra.mxu0 0.0
    %1434 = vmatprep.subr.mxu0 0.0
    %1435 = vmatpush1.msra.mxu0 0.0
    %1436 = vmatprep.subr.mxu0 0.0
    %1437 = vmatpush1.msra.mxu0 0.0
    %1438 = vmatprep.subr.mxu0 0.0
    %1439 = vmatpush1.msra.mxu0 0.0
    %1440 = vmatprep.subr.mxu0 0.0
    %1441 = vmatpush1.msra.mxu0 0.0
    %1442 = vmatprep.subr.mxu0 0.0
    %1443 = vmatpush1.msra.mxu0 0.0
    %1444 = vmatprep.subr.mxu0 0.0
    %1445 = vmatpush1.msra.mxu0 0.0
    %1446 = vmatprep.subr.mxu0 0.0
    %1447 = vmatpush1.msra.mxu0 0.0
    %1448 = vmatprep.subr.mxu0 0.0
    %1449 = vmatpush1.msra.mxu0 0.0
    %1450 = vmatprep.subr.mxu0 0.0
    %1451 = vmatpush1.msra.mxu0 0.0
    %1452 = vmatprep.subr.mxu0 0.0
    %1453 = vmatpush1.msra.mxu0 0.0
    %1454 = vmatprep.subr.mxu0 0.0
    %1455 = vmatpush1.msra.mxu0 0.0
    %1456 = vmatprep.subr.mxu0 0.0
    %1457 = vmatpush1.msra.mxu0 0.0
    %1458 = vmatprep.subr.mxu0 0.0
    %1459 = vmatpush1.msra.mxu0 0.0
    %1460 = vmatprep.subr.mxu0 0.0
    %1461 = vmatpush1.msra.mxu0 0.0
    %1462 = vmatprep.mubr.f32.mxu0 0.0
    %1463 = vmatmul.mubr.f32.gmra.mrb[0].mxu0 %v1244
    %v1464 = vpop.f32.mrb[0].mxu0
    %v1465 = vadd.f32 0.0, %v1464
    %v1466 = vpop.f32.mrb[0].mxu0
    %v1467 = vadd.f32 0.0, %v1466
    %1468 = vdwg.mxu0
    %v1469 = vadd.f32 %v1259, %v1394
    %v1470 = vadd.f32 %v1260, %v1396
    %v1471 = vadd.f32 %v1261, %v1465
    %v1472 = vadd.f32 %v1262, %v1467
    %s1473 = scalar_lea.vmem [#allocation3], 192
    %v1474 = vld [vmem:[%s1473] sm:$0xff]
    %v1475 = vld [vmem:[%s1473 + $0x8] sm:$0xff]
    %v1476 = vld [vmem:[%s1473 + $0x10] sm:$0xff]
    %v1477 = vld [vmem:[%s1473 + $0x18] sm:$0xff]
    %v1478 = vld [vmem:[#allocation14] sm:$0xff]
    %v1479 = vld [vmem:[#allocation14 + $0x8] sm:$0xff]
    %v1480 = vld [vmem:[#allocation14 + $0x10] sm:$0xff]
    %v1481 = vld [vmem:[#allocation14 + $0x18] sm:$0xff]
    %v1482 = vld [vmem:[#allocation14 + $0x20] sm:$0xff]
    %v1483 = vld [vmem:[#allocation14 + $0x28] sm:$0xff]
    %v1484 = vld [vmem:[#allocation14 + $0x30] sm:$0xff]
    %v1485 = vld [vmem:[#allocation14 + $0x38] sm:$0xff]
    %v1486 = vld [vmem:[#allocation14 + $0x40] sm:$0xff]
    %v1487 = vld [vmem:[#allocation14 + $0x48] sm:$0xff]
    %v1488 = vld [vmem:[#allocation14 + $0x50] sm:$0xff]
    %v1489 = vld [vmem:[#allocation14 + $0x58] sm:$0xff]
    %v1490 = vld [vmem:[#allocation14 + $0x60] sm:$0xff]
    %v1491 = vld [vmem:[#allocation14 + $0x68] sm:$0xff]
    %v1492 = vld [vmem:[#allocation14 + $0x70] sm:$0xff]
    %v1493 = vld [vmem:[#allocation14 + $0x78] sm:$0xff]
    %v1494 = vld [vmem:[#allocation14 + $0x80] sm:$0xff]
    %v1495 = vld [vmem:[#allocation14 + $0x88] sm:$0xff]
    %v1496 = vld [vmem:[#allocation14 + $0x90] sm:$0xff]
    %v1497 = vld [vmem:[#allocation14 + $0x98] sm:$0xff]
    %v1498 = vld [vmem:[#allocation14 + $0xa0] sm:$0xff]
    %v1499 = vld [vmem:[#allocation14 + $0xa8] sm:$0xff]
    %v1500 = vld [vmem:[#allocation14 + $0xb0] sm:$0xff]
    %v1501 = vld [vmem:[#allocation14 + $0xb8] sm:$0xff]
    %v1502 = vld [vmem:[#allocation14 + $0xc0] sm:$0xff]
    %v1503 = vld [vmem:[#allocation14 + $0xc8] sm:$0xff]
    %v1504 = vld [vmem:[#allocation14 + $0xd0] sm:$0xff]
    %v1505 = vld [vmem:[#allocation14 + $0xd8] sm:$0xff]
    %v1506 = vld [vmem:[#allocation14 + $0xe0] sm:$0xff]
    %v1507 = vld [vmem:[#allocation14 + $0xe8] sm:$0xff]
    %v1508 = vld [vmem:[#allocation14 + $0xf0] sm:$0xff]
    %v1509 = vld [vmem:[#allocation14 + $0xf8] sm:$0xff]
    %v1510 = vld [vmem:[#allocation14 + $0x100] sm:$0xff]
    %v1511 = vld [vmem:[#allocation14 + $0x108] sm:$0xff]
    %v1512 = vld [vmem:[#allocation14 + $0x110] sm:$0xff]
    %v1513 = vld [vmem:[#allocation14 + $0x118] sm:$0xff]
    %v1514 = vld [vmem:[#allocation14 + $0x120] sm:$0xff]
    %v1515 = vld [vmem:[#allocation14 + $0x128] sm:$0xff]
    %v1516 = vld [vmem:[#allocation14 + $0x130] sm:$0xff]
    %v1517 = vld [vmem:[#allocation14 + $0x138] sm:$0xff]
    %v1518 = vld [vmem:[#allocation14 + $0x140] sm:$0xff]
    %v1519 = vld [vmem:[#allocation14 + $0x148] sm:$0xff]
    %v1520 = vld [vmem:[#allocation14 + $0x150] sm:$0xff]
    %v1521 = vld [vmem:[#allocation14 + $0x158] sm:$0xff]
    %v1522 = vld [vmem:[#allocation14 + $0x160] sm:$0xff]
    %v1523 = vld [vmem:[#allocation14 + $0x168] sm:$0xff]
    %v1524 = vld [vmem:[#allocation14 + $0x170] sm:$0xff]
    %v1525 = vld [vmem:[#allocation14 + $0x178] sm:$0xff]
    %v1526 = vld [vmem:[#allocation14 + $0x180] sm:$0xff]
    %v1527 = vld [vmem:[#allocation14 + $0x188] sm:$0xff]
    %v1528 = vld [vmem:[#allocation14 + $0x190] sm:$0xff]
    %v1529 = vld [vmem:[#allocation14 + $0x198] sm:$0xff]
    %v1530 = vld [vmem:[#allocation14 + $0x1a0] sm:$0xff]
    %v1531 = vld [vmem:[#allocation14 + $0x1a8] sm:$0xff]
    %v1532 = vld [vmem:[#allocation14 + $0x1b0] sm:$0xff]
    %v1533 = vld [vmem:[#allocation14 + $0x1b8] sm:$0xff]
    %v1534 = vld [vmem:[#allocation14 + $0x1c0] sm:$0xff]
    %v1535 = vld [vmem:[#allocation14 + $0x1c8] sm:$0xff]
    %v1536 = vld [vmem:[#allocation14 + $0x1d0] sm:$0xff]
    %v1537 = vld [vmem:[#allocation14 + $0x1d8] sm:$0xff]
    %v1538 = vld [vmem:[#allocation14 + $0x1e0] sm:$0xff]
    %v1539 = vld [vmem:[#allocation14 + $0x1e8] sm:$0xff]
    %v1540 = vld [vmem:[#allocation14 + $0x1f0] sm:$0xff]
    %v1541 = vld [vmem:[#allocation14 + $0x1f8] sm:$0xff]
    %1542 = vmatprep.subr.mxu0 %v1479
    %1543 = vmatpush1.msra.mxu0 %v1478
    %1544 = vmatprep.subr.mxu0 %v1483
    %1545 = vmatpush1.msra.mxu0 %v1482
    %1546 = vmatprep.subr.mxu0 %v1487
    %1547 = vmatpush1.msra.mxu0 %v1486
    %1548 = vmatprep.subr.mxu0 %v1491
    %1549 = vmatpush1.msra.mxu0 %v1490
    %1550 = vmatprep.subr.mxu0 %v1495
    %1551 = vmatpush1.msra.mxu0 %v1494
    %1552 = vmatprep.subr.mxu0 %v1499
    %1553 = vmatpush1.msra.mxu0 %v1498
    %1554 = vmatprep.subr.mxu0 %v1503
    %1555 = vmatpush1.msra.mxu0 %v1502
    %1556 = vmatprep.subr.mxu0 %v1507
    %1557 = vmatpush1.msra.mxu0 %v1506
    %1558 = vmatprep.subr.mxu0 %v1511
    %1559 = vmatpush1.msra.mxu0 %v1510
    %1560 = vmatprep.subr.mxu0 %v1515
    %1561 = vmatpush1.msra.mxu0 %v1514
    %1562 = vmatprep.subr.mxu0 %v1519
    %1563 = vmatpush1.msra.mxu0 %v1518
    %1564 = vmatprep.subr.mxu0 %v1523
    %1565 = vmatpush1.msra.mxu0 %v1522
    %1566 = vmatprep.subr.mxu0 %v1527
    %1567 = vmatpush1.msra.mxu0 %v1526
    %1568 = vmatprep.subr.mxu0 %v1531
    %1569 = vmatpush1.msra.mxu0 %v1530
    %1570 = vmatprep.subr.mxu0 %v1535
    %1571 = vmatpush1.msra.mxu0 %v1534
    %1572 = vmatprep.subr.mxu0 %v1539
    %1573 = vmatpush1.msra.mxu0 %v1538
    %1574 = vmatprep.subr.mxu0 0.0
    %1575 = vmatpush1.msra.mxu0 0.0
    %1576 = vmatprep.subr.mxu0 0.0
    %1577 = vmatpush1.msra.mxu0 0.0
    %1578 = vmatprep.subr.mxu0 0.0
    %1579 = vmatpush1.msra.mxu0 0.0
    %1580 = vmatprep.subr.mxu0 0.0
    %1581 = vmatpush1.msra.mxu0 0.0
    %1582 = vmatprep.subr.mxu0 0.0
    %1583 = vmatpush1.msra.mxu0 0.0
    %1584 = vmatprep.subr.mxu0 0.0
    %1585 = vmatpush1.msra.mxu0 0.0
    %1586 = vmatprep.subr.mxu0 0.0
    %1587 = vmatpush1.msra.mxu0 0.0
    %1588 = vmatprep.subr.mxu0 0.0
    %1589 = vmatpush1.msra.mxu0 0.0
    %1590 = vmatprep.subr.mxu0 0.0
    %1591 = vmatpush1.msra.mxu0 0.0
    %1592 = vmatprep.subr.mxu0 0.0
    %1593 = vmatpush1.msra.mxu0 0.0
    %1594 = vmatprep.subr.mxu0 0.0
    %1595 = vmatpush1.msra.mxu0 0.0
    %1596 = vmatprep.subr.mxu0 0.0
    %1597 = vmatpush1.msra.mxu0 0.0
    %1598 = vmatprep.subr.mxu0 0.0
    %1599 = vmatpush1.msra.mxu0 0.0
    %1600 = vmatprep.subr.mxu0 0.0
    %1601 = vmatpush1.msra.mxu0 0.0
    %1602 = vmatprep.subr.mxu0 0.0
    %1603 = vmatpush1.msra.mxu0 0.0
    %1604 = vmatprep.subr.mxu0 0.0
    %1605 = vmatpush1.msra.mxu0 0.0
    %1606 = vmatprep.mubr.f32.mxu0 0.0
    %1607 = vmatmul.mubr.f32.gmra.mrb[0].mxu0 %v1251
    %v1608 = vpop.f32.mrb[0].mxu0
    %v1609 = vadd.f32 0.0, %v1608
    %v1610 = vpop.f32.mrb[0].mxu0
    %v1611 = vadd.f32 0.0, %v1610
    %1612 = vdwg.mxu0
    %1613 = vmatprep.subr.mxu0 %v1481
    %1614 = vmatpush1.msra.mxu0 %v1480
    %1615 = vmatprep.subr.mxu0 %v1485
    %1616 = vmatpush1.msra.mxu0 %v1484
    %1617 = vmatprep.subr.mxu0 %v1489
    %1618 = vmatpush1.msra.mxu0 %v1488
    %1619 = vmatprep.subr.mxu0 %v1493
    %1620 = vmatpush1.msra.mxu0 %v1492
    %1621 = vmatprep.subr.mxu0 %v1497
    %1622 = vmatpush1.msra.mxu0 %v1496
    %1623 = vmatprep.subr.mxu0 %v1501
    %1624 = vmatpush1.msra.mxu0 %v1500
    %1625 = vmatprep.subr.mxu0 %v1505
    %1626 = vmatpush1.msra.mxu0 %v1504
    %1627 = vmatprep.subr.mxu0 %v1509
    %1628 = vmatpush1.msra.mxu0 %v1508
    %1629 = vmatprep.subr.mxu0 %v1513
    %1630 = vmatpush1.msra.mxu0 %v1512
    %1631 = vmatprep.subr.mxu0 %v1517
    %1632 = vmatpush1.msra.mxu0 %v1516
    %1633 = vmatprep.subr.mxu0 %v1521
    %1634 = vmatpush1.msra.mxu0 %v1520
    %1635 = vmatprep.subr.mxu0 %v1525
    %1636 = vmatpush1.msra.mxu0 %v1524
    %1637 = vmatprep.subr.mxu0 %v1529
    %1638 = vmatpush1.msra.mxu0 %v1528
    %1639 = vmatprep.subr.mxu0 %v1533
    %1640 = vmatpush1.msra.mxu0 %v1532
    %1641 = vmatprep.subr.mxu0 %v1537
    %1642 = vmatpush1.msra.mxu0 %v1536
    %1643 = vmatprep.subr.mxu0 %v1541
    %1644 = vmatpush1.msra.mxu0 %v1540
    %1645 = vmatprep.subr.mxu0 0.0
    %1646 = vmatpush1.msra.mxu0 0.0
    %1647 = vmatprep.subr.mxu0 0.0
    %1648 = vmatpush1.msra.mxu0 0.0
    %1649 = vmatprep.subr.mxu0 0.0
    %1650 = vmatpush1.msra.mxu0 0.0
    %1651 = vmatprep.subr.mxu0 0.0
    %1652 = vmatpush1.msra.mxu0 0.0
    %1653 = vmatprep.subr.mxu0 0.0
    %1654 = vmatpush1.msra.mxu0 0.0
    %1655 = vmatprep.subr.mxu0 0.0
    %1656 = vmatpush1.msra.mxu0 0.0
    %1657 = vmatprep.subr.mxu0 0.0
    %1658 = vmatpush1.msra.mxu0 0.0
    %1659 = vmatprep.subr.mxu0 0.0
    %1660 = vmatpush1.msra.mxu0 0.0
    %1661 = vmatprep.subr.mxu0 0.0
    %1662 = vmatpush1.msra.mxu0 0.0
    %1663 = vmatprep.subr.mxu0 0.0
    %1664 = vmatpush1.msra.mxu0 0.0
    %1665 = vmatprep.subr.mxu0 0.0
    %1666 = vmatpush1.msra.mxu0 0.0
    %1667 = vmatprep.subr.mxu0 0.0
    %1668 = vmatpush1.msra.mxu0 0.0
    %1669 = vmatprep.subr.mxu0 0.0
    %1670 = vmatpush1.msra.mxu0 0.0
    %1671 = vmatprep.subr.mxu0 0.0
    %1672 = vmatpush1.msra.mxu0 0.0
    %1673 = vmatprep.subr.mxu0 0.0
    %1674 = vmatpush1.msra.mxu0 0.0
    %1675 = vmatprep.subr.mxu0 0.0
    %1676 = vmatpush1.msra.mxu0 0.0
    %1677 = vmatprep.mubr.f32.mxu0 0.0
    %1678 = vmatmul.mubr.f32.gmra.mrb[0].mxu0 %v1251
    %v1679 = vpop.f32.mrb[0].mxu0
    %v1680 = vadd.f32 0.0, %v1679
    %v1681 = vpop.f32.mrb[0].mxu0
    %v1682 = vadd.f32 0.0, %v1681
    %1683 = vdwg.mxu0
    %v1684 = vadd.f32 %v1474, %v1609
    %v1685 = vadd.f32 %v1475, %v1611
    %v1686 = vadd.f32 %v1476, %v1680
    %v1687 = vadd.f32 %v1477, %v1682
    %v1688 = vxor.u32 %v1469, 2147483648
    %v1689 = vmul.f32 %v1688, 1.442695
    %v1690 = vpow.pop %v1689
    %v1691 = vadd.f32 %v1690, 1.0
    %v1692 = vrcp.pop %v1691
    %v1693 = vmul.f32 1.0, %v1692
    %v1694 = vxor.u32 %v1470, 2147483648
    %v1695 = vmul.f32 %v1694, 1.442695
    %v1696 = vpow.pop %v1695
    %v1697 = vadd.f32 %v1696, 1.0
    %v1698 = vrcp.pop %v1697
    %v1699 = vmul.f32 1.0, %v1698
    %v1700 = vtanh.pop %v1471
    %v1701 = vxor.u32 %v1472, 2147483648
    %v1702 = vmul.f32 %v1701, 1.442695
    %v1703 = vpow.pop %v1702
    %v1704 = vadd.f32 %v1703, 1.0
    %v1705 = vrcp.pop %v1704
    %v1706 = vmul.f32 1.0, %v1705
    %v1707 = vmul.f32 %v1699, %v1254
    %v1708 = vmul.f32 %v1693, %v1700
    %v1709 = vadd.f32 %v1707, %v1708
    %v1710 = vtanh.pop %v1709
    %v1711 = vmul.f32 %v1706, %v1710
    %v1712 = vxor.u32 %v1684, 2147483648
    %v1713 = vmul.f32 %v1712, 1.442695
    %v1714 = vpow.pop %v1713
    %v1715 = vadd.f32 %v1714, 1.0
    %v1716 = vrcp.pop %v1715
    %v1717 = vmul.f32 1.0, %v1716
    %v1718 = vxor.u32 %v1685, 2147483648
    %v1719 = vmul.f32 %v1718, 1.442695
    %v1720 = vpow.pop %v1719
    %v1721 = vadd.f32 %v1720, 1.0
    %v1722 = vrcp.pop %v1721
    %v1723 = vmul.f32 1.0, %v1722
    %v1724 = vtanh.pop %v1686
    %v1725 = vxor.u32 %v1687, 2147483648
    %v1726 = vmul.f32 %v1725, 1.442695
    %v1727 = vpow.pop %v1726
    %v1728 = vadd.f32 %v1727, 1.0
    %v1729 = vrcp.pop %v1728
    %v1730 = vmul.f32 1.0, %v1729
    %v1731 = vmul.f32 %v1723, %v1255
    %v1732 = vmul.f32 %v1717, %v1724
    %v1733 = vadd.f32 %v1731, %v1732
    %v1734 = vtanh.pop %v1733
    %v1735 = vmul.f32 %v1730, %v1734
    %v1736 = vsel %vm1256, 1, 0
    %1737 = vset.pattern.permute.xlu0 0
    %1738 = vperm.xlu0 %1737, %v1736
    %v1739 = vpop.permute.xlu0 %1738
    %vm1740 = vcmp.eq.s32.totalorder %v1739, 1
    %v1741 = vsel %vm1740, %v1711, 0.0
    %s1742 = scalar_lea.vmem [#allocation4], 8
    %1743 = vst [vmem:[%s1742] sm:$0xff] %v1741
    %v1744 = vsel %vm1257, 1, 0
    %1745 = vset.pattern.permute.xlu0 0
    %1746 = vperm.xlu0 %1745, %v1744
    %v1747 = vpop.permute.xlu0 %1746
    %vm1748 = vcmp.eq.s32.totalorder %v1747, 1
    %v1749 = vsel %vm1748, %v1735, 0.0
    %s1750 = scalar_lea.vmem [#allocation5], 48
    %1751 = vst [vmem:[%s1750] sm:$0xff] %v1749
    %v1752 = vsel %vm1740, %v1711, %v1244
    %v1753 = vsel %vm1740, %v1709, %v1254
    %v1754 = vsel %vm1748, %v1735, %v1251
    %v1755 = vsel %vm1748, %v1733, %v1255
    %vm1756 = vcmp.gt.s32.totalorder %v759, 2
    %vm1757 = vcmp.gt.s32.totalorder %v759, 5
    %s1758 = scalar_lea.vmem [#allocation2], 64
    %v1759 = vld [vmem:[%s1758] sm:$0xff]
    %v1760 = vld [vmem:[%s1758 + $0x8] sm:$0xff]
    %v1761 = vld [vmem:[%s1758 + $0x10] sm:$0xff]
    %v1762 = vld [vmem:[%s1758 + $0x18] sm:$0xff]
    %v1763 = vld [vmem:[#allocation12] sm:$0xff]
    %v1764 = vld [vmem:[#allocation12 + $0x8] sm:$0xff]
    %v1765 = vld [vmem:[#allocation12 + $0x10] sm:$0xff]
    %v1766 = vld [vmem:[#allocation12 + $0x18] sm:$0xff]
    %v1767 = vld [vmem:[#allocation12 + $0x20] sm:$0xff]
    %v1768 = vld [vmem:[#allocation12 + $0x28] sm:$0xff]
    %v1769 = vld [vmem:[#allocation12 + $0x30] sm:$0xff]
    %v1770 = vld [vmem:[#allocation12 + $0x38] sm:$0xff]
    %v1771 = vld [vmem:[#allocation12 + $0x40] sm:$0xff]
    %v1772 = vld [vmem:[#allocation12 + $0x48] sm:$0xff]
    %v1773 = vld [vmem:[#allocation12 + $0x50] sm:$0xff]
    %v1774 = vld [vmem:[#allocation12 + $0x58] sm:$0xff]
    %v1775 = vld [vmem:[#allocation12 + $0x60] sm:$0xff]
    %v1776 = vld [vmem:[#allocation12 + $0x68] sm:$0xff]
    %v1777 = vld [vmem:[#allocation12 + $0x70] sm:$0xff]
    %v1778 = vld [vmem:[#allocation12 + $0x78] sm:$0xff]
    %v1779 = vld [vmem:[#allocation12 + $0x80] sm:$0xff]
    %v1780 = vld [vmem:[#allocation12 + $0x88] sm:$0xff]
    %v1781 = vld [vmem:[#allocation12 + $0x90] sm:$0xff]
    %v1782 = vld [vmem:[#allocation12 + $0x98] sm:$0xff]
    %v1783 = vld [vmem:[#allocation12 + $0xa0] sm:$0xff]
    %v1784 = vld [vmem:[#allocation12 + $0xa8] sm:$0xff]
    %v1785 = vld [vmem:[#allocation12 + $0xb0] sm:$0xff]
    %v1786 = vld [vmem:[#allocation12 + $0xb8] sm:$0xff]
    %v1787 = vld [vmem:[#allocation12 + $0xc0] sm:$0xff]
    %v1788 = vld [vmem:[#allocation12 + $0xc8] sm:$0xff]
    %v1789 = vld [vmem:[#allocation12 + $0xd0] sm:$0xff]
    %v1790 = vld [vmem:[#allocation12 + $0xd8] sm:$0xff]
    %v1791 = vld [vmem:[#allocation12 + $0xe0] sm:$0xff]
    %v1792 = vld [vmem:[#allocation12 + $0xe8] sm:$0xff]
    %v1793 = vld [vmem:[#allocation12 + $0xf0] sm:$0xff]
    %v1794 = vld [vmem:[#allocation12 + $0xf8] sm:$0xff]
    %v1795 = vld [vmem:[#allocation12 + $0x100] sm:$0xff]
    %v1796 = vld [vmem:[#allocation12 + $0x108] sm:$0xff]
    %v1797 = vld [vmem:[#allocation12 + $0x110] sm:$0xff]
    %v1798 = vld [vmem:[#allocation12 + $0x118] sm:$0xff]
    %v1799 = vld [vmem:[#allocation12 + $0x120] sm:$0xff]
    %v1800 = vld [vmem:[#allocation12 + $0x128] sm:$0xff]
    %v1801 = vld [vmem:[#allocation12 + $0x130] sm:$0xff]
    %v1802 = vld [vmem:[#allocation12 + $0x138] sm:$0xff]
    %v1803 = vld [vmem:[#allocation12 + $0x140] sm:$0xff]
    %v1804 = vld [vmem:[#allocation12 + $0x148] sm:$0xff]
    %v1805 = vld [vmem:[#allocation12 + $0x150] sm:$0xff]
    %v1806 = vld [vmem:[#allocation12 + $0x158] sm:$0xff]
    %v1807 = vld [vmem:[#allocation12 + $0x160] sm:$0xff]
    %v1808 = vld [vmem:[#allocation12 + $0x168] sm:$0xff]
    %v1809 = vld [vmem:[#allocation12 + $0x170] sm:$0xff]
    %v1810 = vld [vmem:[#allocation12 + $0x178] sm:$0xff]
    %v1811 = vld [vmem:[#allocation12 + $0x180] sm:$0xff]
    %v1812 = vld [vmem:[#allocation12 + $0x188] sm:$0xff]
    %v1813 = vld [vmem:[#allocation12 + $0x190] sm:$0xff]
    %v1814 = vld [vmem:[#allocation12 + $0x198] sm:$0xff]
    %v1815 = vld [vmem:[#allocation12 + $0x1a0] sm:$0xff]
    %v1816 = vld [vmem:[#allocation12 + $0x1a8] sm:$0xff]
    %v1817 = vld [vmem:[#allocation12 + $0x1b0] sm:$0xff]
    %v1818 = vld [vmem:[#allocation12 + $0x1b8] sm:$0xff]
    %v1819 = vld [vmem:[#allocation12 + $0x1c0] sm:$0xff]
    %v1820 = vld [vmem:[#allocation12 + $0x1c8] sm:$0xff]
    %v1821 = vld [vmem:[#allocation12 + $0x1d0] sm:$0xff]
    %v1822 = vld [vmem:[#allocation12 + $0x1d8] sm:$0xff]
    %v1823 = vld [vmem:[#allocation12 + $0x1e0] sm:$0xff]
    %v1824 = vld [vmem:[#allocation12 + $0x1e8] sm:$0xff]
    %v1825 = vld [vmem:[#allocation12 + $0x1f0] sm:$0xff]
    %v1826 = vld [vmem:[#allocation12 + $0x1f8] sm:$0xff]
    %1827 = vmatprep.subr.mxu0 %v1764
    %1828 = vmatpush1.msra.mxu0 %v1763
    %1829 = vmatprep.subr.mxu0 %v1768
    %1830 = vmatpush1.msra.mxu0 %v1767
    %1831 = vmatprep.subr.mxu0 %v1772
    %1832 = vmatpush1.msra.mxu0 %v1771
    %1833 = vmatprep.subr.mxu0 %v1776
    %1834 = vmatpush1.msra.mxu0 %v1775
    %1835 = vmatprep.subr.mxu0 %v1780
    %1836 = vmatpush1.msra.mxu0 %v1779
    %1837 = vmatprep.subr.mxu0 %v1784
    %1838 = vmatpush1.msra.mxu0 %v1783
    %1839 = vmatprep.subr.mxu0 %v1788
    %1840 = vmatpush1.msra.mxu0 %v1787
    %1841 = vmatprep.subr.mxu0 %v1792
    %1842 = vmatpush1.msra.mxu0 %v1791
    %1843 = vmatprep.subr.mxu0 %v1796
    %1844 = vmatpush1.msra.mxu0 %v1795
    %1845 = vmatprep.subr.mxu0 %v1800
    %1846 = vmatpush1.msra.mxu0 %v1799
    %1847 = vmatprep.subr.mxu0 %v1804
    %1848 = vmatpush1.msra.mxu0 %v1803
    %1849 = vmatprep.subr.mxu0 %v1808
    %1850 = vmatpush1.msra.mxu0 %v1807
    %1851 = vmatprep.subr.mxu0 %v1812
    %1852 = vmatpush1.msra.mxu0 %v1811
    %1853 = vmatprep.subr.mxu0 %v1816
    %1854 = vmatpush1.msra.mxu0 %v1815
    %1855 = vmatprep.subr.mxu0 %v1820
    %1856 = vmatpush1.msra.mxu0 %v1819
    %1857 = vmatprep.subr.mxu0 %v1824
    %1858 = vmatpush1.msra.mxu0 %v1823
    %1859 = vmatprep.subr.mxu0 0.0
    %1860 = vmatpush1.msra.mxu0 0.0
    %1861 = vmatprep.subr.mxu0 0.0
    %1862 = vmatpush1.msra.mxu0 0.0
    %1863 = vmatprep.subr.mxu0 0.0
    %1864 = vmatpush1.msra.mxu0 0.0
    %1865 = vmatprep.subr.mxu0 0.0
    %1866 = vmatpush1.msra.mxu0 0.0
    %1867 = vmatprep.subr.mxu0 0.0
    %1868 = vmatpush1.msra.mxu0 0.0
    %1869 = vmatprep.subr.mxu0 0.0
    %1870 = vmatpush1.msra.mxu0 0.0
    %1871 = vmatprep.subr.mxu0 0.0
    %1872 = vmatpush1.msra.mxu0 0.0
    %1873 = vmatprep.subr.mxu0 0.0
    %1874 = vmatpush1.msra.mxu0 0.0
    %1875 = vmatprep.subr.mxu0 0.0
    %1876 = vmatpush1.msra.mxu0 0.0
    %1877 = vmatprep.subr.mxu0 0.0
    %1878 = vmatpush1.msra.mxu0 0.0
    %1879 = vmatprep.subr.mxu0 0.0
    %1880 = vmatpush1.msra.mxu0 0.0
    %1881 = vmatprep.subr.mxu0 0.0
    %1882 = vmatpush1.msra.mxu0 0.0
    %1883 = vmatprep.subr.mxu0 0.0
    %1884 = vmatpush1.msra.mxu0 0.0
    %1885 = vmatprep.subr.mxu0 0.0
    %1886 = vmatpush1.msra.mxu0 0.0
    %1887 = vmatprep.subr.mxu0 0.0
    %1888 = vmatpush1.msra.mxu0 0.0
    %1889 = vmatprep.subr.mxu0 0.0
    %1890 = vmatpush1.msra.mxu0 0.0
    %1891 = vmatprep.mubr.f32.mxu0 0.0
    %1892 = vmatmul.mubr.f32.gmra.mrb[0].mxu0 %v1752
    %v1893 = vpop.f32.mrb[0].mxu0
    %v1894 = vadd.f32 0.0, %v1893
    %v1895 = vpop.f32.mrb[0].mxu0
    %v1896 = vadd.f32 0.0, %v1895
    %1897 = vdwg.mxu0
    %1898 = vmatprep.subr.mxu0 %v1766
    %1899 = vmatpush1.msra.mxu0 %v1765
    %1900 = vmatprep.subr.mxu0 %v1770
    %1901 = vmatpush1.msra.mxu0 %v1769
    %1902 = vmatprep.subr.mxu0 %v1774
    %1903 = vmatpush1.msra.mxu0 %v1773
    %1904 = vmatprep.subr.mxu0 %v1778
    %1905 = vmatpush1.msra.mxu0 %v1777
    %1906 = vmatprep.subr.mxu0 %v1782
    %1907 = vmatpush1.msra.mxu0 %v1781
    %1908 = vmatprep.subr.mxu0 %v1786
    %1909 = vmatpush1.msra.mxu0 %v1785
    %1910 = vmatprep.subr.mxu0 %v1790
    %1911 = vmatpush1.msra.mxu0 %v1789
    %1912 = vmatprep.subr.mxu0 %v1794
    %1913 = vmatpush1.msra.mxu0 %v1793
    %1914 = vmatprep.subr.mxu0 %v1798
    %1915 = vmatpush1.msra.mxu0 %v1797
    %1916 = vmatprep.subr.mxu0 %v1802
    %1917 = vmatpush1.msra.mxu0 %v1801
    %1918 = vmatprep.subr.mxu0 %v1806
    %1919 = vmatpush1.msra.mxu0 %v1805
    %1920 = vmatprep.subr.mxu0 %v1810
    %1921 = vmatpush1.msra.mxu0 %v1809
    %1922 = vmatprep.subr.mxu0 %v1814
    %1923 = vmatpush1.msra.mxu0 %v1813
    %1924 = vmatprep.subr.mxu0 %v1818
    %1925 = vmatpush1.msra.mxu0 %v1817
    %1926 = vmatprep.subr.mxu0 %v1822
    %1927 = vmatpush1.msra.mxu0 %v1821
    %1928 = vmatprep.subr.mxu0 %v1826
    %1929 = vmatpush1.msra.mxu0 %v1825
    %1930 = vmatprep.subr.mxu0 0.0
    %1931 = vmatpush1.msra.mxu0 0.0
    %1932 = vmatprep.subr.mxu0 0.0
    %1933 = vmatpush1.msra.mxu0 0.0
    %1934 = vmatprep.subr.mxu0 0.0
    %1935 = vmatpush1.msra.mxu0 0.0
    %1936 = vmatprep.subr.mxu0 0.0
    %1937 = vmatpush1.msra.mxu0 0.0
    %1938 = vmatprep.subr.mxu0 0.0
    %1939 = vmatpush1.msra.mxu0 0.0
    %1940 = vmatprep.subr.mxu0 0.0
    %1941 = vmatpush1.msra.mxu0 0.0
    %1942 = vmatprep.subr.mxu0 0.0
    %1943 = vmatpush1.msra.mxu0 0.0
    %1944 = vmatprep.subr.mxu0 0.0
    %1945 = vmatpush1.msra.mxu0 0.0
    %1946 = vmatprep.subr.mxu0 0.0
    %1947 = vmatpush1.msra.mxu0 0.0
    %1948 = vmatprep.subr.mxu0 0.0
    %1949 = vmatpush1.msra.mxu0 0.0
    %1950 = vmatprep.subr.mxu0 0.0
    %1951 = vmatpush1.msra.mxu0 0.0
    %1952 = vmatprep.subr.mxu0 0.0
    %1953 = vmatpush1.msra.mxu0 0.0
    %1954 = vmatprep.subr.mxu0 0.0
    %1955 = vmatpush1.msra.mxu0 0.0
    %1956 = vmatprep.subr.mxu0 0.0
    %1957 = vmatpush1.msra.mxu0 0.0
    %1958 = vmatprep.subr.mxu0 0.0
    %1959 = vmatpush1.msra.mxu0 0.0
    %1960 = vmatprep.subr.mxu0 0.0
    %1961 = vmatpush1.msra.mxu0 0.0
    %1962 = vmatprep.mubr.f32.mxu0 0.0
    %1963 = vmatmul.mubr.f32.gmra.mrb[0].mxu0 %v1752
    %v1964 = vpop.f32.mrb[0].mxu0
    %v1965 = vadd.f32 0.0, %v1964
    %v1966 = vpop.f32.mrb[0].mxu0
    %v1967 = vadd.f32 0.0, %v1966
    %1968 = vdwg.mxu0
    %v1969 = vadd.f32 %v1759, %v1894
    %v1970 = vadd.f32 %v1760, %v1896
    %v1971 = vadd.f32 %v1761, %v1965
    %v1972 = vadd.f32 %v1762, %v1967
    %s1973 = scalar_lea.vmem [#allocation3], 160
    %v1974 = vld [vmem:[%s1973] sm:$0xff]
    %v1975 = vld [vmem:[%s1973 + $0x8] sm:$0xff]
    %v1976 = vld [vmem:[%s1973 + $0x10] sm:$0xff]
    %v1977 = vld [vmem:[%s1973 + $0x18] sm:$0xff]
    %v1978 = vld [vmem:[#allocation14] sm:$0xff]
    %v1979 = vld [vmem:[#allocation14 + $0x8] sm:$0xff]
    %v1980 = vld [vmem:[#allocation14 + $0x10] sm:$0xff]
    %v1981 = vld [vmem:[#allocation14 + $0x18] sm:$0xff]
    %v1982 = vld [vmem:[#allocation14 + $0x20] sm:$0xff]
    %v1983 = vld [vmem:[#allocation14 + $0x28] sm:$0xff]
    %v1984 = vld [vmem:[#allocation14 + $0x30] sm:$0xff]
    %v1985 = vld [vmem:[#allocation14 + $0x38] sm:$0xff]
    %v1986 = vld [vmem:[#allocation14 + $0x40] sm:$0xff]
    %v1987 = vld [vmem:[#allocation14 + $0x48] sm:$0xff]
    %v1988 = vld [vmem:[#allocation14 + $0x50] sm:$0xff]
    %v1989 = vld [vmem:[#allocation14 + $0x58] sm:$0xff]
    %v1990 = vld [vmem:[#allocation14 + $0x60] sm:$0xff]
    %v1991 = vld [vmem:[#allocation14 + $0x68] sm:$0xff]
    %v1992 = vld [vmem:[#allocation14 + $0x70] sm:$0xff]
    %v1993 = vld [vmem:[#allocation14 + $0x78] sm:$0xff]
    %v1994 = vld [vmem:[#allocation14 + $0x80] sm:$0xff]
    %v1995 = vld [vmem:[#allocation14 + $0x88] sm:$0xff]
    %v1996 = vld [vmem:[#allocation14 + $0x90] sm:$0xff]
    %v1997 = vld [vmem:[#allocation14 + $0x98] sm:$0xff]
    %v1998 = vld [vmem:[#allocation14 + $0xa0] sm:$0xff]
    %v1999 = vld [vmem:[#allocation14 + $0xa8] sm:$0xff]
    %v2000 = vld [vmem:[#allocation14 + $0xb0] sm:$0xff]
    %v2001 = vld [vmem:[#allocation14 + $0xb8] sm:$0xff]
    %v2002 = vld [vmem:[#allocation14 + $0xc0] sm:$0xff]
    %v2003 = vld [vmem:[#allocation14 + $0xc8] sm:$0xff]
    %v2004 = vld [vmem:[#allocation14 + $0xd0] sm:$0xff]
    %v2005 = vld [vmem:[#allocation14 + $0xd8] sm:$0xff]
    %v2006 = vld [vmem:[#allocation14 + $0xe0] sm:$0xff]
    %v2007 = vld [vmem:[#allocation14 + $0xe8] sm:$0xff]
    %v2008 = vld [vmem:[#allocation14 + $0xf0] sm:$0xff]
    %v2009 = vld [vmem:[#allocation14 + $0xf8] sm:$0xff]
    %v2010 = vld [vmem:[#allocation14 + $0x100] sm:$0xff]
    %v2011 = vld [vmem:[#allocation14 + $0x108] sm:$0xff]
    %v2012 = vld [vmem:[#allocation14 + $0x110] sm:$0xff]
    %v2013 = vld [vmem:[#allocation14 + $0x118] sm:$0xff]
    %v2014 = vld [vmem:[#allocation14 + $0x120] sm:$0xff]
    %v2015 = vld [vmem:[#allocation14 + $0x128] sm:$0xff]
    %v2016 = vld [vmem:[#allocation14 + $0x130] sm:$0xff]
    %v2017 = vld [vmem:[#allocation14 + $0x138] sm:$0xff]
    %v2018 = vld [vmem:[#allocation14 + $0x140] sm:$0xff]
    %v2019 = vld [vmem:[#allocation14 + $0x148] sm:$0xff]
    %v2020 = vld [vmem:[#allocation14 + $0x150] sm:$0xff]
    %v2021 = vld [vmem:[#allocation14 + $0x158] sm:$0xff]
    %v2022 = vld [vmem:[#allocation14 + $0x160] sm:$0xff]
    %v2023 = vld [vmem:[#allocation14 + $0x168] sm:$0xff]
    %v2024 = vld [vmem:[#allocation14 + $0x170] sm:$0xff]
    %v2025 = vld [vmem:[#allocation14 + $0x178] sm:$0xff]
    %v2026 = vld [vmem:[#allocation14 + $0x180] sm:$0xff]
    %v2027 = vld [vmem:[#allocation14 + $0x188] sm:$0xff]
    %v2028 = vld [vmem:[#allocation14 + $0x190] sm:$0xff]
    %v2029 = vld [vmem:[#allocation14 + $0x198] sm:$0xff]
    %v2030 = vld [vmem:[#allocation14 + $0x1a0] sm:$0xff]
    %v2031 = vld [vmem:[#allocation14 + $0x1a8] sm:$0xff]
    %v2032 = vld [vmem:[#allocation14 + $0x1b0] sm:$0xff]
    %v2033 = vld [vmem:[#allocation14 + $0x1b8] sm:$0xff]
    %v2034 = vld [vmem:[#allocation14 + $0x1c0] sm:$0xff]
    %v2035 = vld [vmem:[#allocation14 + $0x1c8] sm:$0xff]
    %v2036 = vld [vmem:[#allocation14 + $0x1d0] sm:$0xff]
    %v2037 = vld [vmem:[#allocation14 + $0x1d8] sm:$0xff]
    %v2038 = vld [vmem:[#allocation14 + $0x1e0] sm:$0xff]
    %v2039 = vld [vmem:[#allocation14 + $0x1e8] sm:$0xff]
    %v2040 = vld [vmem:[#allocation14 + $0x1f0] sm:$0xff]
    %v2041 = vld [vmem:[#allocation14 + $0x1f8] sm:$0xff]
    %2042 = vmatprep.subr.mxu0 %v1979
    %2043 = vmatpush1.msra.mxu0 %v1978
    %2044 = vmatprep.subr.mxu0 %v1983
    %2045 = vmatpush1.msra.mxu0 %v1982
    %2046 = vmatprep.subr.mxu0 %v1987
    %2047 = vmatpush1.msra.mxu0 %v1986
    %2048 = vmatprep.subr.mxu0 %v1991
    %2049 = vmatpush1.msra.mxu0 %v1990
    %2050 = vmatprep.subr.mxu0 %v1995
    %2051 = vmatpush1.msra.mxu0 %v1994
    %2052 = vmatprep.subr.mxu0 %v1999
    %2053 = vmatpush1.msra.mxu0 %v1998
    %2054 = vmatprep.subr.mxu0 %v2003
    %2055 = vmatpush1.msra.mxu0 %v2002
    %2056 = vmatprep.subr.mxu0 %v2007
    %2057 = vmatpush1.msra.mxu0 %v2006
    %2058 = vmatprep.subr.mxu0 %v2011
    %2059 = vmatpush1.msra.mxu0 %v2010
    %2060 = vmatprep.subr.mxu0 %v2015
    %2061 = vmatpush1.msra.mxu0 %v2014
    %2062 = vmatprep.subr.mxu0 %v2019
    %2063 = vmatpush1.msra.mxu0 %v2018
    %2064 = vmatprep.subr.mxu0 %v2023
    %2065 = vmatpush1.msra.mxu0 %v2022
    %2066 = vmatprep.subr.mxu0 %v2027
    %2067 = vmatpush1.msra.mxu0 %v2026
    %2068 = vmatprep.subr.mxu0 %v2031
    %2069 = vmatpush1.msra.mxu0 %v2030
    %2070 = vmatprep.subr.mxu0 %v2035
    %2071 = vmatpush1.msra.mxu0 %v2034
    %2072 = vmatprep.subr.mxu0 %v2039
    %2073 = vmatpush1.msra.mxu0 %v2038
    %2074 = vmatprep.subr.mxu0 0.0
    %2075 = vmatpush1.msra.mxu0 0.0
    %2076 = vmatprep.subr.mxu0 0.0
    %2077 = vmatpush1.msra.mxu0 0.0
    %2078 = vmatprep.subr.mxu0 0.0
    %2079 = vmatpush1.msra.mxu0 0.0
    %2080 = vmatprep.subr.mxu0 0.0
    %2081 = vmatpush1.msra.mxu0 0.0
    %2082 = vmatprep.subr.mxu0 0.0
    %2083 = vmatpush1.msra.mxu0 0.0
    %2084 = vmatprep.subr.mxu0 0.0
    %2085 = vmatpush1.msra.mxu0 0.0
    %2086 = vmatprep.subr.mxu0 0.0
    %2087 = vmatpush1.msra.mxu0 0.0
    %2088 = vmatprep.subr.mxu0 0.0
    %2089 = vmatpush1.msra.mxu0 0.0
    %2090 = vmatprep.subr.mxu0 0.0
    %2091 = vmatpush1.msra.mxu0 0.0
    %2092 = vmatprep.subr.mxu0 0.0
    %2093 = vmatpush1.msra.mxu0 0.0
    %2094 = vmatprep.subr.mxu0 0.0
    %2095 = vmatpush1.msra.mxu0 0.0
    %2096 = vmatprep.subr.mxu0 0.0
    %2097 = vmatpush1.msra.mxu0 0.0
    %2098 = vmatprep.subr.mxu0 0.0
    %2099 = vmatpush1.msra.mxu0 0.0
    %2100 = vmatprep.subr.mxu0 0.0
    %2101 = vmatpush1.msra.mxu0 0.0
    %2102 = vmatprep.subr.mxu0 0.0
    %2103 = vmatpush1.msra.mxu0 0.0
    %2104 = vmatprep.subr.mxu0 0.0
    %2105 = vmatpush1.msra.mxu0 0.0
    %2106 = vmatprep.mubr.f32.mxu0 0.0
    %2107 = vmatmul.mubr.f32.gmra.mrb[0].mxu0 %v1754
    %v2108 = vpop.f32.mrb[0].mxu0
    %v2109 = vadd.f32 0.0, %v2108
    %v2110 = vpop.f32.mrb[0].mxu0
    %v2111 = vadd.f32 0.0, %v2110
    %2112 = vdwg.mxu0
    %2113 = vmatprep.subr.mxu0 %v1981
    %2114 = vmatpush1.msra.mxu0 %v1980
    %2115 = vmatprep.subr.mxu0 %v1985
    %2116 = vmatpush1.msra.mxu0 %v1984
    %2117 = vmatprep.subr.mxu0 %v1989
    %2118 = vmatpush1.msra.mxu0 %v1988
    %2119 = vmatprep.subr.mxu0 %v1993
    %2120 = vmatpush1.msra.mxu0 %v1992
    %2121 = vmatprep.subr.mxu0 %v1997
    %2122 = vmatpush1.msra.mxu0 %v1996
    %2123 = vmatprep.subr.mxu0 %v2001
    %2124 = vmatpush1.msra.mxu0 %v2000
    %2125 = vmatprep.subr.mxu0 %v2005
    %2126 = vmatpush1.msra.mxu0 %v2004
    %2127 = vmatprep.subr.mxu0 %v2009
    %2128 = vmatpush1.msra.mxu0 %v2008
    %2129 = vmatprep.subr.mxu0 %v2013
    %2130 = vmatpush1.msra.mxu0 %v2012
    %2131 = vmatprep.subr.mxu0 %v2017
    %2132 = vmatpush1.msra.mxu0 %v2016
    %2133 = vmatprep.subr.mxu0 %v2021
    %2134 = vmatpush1.msra.mxu0 %v2020
    %2135 = vmatprep.subr.mxu0 %v2025
    %2136 = vmatpush1.msra.mxu0 %v2024
    %2137 = vmatprep.subr.mxu0 %v2029
    %2138 = vmatpush1.msra.mxu0 %v2028
    %2139 = vmatprep.subr.mxu0 %v2033
    %2140 = vmatpush1.msra.mxu0 %v2032
    %2141 = vmatprep.subr.mxu0 %v2037
    %2142 = vmatpush1.msra.mxu0 %v2036
    %2143 = vmatprep.subr.mxu0 %v2041
    %2144 = vmatpush1.msra.mxu0 %v2040
    %2145 = vmatprep.subr.mxu0 0.0
    %2146 = vmatpush1.msra.mxu0 0.0
    %2147 = vmatprep.subr.mxu0 0.0
    %2148 = vmatpush1.msra.mxu0 0.0
    %2149 = vmatprep.subr.mxu0 0.0
    %2150 = vmatpush1.msra.mxu0 0.0
    %2151 = vmatprep.subr.mxu0 0.0
    %2152 = vmatpush1.msra.mxu0 0.0
    %2153 = vmatprep.subr.mxu0 0.0
    %2154 = vmatpush1.msra.mxu0 0.0
    %2155 = vmatprep.subr.mxu0 0.0
    %2156 = vmatpush1.msra.mxu0 0.0
    %2157 = vmatprep.subr.mxu0 0.0
    %2158 = vmatpush1.msra.mxu0 0.0
    %2159 = vmatprep.subr.mxu0 0.0
    %2160 = vmatpush1.msra.mxu0 0.0
    %2161 = vmatprep.subr.mxu0 0.0
    %2162 = vmatpush1.msra.mxu0 0.0
    %2163 = vmatprep.subr.mxu0 0.0
    %2164 = vmatpush1.msra.mxu0 0.0
    %2165 = vmatprep.subr.mxu0 0.0
    %2166 = vmatpush1.msra.mxu0 0.0
    %2167 = vmatprep.subr.mxu0 0.0
    %2168 = vmatpush1.msra.mxu0 0.0
    %2169 = vmatprep.subr.mxu0 0.0
    %2170 = vmatpush1.msra.mxu0 0.0
    %2171 = vmatprep.subr.mxu0 0.0
    %2172 = vmatpush1.msra.mxu0 0.0
    %2173 = vmatprep.subr.mxu0 0.0
    %2174 = vmatpush1.msra.mxu0 0.0
    %2175 = vmatprep.subr.mxu0 0.0
    %2176 = vmatpush1.msra.mxu0 0.0
    %2177 = vmatprep.mubr.f32.mxu0 0.0
    %2178 = vmatmul.mubr.f32.gmra.mrb[0].mxu0 %v1754
    %v2179 = vpop.f32.mrb[0].mxu0
    %v2180 = vadd.f32 0.0, %v2179
    %v2181 = vpop.f32.mrb[0].mxu0
    %v2182 = vadd.f32 0.0, %v2181
    %2183 = vdwg.mxu0
    %v2184 = vadd.f32 %v1974, %v2109
    %v2185 = vadd.f32 %v1975, %v2111
    %v2186 = vadd.f32 %v1976, %v2180
    %v2187 = vadd.f32 %v1977, %v2182
    %v2188 = vxor.u32 %v1969, 2147483648
    %v2189 = vmul.f32 %v2188, 1.442695
    %v2190 = vpow.pop %v2189
    %v2191 = vadd.f32 %v2190, 1.0
    %v2192 = vrcp.pop %v2191
    %v2193 = vmul.f32 1.0, %v2192
    %v2194 = vxor.u32 %v1970, 2147483648
    %v2195 = vmul.f32 %v2194, 1.442695
    %v2196 = vpow.pop %v2195
    %v2197 = vadd.f32 %v2196, 1.0
    %v2198 = vrcp.pop %v2197
    %v2199 = vmul.f32 1.0, %v2198
    %v2200 = vtanh.pop %v1971
    %v2201 = vxor.u32 %v1972, 2147483648
    %v2202 = vmul.f32 %v2201, 1.442695
    %v2203 = vpow.pop %v2202
    %v2204 = vadd.f32 %v2203, 1.0
    %v2205 = vrcp.pop %v2204
    %v2206 = vmul.f32 1.0, %v2205
    %v2207 = vmul.f32 %v2199, %v1753
    %v2208 = vmul.f32 %v2193, %v2200
    %v2209 = vadd.f32 %v2207, %v2208
    %v2210 = vtanh.pop %v2209
    %v2211 = vmul.f32 %v2206, %v2210
    %v2212 = vxor.u32 %v2184, 2147483648
    %v2213 = vmul.f32 %v2212, 1.442695
    %v2214 = vpow.pop %v2213
    %v2215 = vadd.f32 %v2214, 1.0
    %v2216 = vrcp.pop %v2215
    %v2217 = vmul.f32 1.0, %v2216
    %v2218 = vxor.u32 %v2185, 2147483648
    %v2219 = vmul.f32 %v2218, 1.442695
    %v2220 = vpow.pop %v2219
    %v2221 = vadd.f32 %v2220, 1.0
    %v2222 = vrcp.pop %v2221
    %v2223 = vmul.f32 1.0, %v2222
    %v2224 = vtanh.pop %v2186
    %v2225 = vxor.u32 %v2187, 2147483648
    %v2226 = vmul.f32 %v2225, 1.442695
    %v2227 = vpow.pop %v2226
    %v2228 = vadd.f32 %v2227, 1.0
    %v2229 = vrcp.pop %v2228
    %v2230 = vmul.f32 1.0, %v2229
    %v2231 = vmul.f32 %v2223, %v1755
    %v2232 = vmul.f32 %v2217, %v2224
    %v2233 = vadd.f32 %v2231, %v2232
    %v2234 = vtanh.pop %v2233
    %v2235 = vmul.f32 %v2230, %v2234
    %v2236 = vsel %vm1756, 1, 0
    %2237 = vset.pattern.permute.xlu0 0
    %2238 = vperm.xlu0 %2237, %v2236
    %v2239 = vpop.permute.xlu0 %2238
    %vm2240 = vcmp.eq.s32.totalorder %v2239, 1
    %v2241 = vsel %vm2240, %v2211, 0.0
    %s2242 = scalar_lea.vmem [#allocation4], 16
    %2243 = vst [vmem:[%s2242] sm:$0xff] %v2241
    %v2244 = vsel %vm1757, 1, 0
    %2245 = vset.pattern.permute.xlu0 0
    %2246 = vperm.xlu0 %2245, %v2244
    %v2247 = vpop.permute.xlu0 %2246
    %vm2248 = vcmp.eq.s32.totalorder %v2247, 1
    %v2249 = vsel %vm2248, %v2235, 0.0
    %s2250 = scalar_lea.vmem [#allocation5], 40
    %2251 = vst [vmem:[%s2250] sm:$0xff] %v2249
    %v2252 = vsel %vm2240, %v2211, %v1752
    %v2253 = vsel %vm2240, %v2209, %v1753
    %v2254 = vsel %vm2248, %v2235, %v1754
    %v2255 = vsel %vm2248, %v2233, %v1755
    %vm2256 = vcmp.gt.s32.totalorder %v759, 3
    %vm2257 = vcmp.gt.s32.totalorder %v759, 4
    %s2258 = scalar_lea.vmem [#allocation2], 96
    %v2259 = vld [vmem:[%s2258] sm:$0xff]
    %v2260 = vld [vmem:[%s2258 + $0x8] sm:$0xff]
    %v2261 = vld [vmem:[%s2258 + $0x10] sm:$0xff]
    %v2262 = vld [vmem:[%s2258 + $0x18] sm:$0xff]
    %v2263 = vld [vmem:[#allocation12] sm:$0xff]
    %v2264 = vld [vmem:[#allocation12 + $0x8] sm:$0xff]
    %v2265 = vld [vmem:[#allocation12 + $0x10] sm:$0xff]
    %v2266 = vld [vmem:[#allocation12 + $0x18] sm:$0xff]
    %v2267 = vld [vmem:[#allocation12 + $0x20] sm:$0xff]
    %v2268 = vld [vmem:[#allocation12 + $0x28] sm:$0xff]
    %v2269 = vld [vmem:[#allocation12 + $0x30] sm:$0xff]
    %v2270 = vld [vmem:[#allocation12 + $0x38] sm:$0xff]
    %v2271 = vld [vmem:[#allocation12 + $0x40] sm:$0xff]
    %v2272 = vld [vmem:[#allocation12 + $0x48] sm:$0xff]
    %v2273 = vld [vmem:[#allocation12 + $0x50] sm:$0xff]
    %v2274 = vld [vmem:[#allocation12 + $0x58] sm:$0xff]
    %v2275 = vld [vmem:[#allocation12 + $0x60] sm:$0xff]
    %v2276 = vld [vmem:[#allocation12 + $0x68] sm:$0xff]
    %v2277 = vld [vmem:[#allocation12 + $0x70] sm:$0xff]
    %v2278 = vld [vmem:[#allocation12 + $0x78] sm:$0xff]
    %v2279 = vld [vmem:[#allocation12 + $0x80] sm:$0xff]
    %v2280 = vld [vmem:[#allocation12 + $0x88] sm:$0xff]
    %v2281 = vld [vmem:[#allocation12 + $0x90] sm:$0xff]
    %v2282 = vld [vmem:[#allocation12 + $0x98] sm:$0xff]
    %v2283 = vld [vmem:[#allocation12 + $0xa0] sm:$0xff]
    %v2284 = vld [vmem:[#allocation12 + $0xa8] sm:$0xff]
    %v2285 = vld [vmem:[#allocation12 + $0xb0] sm:$0xff]
    %v2286 = vld [vmem:[#allocation12 + $0xb8] sm:$0xff]
    %v2287 = vld [vmem:[#allocation12 + $0xc0] sm:$0xff]
    %v2288 = vld [vmem:[#allocation12 + $0xc8] sm:$0xff]
    %v2289 = vld [vmem:[#allocation12 + $0xd0] sm:$0xff]
    %v2290 = vld [vmem:[#allocation12 + $0xd8] sm:$0xff]
    %v2291 = vld [vmem:[#allocation12 + $0xe0] sm:$0xff]
    %v2292 = vld [vmem:[#allocation12 + $0xe8] sm:$0xff]
    %v2293 = vld [vmem:[#allocation12 + $0xf0] sm:$0xff]
    %v2294 = vld [vmem:[#allocation12 + $0xf8] sm:$0xff]
    %v2295 = vld [vmem:[#allocation12 + $0x100] sm:$0xff]
    %v2296 = vld [vmem:[#allocation12 + $0x108] sm:$0xff]
    %v2297 = vld [vmem:[#allocation12 + $0x110] sm:$0xff]
    %v2298 = vld [vmem:[#allocation12 + $0x118] sm:$0xff]
    %v2299 = vld [vmem:[#allocation12 + $0x120] sm:$0xff]
    %v2300 = vld [vmem:[#allocation12 + $0x128] sm:$0xff]
    %v2301 = vld [vmem:[#allocation12 + $0x130] sm:$0xff]
    %v2302 = vld [vmem:[#allocation12 + $0x138] sm:$0xff]
    %v2303 = vld [vmem:[#allocation12 + $0x140] sm:$0xff]
    %v2304 = vld [vmem:[#allocation12 + $0x148] sm:$0xff]
    %v2305 = vld [vmem:[#allocation12 + $0x150] sm:$0xff]
    %v2306 = vld [vmem:[#allocation12 + $0x158] sm:$0xff]
    %v2307 = vld [vmem:[#allocation12 + $0x160] sm:$0xff]
    %v2308 = vld [vmem:[#allocation12 + $0x168] sm:$0xff]
    %v2309 = vld [vmem:[#allocation12 + $0x170] sm:$0xff]
    %v2310 = vld [vmem:[#allocation12 + $0x178] sm:$0xff]
    %v2311 = vld [vmem:[#allocation12 + $0x180] sm:$0xff]
    %v2312 = vld [vmem:[#allocation12 + $0x188] sm:$0xff]
    %v2313 = vld [vmem:[#allocation12 + $0x190] sm:$0xff]
    %v2314 = vld [vmem:[#allocation12 + $0x198] sm:$0xff]
    %v2315 = vld [vmem:[#allocation12 + $0x1a0] sm:$0xff]
    %v2316 = vld [vmem:[#allocation12 + $0x1a8] sm:$0xff]
    %v2317 = vld [vmem:[#allocation12 + $0x1b0] sm:$0xff]
    %v2318 = vld [vmem:[#allocation12 + $0x1b8] sm:$0xff]
    %v2319 = vld [vmem:[#allocation12 + $0x1c0] sm:$0xff]
    %v2320 = vld [vmem:[#allocation12 + $0x1c8] sm:$0xff]
    %v2321 = vld [vmem:[#allocation12 + $0x1d0] sm:$0xff]
    %v2322 = vld [vmem:[#allocation12 + $0x1d8] sm:$0xff]
    %v2323 = vld [vmem:[#allocation12 + $0x1e0] sm:$0xff]
    %v2324 = vld [vmem:[#allocation12 + $0x1e8] sm:$0xff]
    %v2325 = vld [vmem:[#allocation12 + $0x1f0] sm:$0xff]
    %v2326 = vld [vmem:[#allocation12 + $0x1f8] sm:$0xff]
    %2327 = vmatprep.subr.mxu0 %v2264
    %2328 = vmatpush1.msra.mxu0 %v2263
    %2329 = vmatprep.subr.mxu0 %v2268
    %2330 = vmatpush1.msra.mxu0 %v2267
    %2331 = vmatprep.subr.mxu0 %v2272
    %2332 = vmatpush1.msra.mxu0 %v2271
    %2333 = vmatprep.subr.mxu0 %v2276
    %2334 = vmatpush1.msra.mxu0 %v2275
    %2335 = vmatprep.subr.mxu0 %v2280
    %2336 = vmatpush1.msra.mxu0 %v2279
    %2337 = vmatprep.subr.mxu0 %v2284
    %2338 = vmatpush1.msra.mxu0 %v2283
    %2339 = vmatprep.subr.mxu0 %v2288
    %2340 = vmatpush1.msra.mxu0 %v2287
    %2341 = vmatprep.subr.mxu0 %v2292
    %2342 = vmatpush1.msra.mxu0 %v2291
    %2343 = vmatprep.subr.mxu0 %v2296
    %2344 = vmatpush1.msra.mxu0 %v2295
    %2345 = vmatprep.subr.mxu0 %v2300
    %2346 = vmatpush1.msra.mxu0 %v2299
    %2347 = vmatprep.subr.mxu0 %v2304
    %2348 = vmatpush1.msra.mxu0 %v2303
    %2349 = vmatprep.subr.mxu0 %v2308
    %2350 = vmatpush1.msra.mxu0 %v2307
    %2351 = vmatprep.subr.mxu0 %v2312
    %2352 = vmatpush1.msra.mxu0 %v2311
    %2353 = vmatprep.subr.mxu0 %v2316
    %2354 = vmatpush1.msra.mxu0 %v2315
    %2355 = vmatprep.subr.mxu0 %v2320
    %2356 = vmatpush1.msra.mxu0 %v2319
    %2357 = vmatprep.subr.mxu0 %v2324
    %2358 = vmatpush1.msra.mxu0 %v2323
    %2359 = vmatprep.subr.mxu0 0.0
    %2360 = vmatpush1.msra.mxu0 0.0
    %2361 = vmatprep.subr.mxu0 0.0
    %2362 = vmatpush1.msra.mxu0 0.0
    %2363 = vmatprep.subr.mxu0 0.0
    %2364 = vmatpush1.msra.mxu0 0.0
    %2365 = vmatprep.subr.mxu0 0.0
    %2366 = vmatpush1.msra.mxu0 0.0
    %2367 = vmatprep.subr.mxu0 0.0
    %2368 = vmatpush1.msra.mxu0 0.0
    %2369 = vmatprep.subr.mxu0 0.0
    %2370 = vmatpush1.msra.mxu0 0.0
    %2371 = vmatprep.subr.mxu0 0.0
    %2372 = vmatpush1.msra.mxu0 0.0
    %2373 = vmatprep.subr.mxu0 0.0
    %2374 = vmatpush1.msra.mxu0 0.0
    %2375 = vmatprep.subr.mxu0 0.0
    %2376 = vmatpush1.msra.mxu0 0.0
    %2377 = vmatprep.subr.mxu0 0.0
    %2378 = vmatpush1.msra.mxu0 0.0
    %2379 = vmatprep.subr.mxu0 0.0
    %2380 = vmatpush1.msra.mxu0 0.0
    %2381 = vmatprep.subr.mxu0 0.0
    %2382 = vmatpush1.msra.mxu0 0.0
    %2383 = vmatprep.subr.mxu0 0.0
    %2384 = vmatpush1.msra.mxu0 0.0
    %2385 = vmatprep.subr.mxu0 0.0
    %2386 = vmatpush1.msra.mxu0 0.0
    %2387 = vmatprep.subr.mxu0 0.0
    %2388 = vmatpush1.msra.mxu0 0.0
    %2389 = vmatprep.subr.mxu0 0.0
    %2390 = vmatpush1.msra.mxu0 0.0
    %2391 = vmatprep.mubr.f32.mxu0 0.0
    %2392 = vmatmul.mubr.f32.gmra.mrb[0].mxu0 %v2252
    %v2393 = vpop.f32.mrb[0].mxu0
    %v2394 = vadd.f32 0.0, %v2393
    %v2395 = vpop.f32.mrb[0].mxu0
    %v2396 = vadd.f32 0.0, %v2395
    %2397 = vdwg.mxu0
    %2398 = vmatprep.subr.mxu0 %v2266
    %2399 = vmatpush1.msra.mxu0 %v2265
    %2400 = vmatprep.subr.mxu0 %v2270
    %2401 = vmatpush1.msra.mxu0 %v2269
    %2402 = vmatprep.subr.mxu0 %v2274
    %2403 = vmatpush1.msra.mxu0 %v2273
    %2404 = vmatprep.subr.mxu0 %v2278
    %2405 = vmatpush1.msra.mxu0 %v2277
    %2406 = vmatprep.subr.mxu0 %v2282
    %2407 = vmatpush1.msra.mxu0 %v2281
    %2408 = vmatprep.subr.mxu0 %v2286
    %2409 = vmatpush1.msra.mxu0 %v2285
    %2410 = vmatprep.subr.mxu0 %v2290
    %2411 = vmatpush1.msra.mxu0 %v2289
    %2412 = vmatprep.subr.mxu0 %v2294
    %2413 = vmatpush1.msra.mxu0 %v2293
    %2414 = vmatprep.subr.mxu0 %v2298
    %2415 = vmatpush1.msra.mxu0 %v2297
    %2416 = vmatprep.subr.mxu0 %v2302
    %2417 = vmatpush1.msra.mxu0 %v2301
    %2418 = vmatprep.subr.mxu0 %v2306
    %2419 = vmatpush1.msra.mxu0 %v2305
    %2420 = vmatprep.subr.mxu0 %v2310
    %2421 = vmatpush1.msra.mxu0 %v2309
    %2422 = vmatprep.subr.mxu0 %v2314
    %2423 = vmatpush1.msra.mxu0 %v2313
    %2424 = vmatprep.subr.mxu0 %v2318
    %2425 = vmatpush1.msra.mxu0 %v2317
    %2426 = vmatprep.subr.mxu0 %v2322
    %2427 = vmatpush1.msra.mxu0 %v2321
    %2428 = vmatprep.subr.mxu0 %v2326
    %2429 = vmatpush1.msra.mxu0 %v2325
    %2430 = vmatprep.subr.mxu0 0.0
    %2431 = vmatpush1.msra.mxu0 0.0
    %2432 = vmatprep.subr.mxu0 0.0
    %2433 = vmatpush1.msra.mxu0 0.0
    %2434 = vmatprep.subr.mxu0 0.0
    %2435 = vmatpush1.msra.mxu0 0.0
    %2436 = vmatprep.subr.mxu0 0.0
    %2437 = vmatpush1.msra.mxu0 0.0
    %2438 = vmatprep.subr.mxu0 0.0
    %2439 = vmatpush1.msra.mxu0 0.0
    %2440 = vmatprep.subr.mxu0 0.0
    %2441 = vmatpush1.msra.mxu0 0.0
    %2442 = vmatprep.subr.mxu0 0.0
    %2443 = vmatpush1.msra.mxu0 0.0
    %2444 = vmatprep.subr.mxu0 0.0
    %2445 = vmatpush1.msra.mxu0 0.0
    %2446 = vmatprep.subr.mxu0 0.0
    %2447 = vmatpush1.msra.mxu0 0.0
    %2448 = vmatprep.subr.mxu0 0.0
    %2449 = vmatpush1.msra.mxu0 0.0
    %2450 = vmatprep.subr.mxu0 0.0
    %2451 = vmatpush1.msra.mxu0 0.0
    %2452 = vmatprep.subr.mxu0 0.0
    %2453 = vmatpush1.msra.mxu0 0.0
    %2454 = vmatprep.subr.mxu0 0.0
    %2455 = vmatpush1.msra.mxu0 0.0
    %2456 = vmatprep.subr.mxu0 0.0
    %2457 = vmatpush1.msra.mxu0 0.0
    %2458 = vmatprep.subr.mxu0 0.0
    %2459 = vmatpush1.msra.mxu0 0.0
    %2460 = vmatprep.subr.mxu0 0.0
    %2461 = vmatpush1.msra.mxu0 0.0
    %2462 = vmatprep.mubr.f32.mxu0 0.0
    %2463 = vmatmul.mubr.f32.gmra.mrb[0].mxu0 %v2252
    %v2464 = vpop.f32.mrb[0].mxu0
    %v2465 = vadd.f32 0.0, %v2464
    %v2466 = vpop.f32.mrb[0].mxu0
    %v2467 = vadd.f32 0.0, %v2466
    %2468 = vdwg.mxu0
    %v2469 = vadd.f32 %v2259, %v2394
    %v2470 = vadd.f32 %v2260, %v2396
    %v2471 = vadd.f32 %v2261, %v2465
    %v2472 = vadd.f32 %v2262, %v2467
    %s2473 = scalar_lea.vmem [#allocation3], 128
    %v2474 = vld [vmem:[%s2473] sm:$0xff]
    %v2475 = vld [vmem:[%s2473 + $0x8] sm:$0xff]
    %v2476 = vld [vmem:[%s2473 + $0x10] sm:$0xff]
    %v2477 = vld [vmem:[%s2473 + $0x18] sm:$0xff]
    %v2478 = vld [vmem:[#allocation14] sm:$0xff]
    %v2479 = vld [vmem:[#allocation14 + $0x8] sm:$0xff]
    %v2480 = vld [vmem:[#allocation14 + $0x10] sm:$0xff]
    %v2481 = vld [vmem:[#allocation14 + $0x18] sm:$0xff]
    %v2482 = vld [vmem:[#allocation14 + $0x20] sm:$0xff]
    %v2483 = vld [vmem:[#allocation14 + $0x28] sm:$0xff]
    %v2484 = vld [vmem:[#allocation14 + $0x30] sm:$0xff]
    %v2485 = vld [vmem:[#allocation14 + $0x38] sm:$0xff]
    %v2486 = vld [vmem:[#allocation14 + $0x40] sm:$0xff]
    %v2487 = vld [vmem:[#allocation14 + $0x48] sm:$0xff]
    %v2488 = vld [vmem:[#allocation14 + $0x50] sm:$0xff]
    %v2489 = vld [vmem:[#allocation14 + $0x58] sm:$0xff]
    %v2490 = vld [vmem:[#allocation14 + $0x60] sm:$0xff]
    %v2491 = vld [vmem:[#allocation14 + $0x68] sm:$0xff]
    %v2492 = vld [vmem:[#allocation14 + $0x70] sm:$0xff]
    %v2493 = vld [vmem:[#allocation14 + $0x78] sm:$0xff]
    %v2494 = vld [vmem:[#allocation14 + $0x80] sm:$0xff]
    %v2495 = vld [vmem:[#allocation14 + $0x88] sm:$0xff]
    %v2496 = vld [vmem:[#allocation14 + $0x90] sm:$0xff]
    %v2497 = vld [vmem:[#allocation14 + $0x98] sm:$0xff]
    %v2498 = vld [vmem:[#allocation14 + $0xa0] sm:$0xff]
    %v2499 = vld [vmem:[#allocation14 + $0xa8] sm:$0xff]
    %v2500 = vld [vmem:[#allocation14 + $0xb0] sm:$0xff]
    %v2501 = vld [vmem:[#allocation14 + $0xb8] sm:$0xff]
    %v2502 = vld [vmem:[#allocation14 + $0xc0] sm:$0xff]
    %v2503 = vld [vmem:[#allocation14 + $0xc8] sm:$0xff]
    %v2504 = vld [vmem:[#allocation14 + $0xd0] sm:$0xff]
    %v2505 = vld [vmem:[#allocation14 + $0xd8] sm:$0xff]
    %v2506 = vld [vmem:[#allocation14 + $0xe0] sm:$0xff]
    %v2507 = vld [vmem:[#allocation14 + $0xe8] sm:$0xff]
    %v2508 = vld [vmem:[#allocation14 + $0xf0] sm:$0xff]
    %v2509 = vld [vmem:[#allocation14 + $0xf8] sm:$0xff]
    %v2510 = vld [vmem:[#allocation14 + $0x100] sm:$0xff]
    %v2511 = vld [vmem:[#allocation14 + $0x108] sm:$0xff]
    %v2512 = vld [vmem:[#allocation14 + $0x110] sm:$0xff]
    %v2513 = vld [vmem:[#allocation14 + $0x118] sm:$0xff]
    %v2514 = vld [vmem:[#allocation14 + $0x120] sm:$0xff]
    %v2515 = vld [vmem:[#allocation14 + $0x128] sm:$0xff]
    %v2516 = vld [vmem:[#allocation14 + $0x130] sm:$0xff]
    %v2517 = vld [vmem:[#allocation14 + $0x138] sm:$0xff]
    %v2518 = vld [vmem:[#allocation14 + $0x140] sm:$0xff]
    %v2519 = vld [vmem:[#allocation14 + $0x148] sm:$0xff]
    %v2520 = vld [vmem:[#allocation14 + $0x150] sm:$0xff]
    %v2521 = vld [vmem:[#allocation14 + $0x158] sm:$0xff]
    %v2522 = vld [vmem:[#allocation14 + $0x160] sm:$0xff]
    %v2523 = vld [vmem:[#allocation14 + $0x168] sm:$0xff]
    %v2524 = vld [vmem:[#allocation14 + $0x170] sm:$0xff]
    %v2525 = vld [vmem:[#allocation14 + $0x178] sm:$0xff]
    %v2526 = vld [vmem:[#allocation14 + $0x180] sm:$0xff]
    %v2527 = vld [vmem:[#allocation14 + $0x188] sm:$0xff]
    %v2528 = vld [vmem:[#allocation14 + $0x190] sm:$0xff]
    %v2529 = vld [vmem:[#allocation14 + $0x198] sm:$0xff]
    %v2530 = vld [vmem:[#allocation14 + $0x1a0] sm:$0xff]
    %v2531 = vld [vmem:[#allocation14 + $0x1a8] sm:$0xff]
    %v2532 = vld [vmem:[#allocation14 + $0x1b0] sm:$0xff]
    %v2533 = vld [vmem:[#allocation14 + $0x1b8] sm:$0xff]
    %v2534 = vld [vmem:[#allocation14 + $0x1c0] sm:$0xff]
    %v2535 = vld [vmem:[#allocation14 + $0x1c8] sm:$0xff]
    %v2536 = vld [vmem:[#allocation14 + $0x1d0] sm:$0xff]
    %v2537 = vld [vmem:[#allocation14 + $0x1d8] sm:$0xff]
    %v2538 = vld [vmem:[#allocation14 + $0x1e0] sm:$0xff]
    %v2539 = vld [vmem:[#allocation14 + $0x1e8] sm:$0xff]
    %v2540 = vld [vmem:[#allocation14 + $0x1f0] sm:$0xff]
    %v2541 = vld [vmem:[#allocation14 + $0x1f8] sm:$0xff]
    %2542 = vmatprep.subr.mxu0 %v2479
    %2543 = vmatpush1.msra.mxu0 %v2478
    %2544 = vmatprep.subr.mxu0 %v2483
    %2545 = vmatpush1.msra.mxu0 %v2482
    %2546 = vmatprep.subr.mxu0 %v2487
    %2547 = vmatpush1.msra.mxu0 %v2486
    %2548 = vmatprep.subr.mxu0 %v2491
    %2549 = vmatpush1.msra.mxu0 %v2490
    %2550 = vmatprep.subr.mxu0 %v2495
    %2551 = vmatpush1.msra.mxu0 %v2494
    %2552 = vmatprep.subr.mxu0 %v2499
    %2553 = vmatpush1.msra.mxu0 %v2498
    %2554 = vmatprep.subr.mxu0 %v2503
    %2555 = vmatpush1.msra.mxu0 %v2502
    %2556 = vmatprep.subr.mxu0 %v2507
    %2557 = vmatpush1.msra.mxu0 %v2506
    %2558 = vmatprep.subr.mxu0 %v2511
    %2559 = vmatpush1.msra.mxu0 %v2510
    %2560 = vmatprep.subr.mxu0 %v2515
    %2561 = vmatpush1.msra.mxu0 %v2514
    %2562 = vmatprep.subr.mxu0 %v2519
    %2563 = vmatpush1.msra.mxu0 %v2518
    %2564 = vmatprep.subr.mxu0 %v2523
    %2565 = vmatpush1.msra.mxu0 %v2522
    %2566 = vmatprep.subr.mxu0 %v2527
    %2567 = vmatpush1.msra.mxu0 %v2526
    %2568 = vmatprep.subr.mxu0 %v2531
    %2569 = vmatpush1.msra.mxu0 %v2530
    %2570 = vmatprep.subr.mxu0 %v2535
    %2571 = vmatpush1.msra.mxu0 %v2534
    %2572 = vmatprep.subr.mxu0 %v2539
    %2573 = vmatpush1.msra.mxu0 %v2538
    %2574 = vmatprep.subr.mxu0 0.0
    %2575 = vmatpush1.msra.mxu0 0.0
    %2576 = vmatprep.subr.mxu0 0.0
    %2577 = vmatpush1.msra.mxu0 0.0
    %2578 = vmatprep.subr.mxu0 0.0
    %2579 = vmatpush1.msra.mxu0 0.0
    %2580 = vmatprep.subr.mxu0 0.0
    %2581 = vmatpush1.msra.mxu0 0.0
    %2582 = vmatprep.subr.mxu0 0.0
    %2583 = vmatpush1.msra.mxu0 0.0
    %2584 = vmatprep.subr.mxu0 0.0
    %2585 = vmatpush1.msra.mxu0 0.0
    %2586 = vmatprep.subr.mxu0 0.0
    %2587 = vmatpush1.msra.mxu0 0.0
    %2588 = vmatprep.subr.mxu0 0.0
    %2589 = vmatpush1.msra.mxu0 0.0
    %2590 = vmatprep.subr.mxu0 0.0
    %2591 = vmatpush1.msra.mxu0 0.0
    %2592 = vmatprep.subr.mxu0 0.0
    %2593 = vmatpush1.msra.mxu0 0.0
    %2594 = vmatprep.subr.mxu0 0.0
    %2595 = vmatpush1.msra.mxu0 0.0
    %2596 = vmatprep.subr.mxu0 0.0
    %2597 = vmatpush1.msra.mxu0 0.0
    %2598 = vmatprep.subr.mxu0 0.0
    %2599 = vmatpush1.msra.mxu0 0.0
    %2600 = vmatprep.subr.mxu0 0.0
    %2601 = vmatpush1.msra.mxu0 0.0
    %2602 = vmatprep.subr.mxu0 0.0
    %2603 = vmatpush1.msra.mxu0 0.0
    %2604 = vmatprep.subr.mxu0 0.0
    %2605 = vmatpush1.msra.mxu0 0.0
    %2606 = vmatprep.mubr.f32.mxu0 0.0
    %2607 = vmatmul.mubr.f32.gmra.mrb[0].mxu0 %v2254
    %v2608 = vpop.f32.mrb[0].mxu0
    %v2609 = vadd.f32 0.0, %v2608
    %v2610 = vpop.f32.mrb[0].mxu0
    %v2611 = vadd.f32 0.0, %v2610
    %2612 = vdwg.mxu0
    %2613 = vmatprep.subr.mxu0 %v2481
    %2614 = vmatpush1.msra.mxu0 %v2480
    %2615 = vmatprep.subr.mxu0 %v2485
    %2616 = vmatpush1.msra.mxu0 %v2484
    %2617 = vmatprep.subr.mxu0 %v2489
    %2618 = vmatpush1.msra.mxu0 %v2488
    %2619 = vmatprep.subr.mxu0 %v2493
    %2620 = vmatpush1.msra.mxu0 %v2492
    %2621 = vmatprep.subr.mxu0 %v2497
    %2622 = vmatpush1.msra.mxu0 %v2496
    %2623 = vmatprep.subr.mxu0 %v2501
    %2624 = vmatpush1.msra.mxu0 %v2500
    %2625 = vmatprep.subr.mxu0 %v2505
    %2626 = vmatpush1.msra.mxu0 %v2504
    %2627 = vmatprep.subr.mxu0 %v2509
    %2628 = vmatpush1.msra.mxu0 %v2508
    %2629 = vmatprep.subr.mxu0 %v2513
    %2630 = vmatpush1.msra.mxu0 %v2512
    %2631 = vmatprep.subr.mxu0 %v2517
    %2632 = vmatpush1.msra.mxu0 %v2516
    %2633 = vmatprep.subr.mxu0 %v2521
    %2634 = vmatpush1.msra.mxu0 %v2520
    %2635 = vmatprep.subr.mxu0 %v2525
    %2636 = vmatpush1.msra.mxu0 %v2524
    %2637 = vmatprep.subr.mxu0 %v2529
    %2638 = vmatpush1.msra.mxu0 %v2528
    %2639 = vmatprep.subr.mxu0 %v2533
    %2640 = vmatpush1.msra.mxu0 %v2532
    %2641 = vmatprep.subr.mxu0 %v2537
    %2642 = vmatpush1.msra.mxu0 %v2536
    %2643 = vmatprep.subr.mxu0 %v2541
    %2644 = vmatpush1.msra.mxu0 %v2540
    %2645 = vmatprep.subr.mxu0 0.0
    %2646 = vmatpush1.msra.mxu0 0.0
    %2647 = vmatprep.subr.mxu0 0.0
    %2648 = vmatpush1.msra.mxu0 0.0
    %2649 = vmatprep.subr.mxu0 0.0
    %2650 = vmatpush1.msra.mxu0 0.0
    %2651 = vmatprep.subr.mxu0 0.0
    %2652 = vmatpush1.msra.mxu0 0.0
    %2653 = vmatprep.subr.mxu0 0.0
    %2654 = vmatpush1.msra.mxu0 0.0
    %2655 = vmatprep.subr.mxu0 0.0
    %2656 = vmatpush1.msra.mxu0 0.0
    %2657 = vmatprep.subr.mxu0 0.0
    %2658 = vmatpush1.msra.mxu0 0.0
    %2659 = vmatprep.subr.mxu0 0.0
    %2660 = vmatpush1.msra.mxu0 0.0
    %2661 = vmatprep.subr.mxu0 0.0
    %2662 = vmatpush1.msra.mxu0 0.0
    %2663 = vmatprep.subr.mxu0 0.0
    %2664 = vmatpush1.msra.mxu0 0.0
    %2665 = vmatprep.subr.mxu0 0.0
    %2666 = vmatpush1.msra.mxu0 0.0
    %2667 = vmatprep.subr.mxu0 0.0
    %2668 = vmatpush1.msra.mxu0 0.0
    %2669 = vmatprep.subr.mxu0 0.0
    %2670 = vmatpush1.msra.mxu0 0.0
    %2671 = vmatprep.subr.mxu0 0.0
    %2672 = vmatpush1.msra.mxu0 0.0
    %2673 = vmatprep.subr.mxu0 0.0
    %2674 = vmatpush1.msra.mxu0 0.0
    %2675 = vmatprep.subr.mxu0 0.0
    %2676 = vmatpush1.msra.mxu0 0.0
    %2677 = vmatprep.mubr.f32.mxu0 0.0
    %2678 = vmatmul.mubr.f32.gmra.mrb[0].mxu0 %v2254
    %v2679 = vpop.f32.mrb[0].mxu0
    %v2680 = vadd.f32 0.0, %v2679
    %v2681 = vpop.f32.mrb[0].mxu0
    %v2682 = vadd.f32 0.0, %v2681
    %2683 = vdwg.mxu0
    %v2684 = vadd.f32 %v2474, %v2609
    %v2685 = vadd.f32 %v2475, %v2611
    %v2686 = vadd.f32 %v2476, %v2680
    %v2687 = vadd.f32 %v2477, %v2682
    %v2688 = vxor.u32 %v2469, 2147483648
    %v2689 = vmul.f32 %v2688, 1.442695
    %v2690 = vpow.pop %v2689
    %v2691 = vadd.f32 %v2690, 1.0
    %v2692 = vrcp.pop %v2691
    %v2693 = vmul.f32 1.0, %v2692
    %v2694 = vxor.u32 %v2470, 2147483648
    %v2695 = vmul.f32 %v2694, 1.442695
    %v2696 = vpow.pop %v2695
    %v2697 = vadd.f32 %v2696, 1.0
    %v2698 = vrcp.pop %v2697
    %v2699 = vmul.f32 1.0, %v2698
    %v2700 = vtanh.pop %v2471
    %v2701 = vxor.u32 %v2472, 2147483648
    %v2702 = vmul.f32 %v2701, 1.442695
    %v2703 = vpow.pop %v2702
    %v2704 = vadd.f32 %v2703, 1.0
    %v2705 = vrcp.pop %v2704
    %v2706 = vmul.f32 1.0, %v2705
    %v2707 = vmul.f32 %v2699, %v2253
    %v2708 = vmul.f32 %v2693, %v2700
    %v2709 = vadd.f32 %v2707, %v2708
    %v2710 = vtanh.pop %v2709
    %v2711 = vmul.f32 %v2706, %v2710
    %v2712 = vxor.u32 %v2684, 2147483648
    %v2713 = vmul.f32 %v2712, 1.442695
    %v2714 = vpow.pop %v2713
    %v2715 = vadd.f32 %v2714, 1.0
    %v2716 = vrcp.pop %v2715
    %v2717 = vmul.f32 1.0, %v2716
    %v2718 = vxor.u32 %v2685, 2147483648
    %v2719 = vmul.f32 %v2718, 1.442695
    %v2720 = vpow.pop %v2719
    %v2721 = vadd.f32 %v2720, 1.0
    %v2722 = vrcp.pop %v2721
    %v2723 = vmul.f32 1.0, %v2722
    %v2724 = vtanh.pop %v2686
    %v2725 = vxor.u32 %v2687, 2147483648
    %v2726 = vmul.f32 %v2725, 1.442695
    %v2727 = vpow.pop %v2726
    %v2728 = vadd.f32 %v2727, 1.0
    %v2729 = vrcp.pop %v2728
    %v2730 = vmul.f32 1.0, %v2729
    %v2731 = vmul.f32 %v2723, %v2255
    %v2732 = vmul.f32 %v2717, %v2724
    %v2733 = vadd.f32 %v2731, %v2732
    %v2734 = vtanh.pop %v2733
    %v2735 = vmul.f32 %v2730, %v2734
    %v2736 = vsel %vm2256, 1, 0
    %2737 = vset.pattern.permute.xlu0 0
    %2738 = vperm.xlu0 %2737, %v2736
    %v2739 = vpop.permute.xlu0 %2738
    %vm2740 = vcmp.eq.s32.totalorder %v2739, 1
    %v2741 = vsel %vm2740, %v2711, 0.0
    %s2742 = scalar_lea.vmem [#allocation4], 24
    %2743 = vst [vmem:[%s2742] sm:$0xff] %v2741
    %v2744 = vsel %vm2257, 1, 0
    %2745 = vset.pattern.permute.xlu0 0
    %2746 = vperm.xlu0 %2745, %v2744
    %v2747 = vpop.permute.xlu0 %2746
    %vm2748 = vcmp.eq.s32.totalorder %v2747, 1
    %v2749 = vsel %vm2748, %v2735, 0.0
    %s2750 = scalar_lea.vmem [#allocation5], 32
    %2751 = vst [vmem:[%s2750] sm:$0xff] %v2749
    %v2752 = vsel %vm2740, %v2711, %v2252
    %v2753 = vsel %vm2740, %v2709, %v2253
    %v2754 = vsel %vm2748, %v2735, %v2254
    %v2755 = vsel %vm2748, %v2733, %v2255
    %s2756 = scalar_lea.vmem [#allocation2], 128
    %v2757 = vld [vmem:[%s2756] sm:$0xff]
    %v2758 = vld [vmem:[%s2756 + $0x8] sm:$0xff]
    %v2759 = vld [vmem:[%s2756 + $0x10] sm:$0xff]
    %v2760 = vld [vmem:[%s2756 + $0x18] sm:$0xff]
    %v2761 = vld [vmem:[#allocation12] sm:$0xff]
    %v2762 = vld [vmem:[#allocation12 + $0x8] sm:$0xff]
    %v2763 = vld [vmem:[#allocation12 + $0x10] sm:$0xff]
    %v2764 = vld [vmem:[#allocation12 + $0x18] sm:$0xff]
    %v2765 = vld [vmem:[#allocation12 + $0x20] sm:$0xff]
    %v2766 = vld [vmem:[#allocation12 + $0x28] sm:$0xff]
    %v2767 = vld [vmem:[#allocation12 + $0x30] sm:$0xff]
    %v2768 = vld [vmem:[#allocation12 + $0x38] sm:$0xff]
    %v2769 = vld [vmem:[#allocation12 + $0x40] sm:$0xff]
    %v2770 = vld [vmem:[#allocation12 + $0x48] sm:$0xff]
    %v2771 = vld [vmem:[#allocation12 + $0x50] sm:$0xff]
    %v2772 = vld [vmem:[#allocation12 + $0x58] sm:$0xff]
    %v2773 = vld [vmem:[#allocation12 + $0x60] sm:$0xff]
    %v2774 = vld [vmem:[#allocation12 + $0x68] sm:$0xff]
    %v2775 = vld [vmem:[#allocation12 + $0x70] sm:$0xff]
    %v2776 = vld [vmem:[#allocation12 + $0x78] sm:$0xff]
    %v2777 = vld [vmem:[#allocation12 + $0x80] sm:$0xff]
    %v2778 = vld [vmem:[#allocation12 + $0x88] sm:$0xff]
    %v2779 = vld [vmem:[#allocation12 + $0x90] sm:$0xff]
    %v2780 = vld [vmem:[#allocation12 + $0x98] sm:$0xff]
    %v2781 = vld [vmem:[#allocation12 + $0xa0] sm:$0xff]
    %v2782 = vld [vmem:[#allocation12 + $0xa8] sm:$0xff]
    %v2783 = vld [vmem:[#allocation12 + $0xb0] sm:$0xff]
    %v2784 = vld [vmem:[#allocation12 + $0xb8] sm:$0xff]
    %v2785 = vld [vmem:[#allocation12 + $0xc0] sm:$0xff]
    %v2786 = vld [vmem:[#allocation12 + $0xc8] sm:$0xff]
    %v2787 = vld [vmem:[#allocation12 + $0xd0] sm:$0xff]
    %v2788 = vld [vmem:[#allocation12 + $0xd8] sm:$0xff]
    %v2789 = vld [vmem:[#allocation12 + $0xe0] sm:$0xff]
    %v2790 = vld [vmem:[#allocation12 + $0xe8] sm:$0xff]
    %v2791 = vld [vmem:[#allocation12 + $0xf0] sm:$0xff]
    %v2792 = vld [vmem:[#allocation12 + $0xf8] sm:$0xff]
    %v2793 = vld [vmem:[#allocation12 + $0x100] sm:$0xff]
    %v2794 = vld [vmem:[#allocation12 + $0x108] sm:$0xff]
    %v2795 = vld [vmem:[#allocation12 + $0x110] sm:$0xff]
    %v2796 = vld [vmem:[#allocation12 + $0x118] sm:$0xff]
    %v2797 = vld [vmem:[#allocation12 + $0x120] sm:$0xff]
    %v2798 = vld [vmem:[#allocation12 + $0x128] sm:$0xff]
    %v2799 = vld [vmem:[#allocation12 + $0x130] sm:$0xff]
    %v2800 = vld [vmem:[#allocation12 + $0x138] sm:$0xff]
    %v2801 = vld [vmem:[#allocation12 + $0x140] sm:$0xff]
    %v2802 = vld [vmem:[#allocation12 + $0x148] sm:$0xff]
    %v2803 = vld [vmem:[#allocation12 + $0x150] sm:$0xff]
    %v2804 = vld [vmem:[#allocation12 + $0x158] sm:$0xff]
    %v2805 = vld [vmem:[#allocation12 + $0x160] sm:$0xff]
    %v2806 = vld [vmem:[#allocation12 + $0x168] sm:$0xff]
    %v2807 = vld [vmem:[#allocation12 + $0x170] sm:$0xff]
    %v2808 = vld [vmem:[#allocation12 + $0x178] sm:$0xff]
    %v2809 = vld [vmem:[#allocation12 + $0x180] sm:$0xff]
    %v2810 = vld [vmem:[#allocation12 + $0x188] sm:$0xff]
    %v2811 = vld [vmem:[#allocation12 + $0x190] sm:$0xff]
    %v2812 = vld [vmem:[#allocation12 + $0x198] sm:$0xff]
    %v2813 = vld [vmem:[#allocation12 + $0x1a0] sm:$0xff]
    %v2814 = vld [vmem:[#allocation12 + $0x1a8] sm:$0xff]
    %v2815 = vld [vmem:[#allocation12 + $0x1b0] sm:$0xff]
    %v2816 = vld [vmem:[#allocation12 + $0x1b8] sm:$0xff]
    %v2817 = vld [vmem:[#allocation12 + $0x1c0] sm:$0xff]
    %v2818 = vld [vmem:[#allocation12 + $0x1c8] sm:$0xff]
    %v2819 = vld [vmem:[#allocation12 + $0x1d0] sm:$0xff]
    %v2820 = vld [vmem:[#allocation12 + $0x1d8] sm:$0xff]
    %v2821 = vld [vmem:[#allocation12 + $0x1e0] sm:$0xff]
    %v2822 = vld [vmem:[#allocation12 + $0x1e8] sm:$0xff]
    %v2823 = vld [vmem:[#allocation12 + $0x1f0] sm:$0xff]
    %v2824 = vld [vmem:[#allocation12 + $0x1f8] sm:$0xff]
    %2825 = vmatprep.subr.mxu0 %v2762
    %2826 = vmatpush1.msra.mxu0 %v2761
    %2827 = vmatprep.subr.mxu0 %v2766
    %2828 = vmatpush1.msra.mxu0 %v2765
    %2829 = vmatprep.subr.mxu0 %v2770
    %2830 = vmatpush1.msra.mxu0 %v2769
    %2831 = vmatprep.subr.mxu0 %v2774
    %2832 = vmatpush1.msra.mxu0 %v2773
    %2833 = vmatprep.subr.mxu0 %v2778
    %2834 = vmatpush1.msra.mxu0 %v2777
    %2835 = vmatprep.subr.mxu0 %v2782
    %2836 = vmatpush1.msra.mxu0 %v2781
    %2837 = vmatprep.subr.mxu0 %v2786
    %2838 = vmatpush1.msra.mxu0 %v2785
    %2839 = vmatprep.subr.mxu0 %v2790
    %2840 = vmatpush1.msra.mxu0 %v2789
    %2841 = vmatprep.subr.mxu0 %v2794
    %2842 = vmatpush1.msra.mxu0 %v2793
    %2843 = vmatprep.subr.mxu0 %v2798
    %2844 = vmatpush1.msra.mxu0 %v2797
    %2845 = vmatprep.subr.mxu0 %v2802
    %2846 = vmatpush1.msra.mxu0 %v2801
    %2847 = vmatprep.subr.mxu0 %v2806
    %2848 = vmatpush1.msra.mxu0 %v2805
    %2849 = vmatprep.subr.mxu0 %v2810
    %2850 = vmatpush1.msra.mxu0 %v2809
    %2851 = vmatprep.subr.mxu0 %v2814
    %2852 = vmatpush1.msra.mxu0 %v2813
    %2853 = vmatprep.subr.mxu0 %v2818
    %2854 = vmatpush1.msra.mxu0 %v2817
    %2855 = vmatprep.subr.mxu0 %v2822
    %2856 = vmatpush1.msra.mxu0 %v2821
    %2857 = vmatprep.subr.mxu0 0.0
    %2858 = vmatpush1.msra.mxu0 0.0
    %2859 = vmatprep.subr.mxu0 0.0
    %2860 = vmatpush1.msra.mxu0 0.0
    %2861 = vmatprep.subr.mxu0 0.0
    %2862 = vmatpush1.msra.mxu0 0.0
    %2863 = vmatprep.subr.mxu0 0.0
    %2864 = vmatpush1.msra.mxu0 0.0
    %2865 = vmatprep.subr.mxu0 0.0
    %2866 = vmatpush1.msra.mxu0 0.0
    %2867 = vmatprep.subr.mxu0 0.0
    %2868 = vmatpush1.msra.mxu0 0.0
    %2869 = vmatprep.subr.mxu0 0.0
    %2870 = vmatpush1.msra.mxu0 0.0
    %2871 = vmatprep.subr.mxu0 0.0
    %2872 = vmatpush1.msra.mxu0 0.0
    %2873 = vmatprep.subr.mxu0 0.0
    %2874 = vmatpush1.msra.mxu0 0.0
    %2875 = vmatprep.subr.mxu0 0.0
    %2876 = vmatpush1.msra.mxu0 0.0
    %2877 = vmatprep.subr.mxu0 0.0
    %2878 = vmatpush1.msra.mxu0 0.0
    %2879 = vmatprep.subr.mxu0 0.0
    %2880 = vmatpush1.msra.mxu0 0.0
    %2881 = vmatprep.subr.mxu0 0.0
    %2882 = vmatpush1.msra.mxu0 0.0
    %2883 = vmatprep.subr.mxu0 0.0
    %2884 = vmatpush1.msra.mxu0 0.0
    %2885 = vmatprep.subr.mxu0 0.0
    %2886 = vmatpush1.msra.mxu0 0.0
    %2887 = vmatprep.subr.mxu0 0.0
    %2888 = vmatpush1.msra.mxu0 0.0
    %2889 = vmatprep.mubr.f32.mxu0 0.0
    %2890 = vmatmul.mubr.f32.gmra.mrb[0].mxu0 %v2752
    %v2891 = vpop.f32.mrb[0].mxu0
    %v2892 = vadd.f32 0.0, %v2891
    %v2893 = vpop.f32.mrb[0].mxu0
    %v2894 = vadd.f32 0.0, %v2893
    %2895 = vdwg.mxu0
    %2896 = vmatprep.subr.mxu0 %v2764
    %2897 = vmatpush1.msra.mxu0 %v2763
    %2898 = vmatprep.subr.mxu0 %v2768
    %2899 = vmatpush1.msra.mxu0 %v2767
    %2900 = vmatprep.subr.mxu0 %v2772
    %2901 = vmatpush1.msra.mxu0 %v2771
    %2902 = vmatprep.subr.mxu0 %v2776
    %2903 = vmatpush1.msra.mxu0 %v2775
    %2904 = vmatprep.subr.mxu0 %v2780
    %2905 = vmatpush1.msra.mxu0 %v2779
    %2906 = vmatprep.subr.mxu0 %v2784
    %2907 = vmatpush1.msra.mxu0 %v2783
    %2908 = vmatprep.subr.mxu0 %v2788
    %2909 = vmatpush1.msra.mxu0 %v2787
    %2910 = vmatprep.subr.mxu0 %v2792
    %2911 = vmatpush1.msra.mxu0 %v2791
    %2912 = vmatprep.subr.mxu0 %v2796
    %2913 = vmatpush1.msra.mxu0 %v2795
    %2914 = vmatprep.subr.mxu0 %v2800
    %2915 = vmatpush1.msra.mxu0 %v2799
    %2916 = vmatprep.subr.mxu0 %v2804
    %2917 = vmatpush1.msra.mxu0 %v2803
    %2918 = vmatprep.subr.mxu0 %v2808
    %2919 = vmatpush1.msra.mxu0 %v2807
    %2920 = vmatprep.subr.mxu0 %v2812
    %2921 = vmatpush1.msra.mxu0 %v2811
    %2922 = vmatprep.subr.mxu0 %v2816
    %2923 = vmatpush1.msra.mxu0 %v2815
    %2924 = vmatprep.subr.mxu0 %v2820
    %2925 = vmatpush1.msra.mxu0 %v2819
    %2926 = vmatprep.subr.mxu0 %v2824
    %2927 = vmatpush1.msra.mxu0 %v2823
    %2928 = vmatprep.subr.mxu0 0.0
    %2929 = vmatpush1.msra.mxu0 0.0
    %2930 = vmatprep.subr.mxu0 0.0
    %2931 = vmatpush1.msra.mxu0 0.0
    %2932 = vmatprep.subr.mxu0 0.0
    %2933 = vmatpush1.msra.mxu0 0.0
    %2934 = vmatprep.subr.mxu0 0.0
    %2935 = vmatpush1.msra.mxu0 0.0
    %2936 = vmatprep.subr.mxu0 0.0
    %2937 = vmatpush1.msra.mxu0 0.0
    %2938 = vmatprep.subr.mxu0 0.0
    %2939 = vmatpush1.msra.mxu0 0.0
    %2940 = vmatprep.subr.mxu0 0.0
    %2941 = vmatpush1.msra.mxu0 0.0
    %2942 = vmatprep.subr.mxu0 0.0
    %2943 = vmatpush1.msra.mxu0 0.0
    %2944 = vmatprep.subr.mxu0 0.0
    %2945 = vmatpush1.msra.mxu0 0.0
    %2946 = vmatprep.subr.mxu0 0.0
    %2947 = vmatpush1.msra.mxu0 0.0
    %2948 = vmatprep.subr.mxu0 0.0
    %2949 = vmatpush1.msra.mxu0 0.0
    %2950 = vmatprep.subr.mxu0 0.0
    %2951 = vmatpush1.msra.mxu0 0.0
    %2952 = vmatprep.subr.mxu0 0.0
    %2953 = vmatpush1.msra.mxu0 0.0
    %2954 = vmatprep.subr.mxu0 0.0
    %2955 = vmatpush1.msra.mxu0 0.0
    %2956 = vmatprep.subr.mxu0 0.0
    %2957 = vmatpush1.msra.mxu0 0.0
    %2958 = vmatprep.subr.mxu0 0.0
    %2959 = vmatpush1.msra.mxu0 0.0
    %2960 = vmatprep.mubr.f32.mxu0 0.0
    %2961 = vmatmul.mubr.f32.gmra.mrb[0].mxu0 %v2752
    %v2962 = vpop.f32.mrb[0].mxu0
    %v2963 = vadd.f32 0.0, %v2962
    %v2964 = vpop.f32.mrb[0].mxu0
    %v2965 = vadd.f32 0.0, %v2964
    %2966 = vdwg.mxu0
    %v2967 = vadd.f32 %v2757, %v2892
    %v2968 = vadd.f32 %v2758, %v2894
    %v2969 = vadd.f32 %v2759, %v2963
    %v2970 = vadd.f32 %v2760, %v2965
    %s2971 = scalar_lea.vmem [#allocation3], 96
    %v2972 = vld [vmem:[%s2971] sm:$0xff]
    %v2973 = vld [vmem:[%s2971 + $0x8] sm:$0xff]
    %v2974 = vld [vmem:[%s2971 + $0x10] sm:$0xff]
    %v2975 = vld [vmem:[%s2971 + $0x18] sm:$0xff]
    %v2976 = vld [vmem:[#allocation14] sm:$0xff]
    %v2977 = vld [vmem:[#allocation14 + $0x8] sm:$0xff]
    %v2978 = vld [vmem:[#allocation14 + $0x10] sm:$0xff]
    %v2979 = vld [vmem:[#allocation14 + $0x18] sm:$0xff]
    %v2980 = vld [vmem:[#allocation14 + $0x20] sm:$0xff]
    %v2981 = vld [vmem:[#allocation14 + $0x28] sm:$0xff]
    %v2982 = vld [vmem:[#allocation14 + $0x30] sm:$0xff]
    %v2983 = vld [vmem:[#allocation14 + $0x38] sm:$0xff]
    %v2984 = vld [vmem:[#allocation14 + $0x40] sm:$0xff]
    %v2985 = vld [vmem:[#allocation14 + $0x48] sm:$0xff]
    %v2986 = vld [vmem:[#allocation14 + $0x50] sm:$0xff]
    %v2987 = vld [vmem:[#allocation14 + $0x58] sm:$0xff]
    %v2988 = vld [vmem:[#allocation14 + $0x60] sm:$0xff]
    %v2989 = vld [vmem:[#allocation14 + $0x68] sm:$0xff]
    %v2990 = vld [vmem:[#allocation14 + $0x70] sm:$0xff]
    %v2991 = vld [vmem:[#allocation14 + $0x78] sm:$0xff]
    %v2992 = vld [vmem:[#allocation14 + $0x80] sm:$0xff]
    %v2993 = vld [vmem:[#allocation14 + $0x88] sm:$0xff]
    %v2994 = vld [vmem:[#allocation14 + $0x90] sm:$0xff]
    %v2995 = vld [vmem:[#allocation14 + $0x98] sm:$0xff]
    %v2996 = vld [vmem:[#allocation14 + $0xa0] sm:$0xff]
    %v2997 = vld [vmem:[#allocation14 + $0xa8] sm:$0xff]
    %v2998 = vld [vmem:[#allocation14 + $0xb0] sm:$0xff]
    %v2999 = vld [vmem:[#allocation14 + $0xb8] sm:$0xff]
    %v3000 = vld [vmem:[#allocation14 + $0xc0] sm:$0xff]
    %v3001 = vld [vmem:[#allocation14 + $0xc8] sm:$0xff]
    %v3002 = vld [vmem:[#allocation14 + $0xd0] sm:$0xff]
    %v3003 = vld [vmem:[#allocation14 + $0xd8] sm:$0xff]
    %v3004 = vld [vmem:[#allocation14 + $0xe0] sm:$0xff]
    %v3005 = vld [vmem:[#allocation14 + $0xe8] sm:$0xff]
    %v3006 = vld [vmem:[#allocation14 + $0xf0] sm:$0xff]
    %v3007 = vld [vmem:[#allocation14 + $0xf8] sm:$0xff]
    %v3008 = vld [vmem:[#allocation14 + $0x100] sm:$0xff]
    %v3009 = vld [vmem:[#allocation14 + $0x108] sm:$0xff]
    %v3010 = vld [vmem:[#allocation14 + $0x110] sm:$0xff]
    %v3011 = vld [vmem:[#allocation14 + $0x118] sm:$0xff]
    %v3012 = vld [vmem:[#allocation14 + $0x120] sm:$0xff]
    %v3013 = vld [vmem:[#allocation14 + $0x128] sm:$0xff]
    %v3014 = vld [vmem:[#allocation14 + $0x130] sm:$0xff]
    %v3015 = vld [vmem:[#allocation14 + $0x138] sm:$0xff]
    %v3016 = vld [vmem:[#allocation14 + $0x140] sm:$0xff]
    %v3017 = vld [vmem:[#allocation14 + $0x148] sm:$0xff]
    %v3018 = vld [vmem:[#allocation14 + $0x150] sm:$0xff]
    %v3019 = vld [vmem:[#allocation14 + $0x158] sm:$0xff]
    %v3020 = vld [vmem:[#allocation14 + $0x160] sm:$0xff]
    %v3021 = vld [vmem:[#allocation14 + $0x168] sm:$0xff]
    %v3022 = vld [vmem:[#allocation14 + $0x170] sm:$0xff]
    %v3023 = vld [vmem:[#allocation14 + $0x178] sm:$0xff]
    %v3024 = vld [vmem:[#allocation14 + $0x180] sm:$0xff]
    %v3025 = vld [vmem:[#allocation14 + $0x188] sm:$0xff]
    %v3026 = vld [vmem:[#allocation14 + $0x190] sm:$0xff]
    %v3027 = vld [vmem:[#allocation14 + $0x198] sm:$0xff]
    %v3028 = vld [vmem:[#allocation14 + $0x1a0] sm:$0xff]
    %v3029 = vld [vmem:[#allocation14 + $0x1a8] sm:$0xff]
    %v3030 = vld [vmem:[#allocation14 + $0x1b0] sm:$0xff]
    %v3031 = vld [vmem:[#allocation14 + $0x1b8] sm:$0xff]
    %v3032 = vld [vmem:[#allocation14 + $0x1c0] sm:$0xff]
    %v3033 = vld [vmem:[#allocation14 + $0x1c8] sm:$0xff]
    %v3034 = vld [vmem:[#allocation14 + $0x1d0] sm:$0xff]
    %v3035 = vld [vmem:[#allocation14 + $0x1d8] sm:$0xff]
    %v3036 = vld [vmem:[#allocation14 + $0x1e0] sm:$0xff]
    %v3037 = vld [vmem:[#allocation14 + $0x1e8] sm:$0xff]
    %v3038 = vld [vmem:[#allocation14 + $0x1f0] sm:$0xff]
    %v3039 = vld [vmem:[#allocation14 + $0x1f8] sm:$0xff]
    %3040 = vmatprep.subr.mxu0 %v2977
    %3041 = vmatpush1.msra.mxu0 %v2976
    %3042 = vmatprep.subr.mxu0 %v2981
    %3043 = vmatpush1.msra.mxu0 %v2980
    %3044 = vmatprep.subr.mxu0 %v2985
    %3045 = vmatpush1.msra.mxu0 %v2984
    %3046 = vmatprep.subr.mxu0 %v2989
    %3047 = vmatpush1.msra.mxu0 %v2988
    %3048 = vmatprep.subr.mxu0 %v2993
    %3049 = vmatpush1.msra.mxu0 %v2992
    %3050 = vmatprep.subr.mxu0 %v2997
    %3051 = vmatpush1.msra.mxu0 %v2996
    %3052 = vmatprep.subr.mxu0 %v3001
    %3053 = vmatpush1.msra.mxu0 %v3000
    %3054 = vmatprep.subr.mxu0 %v3005
    %3055 = vmatpush1.msra.mxu0 %v3004
    %3056 = vmatprep.subr.mxu0 %v3009
    %3057 = vmatpush1.msra.mxu0 %v3008
    %3058 = vmatprep.subr.mxu0 %v3013
    %3059 = vmatpush1.msra.mxu0 %v3012
    %3060 = vmatprep.subr.mxu0 %v3017
    %3061 = vmatpush1.msra.mxu0 %v3016
    %3062 = vmatprep.subr.mxu0 %v3021
    %3063 = vmatpush1.msra.mxu0 %v3020
    %3064 = vmatprep.subr.mxu0 %v3025
    %3065 = vmatpush1.msra.mxu0 %v3024
    %3066 = vmatprep.subr.mxu0 %v3029
    %3067 = vmatpush1.msra.mxu0 %v3028
    %3068 = vmatprep.subr.mxu0 %v3033
    %3069 = vmatpush1.msra.mxu0 %v3032
    %3070 = vmatprep.subr.mxu0 %v3037
    %3071 = vmatpush1.msra.mxu0 %v3036
    %3072 = vmatprep.subr.mxu0 0.0
    %3073 = vmatpush1.msra.mxu0 0.0
    %3074 = vmatprep.subr.mxu0 0.0
    %3075 = vmatpush1.msra.mxu0 0.0
    %3076 = vmatprep.subr.mxu0 0.0
    %3077 = vmatpush1.msra.mxu0 0.0
    %3078 = vmatprep.subr.mxu0 0.0
    %3079 = vmatpush1.msra.mxu0 0.0
    %3080 = vmatprep.subr.mxu0 0.0
    %3081 = vmatpush1.msra.mxu0 0.0
    %3082 = vmatprep.subr.mxu0 0.0
    %3083 = vmatpush1.msra.mxu0 0.0
    %3084 = vmatprep.subr.mxu0 0.0
    %3085 = vmatpush1.msra.mxu0 0.0
    %3086 = vmatprep.subr.mxu0 0.0
    %3087 = vmatpush1.msra.mxu0 0.0
    %3088 = vmatprep.subr.mxu0 0.0
    %3089 = vmatpush1.msra.mxu0 0.0
    %3090 = vmatprep.subr.mxu0 0.0
    %3091 = vmatpush1.msra.mxu0 0.0
    %3092 = vmatprep.subr.mxu0 0.0
    %3093 = vmatpush1.msra.mxu0 0.0
    %3094 = vmatprep.subr.mxu0 0.0
    %3095 = vmatpush1.msra.mxu0 0.0
    %3096 = vmatprep.subr.mxu0 0.0
    %3097 = vmatpush1.msra.mxu0 0.0
    %3098 = vmatprep.subr.mxu0 0.0
    %3099 = vmatpush1.msra.mxu0 0.0
    %3100 = vmatprep.subr.mxu0 0.0
    %3101 = vmatpush1.msra.mxu0 0.0
    %3102 = vmatprep.subr.mxu0 0.0
    %3103 = vmatpush1.msra.mxu0 0.0
    %3104 = vmatprep.mubr.f32.mxu0 0.0
    %3105 = vmatmul.mubr.f32.gmra.mrb[0].mxu0 %v2754
    %v3106 = vpop.f32.mrb[0].mxu0
    %v3107 = vadd.f32 0.0, %v3106
    %v3108 = vpop.f32.mrb[0].mxu0
    %v3109 = vadd.f32 0.0, %v3108
    %3110 = vdwg.mxu0
    %3111 = vmatprep.subr.mxu0 %v2979
    %3112 = vmatpush1.msra.mxu0 %v2978
    %3113 = vmatprep.subr.mxu0 %v2983
    %3114 = vmatpush1.msra.mxu0 %v2982
    %3115 = vmatprep.subr.mxu0 %v2987
    %3116 = vmatpush1.msra.mxu0 %v2986
    %3117 = vmatprep.subr.mxu0 %v2991
    %3118 = vmatpush1.msra.mxu0 %v2990
    %3119 = vmatprep.subr.mxu0 %v2995
    %3120 = vmatpush1.msra.mxu0 %v2994
    %3121 = vmatprep.subr.mxu0 %v2999
    %3122 = vmatpush1.msra.mxu0 %v2998
    %3123 = vmatprep.subr.mxu0 %v3003
    %3124 = vmatpush1.msra.mxu0 %v3002
    %3125 = vmatprep.subr.mxu0 %v3007
    %3126 = vmatpush1.msra.mxu0 %v3006
    %3127 = vmatprep.subr.mxu0 %v3011
    %3128 = vmatpush1.msra.mxu0 %v3010
    %3129 = vmatprep.subr.mxu0 %v3015
    %3130 = vmatpush1.msra.mxu0 %v3014
    %3131 = vmatprep.subr.mxu0 %v3019
    %3132 = vmatpush1.msra.mxu0 %v3018
    %3133 = vmatprep.subr.mxu0 %v3023
    %3134 = vmatpush1.msra.mxu0 %v3022
    %3135 = vmatprep.subr.mxu0 %v3027
    %3136 = vmatpush1.msra.mxu0 %v3026
    %3137 = vmatprep.subr.mxu0 %v3031
    %3138 = vmatpush1.msra.mxu0 %v3030
    %3139 = vmatprep.subr.mxu0 %v3035
    %3140 = vmatpush1.msra.mxu0 %v3034
    %3141 = vmatprep.subr.mxu0 %v3039
    %3142 = vmatpush1.msra.mxu0 %v3038
    %3143 = vmatprep.subr.mxu0 0.0
    %3144 = vmatpush1.msra.mxu0 0.0
    %3145 = vmatprep.subr.mxu0 0.0
    %3146 = vmatpush1.msra.mxu0 0.0
    %3147 = vmatprep.subr.mxu0 0.0
    %3148 = vmatpush1.msra.mxu0 0.0
    %3149 = vmatprep.subr.mxu0 0.0
    %3150 = vmatpush1.msra.mxu0 0.0
    %3151 = vmatprep.subr.mxu0 0.0
    %3152 = vmatpush1.msra.mxu0 0.0
    %3153 = vmatprep.subr.mxu0 0.0
    %3154 = vmatpush1.msra.mxu0 0.0
    %3155 = vmatprep.subr.mxu0 0.0
    %3156 = vmatpush1.msra.mxu0 0.0
    %3157 = vmatprep.subr.mxu0 0.0
    %3158 = vmatpush1.msra.mxu0 0.0
    %3159 = vmatprep.subr.mxu0 0.0
    %3160 = vmatpush1.msra.mxu0 0.0
    %3161 = vmatprep.subr.mxu0 0.0
    %3162 = vmatpush1.msra.mxu0 0.0
    %3163 = vmatprep.subr.mxu0 0.0
    %3164 = vmatpush1.msra.mxu0 0.0
    %3165 = vmatprep.subr.mxu0 0.0
    %3166 = vmatpush1.msra.mxu0 0.0
    %3167 = vmatprep.subr.mxu0 0.0
    %3168 = vmatpush1.msra.mxu0 0.0
    %3169 = vmatprep.subr.mxu0 0.0
    %3170 = vmatpush1.msra.mxu0 0.0
    %3171 = vmatprep.subr.mxu0 0.0
    %3172 = vmatpush1.msra.mxu0 0.0
    %3173 = vmatprep.subr.mxu0 0.0
    %3174 = vmatpush1.msra.mxu0 0.0
    %3175 = vmatprep.mubr.f32.mxu0 0.0
    %3176 = vmatmul.mubr.f32.gmra.mrb[0].mxu0 %v2754
    %v3177 = vpop.f32.mrb[0].mxu0
    %v3178 = vadd.f32 0.0, %v3177
    %v3179 = vpop.f32.mrb[0].mxu0
    %v3180 = vadd.f32 0.0, %v3179
    %3181 = vdwg.mxu0
    %v3182 = vadd.f32 %v2972, %v3107
    %v3183 = vadd.f32 %v2973, %v3109
    %v3184 = vadd.f32 %v2974, %v3178
    %v3185 = vadd.f32 %v2975, %v3180
    %v3186 = vxor.u32 %v2967, 2147483648
    %v3187 = vmul.f32 %v3186, 1.442695
    %v3188 = vpow.pop %v3187
    %v3189 = vadd.f32 %v3188, 1.0
    %v3190 = vrcp.pop %v3189
    %v3191 = vmul.f32 1.0, %v3190
    %v3192 = vxor.u32 %v2968, 2147483648
    %v3193 = vmul.f32 %v3192, 1.442695
    %v3194 = vpow.pop %v3193
    %v3195 = vadd.f32 %v3194, 1.0
    %v3196 = vrcp.pop %v3195
    %v3197 = vmul.f32 1.0, %v3196
    %v3198 = vtanh.pop %v2969
    %v3199 = vxor.u32 %v2970, 2147483648
    %v3200 = vmul.f32 %v3199, 1.442695
    %v3201 = vpow.pop %v3200
    %v3202 = vadd.f32 %v3201, 1.0
    %v3203 = vrcp.pop %v3202
    %v3204 = vmul.f32 1.0, %v3203
    %v3205 = vmul.f32 %v3197, %v2753
    %v3206 = vmul.f32 %v3191, %v3198
    %v3207 = vadd.f32 %v3205, %v3206
    %v3208 = vtanh.pop %v3207
    %v3209 = vmul.f32 %v3204, %v3208
    %v3210 = vxor.u32 %v3182, 2147483648
    %v3211 = vmul.f32 %v3210, 1.442695
    %v3212 = vpow.pop %v3211
    %v3213 = vadd.f32 %v3212, 1.0
    %v3214 = vrcp.pop %v3213
    %v3215 = vmul.f32 1.0, %v3214
    %v3216 = vxor.u32 %v3183, 2147483648
    %v3217 = vmul.f32 %v3216, 1.442695
    %v3218 = vpow.pop %v3217
    %v3219 = vadd.f32 %v3218, 1.0
    %v3220 = vrcp.pop %v3219
    %v3221 = vmul.f32 1.0, %v3220
    %v3222 = vtanh.pop %v3184
    %v3223 = vxor.u32 %v3185, 2147483648
    %v3224 = vmul.f32 %v3223, 1.442695
    %v3225 = vpow.pop %v3224
    %v3226 = vadd.f32 %v3225, 1.0
    %v3227 = vrcp.pop %v3226
    %v3228 = vmul.f32 1.0, %v3227
    %v3229 = vmul.f32 %v3221, %v2755
    %v3230 = vmul.f32 %v3215, %v3222
    %v3231 = vadd.f32 %v3229, %v3230
    %v3232 = vtanh.pop %v3231
    %v3233 = vmul.f32 %v3228, %v3232
    %v3234 = vsel %vm2748, %v3209, 0.0
    %s3235 = scalar_lea.vmem [#allocation4], 32
    %3236 = vst [vmem:[%s3235] sm:$0xff] %v3234
    %v3237 = vsel %vm2740, %v3233, 0.0
    %s3238 = scalar_lea.vmem [#allocation5], 24
    %3239 = vst [vmem:[%s3238] sm:$0xff] %v3237
    %v3240 = vsel %vm2748, %v3209, %v2752
    %v3241 = vsel %vm2748, %v3207, %v2753
    %v3242 = vsel %vm2740, %v3233, %v2754
    %v3243 = vsel %vm2740, %v3231, %v2755
    %s3244 = scalar_lea.vmem [#allocation2], 160
    %v3245 = vld [vmem:[%s3244] sm:$0xff]
    %v3246 = vld [vmem:[%s3244 + $0x8] sm:$0xff]
    %v3247 = vld [vmem:[%s3244 + $0x10] sm:$0xff]
    %v3248 = vld [vmem:[%s3244 + $0x18] sm:$0xff]
    %v3249 = vld [vmem:[#allocation12] sm:$0xff]
    %v3250 = vld [vmem:[#allocation12 + $0x8] sm:$0xff]
    %v3251 = vld [vmem:[#allocation12 + $0x10] sm:$0xff]
    %v3252 = vld [vmem:[#allocation12 + $0x18] sm:$0xff]
    %v3253 = vld [vmem:[#allocation12 + $0x20] sm:$0xff]
    %v3254 = vld [vmem:[#allocation12 + $0x28] sm:$0xff]
    %v3255 = vld [vmem:[#allocation12 + $0x30] sm:$0xff]
    %v3256 = vld [vmem:[#allocation12 + $0x38] sm:$0xff]
    %v3257 = vld [vmem:[#allocation12 + $0x40] sm:$0xff]
    %v3258 = vld [vmem:[#allocation12 + $0x48] sm:$0xff]
    %v3259 = vld [vmem:[#allocation12 + $0x50] sm:$0xff]
    %v3260 = vld [vmem:[#allocation12 + $0x58] sm:$0xff]
    %v3261 = vld [vmem:[#allocation12 + $0x60] sm:$0xff]
    %v3262 = vld [vmem:[#allocation12 + $0x68] sm:$0xff]
    %v3263 = vld [vmem:[#allocation12 + $0x70] sm:$0xff]
    %v3264 = vld [vmem:[#allocation12 + $0x78] sm:$0xff]
    %v3265 = vld [vmem:[#allocation12 + $0x80] sm:$0xff]
    %v3266 = vld [vmem:[#allocation12 + $0x88] sm:$0xff]
    %v3267 = vld [vmem:[#allocation12 + $0x90] sm:$0xff]
    %v3268 = vld [vmem:[#allocation12 + $0x98] sm:$0xff]
    %v3269 = vld [vmem:[#allocation12 + $0xa0] sm:$0xff]
    %v3270 = vld [vmem:[#allocation12 + $0xa8] sm:$0xff]
    %v3271 = vld [vmem:[#allocation12 + $0xb0] sm:$0xff]
    %v3272 = vld [vmem:[#allocation12 + $0xb8] sm:$0xff]
    %v3273 = vld [vmem:[#allocation12 + $0xc0] sm:$0xff]
    %v3274 = vld [vmem:[#allocation12 + $0xc8] sm:$0xff]
    %v3275 = vld [vmem:[#allocation12 + $0xd0] sm:$0xff]
    %v3276 = vld [vmem:[#allocation12 + $0xd8] sm:$0xff]
    %v3277 = vld [vmem:[#allocation12 + $0xe0] sm:$0xff]
    %v3278 = vld [vmem:[#allocation12 + $0xe8] sm:$0xff]
    %v3279 = vld [vmem:[#allocation12 + $0xf0] sm:$0xff]
    %v3280 = vld [vmem:[#allocation12 + $0xf8] sm:$0xff]
    %v3281 = vld [vmem:[#allocation12 + $0x100] sm:$0xff]
    %v3282 = vld [vmem:[#allocation12 + $0x108] sm:$0xff]
    %v3283 = vld [vmem:[#allocation12 + $0x110] sm:$0xff]
    %v3284 = vld [vmem:[#allocation12 + $0x118] sm:$0xff]
    %v3285 = vld [vmem:[#allocation12 + $0x120] sm:$0xff]
    %v3286 = vld [vmem:[#allocation12 + $0x128] sm:$0xff]
    %v3287 = vld [vmem:[#allocation12 + $0x130] sm:$0xff]
    %v3288 = vld [vmem:[#allocation12 + $0x138] sm:$0xff]
    %v3289 = vld [vmem:[#allocation12 + $0x140] sm:$0xff]
    %v3290 = vld [vmem:[#allocation12 + $0x148] sm:$0xff]
    %v3291 = vld [vmem:[#allocation12 + $0x150] sm:$0xff]
    %v3292 = vld [vmem:[#allocation12 + $0x158] sm:$0xff]
    %v3293 = vld [vmem:[#allocation12 + $0x160] sm:$0xff]
    %v3294 = vld [vmem:[#allocation12 + $0x168] sm:$0xff]
    %v3295 = vld [vmem:[#allocation12 + $0x170] sm:$0xff]
    %v3296 = vld [vmem:[#allocation12 + $0x178] sm:$0xff]
    %v3297 = vld [vmem:[#allocation12 + $0x180] sm:$0xff]
    %v3298 = vld [vmem:[#allocation12 + $0x188] sm:$0xff]
    %v3299 = vld [vmem:[#allocation12 + $0x190] sm:$0xff]
    %v3300 = vld [vmem:[#allocation12 + $0x198] sm:$0xff]
    %v3301 = vld [vmem:[#allocation12 + $0x1a0] sm:$0xff]
    %v3302 = vld [vmem:[#allocation12 + $0x1a8] sm:$0xff]
    %v3303 = vld [vmem:[#allocation12 + $0x1b0] sm:$0xff]
    %v3304 = vld [vmem:[#allocation12 + $0x1b8] sm:$0xff]
    %v3305 = vld [vmem:[#allocation12 + $0x1c0] sm:$0xff]
    %v3306 = vld [vmem:[#allocation12 + $0x1c8] sm:$0xff]
    %v3307 = vld [vmem:[#allocation12 + $0x1d0] sm:$0xff]
    %v3308 = vld [vmem:[#allocation12 + $0x1d8] sm:$0xff]
    %v3309 = vld [vmem:[#allocation12 + $0x1e0] sm:$0xff]
    %v3310 = vld [vmem:[#allocation12 + $0x1e8] sm:$0xff]
    %v3311 = vld [vmem:[#allocation12 + $0x1f0] sm:$0xff]
    %v3312 = vld [vmem:[#allocation12 + $0x1f8] sm:$0xff]
    %3313 = vmatprep.subr.mxu0 %v3250
    %3314 = vmatpush1.msra.mxu0 %v3249
    %3315 = vmatprep.subr.mxu0 %v3254
    %3316 = vmatpush1.msra.mxu0 %v3253
    %3317 = vmatprep.subr.mxu0 %v3258
    %3318 = vmatpush1.msra.mxu0 %v3257
    %3319 = vmatprep.subr.mxu0 %v3262
    %3320 = vmatpush1.msra.mxu0 %v3261
    %3321 = vmatprep.subr.mxu0 %v3266
    %3322 = vmatpush1.msra.mxu0 %v3265
    %3323 = vmatprep.subr.mxu0 %v3270
    %3324 = vmatpush1.msra.mxu0 %v3269
    %3325 = vmatprep.subr.mxu0 %v3274
    %3326 = vmatpush1.msra.mxu0 %v3273
    %3327 = vmatprep.subr.mxu0 %v3278
    %3328 = vmatpush1.msra.mxu0 %v3277
    %3329 = vmatprep.subr.mxu0 %v3282
    %3330 = vmatpush1.msra.mxu0 %v3281
    %3331 = vmatprep.subr.mxu0 %v3286
    %3332 = vmatpush1.msra.mxu0 %v3285
    %3333 = vmatprep.subr.mxu0 %v3290
    %3334 = vmatpush1.msra.mxu0 %v3289
    %3335 = vmatprep.subr.mxu0 %v3294
    %3336 = vmatpush1.msra.mxu0 %v3293
    %3337 = vmatprep.subr.mxu0 %v3298
    %3338 = vmatpush1.msra.mxu0 %v3297
    %3339 = vmatprep.subr.mxu0 %v3302
    %3340 = vmatpush1.msra.mxu0 %v3301
    %3341 = vmatprep.subr.mxu0 %v3306
    %3342 = vmatpush1.msra.mxu0 %v3305
    %3343 = vmatprep.subr.mxu0 %v3310
    %3344 = vmatpush1.msra.mxu0 %v3309
    %3345 = vmatprep.subr.mxu0 0.0
    %3346 = vmatpush1.msra.mxu0 0.0
    %3347 = vmatprep.subr.mxu0 0.0
    %3348 = vmatpush1.msra.mxu0 0.0
    %3349 = vmatprep.subr.mxu0 0.0
    %3350 = vmatpush1.msra.mxu0 0.0
    %3351 = vmatprep.subr.mxu0 0.0
    %3352 = vmatpush1.msra.mxu0 0.0
    %3353 = vmatprep.subr.mxu0 0.0
    %3354 = vmatpush1.msra.mxu0 0.0
    %3355 = vmatprep.subr.mxu0 0.0
    %3356 = vmatpush1.msra.mxu0 0.0
    %3357 = vmatprep.subr.mxu0 0.0
    %3358 = vmatpush1.msra.mxu0 0.0
    %3359 = vmatprep.subr.mxu0 0.0
    %3360 = vmatpush1.msra.mxu0 0.0
    %3361 = vmatprep.subr.mxu0 0.0
    %3362 = vmatpush1.msra.mxu0 0.0
    %3363 = vmatprep.subr.mxu0 0.0
    %3364 = vmatpush1.msra.mxu0 0.0
    %3365 = vmatprep.subr.mxu0 0.0
    %3366 = vmatpush1.msra.mxu0 0.0
    %3367 = vmatprep.subr.mxu0 0.0
    %3368 = vmatpush1.msra.mxu0 0.0
    %3369 = vmatprep.subr.mxu0 0.0
    %3370 = vmatpush1.msra.mxu0 0.0
    %3371 = vmatprep.subr.mxu0 0.0
    %3372 = vmatpush1.msra.mxu0 0.0
    %3373 = vmatprep.subr.mxu0 0.0
    %3374 = vmatpush1.msra.mxu0 0.0
    %3375 = vmatprep.subr.mxu0 0.0
    %3376 = vmatpush1.msra.mxu0 0.0
    %3377 = vmatprep.mubr.f32.mxu0 0.0
    %3378 = vmatmul.mubr.f32.gmra.mrb[0].mxu0 %v3240
    %v3379 = vpop.f32.mrb[0].mxu0
    %v3380 = vadd.f32 0.0, %v3379
    %v3381 = vpop.f32.mrb[0].mxu0
    %v3382 = vadd.f32 0.0, %v3381
    %3383 = vdwg.mxu0
    %3384 = vmatprep.subr.mxu0 %v3252
    %3385 = vmatpush1.msra.mxu0 %v3251
    %3386 = vmatprep.subr.mxu0 %v3256
    %3387 = vmatpush1.msra.mxu0 %v3255
    %3388 = vmatprep.subr.mxu0 %v3260
    %3389 = vmatpush1.msra.mxu0 %v3259
    %3390 = vmatprep.subr.mxu0 %v3264
    %3391 = vmatpush1.msra.mxu0 %v3263
    %3392 = vmatprep.subr.mxu0 %v3268
    %3393 = vmatpush1.msra.mxu0 %v3267
    %3394 = vmatprep.subr.mxu0 %v3272
    %3395 = vmatpush1.msra.mxu0 %v3271
    %3396 = vmatprep.subr.mxu0 %v3276
    %3397 = vmatpush1.msra.mxu0 %v3275
    %3398 = vmatprep.subr.mxu0 %v3280
    %3399 = vmatpush1.msra.mxu0 %v3279
    %3400 = vmatprep.subr.mxu0 %v3284
    %3401 = vmatpush1.msra.mxu0 %v3283
    %3402 = vmatprep.subr.mxu0 %v3288
    %3403 = vmatpush1.msra.mxu0 %v3287
    %3404 = vmatprep.subr.mxu0 %v3292
    %3405 = vmatpush1.msra.mxu0 %v3291
    %3406 = vmatprep.subr.mxu0 %v3296
    %3407 = vmatpush1.msra.mxu0 %v3295
    %3408 = vmatprep.subr.mxu0 %v3300
    %3409 = vmatpush1.msra.mxu0 %v3299
    %3410 = vmatprep.subr.mxu0 %v3304
    %3411 = vmatpush1.msra.mxu0 %v3303
    %3412 = vmatprep.subr.mxu0 %v3308
    %3413 = vmatpush1.msra.mxu0 %v3307
    %3414 = vmatprep.subr.mxu0 %v3312
    %3415 = vmatpush1.msra.mxu0 %v3311
    %3416 = vmatprep.subr.mxu0 0.0
    %3417 = vmatpush1.msra.mxu0 0.0
    %3418 = vmatprep.subr.mxu0 0.0
    %3419 = vmatpush1.msra.mxu0 0.0
    %3420 = vmatprep.subr.mxu0 0.0
    %3421 = vmatpush1.msra.mxu0 0.0
    %3422 = vmatprep.subr.mxu0 0.0
    %3423 = vmatpush1.msra.mxu0 0.0
    %3424 = vmatprep.subr.mxu0 0.0
    %3425 = vmatpush1.msra.mxu0 0.0
    %3426 = vmatprep.subr.mxu0 0.0
    %3427 = vmatpush1.msra.mxu0 0.0
    %3428 = vmatprep.subr.mxu0 0.0
    %3429 = vmatpush1.msra.mxu0 0.0
    %3430 = vmatprep.subr.mxu0 0.0
    %3431 = vmatpush1.msra.mxu0 0.0
    %3432 = vmatprep.subr.mxu0 0.0
    %3433 = vmatpush1.msra.mxu0 0.0
    %3434 = vmatprep.subr.mxu0 0.0
    %3435 = vmatpush1.msra.mxu0 0.0
    %3436 = vmatprep.subr.mxu0 0.0
    %3437 = vmatpush1.msra.mxu0 0.0
    %3438 = vmatprep.subr.mxu0 0.0
    %3439 = vmatpush1.msra.mxu0 0.0
    %3440 = vmatprep.subr.mxu0 0.0
    %3441 = vmatpush1.msra.mxu0 0.0
    %3442 = vmatprep.subr.mxu0 0.0
    %3443 = vmatpush1.msra.mxu0 0.0
    %3444 = vmatprep.subr.mxu0 0.0
    %3445 = vmatpush1.msra.mxu0 0.0
    %3446 = vmatprep.subr.mxu0 0.0
    %3447 = vmatpush1.msra.mxu0 0.0
    %3448 = vmatprep.mubr.f32.mxu0 0.0
    %3449 = vmatmul.mubr.f32.gmra.mrb[0].mxu0 %v3240
    %v3450 = vpop.f32.mrb[0].mxu0
    %v3451 = vadd.f32 0.0, %v3450
    %v3452 = vpop.f32.mrb[0].mxu0
    %v3453 = vadd.f32 0.0, %v3452
    %3454 = vdwg.mxu0
    %v3455 = vadd.f32 %v3245, %v3380
    %v3456 = vadd.f32 %v3246, %v3382
    %v3457 = vadd.f32 %v3247, %v3451
    %v3458 = vadd.f32 %v3248, %v3453
    %s3459 = scalar_lea.vmem [#allocation3], 64
    %v3460 = vld [vmem:[%s3459] sm:$0xff]
    %v3461 = vld [vmem:[%s3459 + $0x8] sm:$0xff]
    %v3462 = vld [vmem:[%s3459 + $0x10] sm:$0xff]
    %v3463 = vld [vmem:[%s3459 + $0x18] sm:$0xff]
    %v3464 = vld [vmem:[#allocation14] sm:$0xff]
    %v3465 = vld [vmem:[#allocation14 + $0x8] sm:$0xff]
    %v3466 = vld [vmem:[#allocation14 + $0x10] sm:$0xff]
    %v3467 = vld [vmem:[#allocation14 + $0x18] sm:$0xff]
    %v3468 = vld [vmem:[#allocation14 + $0x20] sm:$0xff]
    %v3469 = vld [vmem:[#allocation14 + $0x28] sm:$0xff]
    %v3470 = vld [vmem:[#allocation14 + $0x30] sm:$0xff]
    %v3471 = vld [vmem:[#allocation14 + $0x38] sm:$0xff]
    %v3472 = vld [vmem:[#allocation14 + $0x40] sm:$0xff]
    %v3473 = vld [vmem:[#allocation14 + $0x48] sm:$0xff]
    %v3474 = vld [vmem:[#allocation14 + $0x50] sm:$0xff]
    %v3475 = vld [vmem:[#allocation14 + $0x58] sm:$0xff]
    %v3476 = vld [vmem:[#allocation14 + $0x60] sm:$0xff]
    %v3477 = vld [vmem:[#allocation14 + $0x68] sm:$0xff]
    %v3478 = vld [vmem:[#allocation14 + $0x70] sm:$0xff]
    %v3479 = vld [vmem:[#allocation14 + $0x78] sm:$0xff]
    %v3480 = vld [vmem:[#allocation14 + $0x80] sm:$0xff]
    %v3481 = vld [vmem:[#allocation14 + $0x88] sm:$0xff]
    %v3482 = vld [vmem:[#allocation14 + $0x90] sm:$0xff]
    %v3483 = vld [vmem:[#allocation14 + $0x98] sm:$0xff]
    %v3484 = vld [vmem:[#allocation14 + $0xa0] sm:$0xff]
    %v3485 = vld [vmem:[#allocation14 + $0xa8] sm:$0xff]
    %v3486 = vld [vmem:[#allocation14 + $0xb0] sm:$0xff]
    %v3487 = vld [vmem:[#allocation14 + $0xb8] sm:$0xff]
    %v3488 = vld [vmem:[#allocation14 + $0xc0] sm:$0xff]
    %v3489 = vld [vmem:[#allocation14 + $0xc8] sm:$0xff]
    %v3490 = vld [vmem:[#allocation14 + $0xd0] sm:$0xff]
    %v3491 = vld [vmem:[#allocation14 + $0xd8] sm:$0xff]
    %v3492 = vld [vmem:[#allocation14 + $0xe0] sm:$0xff]
    %v3493 = vld [vmem:[#allocation14 + $0xe8] sm:$0xff]
    %v3494 = vld [vmem:[#allocation14 + $0xf0] sm:$0xff]
    %v3495 = vld [vmem:[#allocation14 + $0xf8] sm:$0xff]
    %v3496 = vld [vmem:[#allocation14 + $0x100] sm:$0xff]
    %v3497 = vld [vmem:[#allocation14 + $0x108] sm:$0xff]
    %v3498 = vld [vmem:[#allocation14 + $0x110] sm:$0xff]
    %v3499 = vld [vmem:[#allocation14 + $0x118] sm:$0xff]
    %v3500 = vld [vmem:[#allocation14 + $0x120] sm:$0xff]
    %v3501 = vld [vmem:[#allocation14 + $0x128] sm:$0xff]
    %v3502 = vld [vmem:[#allocation14 + $0x130] sm:$0xff]
    %v3503 = vld [vmem:[#allocation14 + $0x138] sm:$0xff]
    %v3504 = vld [vmem:[#allocation14 + $0x140] sm:$0xff]
    %v3505 = vld [vmem:[#allocation14 + $0x148] sm:$0xff]
    %v3506 = vld [vmem:[#allocation14 + $0x150] sm:$0xff]
    %v3507 = vld [vmem:[#allocation14 + $0x158] sm:$0xff]
    %v3508 = vld [vmem:[#allocation14 + $0x160] sm:$0xff]
    %v3509 = vld [vmem:[#allocation14 + $0x168] sm:$0xff]
    %v3510 = vld [vmem:[#allocation14 + $0x170] sm:$0xff]
    %v3511 = vld [vmem:[#allocation14 + $0x178] sm:$0xff]
    %v3512 = vld [vmem:[#allocation14 + $0x180] sm:$0xff]
    %v3513 = vld [vmem:[#allocation14 + $0x188] sm:$0xff]
    %v3514 = vld [vmem:[#allocation14 + $0x190] sm:$0xff]
    %v3515 = vld [vmem:[#allocation14 + $0x198] sm:$0xff]
    %v3516 = vld [vmem:[#allocation14 + $0x1a0] sm:$0xff]
    %v3517 = vld [vmem:[#allocation14 + $0x1a8] sm:$0xff]
    %v3518 = vld [vmem:[#allocation14 + $0x1b0] sm:$0xff]
    %v3519 = vld [vmem:[#allocation14 + $0x1b8] sm:$0xff]
    %v3520 = vld [vmem:[#allocation14 + $0x1c0] sm:$0xff]
    %v3521 = vld [vmem:[#allocation14 + $0x1c8] sm:$0xff]
    %v3522 = vld [vmem:[#allocation14 + $0x1d0] sm:$0xff]
    %v3523 = vld [vmem:[#allocation14 + $0x1d8] sm:$0xff]
    %v3524 = vld [vmem:[#allocation14 + $0x1e0] sm:$0xff]
    %v3525 = vld [vmem:[#allocation14 + $0x1e8] sm:$0xff]
    %v3526 = vld [vmem:[#allocation14 + $0x1f0] sm:$0xff]
    %v3527 = vld [vmem:[#allocation14 + $0x1f8] sm:$0xff]
    %3528 = vmatprep.subr.mxu0 %v3465
    %3529 = vmatpush1.msra.mxu0 %v3464
    %3530 = vmatprep.subr.mxu0 %v3469
    %3531 = vmatpush1.msra.mxu0 %v3468
    %3532 = vmatprep.subr.mxu0 %v3473
    %3533 = vmatpush1.msra.mxu0 %v3472
    %3534 = vmatprep.subr.mxu0 %v3477
    %3535 = vmatpush1.msra.mxu0 %v3476
    %3536 = vmatprep.subr.mxu0 %v3481
    %3537 = vmatpush1.msra.mxu0 %v3480
    %3538 = vmatprep.subr.mxu0 %v3485
    %3539 = vmatpush1.msra.mxu0 %v3484
    %3540 = vmatprep.subr.mxu0 %v3489
    %3541 = vmatpush1.msra.mxu0 %v3488
    %3542 = vmatprep.subr.mxu0 %v3493
    %3543 = vmatpush1.msra.mxu0 %v3492
    %3544 = vmatprep.subr.mxu0 %v3497
    %3545 = vmatpush1.msra.mxu0 %v3496
    %3546 = vmatprep.subr.mxu0 %v3501
    %3547 = vmatpush1.msra.mxu0 %v3500
    %3548 = vmatprep.subr.mxu0 %v3505
    %3549 = vmatpush1.msra.mxu0 %v3504
    %3550 = vmatprep.subr.mxu0 %v3509
    %3551 = vmatpush1.msra.mxu0 %v3508
    %3552 = vmatprep.subr.mxu0 %v3513
    %3553 = vmatpush1.msra.mxu0 %v3512
    %3554 = vmatprep.subr.mxu0 %v3517
    %3555 = vmatpush1.msra.mxu0 %v3516
    %3556 = vmatprep.subr.mxu0 %v3521
    %3557 = vmatpush1.msra.mxu0 %v3520
    %3558 = vmatprep.subr.mxu0 %v3525
    %3559 = vmatpush1.msra.mxu0 %v3524
    %3560 = vmatprep.subr.mxu0 0.0
    %3561 = vmatpush1.msra.mxu0 0.0
    %3562 = vmatprep.subr.mxu0 0.0
    %3563 = vmatpush1.msra.mxu0 0.0
    %3564 = vmatprep.subr.mxu0 0.0
    %3565 = vmatpush1.msra.mxu0 0.0
    %3566 = vmatprep.subr.mxu0 0.0
    %3567 = vmatpush1.msra.mxu0 0.0
    %3568 = vmatprep.subr.mxu0 0.0
    %3569 = vmatpush1.msra.mxu0 0.0
    %3570 = vmatprep.subr.mxu0 0.0
    %3571 = vmatpush1.msra.mxu0 0.0
    %3572 = vmatprep.subr.mxu0 0.0
    %3573 = vmatpush1.msra.mxu0 0.0
    %3574 = vmatprep.subr.mxu0 0.0
    %3575 = vmatpush1.msra.mxu0 0.0
    %3576 = vmatprep.subr.mxu0 0.0
    %3577 = vmatpush1.msra.mxu0 0.0
    %3578 = vmatprep.subr.mxu0 0.0
    %3579 = vmatpush1.msra.mxu0 0.0
    %3580 = vmatprep.subr.mxu0 0.0
    %3581 = vmatpush1.msra.mxu0 0.0
    %3582 = vmatprep.subr.mxu0 0.0
    %3583 = vmatpush1.msra.mxu0 0.0
    %3584 = vmatprep.subr.mxu0 0.0
    %3585 = vmatpush1.msra.mxu0 0.0
    %3586 = vmatprep.subr.mxu0 0.0
    %3587 = vmatpush1.msra.mxu0 0.0
    %3588 = vmatprep.subr.mxu0 0.0
    %3589 = vmatpush1.msra.mxu0 0.0
    %3590 = vmatprep.subr.mxu0 0.0
    %3591 = vmatpush1.msra.mxu0 0.0
    %3592 = vmatprep.mubr.f32.mxu0 0.0
    %3593 = vmatmul.mubr.f32.gmra.mrb[0].mxu0 %v3242
    %v3594 = vpop.f32.mrb[0].mxu0
    %v3595 = vadd.f32 0.0, %v3594
    %v3596 = vpop.f32.mrb[0].mxu0
    %v3597 = vadd.f32 0.0, %v3596
    %3598 = vdwg.mxu0
    %3599 = vmatprep.subr.mxu0 %v3467
    %3600 = vmatpush1.msra.mxu0 %v3466
    %3601 = vmatprep.subr.mxu0 %v3471
    %3602 = vmatpush1.msra.mxu0 %v3470
    %3603 = vmatprep.subr.mxu0 %v3475
    %3604 = vmatpush1.msra.mxu0 %v3474
    %3605 = vmatprep.subr.mxu0 %v3479
    %3606 = vmatpush1.msra.mxu0 %v3478
    %3607 = vmatprep.subr.mxu0 %v3483
    %3608 = vmatpush1.msra.mxu0 %v3482
    %3609 = vmatprep.subr.mxu0 %v3487
    %3610 = vmatpush1.msra.mxu0 %v3486
    %3611 = vmatprep.subr.mxu0 %v3491
    %3612 = vmatpush1.msra.mxu0 %v3490
    %3613 = vmatprep.subr.mxu0 %v3495
    %3614 = vmatpush1.msra.mxu0 %v3494
    %3615 = vmatprep.subr.mxu0 %v3499
    %3616 = vmatpush1.msra.mxu0 %v3498
    %3617 = vmatprep.subr.mxu0 %v3503
    %3618 = vmatpush1.msra.mxu0 %v3502
    %3619 = vmatprep.subr.mxu0 %v3507
    %3620 = vmatpush1.msra.mxu0 %v3506
    %3621 = vmatprep.subr.mxu0 %v3511
    %3622 = vmatpush1.msra.mxu0 %v3510
    %3623 = vmatprep.subr.mxu0 %v3515
    %3624 = vmatpush1.msra.mxu0 %v3514
    %3625 = vmatprep.subr.mxu0 %v3519
    %3626 = vmatpush1.msra.mxu0 %v3518
    %3627 = vmatprep.subr.mxu0 %v3523
    %3628 = vmatpush1.msra.mxu0 %v3522
    %3629 = vmatprep.subr.mxu0 %v3527
    %3630 = vmatpush1.msra.mxu0 %v3526
    %3631 = vmatprep.subr.mxu0 0.0
    %3632 = vmatpush1.msra.mxu0 0.0
    %3633 = vmatprep.subr.mxu0 0.0
    %3634 = vmatpush1.msra.mxu0 0.0
    %3635 = vmatprep.subr.mxu0 0.0
    %3636 = vmatpush1.msra.mxu0 0.0
    %3637 = vmatprep.subr.mxu0 0.0
    %3638 = vmatpush1.msra.mxu0 0.0
    %3639 = vmatprep.subr.mxu0 0.0
    %3640 = vmatpush1.msra.mxu0 0.0
    %3641 = vmatprep.subr.mxu0 0.0
    %3642 = vmatpush1.msra.mxu0 0.0
    %3643 = vmatprep.subr.mxu0 0.0
    %3644 = vmatpush1.msra.mxu0 0.0
    %3645 = vmatprep.subr.mxu0 0.0
    %3646 = vmatpush1.msra.mxu0 0.0
    %3647 = vmatprep.subr.mxu0 0.0
    %3648 = vmatpush1.msra.mxu0 0.0
    %3649 = vmatprep.subr.mxu0 0.0
    %3650 = vmatpush1.msra.mxu0 0.0
    %3651 = vmatprep.subr.mxu0 0.0
    %3652 = vmatpush1.msra.mxu0 0.0
    %3653 = vmatprep.subr.mxu0 0.0
    %3654 = vmatpush1.msra.mxu0 0.0
    %3655 = vmatprep.subr.mxu0 0.0
    %3656 = vmatpush1.msra.mxu0 0.0
    %3657 = vmatprep.subr.mxu0 0.0
    %3658 = vmatpush1.msra.mxu0 0.0
    %3659 = vmatprep.subr.mxu0 0.0
    %3660 = vmatpush1.msra.mxu0 0.0
    %3661 = vmatprep.subr.mxu0 0.0
    %3662 = vmatpush1.msra.mxu0 0.0
    %3663 = vmatprep.mubr.f32.mxu0 0.0
    %3664 = vmatmul.mubr.f32.gmra.mrb[0].mxu0 %v3242
    %v3665 = vpop.f32.mrb[0].mxu0
    %v3666 = vadd.f32 0.0, %v3665
    %v3667 = vpop.f32.mrb[0].mxu0
    %v3668 = vadd.f32 0.0, %v3667
    %3669 = vdwg.mxu0
    %v3670 = vadd.f32 %v3460, %v3595
    %v3671 = vadd.f32 %v3461, %v3597
    %v3672 = vadd.f32 %v3462, %v3666
    %v3673 = vadd.f32 %v3463, %v3668
    %v3674 = vxor.u32 %v3455, 2147483648
    %v3675 = vmul.f32 %v3674, 1.442695
    %v3676 = vpow.pop %v3675
    %v3677 = vadd.f32 %v3676, 1.0
    %v3678 = vrcp.pop %v3677
    %v3679 = vmul.f32 1.0, %v3678
    %v3680 = vxor.u32 %v3456, 2147483648
    %v3681 = vmul.f32 %v3680, 1.442695
    %v3682 = vpow.pop %v3681
    %v3683 = vadd.f32 %v3682, 1.0
    %v3684 = vrcp.pop %v3683
    %v3685 = vmul.f32 1.0, %v3684
    %v3686 = vtanh.pop %v3457
    %v3687 = vxor.u32 %v3458, 2147483648
    %v3688 = vmul.f32 %v3687, 1.442695
    %v3689 = vpow.pop %v3688
    %v3690 = vadd.f32 %v3689, 1.0
    %v3691 = vrcp.pop %v3690
    %v3692 = vmul.f32 1.0, %v3691
    %v3693 = vmul.f32 %v3685, %v3241
    %v3694 = vmul.f32 %v3679, %v3686
    %v3695 = vadd.f32 %v3693, %v3694
    %v3696 = vtanh.pop %v3695
    %v3697 = vmul.f32 %v3692, %v3696
    %v3698 = vxor.u32 %v3670, 2147483648
    %v3699 = vmul.f32 %v3698, 1.442695
    %v3700 = vpow.pop %v3699
    %v3701 = vadd.f32 %v3700, 1.0
    %v3702 = vrcp.pop %v3701
    %v3703 = vmul.f32 1.0, %v3702
    %v3704 = vxor.u32 %v3671, 2147483648
    %v3705 = vmul.f32 %v3704, 1.442695
    %v3706 = vpow.pop %v3705
    %v3707 = vadd.f32 %v3706, 1.0
    %v3708 = vrcp.pop %v3707
    %v3709 = vmul.f32 1.0, %v3708
    %v3710 = vtanh.pop %v3672
    %v3711 = vxor.u32 %v3673, 2147483648
    %v3712 = vmul.f32 %v3711, 1.442695
    %v3713 = vpow.pop %v3712
    %v3714 = vadd.f32 %v3713, 1.0
    %v3715 = vrcp.pop %v3714
    %v3716 = vmul.f32 1.0, %v3715
    %v3717 = vmul.f32 %v3709, %v3243
    %v3718 = vmul.f32 %v3703, %v3710
    %v3719 = vadd.f32 %v3717, %v3718
    %v3720 = vtanh.pop %v3719
    %v3721 = vmul.f32 %v3716, %v3720
    %v3722 = vsel %vm2248, %v3697, 0.0
    %s3723 = scalar_lea.vmem [#allocation4], 40
    %3724 = vst [vmem:[%s3723] sm:$0xff] %v3722
    %v3725 = vsel %vm2240, %v3721, 0.0
    %s3726 = scalar_lea.vmem [#allocation5], 16
    %3727 = vst [vmem:[%s3726] sm:$0xff] %v3725
    %v3728 = vsel %vm2248, %v3697, %v3240
    %v3729 = vsel %vm2248, %v3695, %v3241
    %v3730 = vsel %vm2240, %v3721, %v3242
    %v3731 = vsel %vm2240, %v3719, %v3243
    %s3732 = scalar_lea.vmem [#allocation2], 192
    %v3733 = vld [vmem:[%s3732] sm:$0xff]
    %v3734 = vld [vmem:[%s3732 + $0x8] sm:$0xff]
    %v3735 = vld [vmem:[%s3732 + $0x10] sm:$0xff]
    %v3736 = vld [vmem:[%s3732 + $0x18] sm:$0xff]
    %v3737 = vld [vmem:[#allocation12] sm:$0xff]
    %v3738 = vld [vmem:[#allocation12 + $0x8] sm:$0xff]
    %v3739 = vld [vmem:[#allocation12 + $0x10] sm:$0xff]
    %v3740 = vld [vmem:[#allocation12 + $0x18] sm:$0xff]
    %v3741 = vld [vmem:[#allocation12 + $0x20] sm:$0xff]
    %v3742 = vld [vmem:[#allocation12 + $0x28] sm:$0xff]
    %v3743 = vld [vmem:[#allocation12 + $0x30] sm:$0xff]
    %v3744 = vld [vmem:[#allocation12 + $0x38] sm:$0xff]
    %v3745 = vld [vmem:[#allocation12 + $0x40] sm:$0xff]
    %v3746 = vld [vmem:[#allocation12 + $0x48] sm:$0xff]
    %v3747 = vld [vmem:[#allocation12 + $0x50] sm:$0xff]
    %v3748 = vld [vmem:[#allocation12 + $0x58] sm:$0xff]
    %v3749 = vld [vmem:[#allocation12 + $0x60] sm:$0xff]
    %v3750 = vld [vmem:[#allocation12 + $0x68] sm:$0xff]
    %v3751 = vld [vmem:[#allocation12 + $0x70] sm:$0xff]
    %v3752 = vld [vmem:[#allocation12 + $0x78] sm:$0xff]
    %v3753 = vld [vmem:[#allocation12 + $0x80] sm:$0xff]
    %v3754 = vld [vmem:[#allocation12 + $0x88] sm:$0xff]
    %v3755 = vld [vmem:[#allocation12 + $0x90] sm:$0xff]
    %v3756 = vld [vmem:[#allocation12 + $0x98] sm:$0xff]
    %v3757 = vld [vmem:[#allocation12 + $0xa0] sm:$0xff]
    %v3758 = vld [vmem:[#allocation12 + $0xa8] sm:$0xff]
    %v3759 = vld [vmem:[#allocation12 + $0xb0] sm:$0xff]
    %v3760 = vld [vmem:[#allocation12 + $0xb8] sm:$0xff]
    %v3761 = vld [vmem:[#allocation12 + $0xc0] sm:$0xff]
    %v3762 = vld [vmem:[#allocation12 + $0xc8] sm:$0xff]
    %v3763 = vld [vmem:[#allocation12 + $0xd0] sm:$0xff]
    %v3764 = vld [vmem:[#allocation12 + $0xd8] sm:$0xff]
    %v3765 = vld [vmem:[#allocation12 + $0xe0] sm:$0xff]
    %v3766 = vld [vmem:[#allocation12 + $0xe8] sm:$0xff]
    %v3767 = vld [vmem:[#allocation12 + $0xf0] sm:$0xff]
    %v3768 = vld [vmem:[#allocation12 + $0xf8] sm:$0xff]
    %v3769 = vld [vmem:[#allocation12 + $0x100] sm:$0xff]
    %v3770 = vld [vmem:[#allocation12 + $0x108] sm:$0xff]
    %v3771 = vld [vmem:[#allocation12 + $0x110] sm:$0xff]
    %v3772 = vld [vmem:[#allocation12 + $0x118] sm:$0xff]
    %v3773 = vld [vmem:[#allocation12 + $0x120] sm:$0xff]
    %v3774 = vld [vmem:[#allocation12 + $0x128] sm:$0xff]
    %v3775 = vld [vmem:[#allocation12 + $0x130] sm:$0xff]
    %v3776 = vld [vmem:[#allocation12 + $0x138] sm:$0xff]
    %v3777 = vld [vmem:[#allocation12 + $0x140] sm:$0xff]
    %v3778 = vld [vmem:[#allocation12 + $0x148] sm:$0xff]
    %v3779 = vld [vmem:[#allocation12 + $0x150] sm:$0xff]
    %v3780 = vld [vmem:[#allocation12 + $0x158] sm:$0xff]
    %v3781 = vld [vmem:[#allocation12 + $0x160] sm:$0xff]
    %v3782 = vld [vmem:[#allocation12 + $0x168] sm:$0xff]
    %v3783 = vld [vmem:[#allocation12 + $0x170] sm:$0xff]
    %v3784 = vld [vmem:[#allocation12 + $0x178] sm:$0xff]
    %v3785 = vld [vmem:[#allocation12 + $0x180] sm:$0xff]
    %v3786 = vld [vmem:[#allocation12 + $0x188] sm:$0xff]
    %v3787 = vld [vmem:[#allocation12 + $0x190] sm:$0xff]
    %v3788 = vld [vmem:[#allocation12 + $0x198] sm:$0xff]
    %v3789 = vld [vmem:[#allocation12 + $0x1a0] sm:$0xff]
    %v3790 = vld [vmem:[#allocation12 + $0x1a8] sm:$0xff]
    %v3791 = vld [vmem:[#allocation12 + $0x1b0] sm:$0xff]
    %v3792 = vld [vmem:[#allocation12 + $0x1b8] sm:$0xff]
    %v3793 = vld [vmem:[#allocation12 + $0x1c0] sm:$0xff]
    %v3794 = vld [vmem:[#allocation12 + $0x1c8] sm:$0xff]
    %v3795 = vld [vmem:[#allocation12 + $0x1d0] sm:$0xff]
    %v3796 = vld [vmem:[#allocation12 + $0x1d8] sm:$0xff]
    %v3797 = vld [vmem:[#allocation12 + $0x1e0] sm:$0xff]
    %v3798 = vld [vmem:[#allocation12 + $0x1e8] sm:$0xff]
    %v3799 = vld [vmem:[#allocation12 + $0x1f0] sm:$0xff]
    %v3800 = vld [vmem:[#allocation12 + $0x1f8] sm:$0xff]
    %3801 = vmatprep.subr.mxu0 %v3738
    %3802 = vmatpush1.msra.mxu0 %v3737
    %3803 = vmatprep.subr.mxu0 %v3742
    %3804 = vmatpush1.msra.mxu0 %v3741
    %3805 = vmatprep.subr.mxu0 %v3746
    %3806 = vmatpush1.msra.mxu0 %v3745
    %3807 = vmatprep.subr.mxu0 %v3750
    %3808 = vmatpush1.msra.mxu0 %v3749
    %3809 = vmatprep.subr.mxu0 %v3754
    %3810 = vmatpush1.msra.mxu0 %v3753
    %3811 = vmatprep.subr.mxu0 %v3758
    %3812 = vmatpush1.msra.mxu0 %v3757
    %3813 = vmatprep.subr.mxu0 %v3762
    %3814 = vmatpush1.msra.mxu0 %v3761
    %3815 = vmatprep.subr.mxu0 %v3766
    %3816 = vmatpush1.msra.mxu0 %v3765
    %3817 = vmatprep.subr.mxu0 %v3770
    %3818 = vmatpush1.msra.mxu0 %v3769
    %3819 = vmatprep.subr.mxu0 %v3774
    %3820 = vmatpush1.msra.mxu0 %v3773
    %3821 = vmatprep.subr.mxu0 %v3778
    %3822 = vmatpush1.msra.mxu0 %v3777
    %3823 = vmatprep.subr.mxu0 %v3782
    %3824 = vmatpush1.msra.mxu0 %v3781
    %3825 = vmatprep.subr.mxu0 %v3786
    %3826 = vmatpush1.msra.mxu0 %v3785
    %3827 = vmatprep.subr.mxu0 %v3790
    %3828 = vmatpush1.msra.mxu0 %v3789
    %3829 = vmatprep.subr.mxu0 %v3794
    %3830 = vmatpush1.msra.mxu0 %v3793
    %3831 = vmatprep.subr.mxu0 %v3798
    %3832 = vmatpush1.msra.mxu0 %v3797
    %3833 = vmatprep.subr.mxu0 0.0
    %3834 = vmatpush1.msra.mxu0 0.0
    %3835 = vmatprep.subr.mxu0 0.0
    %3836 = vmatpush1.msra.mxu0 0.0
    %3837 = vmatprep.subr.mxu0 0.0
    %3838 = vmatpush1.msra.mxu0 0.0
    %3839 = vmatprep.subr.mxu0 0.0
    %3840 = vmatpush1.msra.mxu0 0.0
    %3841 = vmatprep.subr.mxu0 0.0
    %3842 = vmatpush1.msra.mxu0 0.0
    %3843 = vmatprep.subr.mxu0 0.0
    %3844 = vmatpush1.msra.mxu0 0.0
    %3845 = vmatprep.subr.mxu0 0.0
    %3846 = vmatpush1.msra.mxu0 0.0
    %3847 = vmatprep.subr.mxu0 0.0
    %3848 = vmatpush1.msra.mxu0 0.0
    %3849 = vmatprep.subr.mxu0 0.0
    %3850 = vmatpush1.msra.mxu0 0.0
    %3851 = vmatprep.subr.mxu0 0.0
    %3852 = vmatpush1.msra.mxu0 0.0
    %3853 = vmatprep.subr.mxu0 0.0
    %3854 = vmatpush1.msra.mxu0 0.0
    %3855 = vmatprep.subr.mxu0 0.0
    %3856 = vmatpush1.msra.mxu0 0.0
    %3857 = vmatprep.subr.mxu0 0.0
    %3858 = vmatpush1.msra.mxu0 0.0
    %3859 = vmatprep.subr.mxu0 0.0
    %3860 = vmatpush1.msra.mxu0 0.0
    %3861 = vmatprep.subr.mxu0 0.0
    %3862 = vmatpush1.msra.mxu0 0.0
    %3863 = vmatprep.subr.mxu0 0.0
    %3864 = vmatpush1.msra.mxu0 0.0
    %3865 = vmatprep.mubr.f32.mxu0 0.0
    %3866 = vmatmul.mubr.f32.gmra.mrb[0].mxu0 %v3728
    %v3867 = vpop.f32.mrb[0].mxu0
    %v3868 = vadd.f32 0.0, %v3867
    %v3869 = vpop.f32.mrb[0].mxu0
    %v3870 = vadd.f32 0.0, %v3869
    %3871 = vdwg.mxu0
    %3872 = vmatprep.subr.mxu0 %v3740
    %3873 = vmatpush1.msra.mxu0 %v3739
    %3874 = vmatprep.subr.mxu0 %v3744
    %3875 = vmatpush1.msra.mxu0 %v3743
    %3876 = vmatprep.subr.mxu0 %v3748
    %3877 = vmatpush1.msra.mxu0 %v3747
    %3878 = vmatprep.subr.mxu0 %v3752
    %3879 = vmatpush1.msra.mxu0 %v3751
    %3880 = vmatprep.subr.mxu0 %v3756
    %3881 = vmatpush1.msra.mxu0 %v3755
    %3882 = vmatprep.subr.mxu0 %v3760
    %3883 = vmatpush1.msra.mxu0 %v3759
    %3884 = vmatprep.subr.mxu0 %v3764
    %3885 = vmatpush1.msra.mxu0 %v3763
    %3886 = vmatprep.subr.mxu0 %v3768
    %3887 = vmatpush1.msra.mxu0 %v3767
    %3888 = vmatprep.subr.mxu0 %v3772
    %3889 = vmatpush1.msra.mxu0 %v3771
    %3890 = vmatprep.subr.mxu0 %v3776
    %3891 = vmatpush1.msra.mxu0 %v3775
    %3892 = vmatprep.subr.mxu0 %v3780
    %3893 = vmatpush1.msra.mxu0 %v3779
    %3894 = vmatprep.subr.mxu0 %v3784
    %3895 = vmatpush1.msra.mxu0 %v3783
    %3896 = vmatprep.subr.mxu0 %v3788
    %3897 = vmatpush1.msra.mxu0 %v3787
    %3898 = vmatprep.subr.mxu0 %v3792
    %3899 = vmatpush1.msra.mxu0 %v3791
    %3900 = vmatprep.subr.mxu0 %v3796
    %3901 = vmatpush1.msra.mxu0 %v3795
    %3902 = vmatprep.subr.mxu0 %v3800
    %3903 = vmatpush1.msra.mxu0 %v3799
    %3904 = vmatprep.subr.mxu0 0.0
    %3905 = vmatpush1.msra.mxu0 0.0
    %3906 = vmatprep.subr.mxu0 0.0
    %3907 = vmatpush1.msra.mxu0 0.0
    %3908 = vmatprep.subr.mxu0 0.0
    %3909 = vmatpush1.msra.mxu0 0.0
    %3910 = vmatprep.subr.mxu0 0.0
    %3911 = vmatpush1.msra.mxu0 0.0
    %3912 = vmatprep.subr.mxu0 0.0
    %3913 = vmatpush1.msra.mxu0 0.0
    %3914 = vmatprep.subr.mxu0 0.0
    %3915 = vmatpush1.msra.mxu0 0.0
    %3916 = vmatprep.subr.mxu0 0.0
    %3917 = vmatpush1.msra.mxu0 0.0
    %3918 = vmatprep.subr.mxu0 0.0
    %3919 = vmatpush1.msra.mxu0 0.0
    %3920 = vmatprep.subr.mxu0 0.0
    %3921 = vmatpush1.msra.mxu0 0.0
    %3922 = vmatprep.subr.mxu0 0.0
    %3923 = vmatpush1.msra.mxu0 0.0
    %3924 = vmatprep.subr.mxu0 0.0
    %3925 = vmatpush1.msra.mxu0 0.0
    %3926 = vmatprep.subr.mxu0 0.0
    %3927 = vmatpush1.msra.mxu0 0.0
    %3928 = vmatprep.subr.mxu0 0.0
    %3929 = vmatpush1.msra.mxu0 0.0
    %3930 = vmatprep.subr.mxu0 0.0
    %3931 = vmatpush1.msra.mxu0 0.0
    %3932 = vmatprep.subr.mxu0 0.0
    %3933 = vmatpush1.msra.mxu0 0.0
    %3934 = vmatprep.subr.mxu0 0.0
    %3935 = vmatpush1.msra.mxu0 0.0
    %3936 = vmatprep.mubr.f32.mxu0 0.0
    %3937 = vmatmul.mubr.f32.gmra.mrb[0].mxu0 %v3728
    %v3938 = vpop.f32.mrb[0].mxu0
    %v3939 = vadd.f32 0.0, %v3938
    %v3940 = vpop.f32.mrb[0].mxu0
    %v3941 = vadd.f32 0.0, %v3940
    %3942 = vdwg.mxu0
    %v3943 = vadd.f32 %v3733, %v3868
    %v3944 = vadd.f32 %v3734, %v3870
    %v3945 = vadd.f32 %v3735, %v3939
    %v3946 = vadd.f32 %v3736, %v3941
    %s3947 = scalar_lea.vmem [#allocation3], 32
    %v3948 = vld [vmem:[%s3947] sm:$0xff]
    %v3949 = vld [vmem:[%s3947 + $0x8] sm:$0xff]
    %v3950 = vld [vmem:[%s3947 + $0x10] sm:$0xff]
    %v3951 = vld [vmem:[%s3947 + $0x18] sm:$0xff]
    %v3952 = vld [vmem:[#allocation14] sm:$0xff]
    %v3953 = vld [vmem:[#allocation14 + $0x8] sm:$0xff]
    %v3954 = vld [vmem:[#allocation14 + $0x10] sm:$0xff]
    %v3955 = vld [vmem:[#allocation14 + $0x18] sm:$0xff]
    %v3956 = vld [vmem:[#allocation14 + $0x20] sm:$0xff]
    %v3957 = vld [vmem:[#allocation14 + $0x28] sm:$0xff]
    %v3958 = vld [vmem:[#allocation14 + $0x30] sm:$0xff]
    %v3959 = vld [vmem:[#allocation14 + $0x38] sm:$0xff]
    %v3960 = vld [vmem:[#allocation14 + $0x40] sm:$0xff]
    %v3961 = vld [vmem:[#allocation14 + $0x48] sm:$0xff]
    %v3962 = vld [vmem:[#allocation14 + $0x50] sm:$0xff]
    %v3963 = vld [vmem:[#allocation14 + $0x58] sm:$0xff]
    %v3964 = vld [vmem:[#allocation14 + $0x60] sm:$0xff]
    %v3965 = vld [vmem:[#allocation14 + $0x68] sm:$0xff]
    %v3966 = vld [vmem:[#allocation14 + $0x70] sm:$0xff]
    %v3967 = vld [vmem:[#allocation14 + $0x78] sm:$0xff]
    %v3968 = vld [vmem:[#allocation14 + $0x80] sm:$0xff]
    %v3969 = vld [vmem:[#allocation14 + $0x88] sm:$0xff]
    %v3970 = vld [vmem:[#allocation14 + $0x90] sm:$0xff]
    %v3971 = vld [vmem:[#allocation14 + $0x98] sm:$0xff]
    %v3972 = vld [vmem:[#allocation14 + $0xa0] sm:$0xff]
    %v3973 = vld [vmem:[#allocation14 + $0xa8] sm:$0xff]
    %v3974 = vld [vmem:[#allocation14 + $0xb0] sm:$0xff]
    %v3975 = vld [vmem:[#allocation14 + $0xb8] sm:$0xff]
    %v3976 = vld [vmem:[#allocation14 + $0xc0] sm:$0xff]
    %v3977 = vld [vmem:[#allocation14 + $0xc8] sm:$0xff]
    %v3978 = vld [vmem:[#allocation14 + $0xd0] sm:$0xff]
    %v3979 = vld [vmem:[#allocation14 + $0xd8] sm:$0xff]
    %v3980 = vld [vmem:[#allocation14 + $0xe0] sm:$0xff]
    %v3981 = vld [vmem:[#allocation14 + $0xe8] sm:$0xff]
    %v3982 = vld [vmem:[#allocation14 + $0xf0] sm:$0xff]
    %v3983 = vld [vmem:[#allocation14 + $0xf8] sm:$0xff]
    %v3984 = vld [vmem:[#allocation14 + $0x100] sm:$0xff]
    %v3985 = vld [vmem:[#allocation14 + $0x108] sm:$0xff]
    %v3986 = vld [vmem:[#allocation14 + $0x110] sm:$0xff]
    %v3987 = vld [vmem:[#allocation14 + $0x118] sm:$0xff]
    %v3988 = vld [vmem:[#allocation14 + $0x120] sm:$0xff]
    %v3989 = vld [vmem:[#allocation14 + $0x128] sm:$0xff]
    %v3990 = vld [vmem:[#allocation14 + $0x130] sm:$0xff]
    %v3991 = vld [vmem:[#allocation14 + $0x138] sm:$0xff]
    %v3992 = vld [vmem:[#allocation14 + $0x140] sm:$0xff]
    %v3993 = vld [vmem:[#allocation14 + $0x148] sm:$0xff]
    %v3994 = vld [vmem:[#allocation14 + $0x150] sm:$0xff]
    %v3995 = vld [vmem:[#allocation14 + $0x158] sm:$0xff]
    %v3996 = vld [vmem:[#allocation14 + $0x160] sm:$0xff]
    %v3997 = vld [vmem:[#allocation14 + $0x168] sm:$0xff]
    %v3998 = vld [vmem:[#allocation14 + $0x170] sm:$0xff]
    %v3999 = vld [vmem:[#allocation14 + $0x178] sm:$0xff]
    %v4000 = vld [vmem:[#allocation14 + $0x180] sm:$0xff]
    %v4001 = vld [vmem:[#allocation14 + $0x188] sm:$0xff]
    %v4002 = vld [vmem:[#allocation14 + $0x190] sm:$0xff]
    %v4003 = vld [vmem:[#allocation14 + $0x198] sm:$0xff]
    %v4004 = vld [vmem:[#allocation14 + $0x1a0] sm:$0xff]
    %v4005 = vld [vmem:[#allocation14 + $0x1a8] sm:$0xff]
    %v4006 = vld [vmem:[#allocation14 + $0x1b0] sm:$0xff]
    %v4007 = vld [vmem:[#allocation14 + $0x1b8] sm:$0xff]
    %v4008 = vld [vmem:[#allocation14 + $0x1c0] sm:$0xff]
    %v4009 = vld [vmem:[#allocation14 + $0x1c8] sm:$0xff]
    %v4010 = vld [vmem:[#allocation14 + $0x1d0] sm:$0xff]
    %v4011 = vld [vmem:[#allocation14 + $0x1d8] sm:$0xff]
    %v4012 = vld [vmem:[#allocation14 + $0x1e0] sm:$0xff]
    %v4013 = vld [vmem:[#allocation14 + $0x1e8] sm:$0xff]
    %v4014 = vld [vmem:[#allocation14 + $0x1f0] sm:$0xff]
    %v4015 = vld [vmem:[#allocation14 + $0x1f8] sm:$0xff]
    %4016 = vmatprep.subr.mxu0 %v3953
    %4017 = vmatpush1.msra.mxu0 %v3952
    %4018 = vmatprep.subr.mxu0 %v3957
    %4019 = vmatpush1.msra.mxu0 %v3956
    %4020 = vmatprep.subr.mxu0 %v3961
    %4021 = vmatpush1.msra.mxu0 %v3960
    %4022 = vmatprep.subr.mxu0 %v3965
    %4023 = vmatpush1.msra.mxu0 %v3964
    %4024 = vmatprep.subr.mxu0 %v3969
    %4025 = vmatpush1.msra.mxu0 %v3968
    %4026 = vmatprep.subr.mxu0 %v3973
    %4027 = vmatpush1.msra.mxu0 %v3972
    %4028 = vmatprep.subr.mxu0 %v3977
    %4029 = vmatpush1.msra.mxu0 %v3976
    %4030 = vmatprep.subr.mxu0 %v3981
    %4031 = vmatpush1.msra.mxu0 %v3980
    %4032 = vmatprep.subr.mxu0 %v3985
    %4033 = vmatpush1.msra.mxu0 %v3984
    %4034 = vmatprep.subr.mxu0 %v3989
    %4035 = vmatpush1.msra.mxu0 %v3988
    %4036 = vmatprep.subr.mxu0 %v3993
    %4037 = vmatpush1.msra.mxu0 %v3992
    %4038 = vmatprep.subr.mxu0 %v3997
    %4039 = vmatpush1.msra.mxu0 %v3996
    %4040 = vmatprep.subr.mxu0 %v4001
    %4041 = vmatpush1.msra.mxu0 %v4000
    %4042 = vmatprep.subr.mxu0 %v4005
    %4043 = vmatpush1.msra.mxu0 %v4004
    %4044 = vmatprep.subr.mxu0 %v4009
    %4045 = vmatpush1.msra.mxu0 %v4008
    %4046 = vmatprep.subr.mxu0 %v4013
    %4047 = vmatpush1.msra.mxu0 %v4012
    %4048 = vmatprep.subr.mxu0 0.0
    %4049 = vmatpush1.msra.mxu0 0.0
    %4050 = vmatprep.subr.mxu0 0.0
    %4051 = vmatpush1.msra.mxu0 0.0
    %4052 = vmatprep.subr.mxu0 0.0
    %4053 = vmatpush1.msra.mxu0 0.0
    %4054 = vmatprep.subr.mxu0 0.0
    %4055 = vmatpush1.msra.mxu0 0.0
    %4056 = vmatprep.subr.mxu0 0.0
    %4057 = vmatpush1.msra.mxu0 0.0
    %4058 = vmatprep.subr.mxu0 0.0
    %4059 = vmatpush1.msra.mxu0 0.0
    %4060 = vmatprep.subr.mxu0 0.0
    %4061 = vmatpush1.msra.mxu0 0.0
    %4062 = vmatprep.subr.mxu0 0.0
    %4063 = vmatpush1.msra.mxu0 0.0
    %4064 = vmatprep.subr.mxu0 0.0
    %4065 = vmatpush1.msra.mxu0 0.0
    %4066 = vmatprep.subr.mxu0 0.0
    %4067 = vmatpush1.msra.mxu0 0.0
    %4068 = vmatprep.subr.mxu0 0.0
    %4069 = vmatpush1.msra.mxu0 0.0
    %4070 = vmatprep.subr.mxu0 0.0
    %4071 = vmatpush1.msra.mxu0 0.0
    %4072 = vmatprep.subr.mxu0 0.0
    %4073 = vmatpush1.msra.mxu0 0.0
    %4074 = vmatprep.subr.mxu0 0.0
    %4075 = vmatpush1.msra.mxu0 0.0
    %4076 = vmatprep.subr.mxu0 0.0
    %4077 = vmatpush1.msra.mxu0 0.0
    %4078 = vmatprep.subr.mxu0 0.0
    %4079 = vmatpush1.msra.mxu0 0.0
    %4080 = vmatprep.mubr.f32.mxu0 0.0
    %4081 = vmatmul.mubr.f32.gmra.mrb[0].mxu0 %v3730
    %v4082 = vpop.f32.mrb[0].mxu0
    %v4083 = vadd.f32 0.0, %v4082
    %v4084 = vpop.f32.mrb[0].mxu0
    %v4085 = vadd.f32 0.0, %v4084
    %4086 = vdwg.mxu0
    %4087 = vmatprep.subr.mxu0 %v3955
    %4088 = vmatpush1.msra.mxu0 %v3954
    %4089 = vmatprep.subr.mxu0 %v3959
    %4090 = vmatpush1.msra.mxu0 %v3958
    %4091 = vmatprep.subr.mxu0 %v3963
    %4092 = vmatpush1.msra.mxu0 %v3962
    %4093 = vmatprep.subr.mxu0 %v3967
    %4094 = vmatpush1.msra.mxu0 %v3966
    %4095 = vmatprep.subr.mxu0 %v3971
    %4096 = vmatpush1.msra.mxu0 %v3970
    %4097 = vmatprep.subr.mxu0 %v3975
    %4098 = vmatpush1.msra.mxu0 %v3974
    %4099 = vmatprep.subr.mxu0 %v3979
    %4100 = vmatpush1.msra.mxu0 %v3978
    %4101 = vmatprep.subr.mxu0 %v3983
    %4102 = vmatpush1.msra.mxu0 %v3982
    %4103 = vmatprep.subr.mxu0 %v3987
    %4104 = vmatpush1.msra.mxu0 %v3986
    %4105 = vmatprep.subr.mxu0 %v3991
    %4106 = vmatpush1.msra.mxu0 %v3990
    %4107 = vmatprep.subr.mxu0 %v3995
    %4108 = vmatpush1.msra.mxu0 %v3994
    %4109 = vmatprep.subr.mxu0 %v3999
    %4110 = vmatpush1.msra.mxu0 %v3998
    %4111 = vmatprep.subr.mxu0 %v4003
    %4112 = vmatpush1.msra.mxu0 %v4002
    %4113 = vmatprep.subr.mxu0 %v4007
    %4114 = vmatpush1.msra.mxu0 %v4006
    %4115 = vmatprep.subr.mxu0 %v4011
    %4116 = vmatpush1.msra.mxu0 %v4010
    %4117 = vmatprep.subr.mxu0 %v4015
    %4118 = vmatpush1.msra.mxu0 %v4014
    %4119 = vmatprep.subr.mxu0 0.0
    %4120 = vmatpush1.msra.mxu0 0.0
    %4121 = vmatprep.subr.mxu0 0.0
    %4122 = vmatpush1.msra.mxu0 0.0
    %4123 = vmatprep.subr.mxu0 0.0
    %4124 = vmatpush1.msra.mxu0 0.0
    %4125 = vmatprep.subr.mxu0 0.0
    %4126 = vmatpush1.msra.mxu0 0.0
    %4127 = vmatprep.subr.mxu0 0.0
    %4128 = vmatpush1.msra.mxu0 0.0
    %4129 = vmatprep.subr.mxu0 0.0
    %4130 = vmatpush1.msra.mxu0 0.0
    %4131 = vmatprep.subr.mxu0 0.0
    %4132 = vmatpush1.msra.mxu0 0.0
    %4133 = vmatprep.subr.mxu0 0.0
    %4134 = vmatpush1.msra.mxu0 0.0
    %4135 = vmatprep.subr.mxu0 0.0
    %4136 = vmatpush1.msra.mxu0 0.0
    %4137 = vmatprep.subr.mxu0 0.0
    %4138 = vmatpush1.msra.mxu0 0.0
    %4139 = vmatprep.subr.mxu0 0.0
    %4140 = vmatpush1.msra.mxu0 0.0
    %4141 = vmatprep.subr.mxu0 0.0
    %4142 = vmatpush1.msra.mxu0 0.0
    %4143 = vmatprep.subr.mxu0 0.0
    %4144 = vmatpush1.msra.mxu0 0.0
    %4145 = vmatprep.subr.mxu0 0.0
    %4146 = vmatpush1.msra.mxu0 0.0
    %4147 = vmatprep.subr.mxu0 0.0
    %4148 = vmatpush1.msra.mxu0 0.0
    %4149 = vmatprep.subr.mxu0 0.0
    %4150 = vmatpush1.msra.mxu0 0.0
    %4151 = vmatprep.mubr.f32.mxu0 0.0
    %4152 = vmatmul.mubr.f32.gmra.mrb[0].mxu0 %v3730
    %v4153 = vpop.f32.mrb[0].mxu0
    %v4154 = vadd.f32 0.0, %v4153
    %v4155 = vpop.f32.mrb[0].mxu0
    %v4156 = vadd.f32 0.0, %v4155
    %4157 = vdwg.mxu0
    %v4158 = vadd.f32 %v3948, %v4083
    %v4159 = vadd.f32 %v3949, %v4085
    %v4160 = vadd.f32 %v3950, %v4154
    %v4161 = vadd.f32 %v3951, %v4156
    %v4162 = vxor.u32 %v3943, 2147483648
    %v4163 = vmul.f32 %v4162, 1.442695
    %v4164 = vpow.pop %v4163
    %v4165 = vadd.f32 %v4164, 1.0
    %v4166 = vrcp.pop %v4165
    %v4167 = vmul.f32 1.0, %v4166
    %v4168 = vxor.u32 %v3944, 2147483648
    %v4169 = vmul.f32 %v4168, 1.442695
    %v4170 = vpow.pop %v4169
    %v4171 = vadd.f32 %v4170, 1.0
    %v4172 = vrcp.pop %v4171
    %v4173 = vmul.f32 1.0, %v4172
    %v4174 = vtanh.pop %v3945
    %v4175 = vxor.u32 %v3946, 2147483648
    %v4176 = vmul.f32 %v4175, 1.442695
    %v4177 = vpow.pop %v4176
    %v4178 = vadd.f32 %v4177, 1.0
    %v4179 = vrcp.pop %v4178
    %v4180 = vmul.f32 1.0, %v4179
    %v4181 = vmul.f32 %v4173, %v3729
    %v4182 = vmul.f32 %v4167, %v4174
    %v4183 = vadd.f32 %v4181, %v4182
    %v4184 = vtanh.pop %v4183
    %v4185 = vmul.f32 %v4180, %v4184
    %v4186 = vxor.u32 %v4158, 2147483648
    %v4187 = vmul.f32 %v4186, 1.442695
    %v4188 = vpow.pop %v4187
    %v4189 = vadd.f32 %v4188, 1.0
    %v4190 = vrcp.pop %v4189
    %v4191 = vmul.f32 1.0, %v4190
    %v4192 = vxor.u32 %v4159, 2147483648
    %v4193 = vmul.f32 %v4192, 1.442695
    %v4194 = vpow.pop %v4193
    %v4195 = vadd.f32 %v4194, 1.0
    %v4196 = vrcp.pop %v4195
    %v4197 = vmul.f32 1.0, %v4196
    %v4198 = vtanh.pop %v4160
    %v4199 = vxor.u32 %v4161, 2147483648
    %v4200 = vmul.f32 %v4199, 1.442695
    %v4201 = vpow.pop %v4200
    %v4202 = vadd.f32 %v4201, 1.0
    %v4203 = vrcp.pop %v4202
    %v4204 = vmul.f32 1.0, %v4203
    %v4205 = vmul.f32 %v4197, %v3731
    %v4206 = vmul.f32 %v4191, %v4198
    %v4207 = vadd.f32 %v4205, %v4206
    %v4208 = vtanh.pop %v4207
    %v4209 = vmul.f32 %v4204, %v4208
    %v4210 = vsel %vm1748, %v4185, 0.0
    %s4211 = scalar_lea.vmem [#allocation4], 48
    %4212 = vst [vmem:[%s4211] sm:$0xff] %v4210
    %v4213 = vsel %vm1740, %v4209, 0.0
    %s4214 = scalar_lea.vmem [#allocation5], 8
    %4215 = vst [vmem:[%s4214] sm:$0xff] %v4213
    %v4216 = vsel %vm1748, %v4185, %v3728
    %v4217 = vsel %vm1748, %v4183, %v3729
    %v4218 = vsel %vm1740, %v4209, %v3730
    %v4219 = vsel %vm1740, %v4207, %v3731
    %s4220 = scalar_lea.vmem [#allocation2], 224
    %v4221 = vld [vmem:[%s4220] sm:$0xff]
    %v4222 = vld [vmem:[%s4220 + $0x8] sm:$0xff]
    %v4223 = vld [vmem:[%s4220 + $0x10] sm:$0xff]
    %v4224 = vld [vmem:[%s4220 + $0x18] sm:$0xff]
    %v4225 = vld [vmem:[#allocation12] sm:$0xff]
    %v4226 = vld [vmem:[#allocation12 + $0x8] sm:$0xff]
    %v4227 = vld [vmem:[#allocation12 + $0x10] sm:$0xff]
    %v4228 = vld [vmem:[#allocation12 + $0x18] sm:$0xff]
    %v4229 = vld [vmem:[#allocation12 + $0x20] sm:$0xff]
    %v4230 = vld [vmem:[#allocation12 + $0x28] sm:$0xff]
    %v4231 = vld [vmem:[#allocation12 + $0x30] sm:$0xff]
    %v4232 = vld [vmem:[#allocation12 + $0x38] sm:$0xff]
    %v4233 = vld [vmem:[#allocation12 + $0x40] sm:$0xff]
    %v4234 = vld [vmem:[#allocation12 + $0x48] sm:$0xff]
    %v4235 = vld [vmem:[#allocation12 + $0x50] sm:$0xff]
    %v4236 = vld [vmem:[#allocation12 + $0x58] sm:$0xff]
    %v4237 = vld [vmem:[#allocation12 + $0x60] sm:$0xff]
    %v4238 = vld [vmem:[#allocation12 + $0x68] sm:$0xff]
    %v4239 = vld [vmem:[#allocation12 + $0x70] sm:$0xff]
    %v4240 = vld [vmem:[#allocation12 + $0x78] sm:$0xff]
    %v4241 = vld [vmem:[#allocation12 + $0x80] sm:$0xff]
    %v4242 = vld [vmem:[#allocation12 + $0x88] sm:$0xff]
    %v4243 = vld [vmem:[#allocation12 + $0x90] sm:$0xff]
    %v4244 = vld [vmem:[#allocation12 + $0x98] sm:$0xff]
    %v4245 = vld [vmem:[#allocation12 + $0xa0] sm:$0xff]
    %v4246 = vld [vmem:[#allocation12 + $0xa8] sm:$0xff]
    %v4247 = vld [vmem:[#allocation12 + $0xb0] sm:$0xff]
    %v4248 = vld [vmem:[#allocation12 + $0xb8] sm:$0xff]
    %v4249 = vld [vmem:[#allocation12 + $0xc0] sm:$0xff]
    %v4250 = vld [vmem:[#allocation12 + $0xc8] sm:$0xff]
    %v4251 = vld [vmem:[#allocation12 + $0xd0] sm:$0xff]
    %v4252 = vld [vmem:[#allocation12 + $0xd8] sm:$0xff]
    %v4253 = vld [vmem:[#allocation12 + $0xe0] sm:$0xff]
    %v4254 = vld [vmem:[#allocation12 + $0xe8] sm:$0xff]
    %v4255 = vld [vmem:[#allocation12 + $0xf0] sm:$0xff]
    %v4256 = vld [vmem:[#allocation12 + $0xf8] sm:$0xff]
    %v4257 = vld [vmem:[#allocation12 + $0x100] sm:$0xff]
    %v4258 = vld [vmem:[#allocation12 + $0x108] sm:$0xff]
    %v4259 = vld [vmem:[#allocation12 + $0x110] sm:$0xff]
    %v4260 = vld [vmem:[#allocation12 + $0x118] sm:$0xff]
    %v4261 = vld [vmem:[#allocation12 + $0x120] sm:$0xff]
    %v4262 = vld [vmem:[#allocation12 + $0x128] sm:$0xff]
    %v4263 = vld [vmem:[#allocation12 + $0x130] sm:$0xff]
    %v4264 = vld [vmem:[#allocation12 + $0x138] sm:$0xff]
    %v4265 = vld [vmem:[#allocation12 + $0x140] sm:$0xff]
    %v4266 = vld [vmem:[#allocation12 + $0x148] sm:$0xff]
    %v4267 = vld [vmem:[#allocation12 + $0x150] sm:$0xff]
    %v4268 = vld [vmem:[#allocation12 + $0x158] sm:$0xff]
    %v4269 = vld [vmem:[#allocation12 + $0x160] sm:$0xff]
    %v4270 = vld [vmem:[#allocation12 + $0x168] sm:$0xff]
    %v4271 = vld [vmem:[#allocation12 + $0x170] sm:$0xff]
    %v4272 = vld [vmem:[#allocation12 + $0x178] sm:$0xff]
    %v4273 = vld [vmem:[#allocation12 + $0x180] sm:$0xff]
    %v4274 = vld [vmem:[#allocation12 + $0x188] sm:$0xff]
    %v4275 = vld [vmem:[#allocation12 + $0x190] sm:$0xff]
    %v4276 = vld [vmem:[#allocation12 + $0x198] sm:$0xff]
    %v4277 = vld [vmem:[#allocation12 + $0x1a0] sm:$0xff]
    %v4278 = vld [vmem:[#allocation12 + $0x1a8] sm:$0xff]
    %v4279 = vld [vmem:[#allocation12 + $0x1b0] sm:$0xff]
    %v4280 = vld [vmem:[#allocation12 + $0x1b8] sm:$0xff]
    %v4281 = vld [vmem:[#allocation12 + $0x1c0] sm:$0xff]
    %v4282 = vld [vmem:[#allocation12 + $0x1c8] sm:$0xff]
    %v4283 = vld [vmem:[#allocation12 + $0x1d0] sm:$0xff]
    %v4284 = vld [vmem:[#allocation12 + $0x1d8] sm:$0xff]
    %v4285 = vld [vmem:[#allocation12 + $0x1e0] sm:$0xff]
    %v4286 = vld [vmem:[#allocation12 + $0x1e8] sm:$0xff]
    %v4287 = vld [vmem:[#allocation12 + $0x1f0] sm:$0xff]
    %v4288 = vld [vmem:[#allocation12 + $0x1f8] sm:$0xff]
    %4289 = vmatprep.subr.mxu0 %v4226
    %4290 = vmatpush1.msra.mxu0 %v4225
    %4291 = vmatprep.subr.mxu0 %v4230
    %4292 = vmatpush1.msra.mxu0 %v4229
    %4293 = vmatprep.subr.mxu0 %v4234
    %4294 = vmatpush1.msra.mxu0 %v4233
    %4295 = vmatprep.subr.mxu0 %v4238
    %4296 = vmatpush1.msra.mxu0 %v4237
    %4297 = vmatprep.subr.mxu0 %v4242
    %4298 = vmatpush1.msra.mxu0 %v4241
    %4299 = vmatprep.subr.mxu0 %v4246
    %4300 = vmatpush1.msra.mxu0 %v4245
    %4301 = vmatprep.subr.mxu0 %v4250
    %4302 = vmatpush1.msra.mxu0 %v4249
    %4303 = vmatprep.subr.mxu0 %v4254
    %4304 = vmatpush1.msra.mxu0 %v4253
    %4305 = vmatprep.subr.mxu0 %v4258
    %4306 = vmatpush1.msra.mxu0 %v4257
    %4307 = vmatprep.subr.mxu0 %v4262
    %4308 = vmatpush1.msra.mxu0 %v4261
    %4309 = vmatprep.subr.mxu0 %v4266
    %4310 = vmatpush1.msra.mxu0 %v4265
    %4311 = vmatprep.subr.mxu0 %v4270
    %4312 = vmatpush1.msra.mxu0 %v4269
    %4313 = vmatprep.subr.mxu0 %v4274
    %4314 = vmatpush1.msra.mxu0 %v4273
    %4315 = vmatprep.subr.mxu0 %v4278
    %4316 = vmatpush1.msra.mxu0 %v4277
    %4317 = vmatprep.subr.mxu0 %v4282
    %4318 = vmatpush1.msra.mxu0 %v4281
    %4319 = vmatprep.subr.mxu0 %v4286
    %4320 = vmatpush1.msra.mxu0 %v4285
    %4321 = vmatprep.subr.mxu0 0.0
    %4322 = vmatpush1.msra.mxu0 0.0
    %4323 = vmatprep.subr.mxu0 0.0
    %4324 = vmatpush1.msra.mxu0 0.0
    %4325 = vmatprep.subr.mxu0 0.0
    %4326 = vmatpush1.msra.mxu0 0.0
    %4327 = vmatprep.subr.mxu0 0.0
    %4328 = vmatpush1.msra.mxu0 0.0
    %4329 = vmatprep.subr.mxu0 0.0
    %4330 = vmatpush1.msra.mxu0 0.0
    %4331 = vmatprep.subr.mxu0 0.0
    %4332 = vmatpush1.msra.mxu0 0.0
    %4333 = vmatprep.subr.mxu0 0.0
    %4334 = vmatpush1.msra.mxu0 0.0
    %4335 = vmatprep.subr.mxu0 0.0
    %4336 = vmatpush1.msra.mxu0 0.0
    %4337 = vmatprep.subr.mxu0 0.0
    %4338 = vmatpush1.msra.mxu0 0.0
    %4339 = vmatprep.subr.mxu0 0.0
    %4340 = vmatpush1.msra.mxu0 0.0
    %4341 = vmatprep.subr.mxu0 0.0
    %4342 = vmatpush1.msra.mxu0 0.0
    %4343 = vmatprep.subr.mxu0 0.0
    %4344 = vmatpush1.msra.mxu0 0.0
    %4345 = vmatprep.subr.mxu0 0.0
    %4346 = vmatpush1.msra.mxu0 0.0
    %4347 = vmatprep.subr.mxu0 0.0
    %4348 = vmatpush1.msra.mxu0 0.0
    %4349 = vmatprep.subr.mxu0 0.0
    %4350 = vmatpush1.msra.mxu0 0.0
    %4351 = vmatprep.subr.mxu0 0.0
    %4352 = vmatpush1.msra.mxu0 0.0
    %4353 = vmatprep.mubr.f32.mxu0 0.0
    %4354 = vmatmul.mubr.f32.gmra.mrb[0].mxu0 %v4216
    %v4355 = vpop.f32.mrb[0].mxu0
    %v4356 = vadd.f32 0.0, %v4355
    %v4357 = vpop.f32.mrb[0].mxu0
    %v4358 = vadd.f32 0.0, %v4357
    %4359 = vdwg.mxu0
    %4360 = vmatprep.subr.mxu0 %v4228
    %4361 = vmatpush1.msra.mxu0 %v4227
    %4362 = vmatprep.subr.mxu0 %v4232
    %4363 = vmatpush1.msra.mxu0 %v4231
    %4364 = vmatprep.subr.mxu0 %v4236
    %4365 = vmatpush1.msra.mxu0 %v4235
    %4366 = vmatprep.subr.mxu0 %v4240
    %4367 = vmatpush1.msra.mxu0 %v4239
    %4368 = vmatprep.subr.mxu0 %v4244
    %4369 = vmatpush1.msra.mxu0 %v4243
    %4370 = vmatprep.subr.mxu0 %v4248
    %4371 = vmatpush1.msra.mxu0 %v4247
    %4372 = vmatprep.subr.mxu0 %v4252
    %4373 = vmatpush1.msra.mxu0 %v4251
    %4374 = vmatprep.subr.mxu0 %v4256
    %4375 = vmatpush1.msra.mxu0 %v4255
    %4376 = vmatprep.subr.mxu0 %v4260
    %4377 = vmatpush1.msra.mxu0 %v4259
    %4378 = vmatprep.subr.mxu0 %v4264
    %4379 = vmatpush1.msra.mxu0 %v4263
    %4380 = vmatprep.subr.mxu0 %v4268
    %4381 = vmatpush1.msra.mxu0 %v4267
    %4382 = vmatprep.subr.mxu0 %v4272
    %4383 = vmatpush1.msra.mxu0 %v4271
    %4384 = vmatprep.subr.mxu0 %v4276
    %4385 = vmatpush1.msra.mxu0 %v4275
    %4386 = vmatprep.subr.mxu0 %v4280
    %4387 = vmatpush1.msra.mxu0 %v4279
    %4388 = vmatprep.subr.mxu0 %v4284
    %4389 = vmatpush1.msra.mxu0 %v4283
    %4390 = vmatprep.subr.mxu0 %v4288
    %4391 = vmatpush1.msra.mxu0 %v4287
    %4392 = vmatprep.subr.mxu0 0.0
    %4393 = vmatpush1.msra.mxu0 0.0
    %4394 = vmatprep.subr.mxu0 0.0
    %4395 = vmatpush1.msra.mxu0 0.0
    %4396 = vmatprep.subr.mxu0 0.0
    %4397 = vmatpush1.msra.mxu0 0.0
    %4398 = vmatprep.subr.mxu0 0.0
    %4399 = vmatpush1.msra.mxu0 0.0
    %4400 = vmatprep.subr.mxu0 0.0
    %4401 = vmatpush1.msra.mxu0 0.0
    %4402 = vmatprep.subr.mxu0 0.0
    %4403 = vmatpush1.msra.mxu0 0.0
    %4404 = vmatprep.subr.mxu0 0.0
    %4405 = vmatpush1.msra.mxu0 0.0
    %4406 = vmatprep.subr.mxu0 0.0
    %4407 = vmatpush1.msra.mxu0 0.0
    %4408 = vmatprep.subr.mxu0 0.0
    %4409 = vmatpush1.msra.mxu0 0.0
    %4410 = vmatprep.subr.mxu0 0.0
    %4411 = vmatpush1.msra.mxu0 0.0
    %4412 = vmatprep.subr.mxu0 0.0
    %4413 = vmatpush1.msra.mxu0 0.0
    %4414 = vmatprep.subr.mxu0 0.0
    %4415 = vmatpush1.msra.mxu0 0.0
    %4416 = vmatprep.subr.mxu0 0.0
    %4417 = vmatpush1.msra.mxu0 0.0
    %4418 = vmatprep.subr.mxu0 0.0
    %4419 = vmatpush1.msra.mxu0 0.0
    %4420 = vmatprep.subr.mxu0 0.0
    %4421 = vmatpush1.msra.mxu0 0.0
    %4422 = vmatprep.subr.mxu0 0.0
    %4423 = vmatpush1.msra.mxu0 0.0
    %4424 = vmatprep.mubr.f32.mxu0 0.0
    %4425 = vmatmul.mubr.f32.gmra.mrb[0].mxu0 %v4216
    %v4426 = vpop.f32.mrb[0].mxu0
    %v4427 = vadd.f32 0.0, %v4426
    %v4428 = vpop.f32.mrb[0].mxu0
    %v4429 = vadd.f32 0.0, %v4428
    %4430 = vdwg.mxu0
    %v4431 = vadd.f32 %v4221, %v4356
    %v4432 = vadd.f32 %v4222, %v4358
    %v4433 = vadd.f32 %v4223, %v4427
    %v4434 = vadd.f32 %v4224, %v4429
    %v4435 = vld [vmem:[#allocation3] sm:$0xff]
    %v4436 = vld [vmem:[#allocation3 + $0x8] sm:$0xff]
    %v4437 = vld [vmem:[#allocation3 + $0x10] sm:$0xff]
    %v4438 = vld [vmem:[#allocation3 + $0x18] sm:$0xff]
    %v4439 = vld [vmem:[#allocation14] sm:$0xff]
    %v4440 = vld [vmem:[#allocation14 + $0x8] sm:$0xff]
    %v4441 = vld [vmem:[#allocation14 + $0x10] sm:$0xff]
    %v4442 = vld [vmem:[#allocation14 + $0x18] sm:$0xff]
    %v4443 = vld [vmem:[#allocation14 + $0x20] sm:$0xff]
    %v4444 = vld [vmem:[#allocation14 + $0x28] sm:$0xff]
    %v4445 = vld [vmem:[#allocation14 + $0x30] sm:$0xff]
    %v4446 = vld [vmem:[#allocation14 + $0x38] sm:$0xff]
    %v4447 = vld [vmem:[#allocation14 + $0x40] sm:$0xff]
    %v4448 = vld [vmem:[#allocation14 + $0x48] sm:$0xff]
    %v4449 = vld [vmem:[#allocation14 + $0x50] sm:$0xff]
    %v4450 = vld [vmem:[#allocation14 + $0x58] sm:$0xff]
    %v4451 = vld [vmem:[#allocation14 + $0x60] sm:$0xff]
    %v4452 = vld [vmem:[#allocation14 + $0x68] sm:$0xff]
    %v4453 = vld [vmem:[#allocation14 + $0x70] sm:$0xff]
    %v4454 = vld [vmem:[#allocation14 + $0x78] sm:$0xff]
    %v4455 = vld [vmem:[#allocation14 + $0x80] sm:$0xff]
    %v4456 = vld [vmem:[#allocation14 + $0x88] sm:$0xff]
    %v4457 = vld [vmem:[#allocation14 + $0x90] sm:$0xff]
    %v4458 = vld [vmem:[#allocation14 + $0x98] sm:$0xff]
    %v4459 = vld [vmem:[#allocation14 + $0xa0] sm:$0xff]
    %v4460 = vld [vmem:[#allocation14 + $0xa8] sm:$0xff]
    %v4461 = vld [vmem:[#allocation14 + $0xb0] sm:$0xff]
    %v4462 = vld [vmem:[#allocation14 + $0xb8] sm:$0xff]
    %v4463 = vld [vmem:[#allocation14 + $0xc0] sm:$0xff]
    %v4464 = vld [vmem:[#allocation14 + $0xc8] sm:$0xff]
    %v4465 = vld [vmem:[#allocation14 + $0xd0] sm:$0xff]
    %v4466 = vld [vmem:[#allocation14 + $0xd8] sm:$0xff]
    %v4467 = vld [vmem:[#allocation14 + $0xe0] sm:$0xff]
    %v4468 = vld [vmem:[#allocation14 + $0xe8] sm:$0xff]
    %v4469 = vld [vmem:[#allocation14 + $0xf0] sm:$0xff]
    %v4470 = vld [vmem:[#allocation14 + $0xf8] sm:$0xff]
    %v4471 = vld [vmem:[#allocation14 + $0x100] sm:$0xff]
    %v4472 = vld [vmem:[#allocation14 + $0x108] sm:$0xff]
    %v4473 = vld [vmem:[#allocation14 + $0x110] sm:$0xff]
    %v4474 = vld [vmem:[#allocation14 + $0x118] sm:$0xff]
    %v4475 = vld [vmem:[#allocation14 + $0x120] sm:$0xff]
    %v4476 = vld [vmem:[#allocation14 + $0x128] sm:$0xff]
    %v4477 = vld [vmem:[#allocation14 + $0x130] sm:$0xff]
    %v4478 = vld [vmem:[#allocation14 + $0x138] sm:$0xff]
    %v4479 = vld [vmem:[#allocation14 + $0x140] sm:$0xff]
    %v4480 = vld [vmem:[#allocation14 + $0x148] sm:$0xff]
    %v4481 = vld [vmem:[#allocation14 + $0x150] sm:$0xff]
    %v4482 = vld [vmem:[#allocation14 + $0x158] sm:$0xff]
    %v4483 = vld [vmem:[#allocation14 + $0x160] sm:$0xff]
    %v4484 = vld [vmem:[#allocation14 + $0x168] sm:$0xff]
    %v4485 = vld [vmem:[#allocation14 + $0x170] sm:$0xff]
    %v4486 = vld [vmem:[#allocation14 + $0x178] sm:$0xff]
    %v4487 = vld [vmem:[#allocation14 + $0x180] sm:$0xff]
    %v4488 = vld [vmem:[#allocation14 + $0x188] sm:$0xff]
    %v4489 = vld [vmem:[#allocation14 + $0x190] sm:$0xff]
    %v4490 = vld [vmem:[#allocation14 + $0x198] sm:$0xff]
    %v4491 = vld [vmem:[#allocation14 + $0x1a0] sm:$0xff]
    %v4492 = vld [vmem:[#allocation14 + $0x1a8] sm:$0xff]
    %v4493 = vld [vmem:[#allocation14 + $0x1b0] sm:$0xff]
    %v4494 = vld [vmem:[#allocation14 + $0x1b8] sm:$0xff]
    %v4495 = vld [vmem:[#allocation14 + $0x1c0] sm:$0xff]
    %v4496 = vld [vmem:[#allocation14 + $0x1c8] sm:$0xff]
    %v4497 = vld [vmem:[#allocation14 + $0x1d0] sm:$0xff]
    %v4498 = vld [vmem:[#allocation14 + $0x1d8] sm:$0xff]
    %v4499 = vld [vmem:[#allocation14 + $0x1e0] sm:$0xff]
    %v4500 = vld [vmem:[#allocation14 + $0x1e8] sm:$0xff]
    %v4501 = vld [vmem:[#allocation14 + $0x1f0] sm:$0xff]
    %v4502 = vld [vmem:[#allocation14 + $0x1f8] sm:$0xff]
    %4503 = vmatprep.subr.mxu0 %v4440
    %4504 = vmatpush1.msra.mxu0 %v4439
    %4505 = vmatprep.subr.mxu0 %v4444
    %4506 = vmatpush1.msra.mxu0 %v4443
    %4507 = vmatprep.subr.mxu0 %v4448
    %4508 = vmatpush1.msra.mxu0 %v4447
    %4509 = vmatprep.subr.mxu0 %v4452
    %4510 = vmatpush1.msra.mxu0 %v4451
    %4511 = vmatprep.subr.mxu0 %v4456
    %4512 = vmatpush1.msra.mxu0 %v4455
    %4513 = vmatprep.subr.mxu0 %v4460
    %4514 = vmatpush1.msra.mxu0 %v4459
    %4515 = vmatprep.subr.mxu0 %v4464
    %4516 = vmatpush1.msra.mxu0 %v4463
    %4517 = vmatprep.subr.mxu0 %v4468
    %4518 = vmatpush1.msra.mxu0 %v4467
    %4519 = vmatprep.subr.mxu0 %v4472
    %4520 = vmatpush1.msra.mxu0 %v4471
    %4521 = vmatprep.subr.mxu0 %v4476
    %4522 = vmatpush1.msra.mxu0 %v4475
    %4523 = vmatprep.subr.mxu0 %v4480
    %4524 = vmatpush1.msra.mxu0 %v4479
    %4525 = vmatprep.subr.mxu0 %v4484
    %4526 = vmatpush1.msra.mxu0 %v4483
    %4527 = vmatprep.subr.mxu0 %v4488
    %4528 = vmatpush1.msra.mxu0 %v4487
    %4529 = vmatprep.subr.mxu0 %v4492
    %4530 = vmatpush1.msra.mxu0 %v4491
    %4531 = vmatprep.subr.mxu0 %v4496
    %4532 = vmatpush1.msra.mxu0 %v4495
    %4533 = vmatprep.subr.mxu0 %v4500
    %4534 = vmatpush1.msra.mxu0 %v4499
    %4535 = vmatprep.subr.mxu0 0.0
    %4536 = vmatpush1.msra.mxu0 0.0
    %4537 = vmatprep.subr.mxu0 0.0
    %4538 = vmatpush1.msra.mxu0 0.0
    %4539 = vmatprep.subr.mxu0 0.0
    %4540 = vmatpush1.msra.mxu0 0.0
    %4541 = vmatprep.subr.mxu0 0.0
    %4542 = vmatpush1.msra.mxu0 0.0
    %4543 = vmatprep.subr.mxu0 0.0
    %4544 = vmatpush1.msra.mxu0 0.0
    %4545 = vmatprep.subr.mxu0 0.0
    %4546 = vmatpush1.msra.mxu0 0.0
    %4547 = vmatprep.subr.mxu0 0.0
    %4548 = vmatpush1.msra.mxu0 0.0
    %4549 = vmatprep.subr.mxu0 0.0
    %4550 = vmatpush1.msra.mxu0 0.0
    %4551 = vmatprep.subr.mxu0 0.0
    %4552 = vmatpush1.msra.mxu0 0.0
    %4553 = vmatprep.subr.mxu0 0.0
    %4554 = vmatpush1.msra.mxu0 0.0
    %4555 = vmatprep.subr.mxu0 0.0
    %4556 = vmatpush1.msra.mxu0 0.0
    %4557 = vmatprep.subr.mxu0 0.0
    %4558 = vmatpush1.msra.mxu0 0.0
    %4559 = vmatprep.subr.mxu0 0.0
    %4560 = vmatpush1.msra.mxu0 0.0
    %4561 = vmatprep.subr.mxu0 0.0
    %4562 = vmatpush1.msra.mxu0 0.0
    %4563 = vmatprep.subr.mxu0 0.0
    %4564 = vmatpush1.msra.mxu0 0.0
    %4565 = vmatprep.subr.mxu0 0.0
    %4566 = vmatpush1.msra.mxu0 0.0
    %4567 = vmatprep.mubr.f32.mxu0 0.0
    %4568 = vmatmul.mubr.f32.gmra.mrb[0].mxu0 %v4218
    %v4569 = vpop.f32.mrb[0].mxu0
    %v4570 = vadd.f32 0.0, %v4569
    %v4571 = vpop.f32.mrb[0].mxu0
    %v4572 = vadd.f32 0.0, %v4571
    %4573 = vdwg.mxu0
    %4574 = vmatprep.subr.mxu0 %v4442
    %4575 = vmatpush1.msra.mxu0 %v4441
    %4576 = vmatprep.subr.mxu0 %v4446
    %4577 = vmatpush1.msra.mxu0 %v4445
    %4578 = vmatprep.subr.mxu0 %v4450
    %4579 = vmatpush1.msra.mxu0 %v4449
    %4580 = vmatprep.subr.mxu0 %v4454
    %4581 = vmatpush1.msra.mxu0 %v4453
    %4582 = vmatprep.subr.mxu0 %v4458
    %4583 = vmatpush1.msra.mxu0 %v4457
    %4584 = vmatprep.subr.mxu0 %v4462
    %4585 = vmatpush1.msra.mxu0 %v4461
    %4586 = vmatprep.subr.mxu0 %v4466
    %4587 = vmatpush1.msra.mxu0 %v4465
    %4588 = vmatprep.subr.mxu0 %v4470
    %4589 = vmatpush1.msra.mxu0 %v4469
    %4590 = vmatprep.subr.mxu0 %v4474
    %4591 = vmatpush1.msra.mxu0 %v4473
    %4592 = vmatprep.subr.mxu0 %v4478
    %4593 = vmatpush1.msra.mxu0 %v4477
    %4594 = vmatprep.subr.mxu0 %v4482
    %4595 = vmatpush1.msra.mxu0 %v4481
    %4596 = vmatprep.subr.mxu0 %v4486
    %4597 = vmatpush1.msra.mxu0 %v4485
    %4598 = vmatprep.subr.mxu0 %v4490
    %4599 = vmatpush1.msra.mxu0 %v4489
    %4600 = vmatprep.subr.mxu0 %v4494
    %4601 = vmatpush1.msra.mxu0 %v4493
    %4602 = vmatprep.subr.mxu0 %v4498
    %4603 = vmatpush1.msra.mxu0 %v4497
    %4604 = vmatprep.subr.mxu0 %v4502
    %4605 = vmatpush1.msra.mxu0 %v4501
    %4606 = vmatprep.subr.mxu0 0.0
    %4607 = vmatpush1.msra.mxu0 0.0
    %4608 = vmatprep.subr.mxu0 0.0
    %4609 = vmatpush1.msra.mxu0 0.0
    %4610 = vmatprep.subr.mxu0 0.0
    %4611 = vmatpush1.msra.mxu0 0.0
    %4612 = vmatprep.subr.mxu0 0.0
    %4613 = vmatpush1.msra.mxu0 0.0
    %4614 = vmatprep.subr.mxu0 0.0
    %4615 = vmatpush1.msra.mxu0 0.0
    %4616 = vmatprep.subr.mxu0 0.0
    %4617 = vmatpush1.msra.mxu0 0.0
    %4618 = vmatprep.subr.mxu0 0.0
    %4619 = vmatpush1.msra.mxu0 0.0
    %4620 = vmatprep.subr.mxu0 0.0
    %4621 = vmatpush1.msra.mxu0 0.0
    %4622 = vmatprep.subr.mxu0 0.0
    %4623 = vmatpush1.msra.mxu0 0.0
    %4624 = vmatprep.subr.mxu0 0.0
    %4625 = vmatpush1.msra.mxu0 0.0
    %4626 = vmatprep.subr.mxu0 0.0
    %4627 = vmatpush1.msra.mxu0 0.0
    %4628 = vmatprep.subr.mxu0 0.0
    %4629 = vmatpush1.msra.mxu0 0.0
    %4630 = vmatprep.subr.mxu0 0.0
    %4631 = vmatpush1.msra.mxu0 0.0
    %4632 = vmatprep.subr.mxu0 0.0
    %4633 = vmatpush1.msra.mxu0 0.0
    %4634 = vmatprep.subr.mxu0 0.0
    %4635 = vmatpush1.msra.mxu0 0.0
    %4636 = vmatprep.subr.mxu0 0.0
    %4637 = vmatpush1.msra.mxu0 0.0
    %4638 = vmatprep.mubr.f32.mxu0 0.0
    %4639 = vmatmul.mubr.f32.gmra.mrb[0].mxu0 %v4218
    %v4640 = vpop.f32.mrb[0].mxu0
    %v4641 = vadd.f32 0.0, %v4640
    %v4642 = vpop.f32.mrb[0].mxu0
    %v4643 = vadd.f32 0.0, %v4642
    %4644 = vdwg.mxu0
    %v4645 = vadd.f32 %v4435, %v4570
    %v4646 = vadd.f32 %v4436, %v4572
    %v4647 = vadd.f32 %v4437, %v4641
    %v4648 = vadd.f32 %v4438, %v4643
    %v4649 = vxor.u32 %v4431, 2147483648
    %v4650 = vmul.f32 %v4649, 1.442695
    %v4651 = vpow.pop %v4650
    %v4652 = vadd.f32 %v4651, 1.0
    %v4653 = vrcp.pop %v4652
    %v4654 = vmul.f32 1.0, %v4653
    %v4655 = vxor.u32 %v4432, 2147483648
    %v4656 = vmul.f32 %v4655, 1.442695
    %v4657 = vpow.pop %v4656
    %v4658 = vadd.f32 %v4657, 1.0
    %v4659 = vrcp.pop %v4658
    %v4660 = vmul.f32 1.0, %v4659
    %v4661 = vtanh.pop %v4433
    %v4662 = vxor.u32 %v4434, 2147483648
    %v4663 = vmul.f32 %v4662, 1.442695
    %v4664 = vpow.pop %v4663
    %v4665 = vadd.f32 %v4664, 1.0
    %v4666 = vrcp.pop %v4665
    %v4667 = vmul.f32 1.0, %v4666
    %v4668 = vmul.f32 %v4660, %v4217
    %v4669 = vmul.f32 %v4654, %v4661
    %v4670 = vadd.f32 %v4668, %v4669
    %v4671 = vtanh.pop %v4670
    %v4672 = vmul.f32 %v4667, %v4671
    %v4673 = vxor.u32 %v4645, 2147483648
    %v4674 = vmul.f32 %v4673, 1.442695
    %v4675 = vpow.pop %v4674
    %v4676 = vadd.f32 %v4675, 1.0
    %v4677 = vrcp.pop %v4676
    %v4678 = vmul.f32 1.0, %v4677
    %v4679 = vxor.u32 %v4646, 2147483648
    %v4680 = vmul.f32 %v4679, 1.442695
    %v4681 = vpow.pop %v4680
    %v4682 = vadd.f32 %v4681, 1.0
    %v4683 = vrcp.pop %v4682
    %v4684 = vmul.f32 1.0, %v4683
    %v4685 = vtanh.pop %v4647
    %v4686 = vxor.u32 %v4648, 2147483648
    %v4687 = vmul.f32 %v4686, 1.442695
    %v4688 = vpow.pop %v4687
    %v4689 = vadd.f32 %v4688, 1.0
    %v4690 = vrcp.pop %v4689
    %v4691 = vmul.f32 1.0, %v4690
    %v4692 = vmul.f32 %v4684, %v4219
    %v4693 = vmul.f32 %v4678, %v4685
    %v4694 = vadd.f32 %v4692, %v4693
    %v4695 = vtanh.pop %v4694
    %v4696 = vmul.f32 %v4691, %v4695
    %v4697 = vsel %vm1250, %v4672, 0.0
    %s4698 = scalar_lea.vmem [#allocation4], 56
    %4699 = vst [vmem:[%s4698] sm:$0xff] %v4697
    %v4700 = vsel %vm1243, %v4696, 0.0
    %4701 = vst [vmem:[#allocation5] sm:$0xff] %v4700
    %v4702 = vld [vmem:[#allocation4] sm:$0xff]
    %v4703 = vld [vmem:[#allocation4 + $0x8] sm:$0xff]
    %v4704 = vld [vmem:[#allocation4 + $0x10] sm:$0xff]
    %v4705 = vld [vmem:[#allocation4 + $0x18] sm:$0xff]
    %v4706 = vld [vmem:[#allocation4 + $0x20] sm:$0xff]
    %v4707 = vld [vmem:[#allocation4 + $0x28] sm:$0xff]
    %v4708 = vld [vmem:[#allocation4 + $0x30] sm:$0xff]
    %v4709 = vld [vmem:[#allocation4 + $0x38] sm:$0xff]
    %v4710 = vld [vmem:[#allocation5] sm:$0xff]
    %v4711 = vld [vmem:[#allocation5 + $0x8] sm:$0xff]
    %v4712 = vld [vmem:[#allocation5 + $0x10] sm:$0xff]
    %v4713 = vld [vmem:[#allocation5 + $0x18] sm:$0xff]
    %v4714 = vld [vmem:[#allocation5 + $0x20] sm:$0xff]
    %v4715 = vld [vmem:[#allocation5 + $0x28] sm:$0xff]
    %v4716 = vld [vmem:[#allocation5 + $0x30] sm:$0xff]
    %v4717 = vld [vmem:[#allocation5 + $0x38] sm:$0xff]
    %v4718 = vld [vmem:[#allocation15] sm:$0xff]
    %v4719 = vld [vmem:[#allocation15 + $0x8] sm:$0xff]
    %v4720 = vld [vmem:[#allocation15 + $0x10] sm:$0xff]
    %v4721 = vld [vmem:[#allocation15 + $0x18] sm:$0xff]
    %v4722 = vld [vmem:[#allocation15 + $0x20] sm:$0xff]
    %v4723 = vld [vmem:[#allocation15 + $0x28] sm:$0xff]
    %v4724 = vld [vmem:[#allocation15 + $0x30] sm:$0xff]
    %v4725 = vld [vmem:[#allocation15 + $0x38] sm:$0xff]
    %v4726 = vld [vmem:[#allocation15 + $0x40] sm:$0xff]
    %v4727 = vld [vmem:[#allocation15 + $0x48] sm:$0xff]
    %v4728 = vld [vmem:[#allocation15 + $0x50] sm:$0xff]
    %v4729 = vld [vmem:[#allocation15 + $0x58] sm:$0xff]
    %v4730 = vld [vmem:[#allocation15 + $0x60] sm:$0xff]
    %v4731 = vld [vmem:[#allocation15 + $0x68] sm:$0xff]
    %v4732 = vld [vmem:[#allocation15 + $0x70] sm:$0xff]
    %v4733 = vld [vmem:[#allocation15 + $0x78] sm:$0xff]
    %v4734 = vld [vmem:[#allocation17] sm:$0xff]
    %v4735 = vld [vmem:[#allocation17 + $0x8] sm:$0xff]
    %v4736 = vld [vmem:[#allocation17 + $0x10] sm:$0xff]
    %v4737 = vld [vmem:[#allocation17 + $0x18] sm:$0xff]
    %v4738 = vld [vmem:[#allocation17 + $0x20] sm:$0xff]
    %v4739 = vld [vmem:[#allocation17 + $0x28] sm:$0xff]
    %v4740 = vld [vmem:[#allocation17 + $0x30] sm:$0xff]
    %v4741 = vld [vmem:[#allocation17 + $0x38] sm:$0xff]
    %v4742 = vld [vmem:[#allocation17 + $0x40] sm:$0xff]
    %v4743 = vld [vmem:[#allocation17 + $0x48] sm:$0xff]
    %v4744 = vld [vmem:[#allocation17 + $0x50] sm:$0xff]
    %v4745 = vld [vmem:[#allocation17 + $0x58] sm:$0xff]
    %v4746 = vld [vmem:[#allocation17 + $0x60] sm:$0xff]
    %v4747 = vld [vmem:[#allocation17 + $0x68] sm:$0xff]
    %v4748 = vld [vmem:[#allocation17 + $0x70] sm:$0xff]
    %v4749 = vld [vmem:[#allocation17 + $0x78] sm:$0xff]
    %4750 = vmatprep.subr.mxu0 0.0
    %4751 = vmatpush1.msra.mxu0 %v4734
    %4752 = vmatprep.subr.mxu0 0.0
    %4753 = vmatpush1.msra.mxu0 %v4735
    %4754 = vmatprep.subr.mxu0 0.0
    %4755 = vmatpush1.msra.mxu0 %v4736
    %4756 = vmatprep.subr.mxu0 0.0
    %4757 = vmatpush1.msra.mxu0 %v4737
    %4758 = vmatprep.subr.mxu0 0.0
    %4759 = vmatpush1.msra.mxu0 %v4738
    %4760 = vmatprep.subr.mxu0 0.0
    %4761 = vmatpush1.msra.mxu0 %v4739
    %4762 = vmatprep.subr.mxu0 0.0
    %4763 = vmatpush1.msra.mxu0 %v4740
    %4764 = vmatprep.subr.mxu0 0.0
    %4765 = vmatpush1.msra.mxu0 %v4741
    %4766 = vmatprep.subr.mxu0 0.0
    %4767 = vmatpush1.msra.mxu0 %v4742
    %4768 = vmatprep.subr.mxu0 0.0
    %4769 = vmatpush1.msra.mxu0 %v4743
    %4770 = vmatprep.subr.mxu0 0.0
    %4771 = vmatpush1.msra.mxu0 %v4744
    %4772 = vmatprep.subr.mxu0 0.0
    %4773 = vmatpush1.msra.mxu0 %v4745
    %4774 = vmatprep.subr.mxu0 0.0
    %4775 = vmatpush1.msra.mxu0 %v4746
    %4776 = vmatprep.subr.mxu0 0.0
    %4777 = vmatpush1.msra.mxu0 %v4747
    %4778 = vmatprep.subr.mxu0 0.0
    %4779 = vmatpush1.msra.mxu0 %v4748
    %4780 = vmatprep.subr.mxu0 0.0
    %4781 = vmatpush1.msra.mxu0 %v4749
    %4782 = vmatprep.subr.mxu0 0.0
    %4783 = vmatpush1.msra.mxu0 0.0
    %4784 = vmatprep.subr.mxu0 0.0
    %4785 = vmatpush1.msra.mxu0 0.0
    %4786 = vmatprep.subr.mxu0 0.0
    %4787 = vmatpush1.msra.mxu0 0.0
    %4788 = vmatprep.subr.mxu0 0.0
    %4789 = vmatpush1.msra.mxu0 0.0
    %4790 = vmatprep.subr.mxu0 0.0
    %4791 = vmatpush1.msra.mxu0 0.0
    %4792 = vmatprep.subr.mxu0 0.0
    %4793 = vmatpush1.msra.mxu0 0.0
    %4794 = vmatprep.subr.mxu0 0.0
    %4795 = vmatpush1.msra.mxu0 0.0
    %4796 = vmatprep.subr.mxu0 0.0
    %4797 = vmatpush1.msra.mxu0 0.0
    %4798 = vmatprep.subr.mxu0 0.0
    %4799 = vmatpush1.msra.mxu0 0.0
    %4800 = vmatprep.subr.mxu0 0.0
    %4801 = vmatpush1.msra.mxu0 0.0
    %4802 = vmatprep.subr.mxu0 0.0
    %4803 = vmatpush1.msra.mxu0 0.0
    %4804 = vmatprep.subr.mxu0 0.0
    %4805 = vmatpush1.msra.mxu0 0.0
    %4806 = vmatprep.subr.mxu0 0.0
    %4807 = vmatpush1.msra.mxu0 0.0
    %4808 = vmatprep.subr.mxu0 0.0
    %4809 = vmatpush1.msra.mxu0 0.0
    %4810 = vmatprep.subr.mxu0 0.0
    %4811 = vmatpush1.msra.mxu0 0.0
    %4812 = vmatprep.subr.mxu0 0.0
    %4813 = vmatpush1.msra.mxu0 0.0
    %4814 = vmatprep.mubr.f32.mxu0 0.0
    %4815 = vmatmul.mubr.f32.gmra.mrb[0].mxu0 %v4710
    %v4816 = vpop.f32.mrb[0].mxu0
    %v4817 = vadd.f32 0.0, %v4816
    %v4818 = vpop.f32.mrb[0].mxu0
    %4819 = vmatprep.mubr.f32.mxu0 0.0
    %4820 = vmatmul.mubr.f32.gmra.mrb[0].mxu0 %v4711
    %v4821 = vpop.f32.mrb[0].mxu0
    %v4822 = vadd.f32 0.0, %v4821
    %v4823 = vpop.f32.mrb[0].mxu0
    %4824 = vmatprep.mubr.f32.mxu0 0.0
    %4825 = vmatmul.mubr.f32.gmra.mrb[0].mxu0 %v4712
    %v4826 = vpop.f32.mrb[0].mxu0
    %v4827 = vadd.f32 0.0, %v4826
    %v4828 = vpop.f32.mrb[0].mxu0
    %4829 = vmatprep.mubr.f32.mxu0 0.0
    %4830 = vmatmul.mubr.f32.gmra.mrb[0].mxu0 %v4713
    %v4831 = vpop.f32.mrb[0].mxu0
    %v4832 = vadd.f32 0.0, %v4831
    %v4833 = vpop.f32.mrb[0].mxu0
    %4834 = vmatprep.mubr.f32.mxu0 0.0
    %4835 = vmatmul.mubr.f32.gmra.mrb[0].mxu0 %v4714
    %v4836 = vpop.f32.mrb[0].mxu0
    %v4837 = vadd.f32 0.0, %v4836
    %v4838 = vpop.f32.mrb[0].mxu0
    %4839 = vmatprep.mubr.f32.mxu0 0.0
    %4840 = vmatmul.mubr.f32.gmra.mrb[0].mxu0 %v4715
    %v4841 = vpop.f32.mrb[0].mxu0
    %v4842 = vadd.f32 0.0, %v4841
    %v4843 = vpop.f32.mrb[0].mxu0
    %4844 = vmatprep.mubr.f32.mxu0 0.0
    %4845 = vmatmul.mubr.f32.gmra.mrb[0].mxu0 %v4716
    %v4846 = vpop.f32.mrb[0].mxu0
    %v4847 = vadd.f32 0.0, %v4846
    %v4848 = vpop.f32.mrb[0].mxu0
    %4849 = vmatprep.mubr.f32.mxu0 0.0
    %4850 = vmatmul.mubr.f32.gmra.mrb[0].mxu0 %v4717
    %v4851 = vpop.f32.mrb[0].mxu0
    %v4852 = vadd.f32 0.0, %v4851
    %v4853 = vpop.f32.mrb[0].mxu0
    %4854 = vdwg.mxu0
    %4855 = vmatprep.subr.mxu0 0.0
    %4856 = vmatpush1.msra.mxu0 %v4718
    %4857 = vmatprep.subr.mxu0 0.0
    %4858 = vmatpush1.msra.mxu0 %v4719
    %4859 = vmatprep.subr.mxu0 0.0
    %4860 = vmatpush1.msra.mxu0 %v4720
    %4861 = vmatprep.subr.mxu0 0.0
    %4862 = vmatpush1.msra.mxu0 %v4721
    %4863 = vmatprep.subr.mxu0 0.0
    %4864 = vmatpush1.msra.mxu0 %v4722
    %4865 = vmatprep.subr.mxu0 0.0
    %4866 = vmatpush1.msra.mxu0 %v4723
    %4867 = vmatprep.subr.mxu0 0.0
    %4868 = vmatpush1.msra.mxu0 %v4724
    %4869 = vmatprep.subr.mxu0 0.0
    %4870 = vmatpush1.msra.mxu0 %v4725
    %4871 = vmatprep.subr.mxu0 0.0
    %4872 = vmatpush1.msra.mxu0 %v4726
    %4873 = vmatprep.subr.mxu0 0.0
    %4874 = vmatpush1.msra.mxu0 %v4727
    %4875 = vmatprep.subr.mxu0 0.0
    %4876 = vmatpush1.msra.mxu0 %v4728
    %4877 = vmatprep.subr.mxu0 0.0
    %4878 = vmatpush1.msra.mxu0 %v4729
    %4879 = vmatprep.subr.mxu0 0.0
    %4880 = vmatpush1.msra.mxu0 %v4730
    %4881 = vmatprep.subr.mxu0 0.0
    %4882 = vmatpush1.msra.mxu0 %v4731
    %4883 = vmatprep.subr.mxu0 0.0
    %4884 = vmatpush1.msra.mxu0 %v4732
    %4885 = vmatprep.subr.mxu0 0.0
    %4886 = vmatpush1.msra.mxu0 %v4733
    %4887 = vmatprep.subr.mxu0 0.0
    %4888 = vmatpush1.msra.mxu0 0.0
    %4889 = vmatprep.subr.mxu0 0.0
    %4890 = vmatpush1.msra.mxu0 0.0
    %4891 = vmatprep.subr.mxu0 0.0
    %4892 = vmatpush1.msra.mxu0 0.0
    %4893 = vmatprep.subr.mxu0 0.0
    %4894 = vmatpush1.msra.mxu0 0.0
    %4895 = vmatprep.subr.mxu0 0.0
    %4896 = vmatpush1.msra.mxu0 0.0
    %4897 = vmatprep.subr.mxu0 0.0
    %4898 = vmatpush1.msra.mxu0 0.0
    %4899 = vmatprep.subr.mxu0 0.0
    %4900 = vmatpush1.msra.mxu0 0.0
    %4901 = vmatprep.subr.mxu0 0.0
    %4902 = vmatpush1.msra.mxu0 0.0
    %4903 = vmatprep.subr.mxu0 0.0
    %4904 = vmatpush1.msra.mxu0 0.0
    %4905 = vmatprep.subr.mxu0 0.0
    %4906 = vmatpush1.msra.mxu0 0.0
    %4907 = vmatprep.subr.mxu0 0.0
    %4908 = vmatpush1.msra.mxu0 0.0
    %4909 = vmatprep.subr.mxu0 0.0
    %4910 = vmatpush1.msra.mxu0 0.0
    %4911 = vmatprep.subr.mxu0 0.0
    %4912 = vmatpush1.msra.mxu0 0.0
    %4913 = vmatprep.subr.mxu0 0.0
    %4914 = vmatpush1.msra.mxu0 0.0
    %4915 = vmatprep.subr.mxu0 0.0
    %4916 = vmatpush1.msra.mxu0 0.0
    %4917 = vmatprep.subr.mxu0 0.0
    %4918 = vmatpush1.msra.mxu0 0.0
    %4919 = vmatprep.mubr.f32.mxu0 0.0
    %4920 = vmatmul.mubr.f32.gmra.mrb[0].mxu0 %v4702
    %v4921 = vpop.f32.mrb[0].mxu0
    %v4922 = vadd.f32 %v4817, %v4921
    %v4923 = vpop.f32.mrb[0].mxu0
    %4924 = vmatprep.mubr.f32.mxu0 0.0
    %4925 = vmatmul.mubr.f32.gmra.mrb[0].mxu0 %v4703
    %v4926 = vpop.f32.mrb[0].mxu0
    %v4927 = vadd.f32 %v4822, %v4926
    %v4928 = vpop.f32.mrb[0].mxu0
    %4929 = vmatprep.mubr.f32.mxu0 0.0
    %4930 = vmatmul.mubr.f32.gmra.mrb[0].mxu0 %v4704
    %v4931 = vpop.f32.mrb[0].mxu0
    %v4932 = vadd.f32 %v4827, %v4931
    %v4933 = vpop.f32.mrb[0].mxu0
    %4934 = vmatprep.mubr.f32.mxu0 0.0
    %4935 = vmatmul.mubr.f32.gmra.mrb[0].mxu0 %v4705
    %v4936 = vpop.f32.mrb[0].mxu0
    %v4937 = vadd.f32 %v4832, %v4936
    %v4938 = vpop.f32.mrb[0].mxu0
    %4939 = vmatprep.mubr.f32.mxu0 0.0
    %4940 = vmatmul.mubr.f32.gmra.mrb[0].mxu0 %v4706
    %v4941 = vpop.f32.mrb[0].mxu0
    %v4942 = vadd.f32 %v4837, %v4941
    %v4943 = vpop.f32.mrb[0].mxu0
    %4944 = vmatprep.mubr.f32.mxu0 0.0
    %4945 = vmatmul.mubr.f32.gmra.mrb[0].mxu0 %v4707
    %v4946 = vpop.f32.mrb[0].mxu0
    %v4947 = vadd.f32 %v4842, %v4946
    %v4948 = vpop.f32.mrb[0].mxu0
    %4949 = vmatprep.mubr.f32.mxu0 0.0
    %4950 = vmatmul.mubr.f32.gmra.mrb[0].mxu0 %v4708
    %v4951 = vpop.f32.mrb[0].mxu0
    %v4952 = vadd.f32 %v4847, %v4951
    %v4953 = vpop.f32.mrb[0].mxu0
    %4954 = vmatprep.mubr.f32.mxu0 0.0
    %4955 = vmatmul.mubr.f32.gmra.mrb[0].mxu0 %v4709
    %v4956 = vpop.f32.mrb[0].mxu0
    %v4957 = vadd.f32 %v4852, %v4956
    %v4958 = vpop.f32.mrb[0].mxu0
    %4959 = vdwg.mxu0
    %v4960 = vld [vmem:[%s10] sm:$0x1]
    %v4962 = vlaneseq
    %v4963 = vshrl.u32 %v4962, 7
    %v4964 = vsub.s32 0, %v4963
    %v4965 = vrot.slane %v4960, %v4964
    %v4967 = vadd.f32 %v4922, %v4965
    %v4968 = vadd.f32 %v4927, %v4965
    %v4969 = vadd.f32 %v4932, %v4965
    %v4970 = vadd.f32 %v4937, %v4965
    %v4971 = vadd.f32 %v4942, %v4965
    %v4972 = vadd.f32 %v4947, %v4965
    %v4973 = vadd.f32 %v4952, %v4965
    %v4974 = vadd.f32 %v4957, %v4965
    %vm4975 = vcmask 64512
    %4976 = vst.msk [vmem:[#allocation18] sm:$0xff] %vm4975, %v4967
    %4977 = vst.msk [vmem:[#allocation18 + $0x8] sm:$0xff] %vm4975, %v4968
    %4978 = vst.msk [vmem:[#allocation18 + $0x10] sm:$0xff] %vm4975, %v4969
    %4979 = vst.msk [vmem:[#allocation18 + $0x18] sm:$0xff] %vm4975, %v4970
    %4980 = vst.msk [vmem:[#allocation18 + $0x20] sm:$0xff] %vm4975, %v4971
    %4981 = vst.msk [vmem:[#allocation18 + $0x28] sm:$0xff] %vm4975, %v4972
    %4982 = vst.msk [vmem:[#allocation18 + $0x30] sm:$0xff] %vm4975, %v4973
    %4983 = vst.msk [vmem:[#allocation18 + $0x38] sm:$0xff] %vm4975, %v4974
    // Predicated region
    $region74: #{tpu_custom_call.1} parent=1 // pred_check
      _
    $region75: #{tpu_custom_call.1} parent=1 // pred_check_branch
      %4985 = sbr.rel (0) target = $region77
    $region76: #{tpu_custom_call.1} parent=1 // pred_region
      %s4987 = ssub.s32 1024, 1024
      %4988 = vsyncadd [#allocation8], %s4987
      %s4989 = sshll.u32 [#allocation18], 4
      %s4990 = int_to_ptr.vmem [resolvable:$true] %s4989
      %4995 = dma.vmem_to_hbm [thread:$0]  %s4990, 1024, %s11, [#allocation8], 128, 128, 8
    $region77: #{tpu_custom_call.1} parent=1 // pred_fallthru
      _
    // Predicated region
    $region78: #{tpu_custom_call.1} parent=1 // pred_check
      _
    $region79: #{tpu_custom_call.1} parent=1 // pred_check_branch
      %4997 = sbr.rel (0) target = $region81
    $region80: #{tpu_custom_call.1} parent=1 // pred_region
      %4998 = dma.done [#allocation8], 1024
    $region81: #{tpu_custom_call.1} parent=1 // pred_fallthru
      _
    %4999 = vsyncpa [#allocation7], 1
    %5000 = vsyncpa [#allocation10], 1
    %5001 = vsyncpa [#allocation13], 1
    %5002 = vsyncpa [#allocation16], 1
    %5003 = vsyncpa [#allocation8], 1

</llo_original>
